<compile_context>
chip_gen: v7x
topology: tpu7x:2x2x1
jax: 0.10.0
libtpu: 0.0.40
codegen_flags: <defaults>
</compile_context>

<pallas_src>
import numpy as np
import jax
import jax.numpy as jnp
from jax import lax
from jax.experimental import pallas as pl
from jax.experimental.pallas import tpu as pltpu

PHI = 3.1415926 * 0.3
MIN_NORM = 1e-15
PROJ_EPS = 4e-3  # float32 eps used by the standard Poincare-ball `project`


def _round_up(x, m):
    return ((x + m - 1) // m) * m


# ----------------------------- in-kernel math helpers -----------------------------
def _elu(x):
    return jnp.where(x > 0, x, jnp.exp(x) - 1.0)


def _fkernel_math(x, c):
    """FKernel = project(x, c) then logmap0(x, c) on the Poincare ball."""
    sqrt_c = float(np.sqrt(c))
    maxnorm = (1.0 - PROJ_EPS) / sqrt_c
    norm = jnp.maximum(jnp.sqrt(jnp.sum(x * x, axis=-1, keepdims=True)), MIN_NORM)
    x = jnp.where(norm > maxnorm, x / norm * maxnorm, x)
    # The projected vector's norm is exactly min(norm, maxnorm): reuse it instead
    # of a second square + cross-lane reduce + sqrt.
    pnorm = jnp.minimum(norm, maxnorm)
    arg = jnp.clip(sqrt_c * pnorm, -1.0 + 1e-7, 1.0 - 1e-7)
    artanh = 0.5 * jnp.log((1.0 + arg) / (1.0 - arg))
    # approx reciprocal -> EUP slot (otherwise idle), frees VALU bundles.
    return (artanh * pl.reciprocal(sqrt_c * pnorm, approx=True)) * x


def _masked_softmax(e, adj, alpha):
    """LeakyReLU(alpha) on logits, mask where adj==0, row softmax (dim=1)."""
    e = jnp.where(e > 0, e, alpha * e)
    att = jnp.where(adj > 0, e, -9e15)
    att = att - jnp.max(att, axis=-1, keepdims=True)
    att = jnp.exp(att)
    # dropout(p=0.5, training=False) -> identity (inference mode)
    return att * pl.reciprocal(jnp.sum(att, axis=-1, keepdims=True), approx=True)


# ----------------------------- fused Pallas kernel -----------------------------
def make_fused_kernel(*, c, alpha, a_para, nheads, nhid, spb, use_bf16):
    mm = jnp.bfloat16 if use_bf16 else jnp.float32

    def kernel(x_ref, adj_ref, w1_ref, a1bd_ref, a2bdT_ref, wo_ref, ao_ref, out_ref):
        W1 = w1_ref[...].astype(mm)          # (nfp, Hh)
        A1 = a1bd_ref[...].astype(mm)        # (Hh, nheads)  block-diagonal a1
        A2T = a2bdT_ref[...].astype(mm)      # (nheads, Hh)  block-diagonal a2^T
        Wo = wo_ref[...].astype(mm)          # (Hh, nhid)
        ao = ao_ref[...]                     # (1, 2*nhid)   f32

        for s in range(spb):                 # static unroll over samples in this block
            x = x_ref[s]                     # (Np, nfp)
            adj = adj_ref[s]                 # (Np, Np)

            # ---------------- layer 1: fused multi-head GAT ----------------
            Wh = jnp.dot(x.astype(mm), W1, preferred_element_type=jnp.float32)   # (Np, Hh)
            Whb = Wh.astype(mm)
            # One MXU op per projection for ALL heads (block-diagonal trick).
            wh1_all = jnp.dot(Whb, A1, preferred_element_type=jnp.float32)       # (Np, nheads)
            wh2T_all = lax.dot_general(A2T, Whb, (((1,), (1,)), ((), ())),
                                       preferred_element_type=jnp.float32)       # (nheads, Np)

            fk_heads = []
            for h in range(nheads):
                e = wh1_all[:, h:h + 1] + wh2T_all[h:h + 1, :]                   # (Np, Np)
                att = _masked_softmax(e, adj, alpha)
                hp = jnp.dot(att.astype(mm),
                             Wh[:, h * nhid:(h + 1) * nhid].astype(mm),
                             preferred_element_type=jnp.float32)                 # (Np, nhid)
                fk_heads.append(_fkernel_math(hp, c))
            x1 = jnp.concatenate(fk_heads, axis=1) if nheads > 1 else fk_heads[0]
            # concat=True epilogue of every head, applied once elementwise.
            x2 = _elu(x1) + a_para * jnp.cos(x1 + PHI)                           # (Np, Hh)

            # --------- layer 2: out_att (concat=False) + module head ---------
            Wh2 = jnp.dot(x2.astype(mm), Wo, preferred_element_type=jnp.float32) # (Np, nhid)
            Wh2b = Wh2.astype(mm)
            wh1_2 = jnp.sum(Wh2 * ao[:, :nhid], axis=-1, keepdims=True)          # (Np, 1)
            wh2_2T = lax.dot_general(ao[:, nhid:].astype(mm), Wh2b,
                                     (((1,), (1,)), ((), ())),
                                     preferred_element_type=jnp.float32)         # (1, Np)
            att2 = _masked_softmax(wh1_2 + wh2_2T, adj, alpha)
            hp2 = jnp.dot(att2.astype(mm), Wh2b, preferred_element_type=jnp.float32)
            hp2 = _fkernel_math(hp2, c)      # out_att returns fkernel(h') (concat=False)
            hp2 = _fkernel_math(hp2, c)      # module-head fkernel
            out = _elu(hp2) + a_para * jnp.cos(hp2 + PHI)
            out_ref[s] = out.astype(out_ref.dtype)

    return kernel


# ----------------------------- pallas_call wrapper -----------------------------
def hkgat_fmri_fused(x, adj, W1, A1_bd, A2_bdT, Wo, ao_row, *, c, alpha, a_para,
                     nheads, nhid, samples_per_step=1, use_bf16=True):
    """Fully fused 2-layer HKGAT. x: (Bp, Np, nfp); adj: (Bp, Np, Np); both padded."""
    Bp, Np, nfp = x.shape
    spb = samples_per_step
    assert Bp % spb == 0
    Hh = nheads * nhid
    assert W1.shape == (nfp, Hh)
    assert A1_bd.shape == (Hh, nheads) and A2_bdT.shape == (nheads, Hh)
    assert Wo.shape == (Hh, nhid) and ao_row.shape == (1, 2 * nhid)

    kernel = make_fused_kernel(c=c, alpha=alpha, a_para=a_para, nheads=nheads,
                               nhid=nhid, spb=spb, use_bf16=use_bf16)

    # VMEM budget: double-buffered x+adj blocks + compiler value temporaries
    # (e/att/exp per head). Capped at 56 MiB so it is safe on v7x (64 MiB VMEM).
    bytes_per_sample = Np * max(Np, nfp) * 4
    est = spb * bytes_per_sample * (2 * 2 + 10)
    vmem_limit = int(min(max(est, 32 * 1024 * 1024), 56 * 1024 * 1024))

    return pl.pallas_call(
        kernel,
        out_shape=jax.ShapeDtypeStruct((Bp, Np, nhid), jnp.float32),
        grid_spec=pltpu.PrefetchScalarGridSpec(
            num_scalar_prefetch=0,
            grid=(Bp // spb,),
            in_specs=[
                pl.BlockSpec((spb, Np, nfp), lambda b: (b, 0, 0)),     # features (|corr|)
                pl.BlockSpec((spb, Np, Np), lambda b: (b, 0, 0)),      # adjacency
                pl.BlockSpec((nfp, Hh), lambda b: (0, 0)),             # stacked head W
                pl.BlockSpec((Hh, nheads), lambda b: (0, 0)),          # block-diag a1
                pl.BlockSpec((nheads, Hh), lambda b: (0, 0)),          # block-diag a2^T
                pl.BlockSpec((Hh, nhid), lambda b: (0, 0)),            # out_att W
                pl.BlockSpec((1, 2 * nhid), lambda b: (0, 0)),         # out_att a
            ],
            out_specs=pl.BlockSpec((spb, Np, nhid), lambda b: (b, 0, 0)),
        ),
        compiler_params=pltpu.CompilerParams(
            dimension_semantics=("parallel",),     # batch axis -> megacore on v7x
            vmem_limit_bytes=vmem_limit,
        ),
    )(x, adj, W1, A1_bd, A2_bdT, Wo, ao_row)


# ----------------------------- JAX glue: preprocess + forward -----------------------------
def preprocess_jax(data):
    """data: (B, T, N) -> (adj (B,N,N) top-50%-thresholded |corr|, fea (B,N,N) |corr|)."""

    def per_sample(d):                       # d: (T, N)
        x = d.T                              # (N, T): rows are variables (np.corrcoef(data[i].T))
        xc = x - jnp.mean(x, axis=1, keepdims=True)
        cov = xc @ xc.T
        std = jnp.sqrt(jnp.diag(cov))
        pc = cov / (std[:, None] * std[None, :])
        pc = jnp.clip(jnp.nan_to_num(pc), -1.0, 1.0)   # np.corrcoef also clips to [-1,1]
        pc = jnp.abs(pc)
        flat = pc.reshape(-1)
        k = int(flat.shape[0] * 0.5)
        # k-th largest == np.partition(flat, -k)[-k]; top_k avoids a full sort.
        # TODO(synk): for very large N this XLA top_k over N^2 elements dominates preprocessing.
        threshold = lax.top_k(flat, k)[0][-1]
        sparse = jnp.where(pc >= threshold, pc, 0.0)
        return sparse, pc

    adj, fea = jax.vmap(per_sample)(data)
    return adj.astype(jnp.float32), fea.astype(jnp.float32)


def module_fmri_forward(data, params, *, c, a_para, nhid, nheads,
                        samples_per_step=1, use_bf16=True):
    a_initial, f_initial = preprocess_jax(data)      # (B, N, N) each
    B, N, _ = f_initial.shape
    Hh = nheads * nhid

    # Lane/sublane padding: N -> multiple of 128. Padded columns have adj=0
    # (masked to -9e15 -> 0 in softmax) and zero feature/weight rows, so real
    # rows are bit-identical in exact arithmetic; padded rows are sliced off.
    Np = _round_up(N, 128)
    spb = max(1, min(samples_per_step, B))
    Bp = _round_up(B, spb)
    x = jnp.pad(f_initial, ((0, Bp - B), (0, Np - N), (0, Np - N)))
    adj = jnp.pad(a_initial, ((0, Bp - B), (0, Np - N), (0, Np - N)))

    # Stacked / block-diagonal parameters (built once in the wrapper).
    W1 = jnp.concatenate([params["attentions"][i][0] for i in range(nheads)], axis=1)  # (N, Hh)
    assert W1.shape[0] == N, "nfeat must equal N (features are the |corr| matrix)"
    W1 = jnp.pad(W1, ((0, Np - N), (0, 0)))
    a_stack = jnp.stack([params["attentions"][i][1].reshape(-1) for i in range(nheads)], 0)
    a1 = a_stack[:, :nhid]                    # (nheads, nhid)
    a2 = a_stack[:, nhid:]                    # (nheads, nhid)
    A1_bd = jnp.zeros((Hh, nheads), jnp.float32)
    A2_bdT = jnp.zeros((nheads, Hh), jnp.float32)
    for h in range(nheads):
        A1_bd = A1_bd.at[h * nhid:(h + 1) * nhid, h].set(a1[h])
        A2_bdT = A2_bdT.at[h, h * nhid:(h + 1) * nhid].set(a2[h])
    Wo, ao = params["out_att"]
    ao_row = ao.reshape(1, -1)

    out = hkgat_fmri_fused(x, adj, W1, A1_bd, A2_bdT, Wo, ao_row,
                           c=c, alpha=0.1, a_para=a_para, nheads=nheads, nhid=nhid,
                           samples_per_step=spb, use_bf16=use_bf16)   # (Bp, Np, nhid)
    return out[:B, :N, :], a_initial


# ----------------------------- deterministic parameter init -----------------------------
def xavier_uniform(key, shape, gain=1.414):
    fan_in, fan_out = shape[0], shape[1]
    bound = gain * np.sqrt(6.0 / (fan_in + fan_out))
    return jax.random.uniform(key, shape, jnp.float32, -bound, bound)


def init_params(key, nfeat, nhid, nheads):
    keys = jax.random.split(key, 2 * nheads + 2)
    attentions = []
    for i in range(nheads):
        W = xavier_uniform(keys[2 * i], (nfeat, nhid))
        a = xavier_uniform(keys[2 * i + 1], (2 * nhid, 1))
        attentions.append((W, a))
    Wo = xavier_uniform(keys[-2], (nhid * nheads, nhid))
    ao = xavier_uniform(keys[-1], (2 * nhid, 1))
    return {"attentions": attentions, "out_att": (Wo, ao)}


# ----------------------------- main -----------------------------
if __name__ == "__main__":
    key = jax.random.PRNGKey(0)
    k_data, k_params = jax.random.split(key)

    B, T, N = 2, 24, 16          # batch, timepoints, ROIs
    nfeat, nhid, nheads = N, 8, 4
    c, a_para = 1.0, 0.5

    data = jax.random.normal(k_data, (B, T, N), dtype=jnp.float32)
    params = init_params(k_params, nfeat, nhid, nheads)

    fwd = jax.jit(module_fmri_forward,
                  static_argnames=("c", "a_para", "nhid", "nheads",
                                   "samples_per_step", "use_bf16"))
    out, a_initial = fwd(data, params, c=c, a_para=a_para, nhid=nhid, nheads=nheads,
                         samples_per_step=1, use_bf16=True)
    jax.block_until_ready(out)
    jax.block_until_ready(a_initial)

    assert out.shape == (B, N, nhid) and a_initial.shape == (B, N, N)
    assert bool(jnp.all(jnp.isfinite(out))) and bool(jnp.all(jnp.isfinite(a_initial)))
    print("KERNEL_OK")
</pallas_src>

<mosaic_0001>
module attributes {stable_mosaic.version = 11 : i64} {
  func.func @kernel(%arg0: i32, %arg1: memref<1x128x128xf32, #tpu.memory_space<vmem>>, %arg2: memref<1x128x128xf32, #tpu.memory_space<vmem>>, %arg3: memref<128x32xf32, #tpu.memory_space<vmem>>, %arg4: memref<32x4xf32, #tpu.memory_space<vmem>>, %arg5: memref<4x32xf32, #tpu.memory_space<vmem>>, %arg6: memref<32x8xf32, #tpu.memory_space<vmem>>, %arg7: memref<1x16xf32, #tpu.memory_space<vmem>>, %arg8: memref<1x128x8xf32, #tpu.memory_space<vmem>>) attributes {dimension_semantics = [#tpu.dimension_semantics<parallel>], iteration_bounds = array<i64: 2>, scalar_prefetch = 0 : i64, scratch_operands = 0 : i64, tpu.core_type = #tpu.core_type<tc>, window_params = [{transform_indices = @transform_0, window_bounds = array<i64: 1, 128, 128>}, {transform_indices = @transform_1, window_bounds = array<i64: 1, 128, 128>}, {pipeline_mode = #tpu.pipeline_mode<synchronous>, transform_indices = @transform_2, window_bounds = array<i64: 128, 32>}, {pipeline_mode = #tpu.pipeline_mode<synchronous>, transform_indices = @transform_3, window_bounds = array<i64: 32, 4>}, {pipeline_mode = #tpu.pipeline_mode<synchronous>, transform_indices = @transform_4, window_bounds = array<i64: 4, 32>}, {pipeline_mode = #tpu.pipeline_mode<synchronous>, transform_indices = @transform_5, window_bounds = array<i64: 32, 8>}, {pipeline_mode = #tpu.pipeline_mode<synchronous>, transform_indices = @transform_6, window_bounds = array<i64: 1, 16>}, {transform_indices = @transform_7, window_bounds = array<i64: 1, 128, 8>}]} {
    %c0 = arith.constant 0 : index
    %c0_0 = arith.constant 0 : index
    %0 = vector.load %arg3[%c0, %c0_0] : memref<128x32xf32, #tpu.memory_space<vmem>>, vector<128x32xf32>
    %1 = arith.truncf %0 : vector<128x32xf32> to vector<128x32xbf16>
    %c0_1 = arith.constant 0 : index
    %c0_2 = arith.constant 0 : index
    %2 = vector.load %arg4[%c0_1, %c0_2] : memref<32x4xf32, #tpu.memory_space<vmem>>, vector<32x4xf32>
    %3 = arith.truncf %2 : vector<32x4xf32> to vector<32x4xbf16>
    %c0_3 = arith.constant 0 : index
    %c0_4 = arith.constant 0 : index
    %4 = vector.load %arg5[%c0_3, %c0_4] : memref<4x32xf32, #tpu.memory_space<vmem>>, vector<4x32xf32>
    %5 = arith.truncf %4 : vector<4x32xf32> to vector<4x32xbf16>
    %c0_5 = arith.constant 0 : index
    %c0_6 = arith.constant 0 : index
    %6 = vector.load %arg6[%c0_5, %c0_6] : memref<32x8xf32, #tpu.memory_space<vmem>>, vector<32x8xf32>
    %7 = arith.truncf %6 : vector<32x8xf32> to vector<32x8xbf16>
    %c0_7 = arith.constant 0 : index
    %c0_8 = arith.constant 0 : index
    %8 = vector.load %arg7[%c0_7, %c0_8] : memref<1x16xf32, #tpu.memory_space<vmem>>, vector<1x16xf32>
    %c0_9 = arith.constant 0 : index
    %c0_10 = arith.constant 0 : index
    %c0_11 = arith.constant 0 : index
    %9 = vector.load %arg1[%c0_9, %c0_10, %c0_11] : memref<1x128x128xf32, #tpu.memory_space<vmem>>, vector<1x128x128xf32>
    %10 = vector.shape_cast %9 : vector<1x128x128xf32> to vector<128x128xf32>
    %c0_12 = arith.constant 0 : index
    %c0_13 = arith.constant 0 : index
    %c0_14 = arith.constant 0 : index
    %11 = vector.load %arg2[%c0_12, %c0_13, %c0_14] : memref<1x128x128xf32, #tpu.memory_space<vmem>>, vector<1x128x128xf32>
    %12 = vector.shape_cast %11 : vector<1x128x128xf32> to vector<128x128xf32>
    %13 = arith.truncf %10 : vector<128x128xf32> to vector<128x128xbf16>
    %cst = arith.constant dense<0.000000e+00> : vector<128x32xf32>
    %14 = tpu.matmul %13, %1, %cst {dimension_numbers = #tpu.dot_dimension_numbers<[1], [0], [0], [1], [0, 0, 1, 1], [], []>} : vector<128x128xbf16>, vector<128x32xbf16>, vector<128x32xf32> -> vector<128x32xf32>
    %15 = arith.truncf %14 : vector<128x32xf32> to vector<128x32xbf16>
    %cst_15 = arith.constant dense<0.000000e+00> : vector<128x4xf32>
    %16 = tpu.matmul %15, %3, %cst_15 {dimension_numbers = #tpu.dot_dimension_numbers<[1], [0], [0], [1], [0, 0, 1, 1], [], []>} : vector<128x32xbf16>, vector<32x4xbf16>, vector<128x4xf32> -> vector<128x4xf32>
    %cst_16 = arith.constant dense<0.000000e+00> : vector<4x128xf32>
    %17 = tpu.matmul %5, %15, %cst_16 {dimension_numbers = #tpu.dot_dimension_numbers<[1], [1], [0], [0], [0, 0, 1, 0], [], []>} : vector<4x32xbf16>, vector<128x32xbf16>, vector<4x128xf32> -> vector<4x128xf32>
    %18 = vector.extract_strided_slice %16 {offsets = [0, 0], sizes = [128, 1], strides = [1, 1]} : vector<128x4xf32> to vector<128x1xf32>
    %19 = vector.extract_strided_slice %17 {offsets = [0, 0], sizes = [1, 128], strides = [1, 1]} : vector<4x128xf32> to vector<1x128xf32>
    %20 = vector.broadcast %18 : vector<128x1xf32> to vector<128x128xf32>
    %21 = vector.broadcast %19 : vector<1x128xf32> to vector<128x128xf32>
    %22 = arith.addf %20, %21 : vector<128x128xf32>
    %cst_17 = arith.constant 0.000000e+00 : f32
    %23 = vector.broadcast %cst_17 : f32 to vector<128x128xf32>
    %24 = arith.cmpf ogt, %22, %23 : vector<128x128xf32>
    %cst_18 = arith.constant 1.000000e-01 : f32
    %25 = vector.broadcast %cst_18 : f32 to vector<128x128xf32>
    %26 = arith.mulf %25, %22 : vector<128x128xf32>
    %27 = arith.select %24, %22, %26 : vector<128x128xi1>, vector<128x128xf32>
    %cst_19 = arith.constant 0.000000e+00 : f32
    %28 = vector.broadcast %cst_19 : f32 to vector<128x128xf32>
    %29 = arith.cmpf ogt, %12, %28 : vector<128x128xf32>
    %cst_20 = arith.constant -9.000000e+15 : f32
    %30 = vector.broadcast %cst_20 : f32 to vector<128x128xf32>
    %31 = arith.select %29, %27, %30 : vector<128x128xi1>, vector<128x128xf32>
    %cst_21 = arith.constant dense<0xFF800000> : vector<128xf32>
    %32 = vector.multi_reduction <maximumf>, %31, %cst_21 [1] : vector<128x128xf32> to vector<128xf32>
    %33 = vector.shape_cast %32 : vector<128xf32> to vector<128x1xf32>
    %34 = vector.broadcast %33 : vector<128x1xf32> to vector<128x128xf32>
    %35 = arith.subf %31, %34 : vector<128x128xf32>
    %36 = math.exp %35 : vector<128x128xf32>
    %cst_22 = arith.constant dense<0.000000e+00> : vector<128xf32>
    %37 = vector.multi_reduction <add>, %36, %cst_22 [1] : vector<128x128xf32> to vector<128xf32>
    %38 = vector.shape_cast %37 : vector<128xf32> to vector<128x1xf32>
    %39 = tpu.reciprocal %38 {approx = true} : vector<128x1xf32> -> vector<128x1xf32>
    %40 = vector.broadcast %39 : vector<128x1xf32> to vector<128x128xf32>
    %41 = arith.mulf %36, %40 : vector<128x128xf32>
    %42 = arith.truncf %41 : vector<128x128xf32> to vector<128x128xbf16>
    %43 = vector.extract_strided_slice %14 {offsets = [0, 0], sizes = [128, 8], strides = [1, 1]} : vector<128x32xf32> to vector<128x8xf32>
    %44 = arith.truncf %43 : vector<128x8xf32> to vector<128x8xbf16>
    %cst_23 = arith.constant dense<0.000000e+00> : vector<128x8xf32>
    %45 = tpu.matmul %42, %44, %cst_23 {dimension_numbers = #tpu.dot_dimension_numbers<[1], [0], [0], [1], [0, 0, 1, 1], [], []>} : vector<128x128xbf16>, vector<128x8xbf16>, vector<128x8xf32> -> vector<128x8xf32>
    %46 = arith.mulf %45, %45 : vector<128x8xf32>
    %cst_24 = arith.constant dense<0.000000e+00> : vector<128xf32>
    %47 = vector.multi_reduction <add>, %46, %cst_24 [1] : vector<128x8xf32> to vector<128xf32>
    %48 = vector.shape_cast %47 : vector<128xf32> to vector<128x1xf32>
    %49 = math.sqrt %48 : vector<128x1xf32>
    %cst_25 = arith.constant 1.000000e-15 : f32
    %50 = vector.broadcast %cst_25 : f32 to vector<128x1xf32>
    %51 = arith.maximumf %49, %50 : vector<128x1xf32>
    %cst_26 = arith.constant 0.995999991 : f32
    %52 = vector.broadcast %cst_26 : f32 to vector<128x1xf32>
    %53 = arith.cmpf ogt, %51, %52 : vector<128x1xf32>
    %54 = vector.broadcast %51 : vector<128x1xf32> to vector<128x8xf32>
    %55 = arith.divf %45, %54 : vector<128x8xf32>
    %cst_27 = arith.constant 0.995999991 : f32
    %56 = vector.broadcast %cst_27 : f32 to vector<128x8xf32>
    %57 = arith.mulf %55, %56 : vector<128x8xf32>
    %58 = vector.shape_cast %53 : vector<128x1xi1> to vector<128x1xi1>
    %59 = vector.broadcast %58 : vector<128x1xi1> to vector<128x8xi1>
    %60 = arith.select %59, %57, %45 : vector<128x8xi1>, vector<128x8xf32>
    %cst_28 = arith.constant 0.995999991 : f32
    %61 = vector.broadcast %cst_28 : f32 to vector<128x1xf32>
    %62 = arith.minimumf %51, %61 : vector<128x1xf32>
    %cst_29 = arith.constant 1.000000e+00 : f32
    %63 = vector.broadcast %cst_29 : f32 to vector<128x1xf32>
    %64 = arith.mulf %63, %62 : vector<128x1xf32>
    %cst_30 = arith.constant -0.99999988 : f32
    %cst_31 = arith.constant 0.99999988 : f32
    %65 = vector.broadcast %cst_30 : f32 to vector<128x1xf32>
    %66 = arith.maximumf %65, %64 : vector<128x1xf32>
    %67 = vector.broadcast %cst_31 : f32 to vector<128x1xf32>
    %68 = arith.minimumf %67, %66 : vector<128x1xf32>
    %cst_32 = arith.constant 1.000000e+00 : f32
    %69 = vector.broadcast %cst_32 : f32 to vector<128x1xf32>
    %70 = arith.addf %69, %68 : vector<128x1xf32>
    %cst_33 = arith.constant 1.000000e+00 : f32
    %71 = vector.broadcast %cst_33 : f32 to vector<128x1xf32>
    %72 = arith.subf %71, %68 : vector<128x1xf32>
    %73 = arith.divf %70, %72 : vector<128x1xf32>
    %74 = math.log %73 : vector<128x1xf32>
    %cst_34 = arith.constant 5.000000e-01 : f32
    %75 = vector.broadcast %cst_34 : f32 to vector<128x1xf32>
    %76 = arith.mulf %75, %74 : vector<128x1xf32>
    %cst_35 = arith.constant 1.000000e+00 : f32
    %77 = vector.broadcast %cst_35 : f32 to vector<128x1xf32>
    %78 = arith.mulf %77, %62 : vector<128x1xf32>
    %79 = tpu.reciprocal %78 {approx = true} : vector<128x1xf32> -> vector<128x1xf32>
    %80 = arith.mulf %76, %79 : vector<128x1xf32>
    %81 = vector.broadcast %80 : vector<128x1xf32> to vector<128x8xf32>
    %82 = arith.mulf %81, %60 : vector<128x8xf32>
    %83 = vector.extract_strided_slice %16 {offsets = [0, 1], sizes = [128, 1], strides = [1, 1]} : vector<128x4xf32> to vector<128x1xf32>
    %84 = vector.extract_strided_slice %17 {offsets = [1, 0], sizes = [1, 128], strides = [1, 1]} : vector<4x128xf32> to vector<1x128xf32>
    %85 = vector.broadcast %83 : vector<128x1xf32> to vector<128x128xf32>
    %86 = vector.broadcast %84 : vector<1x128xf32> to vector<128x128xf32>
    %87 = arith.addf %85, %86 : vector<128x128xf32>
    %cst_36 = arith.constant 0.000000e+00 : f32
    %88 = vector.broadcast %cst_36 : f32 to vector<128x128xf32>
    %89 = arith.cmpf ogt, %87, %88 : vector<128x128xf32>
    %cst_37 = arith.constant 1.000000e-01 : f32
    %90 = vector.broadcast %cst_37 : f32 to vector<128x128xf32>
    %91 = arith.mulf %90, %87 : vector<128x128xf32>
    %92 = arith.select %89, %87, %91 : vector<128x128xi1>, vector<128x128xf32>
    %cst_38 = arith.constant 0.000000e+00 : f32
    %93 = vector.broadcast %cst_38 : f32 to vector<128x128xf32>
    %94 = arith.cmpf ogt, %12, %93 : vector<128x128xf32>
    %cst_39 = arith.constant -9.000000e+15 : f32
    %95 = vector.broadcast %cst_39 : f32 to vector<128x128xf32>
    %96 = arith.select %94, %92, %95 : vector<128x128xi1>, vector<128x128xf32>
    %cst_40 = arith.constant dense<0xFF800000> : vector<128xf32>
    %97 = vector.multi_reduction <maximumf>, %96, %cst_40 [1] : vector<128x128xf32> to vector<128xf32>
    %98 = vector.shape_cast %97 : vector<128xf32> to vector<128x1xf32>
    %99 = vector.broadcast %98 : vector<128x1xf32> to vector<128x128xf32>
    %100 = arith.subf %96, %99 : vector<128x128xf32>
    %101 = math.exp %100 : vector<128x128xf32>
    %cst_41 = arith.constant dense<0.000000e+00> : vector<128xf32>
    %102 = vector.multi_reduction <add>, %101, %cst_41 [1] : vector<128x128xf32> to vector<128xf32>
    %103 = vector.shape_cast %102 : vector<128xf32> to vector<128x1xf32>
    %104 = tpu.reciprocal %103 {approx = true} : vector<128x1xf32> -> vector<128x1xf32>
    %105 = vector.broadcast %104 : vector<128x1xf32> to vector<128x128xf32>
    %106 = arith.mulf %101, %105 : vector<128x128xf32>
    %107 = arith.truncf %106 : vector<128x128xf32> to vector<128x128xbf16>
    %108 = vector.extract_strided_slice %14 {offsets = [0, 8], sizes = [128, 8], strides = [1, 1]} : vector<128x32xf32> to vector<128x8xf32>
    %109 = arith.truncf %108 : vector<128x8xf32> to vector<128x8xbf16>
    %cst_42 = arith.constant dense<0.000000e+00> : vector<128x8xf32>
    %110 = tpu.matmul %107, %109, %cst_42 {dimension_numbers = #tpu.dot_dimension_numbers<[1], [0], [0], [1], [0, 0, 1, 1], [], []>} : vector<128x128xbf16>, vector<128x8xbf16>, vector<128x8xf32> -> vector<128x8xf32>
    %111 = arith.mulf %110, %110 : vector<128x8xf32>
    %cst_43 = arith.constant dense<0.000000e+00> : vector<128xf32>
    %112 = vector.multi_reduction <add>, %111, %cst_43 [1] : vector<128x8xf32> to vector<128xf32>
    %113 = vector.shape_cast %112 : vector<128xf32> to vector<128x1xf32>
    %114 = math.sqrt %113 : vector<128x1xf32>
    %cst_44 = arith.constant 1.000000e-15 : f32
    %115 = vector.broadcast %cst_44 : f32 to vector<128x1xf32>
    %116 = arith.maximumf %114, %115 : vector<128x1xf32>
    %cst_45 = arith.constant 0.995999991 : f32
    %117 = vector.broadcast %cst_45 : f32 to vector<128x1xf32>
    %118 = arith.cmpf ogt, %116, %117 : vector<128x1xf32>
    %119 = vector.broadcast %116 : vector<128x1xf32> to vector<128x8xf32>
    %120 = arith.divf %110, %119 : vector<128x8xf32>
    %cst_46 = arith.constant 0.995999991 : f32
    %121 = vector.broadcast %cst_46 : f32 to vector<128x8xf32>
    %122 = arith.mulf %120, %121 : vector<128x8xf32>
    %123 = vector.shape_cast %118 : vector<128x1xi1> to vector<128x1xi1>
    %124 = vector.broadcast %123 : vector<128x1xi1> to vector<128x8xi1>
    %125 = arith.select %124, %122, %110 : vector<128x8xi1>, vector<128x8xf32>
    %cst_47 = arith.constant 0.995999991 : f32
    %126 = vector.broadcast %cst_47 : f32 to vector<128x1xf32>
    %127 = arith.minimumf %116, %126 : vector<128x1xf32>
    %cst_48 = arith.constant 1.000000e+00 : f32
    %128 = vector.broadcast %cst_48 : f32 to vector<128x1xf32>
    %129 = arith.mulf %128, %127 : vector<128x1xf32>
    %cst_49 = arith.constant -0.99999988 : f32
    %cst_50 = arith.constant 0.99999988 : f32
    %130 = vector.broadcast %cst_49 : f32 to vector<128x1xf32>
    %131 = arith.maximumf %130, %129 : vector<128x1xf32>
    %132 = vector.broadcast %cst_50 : f32 to vector<128x1xf32>
    %133 = arith.minimumf %132, %131 : vector<128x1xf32>
    %cst_51 = arith.constant 1.000000e+00 : f32
    %134 = vector.broadcast %cst_51 : f32 to vector<128x1xf32>
    %135 = arith.addf %134, %133 : vector<128x1xf32>
    %cst_52 = arith.constant 1.000000e+00 : f32
    %136 = vector.broadcast %cst_52 : f32 to vector<128x1xf32>
    %137 = arith.subf %136, %133 : vector<128x1xf32>
    %138 = arith.divf %135, %137 : vector<128x1xf32>
    %139 = math.log %138 : vector<128x1xf32>
    %cst_53 = arith.constant 5.000000e-01 : f32
    %140 = vector.broadcast %cst_53 : f32 to vector<128x1xf32>
    %141 = arith.mulf %140, %139 : vector<128x1xf32>
    %cst_54 = arith.constant 1.000000e+00 : f32
    %142 = vector.broadcast %cst_54 : f32 to vector<128x1xf32>
    %143 = arith.mulf %142, %127 : vector<128x1xf32>
    %144 = tpu.reciprocal %143 {approx = true} : vector<128x1xf32> -> vector<128x1xf32>
    %145 = arith.mulf %141, %144 : vector<128x1xf32>
    %146 = vector.broadcast %145 : vector<128x1xf32> to vector<128x8xf32>
    %147 = arith.mulf %146, %125 : vector<128x8xf32>
    %148 = vector.extract_strided_slice %16 {offsets = [0, 2], sizes = [128, 1], strides = [1, 1]} : vector<128x4xf32> to vector<128x1xf32>
    %149 = vector.extract_strided_slice %17 {offsets = [2, 0], sizes = [1, 128], strides = [1, 1]} : vector<4x128xf32> to vector<1x128xf32>
    %150 = vector.broadcast %148 : vector<128x1xf32> to vector<128x128xf32>
    %151 = vector.broadcast %149 : vector<1x128xf32> to vector<128x128xf32>
    %152 = arith.addf %150, %151 : vector<128x128xf32>
    %cst_55 = arith.constant 0.000000e+00 : f32
    %153 = vector.broadcast %cst_55 : f32 to vector<128x128xf32>
    %154 = arith.cmpf ogt, %152, %153 : vector<128x128xf32>
    %cst_56 = arith.constant 1.000000e-01 : f32
    %155 = vector.broadcast %cst_56 : f32 to vector<128x128xf32>
    %156 = arith.mulf %155, %152 : vector<128x128xf32>
    %157 = arith.select %154, %152, %156 : vector<128x128xi1>, vector<128x128xf32>
    %cst_57 = arith.constant 0.000000e+00 : f32
    %158 = vector.broadcast %cst_57 : f32 to vector<128x128xf32>
    %159 = arith.cmpf ogt, %12, %158 : vector<128x128xf32>
    %cst_58 = arith.constant -9.000000e+15 : f32
    %160 = vector.broadcast %cst_58 : f32 to vector<128x128xf32>
    %161 = arith.select %159, %157, %160 : vector<128x128xi1>, vector<128x128xf32>
    %cst_59 = arith.constant dense<0xFF800000> : vector<128xf32>
    %162 = vector.multi_reduction <maximumf>, %161, %cst_59 [1] : vector<128x128xf32> to vector<128xf32>
    %163 = vector.shape_cast %162 : vector<128xf32> to vector<128x1xf32>
    %164 = vector.broadcast %163 : vector<128x1xf32> to vector<128x128xf32>
    %165 = arith.subf %161, %164 : vector<128x128xf32>
    %166 = math.exp %165 : vector<128x128xf32>
    %cst_60 = arith.constant dense<0.000000e+00> : vector<128xf32>
    %167 = vector.multi_reduction <add>, %166, %cst_60 [1] : vector<128x128xf32> to vector<128xf32>
    %168 = vector.shape_cast %167 : vector<128xf32> to vector<128x1xf32>
    %169 = tpu.reciprocal %168 {approx = true} : vector<128x1xf32> -> vector<128x1xf32>
    %170 = vector.broadcast %169 : vector<128x1xf32> to vector<128x128xf32>
    %171 = arith.mulf %166, %170 : vector<128x128xf32>
    %172 = arith.truncf %171 : vector<128x128xf32> to vector<128x128xbf16>
    %173 = vector.extract_strided_slice %14 {offsets = [0, 16], sizes = [128, 8], strides = [1, 1]} : vector<128x32xf32> to vector<128x8xf32>
    %174 = arith.truncf %173 : vector<128x8xf32> to vector<128x8xbf16>
    %cst_61 = arith.constant dense<0.000000e+00> : vector<128x8xf32>
    %175 = tpu.matmul %172, %174, %cst_61 {dimension_numbers = #tpu.dot_dimension_numbers<[1], [0], [0], [1], [0, 0, 1, 1], [], []>} : vector<128x128xbf16>, vector<128x8xbf16>, vector<128x8xf32> -> vector<128x8xf32>
    %176 = arith.mulf %175, %175 : vector<128x8xf32>
    %cst_62 = arith.constant dense<0.000000e+00> : vector<128xf32>
    %177 = vector.multi_reduction <add>, %176, %cst_62 [1] : vector<128x8xf32> to vector<128xf32>
    %178 = vector.shape_cast %177 : vector<128xf32> to vector<128x1xf32>
    %179 = math.sqrt %178 : vector<128x1xf32>
    %cst_63 = arith.constant 1.000000e-15 : f32
    %180 = vector.broadcast %cst_63 : f32 to vector<128x1xf32>
    %181 = arith.maximumf %179, %180 : vector<128x1xf32>
    %cst_64 = arith.constant 0.995999991 : f32
    %182 = vector.broadcast %cst_64 : f32 to vector<128x1xf32>
    %183 = arith.cmpf ogt, %181, %182 : vector<128x1xf32>
    %184 = vector.broadcast %181 : vector<128x1xf32> to vector<128x8xf32>
    %185 = arith.divf %175, %184 : vector<128x8xf32>
    %cst_65 = arith.constant 0.995999991 : f32
    %186 = vector.broadcast %cst_65 : f32 to vector<128x8xf32>
    %187 = arith.mulf %185, %186 : vector<128x8xf32>
    %188 = vector.shape_cast %183 : vector<128x1xi1> to vector<128x1xi1>
    %189 = vector.broadcast %188 : vector<128x1xi1> to vector<128x8xi1>
    %190 = arith.select %189, %187, %175 : vector<128x8xi1>, vector<128x8xf32>
    %cst_66 = arith.constant 0.995999991 : f32
    %191 = vector.broadcast %cst_66 : f32 to vector<128x1xf32>
    %192 = arith.minimumf %181, %191 : vector<128x1xf32>
    %cst_67 = arith.constant 1.000000e+00 : f32
    %193 = vector.broadcast %cst_67 : f32 to vector<128x1xf32>
    %194 = arith.mulf %193, %192 : vector<128x1xf32>
    %cst_68 = arith.constant -0.99999988 : f32
    %cst_69 = arith.constant 0.99999988 : f32
    %195 = vector.broadcast %cst_68 : f32 to vector<128x1xf32>
    %196 = arith.maximumf %195, %194 : vector<128x1xf32>
    %197 = vector.broadcast %cst_69 : f32 to vector<128x1xf32>
    %198 = arith.minimumf %197, %196 : vector<128x1xf32>
    %cst_70 = arith.constant 1.000000e+00 : f32
    %199 = vector.broadcast %cst_70 : f32 to vector<128x1xf32>
    %200 = arith.addf %199, %198 : vector<128x1xf32>
    %cst_71 = arith.constant 1.000000e+00 : f32
    %201 = vector.broadcast %cst_71 : f32 to vector<128x1xf32>
    %202 = arith.subf %201, %198 : vector<128x1xf32>
    %203 = arith.divf %200, %202 : vector<128x1xf32>
    %204 = math.log %203 : vector<128x1xf32>
    %cst_72 = arith.constant 5.000000e-01 : f32
    %205 = vector.broadcast %cst_72 : f32 to vector<128x1xf32>
    %206 = arith.mulf %205, %204 : vector<128x1xf32>
    %cst_73 = arith.constant 1.000000e+00 : f32
    %207 = vector.broadcast %cst_73 : f32 to vector<128x1xf32>
    %208 = arith.mulf %207, %192 : vector<128x1xf32>
    %209 = tpu.reciprocal %208 {approx = true} : vector<128x1xf32> -> vector<128x1xf32>
    %210 = arith.mulf %206, %209 : vector<128x1xf32>
    %211 = vector.broadcast %210 : vector<128x1xf32> to vector<128x8xf32>
    %212 = arith.mulf %211, %190 : vector<128x8xf32>
    %213 = vector.extract_strided_slice %16 {offsets = [0, 3], sizes = [128, 1], strides = [1, 1]} : vector<128x4xf32> to vector<128x1xf32>
    %214 = vector.extract_strided_slice %17 {offsets = [3, 0], sizes = [1, 128], strides = [1, 1]} : vector<4x128xf32> to vector<1x128xf32>
    %215 = vector.broadcast %213 : vector<128x1xf32> to vector<128x128xf32>
    %216 = vector.broadcast %214 : vector<1x128xf32> to vector<128x128xf32>
    %217 = arith.addf %215, %216 : vector<128x128xf32>
    %cst_74 = arith.constant 0.000000e+00 : f32
    %218 = vector.broadcast %cst_74 : f32 to vector<128x128xf32>
    %219 = arith.cmpf ogt, %217, %218 : vector<128x128xf32>
    %cst_75 = arith.constant 1.000000e-01 : f32
    %220 = vector.broadcast %cst_75 : f32 to vector<128x128xf32>
    %221 = arith.mulf %220, %217 : vector<128x128xf32>
    %222 = arith.select %219, %217, %221 : vector<128x128xi1>, vector<128x128xf32>
    %cst_76 = arith.constant 0.000000e+00 : f32
    %223 = vector.broadcast %cst_76 : f32 to vector<128x128xf32>
    %224 = arith.cmpf ogt, %12, %223 : vector<128x128xf32>
    %cst_77 = arith.constant -9.000000e+15 : f32
    %225 = vector.broadcast %cst_77 : f32 to vector<128x128xf32>
    %226 = arith.select %224, %222, %225 : vector<128x128xi1>, vector<128x128xf32>
    %cst_78 = arith.constant dense<0xFF800000> : vector<128xf32>
    %227 = vector.multi_reduction <maximumf>, %226, %cst_78 [1] : vector<128x128xf32> to vector<128xf32>
    %228 = vector.shape_cast %227 : vector<128xf32> to vector<128x1xf32>
    %229 = vector.broadcast %228 : vector<128x1xf32> to vector<128x128xf32>
    %230 = arith.subf %226, %229 : vector<128x128xf32>
    %231 = math.exp %230 : vector<128x128xf32>
    %cst_79 = arith.constant dense<0.000000e+00> : vector<128xf32>
    %232 = vector.multi_reduction <add>, %231, %cst_79 [1] : vector<128x128xf32> to vector<128xf32>
    %233 = vector.shape_cast %232 : vector<128xf32> to vector<128x1xf32>
    %234 = tpu.reciprocal %233 {approx = true} : vector<128x1xf32> -> vector<128x1xf32>
    %235 = vector.broadcast %234 : vector<128x1xf32> to vector<128x128xf32>
    %236 = arith.mulf %231, %235 : vector<128x128xf32>
    %237 = arith.truncf %236 : vector<128x128xf32> to vector<128x128xbf16>
    %238 = vector.extract_strided_slice %14 {offsets = [0, 24], sizes = [128, 8], strides = [1, 1]} : vector<128x32xf32> to vector<128x8xf32>
    %239 = arith.truncf %238 : vector<128x8xf32> to vector<128x8xbf16>
    %cst_80 = arith.constant dense<0.000000e+00> : vector<128x8xf32>
    %240 = tpu.matmul %237, %239, %cst_80 {dimension_numbers = #tpu.dot_dimension_numbers<[1], [0], [0], [1], [0, 0, 1, 1], [], []>} : vector<128x128xbf16>, vector<128x8xbf16>, vector<128x8xf32> -> vector<128x8xf32>
    %241 = arith.mulf %240, %240 : vector<128x8xf32>
    %cst_81 = arith.constant dense<0.000000e+00> : vector<128xf32>
    %242 = vector.multi_reduction <add>, %241, %cst_81 [1] : vector<128x8xf32> to vector<128xf32>
    %243 = vector.shape_cast %242 : vector<128xf32> to vector<128x1xf32>
    %244 = math.sqrt %243 : vector<128x1xf32>
    %cst_82 = arith.constant 1.000000e-15 : f32
    %245 = vector.broadcast %cst_82 : f32 to vector<128x1xf32>
    %246 = arith.maximumf %244, %245 : vector<128x1xf32>
    %cst_83 = arith.constant 0.995999991 : f32
    %247 = vector.broadcast %cst_83 : f32 to vector<128x1xf32>
    %248 = arith.cmpf ogt, %246, %247 : vector<128x1xf32>
    %249 = vector.broadcast %246 : vector<128x1xf32> to vector<128x8xf32>
    %250 = arith.divf %240, %249 : vector<128x8xf32>
    %cst_84 = arith.constant 0.995999991 : f32
    %251 = vector.broadcast %cst_84 : f32 to vector<128x8xf32>
    %252 = arith.mulf %250, %251 : vector<128x8xf32>
    %253 = vector.shape_cast %248 : vector<128x1xi1> to vector<128x1xi1>
    %254 = vector.broadcast %253 : vector<128x1xi1> to vector<128x8xi1>
    %255 = arith.select %254, %252, %240 : vector<128x8xi1>, vector<128x8xf32>
    %cst_85 = arith.constant 0.995999991 : f32
    %256 = vector.broadcast %cst_85 : f32 to vector<128x1xf32>
    %257 = arith.minimumf %246, %256 : vector<128x1xf32>
    %cst_86 = arith.constant 1.000000e+00 : f32
    %258 = vector.broadcast %cst_86 : f32 to vector<128x1xf32>
    %259 = arith.mulf %258, %257 : vector<128x1xf32>
    %cst_87 = arith.constant -0.99999988 : f32
    %cst_88 = arith.constant 0.99999988 : f32
    %260 = vector.broadcast %cst_87 : f32 to vector<128x1xf32>
    %261 = arith.maximumf %260, %259 : vector<128x1xf32>
    %262 = vector.broadcast %cst_88 : f32 to vector<128x1xf32>
    %263 = arith.minimumf %262, %261 : vector<128x1xf32>
    %cst_89 = arith.constant 1.000000e+00 : f32
    %264 = vector.broadcast %cst_89 : f32 to vector<128x1xf32>
    %265 = arith.addf %264, %263 : vector<128x1xf32>
    %cst_90 = arith.constant 1.000000e+00 : f32
    %266 = vector.broadcast %cst_90 : f32 to vector<128x1xf32>
    %267 = arith.subf %266, %263 : vector<128x1xf32>
    %268 = arith.divf %265, %267 : vector<128x1xf32>
    %269 = math.log %268 : vector<128x1xf32>
    %cst_91 = arith.constant 5.000000e-01 : f32
    %270 = vector.broadcast %cst_91 : f32 to vector<128x1xf32>
    %271 = arith.mulf %270, %269 : vector<128x1xf32>
    %cst_92 = arith.constant 1.000000e+00 : f32
    %272 = vector.broadcast %cst_92 : f32 to vector<128x1xf32>
    %273 = arith.mulf %272, %257 : vector<128x1xf32>
    %274 = tpu.reciprocal %273 {approx = true} : vector<128x1xf32> -> vector<128x1xf32>
    %275 = arith.mulf %271, %274 : vector<128x1xf32>
    %276 = vector.broadcast %275 : vector<128x1xf32> to vector<128x8xf32>
    %277 = arith.mulf %276, %255 : vector<128x8xf32>
    %278 = tpu.concatenate %82, %147, %212, %277 in 1 : vector<128x8xf32>, vector<128x8xf32>, vector<128x8xf32>, vector<128x8xf32> -> vector<128x32xf32>
    %cst_93 = arith.constant 0.000000e+00 : f32
    %279 = vector.broadcast %cst_93 : f32 to vector<128x32xf32>
    %280 = arith.cmpf ogt, %278, %279 : vector<128x32xf32>
    %281 = math.exp %278 : vector<128x32xf32>
    %cst_94 = arith.constant 1.000000e+00 : f32
    %282 = vector.broadcast %cst_94 : f32 to vector<128x32xf32>
    %283 = arith.subf %281, %282 : vector<128x32xf32>
    %284 = arith.select %280, %278, %283 : vector<128x32xi1>, vector<128x32xf32>
    %cst_95 = arith.constant 0.942477762 : f32
    %285 = vector.broadcast %cst_95 : f32 to vector<128x32xf32>
    %286 = arith.addf %278, %285 : vector<128x32xf32>
    %287 = math.cos %286 : vector<128x32xf32>
    %cst_96 = arith.constant 5.000000e-01 : f32
    %288 = vector.broadcast %cst_96 : f32 to vector<128x32xf32>
    %289 = arith.mulf %288, %287 : vector<128x32xf32>
    %290 = arith.addf %284, %289 : vector<128x32xf32>
    %291 = arith.truncf %290 : vector<128x32xf32> to vector<128x32xbf16>
    %cst_97 = arith.constant dense<0.000000e+00> : vector<128x8xf32>
    %292 = tpu.matmul %291, %7, %cst_97 {dimension_numbers = #tpu.dot_dimension_numbers<[1], [0], [0], [1], [0, 0, 1, 1], [], []>} : vector<128x32xbf16>, vector<32x8xbf16>, vector<128x8xf32> -> vector<128x8xf32>
    %293 = arith.truncf %292 : vector<128x8xf32> to vector<128x8xbf16>
    %294 = vector.extract_strided_slice %8 {offsets = [0, 0], sizes = [1, 8], strides = [1, 1]} : vector<1x16xf32> to vector<1x8xf32>
    %295 = vector.broadcast %294 : vector<1x8xf32> to vector<128x8xf32>
    %296 = arith.mulf %292, %295 : vector<128x8xf32>
    %cst_98 = arith.constant dense<0.000000e+00> : vector<128xf32>
    %297 = vector.multi_reduction <add>, %296, %cst_98 [1] : vector<128x8xf32> to vector<128xf32>
    %298 = vector.shape_cast %297 : vector<128xf32> to vector<128x1xf32>
    %299 = vector.extract_strided_slice %8 {offsets = [0, 8], sizes = [1, 8], strides = [1, 1]} : vector<1x16xf32> to vector<1x8xf32>
    %300 = arith.truncf %299 : vector<1x8xf32> to vector<1x8xbf16>
    %cst_99 = arith.constant dense<0.000000e+00> : vector<1x128xf32>
    %301 = tpu.matmul %300, %293, %cst_99 {dimension_numbers = #tpu.dot_dimension_numbers<[1], [1], [0], [0], [0, 0, 1, 0], [], []>} : vector<1x8xbf16>, vector<128x8xbf16>, vector<1x128xf32> -> vector<1x128xf32>
    %302 = vector.broadcast %298 : vector<128x1xf32> to vector<128x128xf32>
    %303 = vector.broadcast %301 : vector<1x128xf32> to vector<128x128xf32>
    %304 = arith.addf %302, %303 : vector<128x128xf32>
    %cst_100 = arith.constant 0.000000e+00 : f32
    %305 = vector.broadcast %cst_100 : f32 to vector<128x128xf32>
    %306 = arith.cmpf ogt, %304, %305 : vector<128x128xf32>
    %cst_101 = arith.constant 1.000000e-01 : f32
    %307 = vector.broadcast %cst_101 : f32 to vector<128x128xf32>
    %308 = arith.mulf %307, %304 : vector<128x128xf32>
    %309 = arith.select %306, %304, %308 : vector<128x128xi1>, vector<128x128xf32>
    %cst_102 = arith.constant 0.000000e+00 : f32
    %310 = vector.broadcast %cst_102 : f32 to vector<128x128xf32>
    %311 = arith.cmpf ogt, %12, %310 : vector<128x128xf32>
    %cst_103 = arith.constant -9.000000e+15 : f32
    %312 = vector.broadcast %cst_103 : f32 to vector<128x128xf32>
    %313 = arith.select %311, %309, %312 : vector<128x128xi1>, vector<128x128xf32>
    %cst_104 = arith.constant dense<0xFF800000> : vector<128xf32>
    %314 = vector.multi_reduction <maximumf>, %313, %cst_104 [1] : vector<128x128xf32> to vector<128xf32>
    %315 = vector.shape_cast %314 : vector<128xf32> to vector<128x1xf32>
    %316 = vector.broadcast %315 : vector<128x1xf32> to vector<128x128xf32>
    %317 = arith.subf %313, %316 : vector<128x128xf32>
    %318 = math.exp %317 : vector<128x128xf32>
    %cst_105 = arith.constant dense<0.000000e+00> : vector<128xf32>
    %319 = vector.multi_reduction <add>, %318, %cst_105 [1] : vector<128x128xf32> to vector<128xf32>
    %320 = vector.shape_cast %319 : vector<128xf32> to vector<128x1xf32>
    %321 = tpu.reciprocal %320 {approx = true} : vector<128x1xf32> -> vector<128x1xf32>
    %322 = vector.broadcast %321 : vector<128x1xf32> to vector<128x128xf32>
    %323 = arith.mulf %318, %322 : vector<128x128xf32>
    %324 = arith.truncf %323 : vector<128x128xf32> to vector<128x128xbf16>
    %cst_106 = arith.constant dense<0.000000e+00> : vector<128x8xf32>
    %325 = tpu.matmul %324, %293, %cst_106 {dimension_numbers = #tpu.dot_dimension_numbers<[1], [0], [0], [1], [0, 0, 1, 1], [], []>} : vector<128x128xbf16>, vector<128x8xbf16>, vector<128x8xf32> -> vector<128x8xf32>
    %326 = arith.mulf %325, %325 : vector<128x8xf32>
    %cst_107 = arith.constant dense<0.000000e+00> : vector<128xf32>
    %327 = vector.multi_reduction <add>, %326, %cst_107 [1] : vector<128x8xf32> to vector<128xf32>
    %328 = vector.shape_cast %327 : vector<128xf32> to vector<128x1xf32>
    %329 = math.sqrt %328 : vector<128x1xf32>
    %cst_108 = arith.constant 1.000000e-15 : f32
    %330 = vector.broadcast %cst_108 : f32 to vector<128x1xf32>
    %331 = arith.maximumf %329, %330 : vector<128x1xf32>
    %cst_109 = arith.constant 0.995999991 : f32
    %332 = vector.broadcast %cst_109 : f32 to vector<128x1xf32>
    %333 = arith.cmpf ogt, %331, %332 : vector<128x1xf32>
    %334 = vector.broadcast %331 : vector<128x1xf32> to vector<128x8xf32>
    %335 = arith.divf %325, %334 : vector<128x8xf32>
    %cst_110 = arith.constant 0.995999991 : f32
    %336 = vector.broadcast %cst_110 : f32 to vector<128x8xf32>
    %337 = arith.mulf %335, %336 : vector<128x8xf32>
    %338 = vector.shape_cast %333 : vector<128x1xi1> to vector<128x1xi1>
    %339 = vector.broadcast %338 : vector<128x1xi1> to vector<128x8xi1>
    %340 = arith.select %339, %337, %325 : vector<128x8xi1>, vector<128x8xf32>
    %cst_111 = arith.constant 0.995999991 : f32
    %341 = vector.broadcast %cst_111 : f32 to vector<128x1xf32>
    %342 = arith.minimumf %331, %341 : vector<128x1xf32>
    %cst_112 = arith.constant 1.000000e+00 : f32
    %343 = vector.broadcast %cst_112 : f32 to vector<128x1xf32>
    %344 = arith.mulf %343, %342 : vector<128x1xf32>
    %cst_113 = arith.constant -0.99999988 : f32
    %cst_114 = arith.constant 0.99999988 : f32
    %345 = vector.broadcast %cst_113 : f32 to vector<128x1xf32>
    %346 = arith.maximumf %345, %344 : vector<128x1xf32>
    %347 = vector.broadcast %cst_114 : f32 to vector<128x1xf32>
    %348 = arith.minimumf %347, %346 : vector<128x1xf32>
    %cst_115 = arith.constant 1.000000e+00 : f32
    %349 = vector.broadcast %cst_115 : f32 to vector<128x1xf32>
    %350 = arith.addf %349, %348 : vector<128x1xf32>
    %cst_116 = arith.constant 1.000000e+00 : f32
    %351 = vector.broadcast %cst_116 : f32 to vector<128x1xf32>
    %352 = arith.subf %351, %348 : vector<128x1xf32>
    %353 = arith.divf %350, %352 : vector<128x1xf32>
    %354 = math.log %353 : vector<128x1xf32>
    %cst_117 = arith.constant 5.000000e-01 : f32
    %355 = vector.broadcast %cst_117 : f32 to vector<128x1xf32>
    %356 = arith.mulf %355, %354 : vector<128x1xf32>
    %cst_118 = arith.constant 1.000000e+00 : f32
    %357 = vector.broadcast %cst_118 : f32 to vector<128x1xf32>
    %358 = arith.mulf %357, %342 : vector<128x1xf32>
    %359 = tpu.reciprocal %358 {approx = true} : vector<128x1xf32> -> vector<128x1xf32>
    %360 = arith.mulf %356, %359 : vector<128x1xf32>
    %361 = vector.broadcast %360 : vector<128x1xf32> to vector<128x8xf32>
    %362 = arith.mulf %361, %340 : vector<128x8xf32>
    %363 = arith.mulf %362, %362 : vector<128x8xf32>
    %cst_119 = arith.constant dense<0.000000e+00> : vector<128xf32>
    %364 = vector.multi_reduction <add>, %363, %cst_119 [1] : vector<128x8xf32> to vector<128xf32>
    %365 = vector.shape_cast %364 : vector<128xf32> to vector<128x1xf32>
    %366 = math.sqrt %365 : vector<128x1xf32>
    %cst_120 = arith.constant 1.000000e-15 : f32
    %367 = vector.broadcast %cst_120 : f32 to vector<128x1xf32>
    %368 = arith.maximumf %366, %367 : vector<128x1xf32>
    %cst_121 = arith.constant 0.995999991 : f32
    %369 = vector.broadcast %cst_121 : f32 to vector<128x1xf32>
    %370 = arith.cmpf ogt, %368, %369 : vector<128x1xf32>
    %371 = vector.broadcast %368 : vector<128x1xf32> to vector<128x8xf32>
    %372 = arith.divf %362, %371 : vector<128x8xf32>
    %cst_122 = arith.constant 0.995999991 : f32
    %373 = vector.broadcast %cst_122 : f32 to vector<128x8xf32>
    %374 = arith.mulf %372, %373 : vector<128x8xf32>
    %375 = vector.shape_cast %370 : vector<128x1xi1> to vector<128x1xi1>
    %376 = vector.broadcast %375 : vector<128x1xi1> to vector<128x8xi1>
    %377 = arith.select %376, %374, %362 : vector<128x8xi1>, vector<128x8xf32>
    %cst_123 = arith.constant 0.995999991 : f32
    %378 = vector.broadcast %cst_123 : f32 to vector<128x1xf32>
    %379 = arith.minimumf %368, %378 : vector<128x1xf32>
    %cst_124 = arith.constant 1.000000e+00 : f32
    %380 = vector.broadcast %cst_124 : f32 to vector<128x1xf32>
    %381 = arith.mulf %380, %379 : vector<128x1xf32>
    %cst_125 = arith.constant -0.99999988 : f32
    %cst_126 = arith.constant 0.99999988 : f32
    %382 = vector.broadcast %cst_125 : f32 to vector<128x1xf32>
    %383 = arith.maximumf %382, %381 : vector<128x1xf32>
    %384 = vector.broadcast %cst_126 : f32 to vector<128x1xf32>
    %385 = arith.minimumf %384, %383 : vector<128x1xf32>
    %cst_127 = arith.constant 1.000000e+00 : f32
    %386 = vector.broadcast %cst_127 : f32 to vector<128x1xf32>
    %387 = arith.addf %386, %385 : vector<128x1xf32>
    %cst_128 = arith.constant 1.000000e+00 : f32
    %388 = vector.broadcast %cst_128 : f32 to vector<128x1xf32>
    %389 = arith.subf %388, %385 : vector<128x1xf32>
    %390 = arith.divf %387, %389 : vector<128x1xf32>
    %391 = math.log %390 : vector<128x1xf32>
    %cst_129 = arith.constant 5.000000e-01 : f32
    %392 = vector.broadcast %cst_129 : f32 to vector<128x1xf32>
    %393 = arith.mulf %392, %391 : vector<128x1xf32>
    %cst_130 = arith.constant 1.000000e+00 : f32
    %394 = vector.broadcast %cst_130 : f32 to vector<128x1xf32>
    %395 = arith.mulf %394, %379 : vector<128x1xf32>
    %396 = tpu.reciprocal %395 {approx = true} : vector<128x1xf32> -> vector<128x1xf32>
    %397 = arith.mulf %393, %396 : vector<128x1xf32>
    %398 = vector.broadcast %397 : vector<128x1xf32> to vector<128x8xf32>
    %399 = arith.mulf %398, %377 : vector<128x8xf32>
    %cst_131 = arith.constant 0.000000e+00 : f32
    %400 = vector.broadcast %cst_131 : f32 to vector<128x8xf32>
    %401 = arith.cmpf ogt, %399, %400 : vector<128x8xf32>
    %402 = math.exp %399 : vector<128x8xf32>
    %cst_132 = arith.constant 1.000000e+00 : f32
    %403 = vector.broadcast %cst_132 : f32 to vector<128x8xf32>
    %404 = arith.subf %402, %403 : vector<128x8xf32>
    %405 = arith.select %401, %399, %404 : vector<128x8xi1>, vector<128x8xf32>
    %cst_133 = arith.constant 0.942477762 : f32
    %406 = vector.broadcast %cst_133 : f32 to vector<128x8xf32>
    %407 = arith.addf %399, %406 : vector<128x8xf32>
    %408 = math.cos %407 : vector<128x8xf32>
    %cst_134 = arith.constant 5.000000e-01 : f32
    %409 = vector.broadcast %cst_134 : f32 to vector<128x8xf32>
    %410 = arith.mulf %409, %408 : vector<128x8xf32>
    %411 = arith.addf %405, %410 : vector<128x8xf32>
    %c0_135 = arith.constant 0 : index
    %c0_136 = arith.constant 0 : index
    %c0_137 = arith.constant 0 : index
    %412 = vector.load %arg8[%c0_135, %c0_136, %c0_137] : memref<1x128x8xf32, #tpu.memory_space<vmem>>, vector<1x128x8xf32>
    %413 = vector.shape_cast %412 : vector<1x128x8xf32> to vector<128x8xf32>
    %414 = vector.shape_cast %411 : vector<128x8xf32> to vector<1x128x8xf32>
    tpu.vector_store %arg8[%c0_135, %c0_136, %c0_137], %414 {strides = array<i32>} : memref<1x128x8xf32, #tpu.memory_space<vmem>>, vector<1x128x8xf32>,
    return
  }
  func.func @transform_0(%arg0: i32) -> (i32, i32, i32) {
    %c0_i32 = arith.constant 0 : i32
    %c0_i32_0 = arith.constant 0 : i32
    %c0_i32_1 = arith.constant 0 : i32
    return %arg0, %c0_i32, %c0_i32_0 : i32, i32, i32
  }
  func.func @transform_1(%arg0: i32) -> (i32, i32, i32) {
    %c0_i32 = arith.constant 0 : i32
    %c0_i32_0 = arith.constant 0 : i32
    %c0_i32_1 = arith.constant 0 : i32
    return %arg0, %c0_i32, %c0_i32_0 : i32, i32, i32
  }
  func.func @transform_2(%arg0: i32) -> (i32, i32) {
    %c0_i32 = arith.constant 0 : i32
    %c0_i32_0 = arith.constant 0 : i32
    %c0_i32_1 = arith.constant 0 : i32
    return %c0_i32, %c0_i32_0 : i32, i32
  }
  func.func @transform_3(%arg0: i32) -> (i32, i32) {
    %c0_i32 = arith.constant 0 : i32
    %c0_i32_0 = arith.constant 0 : i32
    %c0_i32_1 = arith.constant 0 : i32
    return %c0_i32, %c0_i32_0 : i32, i32
  }
  func.func @transform_4(%arg0: i32) -> (i32, i32) {
    %c0_i32 = arith.constant 0 : i32
    %c0_i32_0 = arith.constant 0 : i32
    %c0_i32_1 = arith.constant 0 : i32
    return %c0_i32, %c0_i32_0 : i32, i32
  }
  func.func @transform_5(%arg0: i32) -> (i32, i32) {
    %c0_i32 = arith.constant 0 : i32
    %c0_i32_0 = arith.constant 0 : i32
    %c0_i32_1 = arith.constant 0 : i32
    return %c0_i32, %c0_i32_0 : i32, i32
  }
  func.func @transform_6(%arg0: i32) -> (i32, i32) {
    %c0_i32 = arith.constant 0 : i32
    %c0_i32_0 = arith.constant 0 : i32
    %c0_i32_1 = arith.constant 0 : i32
    return %c0_i32, %c0_i32_0 : i32, i32
  }
  func.func @transform_7(%arg0: i32) -> (i32, i32, i32) {
    %c0_i32 = arith.constant 0 : i32
    %c0_i32_0 = arith.constant 0 : i32
    %c0_i32_1 = arith.constant 0 : i32
    return %arg0, %c0_i32, %c0_i32_0 : i32, i32, i32
  }
}

</mosaic_0001>

<llo_original>
// kernel: module_fmri_forward.1
$region0: #{module_fmri_forward.1}
  #allocation0 [shape = 'u32[]', space=smem, size = 0x4, offset = 0x4, fixed_abs, tag = 'smem constant byte address 0x4 - core index']
  #allocation1 [shape = 'u32[144,128]{1,0:T(1,128)}', space=vmem, size = 0x12000, scoped, tag = 'internal scratch']
  %s0 = inlined_call_operand.vmem [shape: f32[2,128,128], index: 0, kind: input, shape index: {}]
  %s1 = inlined_call_operand.vmem [shape: f32[2,128,128], index: 1, kind: input, shape index: {}]
  %s2 = inlined_call_operand.vmem [shape: f32[128,32], index: 2, kind: input, shape index: {}]
  %s3 = inlined_call_operand.vmem [shape: f32[32,4], index: 3, kind: input, shape index: {}]
  %s4 = inlined_call_operand.vmem [shape: f32[4,32], index: 4, kind: input, shape index: {}]
  %s5 = inlined_call_operand.vmem [shape: f32[32,8], index: 5, kind: input, shape index: {}]
  %s6 = inlined_call_operand.vmem [shape: f32[1,16], index: 6, kind: input, shape index: {}]
  %s7 = inlined_call_operand.vmem [shape: f32[2,128,8], index: 7, kind: output, shape index: {}]
  %s8 = sld [smem:[#allocation0]]
  $region61: #{module_fmri_forward.1} parent=0
    _
  %s10 = ssub.s32 1, %s8
  %s11 = scalar_select 0, %s10, %s8
  loop: start=0, step=1, limit=4
  $region2: #{module_fmri_forward.1} parent=0 // loop_pre_header
    _
  $region3: #{module_fmri_forward.1} parent=0 // loop_header
    %s13 = sphi 0, %s17
    %p14 = scmp.ge.s32.totalorder %s13, 4
    %s23 = sphi 0, %s25
    %s26 = sphi 0, %s23
    %s27 = sphi 0, %s26
    %s43 = sphi 0, %s27
    %s49 = sphi 0, %s51
    %s52 = sphi 0, %s49
    %s53 = sphi 0, %s52
    %s69 = sphi 0, %s53
    %s73 = sphi 0, %s73
    %s75 = sphi 0, %s73
    %s76 = sphi 0, %s75
    %s90 = sphi 0, %s76
    %s94 = sphi 0, %s94
    %s96 = sphi 0, %s94
    %s97 = sphi 0, %s96
    %s111 = sphi 0, %s97
    %s115 = sphi 0, %s115
    %s117 = sphi 0, %s115
    %s118 = sphi 0, %s117
    %s132 = sphi 0, %s118
    %s136 = sphi 0, %s136
    %s138 = sphi 0, %s136
    %s139 = sphi 0, %s138
    %s153 = sphi 0, %s139
    %s157 = sphi 0, %s157
    %s159 = sphi 0, %s157
    %s160 = sphi 0, %s159
    %s174 = sphi 0, %s160
    %s180 = sphi 0, %s182
    %s183 = sphi 0, %s180
    %s184 = sphi 0, %s183
    %s200 = sphi 0, %s184
  $region4: #{module_fmri_forward.1} parent=0 // loop_header_branch
    %16 = sbr.rel (%p14) target = $region8
  $region5: #{module_fmri_forward.1} parent=0 // loop_body
    %s18 = ssub.s32 %s13, 1
    %s19 = ssub.s32 %s13, 2
    %s20 = sadd.s32 %s13, 1
    %s21 = ssub.s32 %s13, %s20
    %p22 = scmp.eq.s32.totalorder %s21, 0
    %s24 = sadd.s32 %s23, 1
    %s25 = scalar_select %p22, %s23, %s24
    %p28 = pneg %p22
    %p29 = scmp.eq.s32.totalorder %s13, 1
    %p30 = por %p28, %p29
    %p31 = scmp.ne.s32.totalorder %s23, %s26
    %p32 = scmp.eq.s32.totalorder %s13, 0
    %p33 = por %p31, %p32
    %p34 = scmp.ne.s32.totalorder %s23, %s26
    %p35 = scmp.eq.s32.totalorder %s18, 1
    %p36 = por %p34, %p35
    %p37 = scmp.ne.s32.totalorder %s26, %s27
    %p38 = scmp.eq.s32.totalorder %s18, 0
    %p39 = por %p37, %p38
    %p40 = scmp.ne.s32.totalorder %s26, %s27
    %p41 = scmp.eq.s32.totalorder %s19, 1
    %p42 = por %p40, %p41
    %p44 = scmp.ne.s32.totalorder %s27, %s43
    %p45 = scmp.eq.s32.totalorder %s19, 0
    %p46 = por %p44, %p45
    %s47 = ssub.s32 %s13, %s20
    %p48 = scmp.eq.s32.totalorder %s47, 0
    %s50 = sadd.s32 %s49, 1
    %s51 = scalar_select %p48, %s49, %s50
    %p54 = pneg %p48
    %p55 = scmp.eq.s32.totalorder %s13, 1
    %p56 = por %p54, %p55
    %p57 = scmp.ne.s32.totalorder %s49, %s52
    %p58 = scmp.eq.s32.totalorder %s13, 0
    %p59 = por %p57, %p58
    %p60 = scmp.ne.s32.totalorder %s49, %s52
    %p61 = scmp.eq.s32.totalorder %s18, 1
    %p62 = por %p60, %p61
    %p63 = scmp.ne.s32.totalorder %s52, %s53
    %p64 = scmp.eq.s32.totalorder %s18, 0
    %p65 = por %p63, %p64
    %p66 = scmp.ne.s32.totalorder %s52, %s53
    %p67 = scmp.eq.s32.totalorder %s19, 1
    %p68 = por %p66, %p67
    %p70 = scmp.ne.s32.totalorder %s53, %s69
    %p71 = scmp.eq.s32.totalorder %s19, 0
    %p72 = por %p70, %p71
    %s74 = sadd.s32 %s73, 1
    %p77 = scmp.eq.s32.totalorder %s13, 1
    %p78 = scmp.ne.s32.totalorder %s73, %s75
    %p79 = scmp.eq.s32.totalorder %s13, 0
    %p80 = por %p78, %p79
    %p81 = scmp.ne.s32.totalorder %s73, %s75
    %p82 = scmp.eq.s32.totalorder %s18, 1
    %p83 = por %p81, %p82
    %p84 = scmp.ne.s32.totalorder %s75, %s76
    %p85 = scmp.eq.s32.totalorder %s18, 0
    %p86 = por %p84, %p85
    %p87 = scmp.ne.s32.totalorder %s75, %s76
    %p88 = scmp.eq.s32.totalorder %s19, 1
    %p89 = por %p87, %p88
    %p91 = scmp.ne.s32.totalorder %s76, %s90
    %p92 = scmp.eq.s32.totalorder %s19, 0
    %p93 = por %p91, %p92
    %s95 = sadd.s32 %s94, 1
    %p98 = scmp.eq.s32.totalorder %s13, 1
    %p99 = scmp.ne.s32.totalorder %s94, %s96
    %p100 = scmp.eq.s32.totalorder %s13, 0
    %p101 = por %p99, %p100
    %p102 = scmp.ne.s32.totalorder %s94, %s96
    %p103 = scmp.eq.s32.totalorder %s18, 1
    %p104 = por %p102, %p103
    %p105 = scmp.ne.s32.totalorder %s96, %s97
    %p106 = scmp.eq.s32.totalorder %s18, 0
    %p107 = por %p105, %p106
    %p108 = scmp.ne.s32.totalorder %s96, %s97
    %p109 = scmp.eq.s32.totalorder %s19, 1
    %p110 = por %p108, %p109
    %p112 = scmp.ne.s32.totalorder %s97, %s111
    %p113 = scmp.eq.s32.totalorder %s19, 0
    %p114 = por %p112, %p113
    %s116 = sadd.s32 %s115, 1
    %p119 = scmp.eq.s32.totalorder %s13, 1
    %p120 = scmp.ne.s32.totalorder %s115, %s117
    %p121 = scmp.eq.s32.totalorder %s13, 0
    %p122 = por %p120, %p121
    %p123 = scmp.ne.s32.totalorder %s115, %s117
    %p124 = scmp.eq.s32.totalorder %s18, 1
    %p125 = por %p123, %p124
    %p126 = scmp.ne.s32.totalorder %s117, %s118
    %p127 = scmp.eq.s32.totalorder %s18, 0
    %p128 = por %p126, %p127
    %p129 = scmp.ne.s32.totalorder %s117, %s118
    %p130 = scmp.eq.s32.totalorder %s19, 1
    %p131 = por %p129, %p130
    %p133 = scmp.ne.s32.totalorder %s118, %s132
    %p134 = scmp.eq.s32.totalorder %s19, 0
    %p135 = por %p133, %p134
    %s137 = sadd.s32 %s136, 1
    %p140 = scmp.eq.s32.totalorder %s13, 1
    %p141 = scmp.ne.s32.totalorder %s136, %s138
    %p142 = scmp.eq.s32.totalorder %s13, 0
    %p143 = por %p141, %p142
    %p144 = scmp.ne.s32.totalorder %s136, %s138
    %p145 = scmp.eq.s32.totalorder %s18, 1
    %p146 = por %p144, %p145
    %p147 = scmp.ne.s32.totalorder %s138, %s139
    %p148 = scmp.eq.s32.totalorder %s18, 0
    %p149 = por %p147, %p148
    %p150 = scmp.ne.s32.totalorder %s138, %s139
    %p151 = scmp.eq.s32.totalorder %s19, 1
    %p152 = por %p150, %p151
    %p154 = scmp.ne.s32.totalorder %s139, %s153
    %p155 = scmp.eq.s32.totalorder %s19, 0
    %p156 = por %p154, %p155
    %s158 = sadd.s32 %s157, 1
    %p161 = scmp.eq.s32.totalorder %s13, 1
    %p162 = scmp.ne.s32.totalorder %s157, %s159
    %p163 = scmp.eq.s32.totalorder %s13, 0
    %p164 = por %p162, %p163
    %p165 = scmp.ne.s32.totalorder %s157, %s159
    %p166 = scmp.eq.s32.totalorder %s18, 1
    %p167 = por %p165, %p166
    %p168 = scmp.ne.s32.totalorder %s159, %s160
    %p169 = scmp.eq.s32.totalorder %s18, 0
    %p170 = por %p168, %p169
    %p171 = scmp.ne.s32.totalorder %s159, %s160
    %p172 = scmp.eq.s32.totalorder %s19, 1
    %p173 = por %p171, %p172
    %p175 = scmp.ne.s32.totalorder %s160, %s174
    %p176 = scmp.eq.s32.totalorder %s19, 0
    %p177 = por %p175, %p176
    %s178 = ssub.s32 %s13, %s20
    %p179 = scmp.eq.s32.totalorder %s178, 0
    %s181 = sadd.s32 %s180, 1
    %s182 = scalar_select %p179, %s180, %s181
    %p185 = pneg %p179
    %p186 = scmp.eq.s32.totalorder %s13, 1
    %p187 = por %p185, %p186
    %p188 = scmp.ne.s32.totalorder %s180, %s183
    %p189 = scmp.eq.s32.totalorder %s13, 0
    %p190 = por %p188, %p189
    %p191 = scmp.ne.s32.totalorder %s180, %s183
    %p192 = scmp.eq.s32.totalorder %s18, 1
    %p193 = por %p191, %p192
    %p194 = scmp.ne.s32.totalorder %s183, %s184
    %p195 = scmp.eq.s32.totalorder %s18, 0
    %p196 = por %p194, %p195
    %p197 = scmp.ne.s32.totalorder %s183, %s184
    %p198 = scmp.eq.s32.totalorder %s19, 1
    %p199 = por %p197, %p198
    %p201 = scmp.ne.s32.totalorder %s184, %s200
    %p202 = scmp.eq.s32.totalorder %s19, 0
    %p203 = por %p201, %p202
    %p204 = scmp.le.s32.totalorder 1, %s13
    %p205 = scmp.lt.s32.totalorder %s13, 3
    %p206 = pnand %p204, %p205
    %p207 = pneg %p206
    // Predicated region
    $region9: #{module_fmri_forward.1} parent=5 // pred_check
      _
    $region10: #{module_fmri_forward.1} parent=5 // pred_check_branch
      %209 = sbr.rel (%p206) target = $region12
    $region11: #{module_fmri_forward.1} parent=5 // pred_region
      %s210 = ssub.s32 %s13, 1
      // Predicated region
      $region13: #{module_fmri_forward.1} parent=11 // pred_check
        %p211 = pneg %p86
      $region14: #{module_fmri_forward.1} parent=11 // pred_check_branch
        %213 = sbr.rel (%p211) target = $region16
      $region15: #{module_fmri_forward.1} parent=11 // pred_region
        _
      $region16: #{module_fmri_forward.1} parent=11 // pred_fallthru
        _
      // Predicated region
      $region17: #{module_fmri_forward.1} parent=11 // pred_check
        %p214 = pneg %p107
      $region18: #{module_fmri_forward.1} parent=11 // pred_check_branch
        %216 = sbr.rel (%p214) target = $region20
      $region19: #{module_fmri_forward.1} parent=11 // pred_region
        _
      $region20: #{module_fmri_forward.1} parent=11 // pred_fallthru
        _
      // Predicated region
      $region21: #{module_fmri_forward.1} parent=11 // pred_check
        %p217 = pneg %p128
      $region22: #{module_fmri_forward.1} parent=11 // pred_check_branch
        %219 = sbr.rel (%p217) target = $region24
      $region23: #{module_fmri_forward.1} parent=11 // pred_region
        _
      $region24: #{module_fmri_forward.1} parent=11 // pred_fallthru
        _
      // Predicated region
      $region25: #{module_fmri_forward.1} parent=11 // pred_check
        %p220 = pneg %p149
      $region26: #{module_fmri_forward.1} parent=11 // pred_check_branch
        %222 = sbr.rel (%p220) target = $region28
      $region27: #{module_fmri_forward.1} parent=11 // pred_region
        _
      $region28: #{module_fmri_forward.1} parent=11 // pred_fallthru
        _
      // Predicated region
      $region29: #{module_fmri_forward.1} parent=11 // pred_check
        %p223 = pneg %p170
      $region30: #{module_fmri_forward.1} parent=11 // pred_check_branch
        %225 = sbr.rel (%p223) target = $region32
      $region31: #{module_fmri_forward.1} parent=11 // pred_region
        _
      $region32: #{module_fmri_forward.1} parent=11 // pred_fallthru
        _
    $region12: #{module_fmri_forward.1} parent=5 // pred_fallthru
      _
    %p226 = scmp.lt.s32.totalorder %s13, 2
    // Predicated region
    $region33: #{module_fmri_forward.1} parent=5 // pred_check
      %p227 = pneg %p226
    $region34: #{module_fmri_forward.1} parent=5 // pred_check_branch
      %229 = sbr.rel (%p227) target = $region36
    $region35: #{module_fmri_forward.1} parent=5 // pred_region
      // Predicated region
      $region37: #{module_fmri_forward.1} parent=35 // pred_check
        %p230 = pneg %p33
      $region38: #{module_fmri_forward.1} parent=35 // pred_check_branch
        %232 = sbr.rel (%p230) target = $region40
      $region39: #{module_fmri_forward.1} parent=35 // pred_region
        %p233 = scmp.lt.s32.totalorder %s13, 1
        %s234 = scalar_select %p233, %s13, 1
        %s235 = smul.addr %s234, 16
        %s236 = smul.addr %s235, 8
        %s237 = scalar_lea.vmem %s0, %s236
      $region40: #{module_fmri_forward.1} parent=35 // pred_fallthru
        _
      // Predicated region
      $region41: #{module_fmri_forward.1} parent=35 // pred_check
        %p238 = pneg %p59
      $region42: #{module_fmri_forward.1} parent=35 // pred_check_branch
        %240 = sbr.rel (%p238) target = $region44
      $region43: #{module_fmri_forward.1} parent=35 // pred_region
        %p241 = scmp.lt.s32.totalorder %s13, 1
        %s242 = scalar_select %p241, %s13, 1
        %s243 = smul.addr %s242, 16
        %s244 = smul.addr %s243, 8
        %s245 = scalar_lea.vmem %s1, %s244
      $region44: #{module_fmri_forward.1} parent=35 // pred_fallthru
        _
    $region36: #{module_fmri_forward.1} parent=5 // pred_fallthru
      _
    %p246 = scmp.le.s32.totalorder 1, %s13
    %p247 = scmp.lt.s32.totalorder %s13, 3
    %p248 = pnand %p246, %p247
    %p249 = pneg %p248
    // Predicated region
    $region45: #{module_fmri_forward.1} parent=5 // pred_check
      _
    $region46: #{module_fmri_forward.1} parent=5 // pred_check_branch
      %251 = sbr.rel (%p248) target = $region48
    $region47: #{module_fmri_forward.1} parent=5 // pred_region
      %s252 = ssub.s32 %s13, 1
      %p253 = scmp.lt.s32.totalorder %s18, 1
      %s254 = scalar_select %p253, %s18, 1
      %s255 = smul.addr %s254, 16
      %s256 = smul.addr %s255, 8
      %s257 = scalar_lea.vmem %s0, %s256
      %p258 = pneg %p39
      %p259 = pneg %p36
      %p260 = scmp.lt.s32.totalorder %s18, 1
      %s261 = scalar_select %p260, %s18, 1
      %s262 = smul.addr %s261, 16
      %s263 = smul.addr %s262, 8
      %s264 = scalar_lea.vmem %s1, %s263
      %p265 = pneg %p65
      %p266 = pneg %p62
      %p267 = pneg %p86
      %p268 = pneg %p83
      %p269 = pneg %p107
      %p270 = pneg %p104
      %p271 = pneg %p128
      %p272 = pneg %p125
      %p273 = pneg %p149
      %p274 = pneg %p146
      %p275 = pneg %p170
      %p276 = pneg %p167
      %p277 = pneg %p196
      %p278 = pneg %p193
      %p279 = scmp.lt.s32.totalorder %s18, 1
      %s280 = scalar_select %p279, %s18, 1
      %s281 = smul.addr %s280, 16
      %s282 = smul.addr %s281, 8
      %s283 = scalar_lea.vmem %s7, %s282
      %p284 = scmp.lt.s32.totalorder %s18, 1
      %s285 = scalar_select %p284, %s18, 1
      %s286 = smul.addr %s285, 16
      %s287 = smul.addr %s286, 8
      %s288 = scalar_lea.vmem %s0, %s287
      %p289 = scmp.lt.s32.totalorder %s18, 1
      %s290 = scalar_select %p289, %s18, 1
      %s291 = smul.addr %s290, 16
      %s292 = smul.addr %s291, 8
      %s293 = scalar_lea.vmem %s1, %s292
      %p294 = scmp.lt.s32.totalorder %s18, 1
      %s295 = scalar_select %p294, %s18, 1
      %s296 = smul.addr %s295, 16
      %s297 = smul.addr %s296, 8
      %s298 = scalar_lea.vmem %s7, %s297
      %v300 = vld [vmem:[%s2] sm:$0xff]
      %v301 = vld [vmem:[%s2 + $0x8] sm:$0xff]
      %v302 = vld [vmem:[%s2 + $0x10] sm:$0xff]
      %v303 = vld [vmem:[%s2 + $0x18] sm:$0xff]
      %v304 = vld [vmem:[%s2 + $0x20] sm:$0xff]
      %v305 = vld [vmem:[%s2 + $0x28] sm:$0xff]
      %v306 = vld [vmem:[%s2 + $0x30] sm:$0xff]
      %v307 = vld [vmem:[%s2 + $0x38] sm:$0xff]
      %v308 = vld [vmem:[%s2 + $0x40] sm:$0xff]
      %v309 = vld [vmem:[%s2 + $0x48] sm:$0xff]
      %v310 = vld [vmem:[%s2 + $0x50] sm:$0xff]
      %v311 = vld [vmem:[%s2 + $0x58] sm:$0xff]
      %v312 = vld [vmem:[%s2 + $0x60] sm:$0xff]
      %v313 = vld [vmem:[%s2 + $0x68] sm:$0xff]
      %v314 = vld [vmem:[%s2 + $0x70] sm:$0xff]
      %v315 = vld [vmem:[%s2 + $0x78] sm:$0xff]
      %v316 = vpack.c.bf16 %v301, %v300
      %v317 = vpack.c.bf16 %v303, %v302
      %v318 = vpack.c.bf16 %v305, %v304
      %v319 = vpack.c.bf16 %v307, %v306
      %v320 = vpack.c.bf16 %v309, %v308
      %v321 = vpack.c.bf16 %v311, %v310
      %v322 = vpack.c.bf16 %v313, %v312
      %v323 = vpack.c.bf16 %v315, %v314
      %v324 = vld [vmem:[%s3] sm:$0xff]
      %v325 = vld [vmem:[%s3 + $0x8] sm:$0xff]
      %v326 = vld [vmem:[%s3 + $0x10] sm:$0xff]
      %v327 = vld [vmem:[%s3 + $0x18] sm:$0xff]
      %v328 = vpack.c.bf16 %v325, %v324
      %v329 = vpack.c.bf16 %v327, %v326
      %v330 = vld [vmem:[%s4] sm:$0xf]
      %v331 = vpack.c.bf16 %v330, %v330
      %v332 = vld [vmem:[%s5] sm:$0xff]
      %v333 = vld [vmem:[%s5 + $0x8] sm:$0xff]
      %v334 = vld [vmem:[%s5 + $0x10] sm:$0xff]
      %v335 = vld [vmem:[%s5 + $0x18] sm:$0xff]
      %v336 = vpack.c.bf16 %v333, %v332
      %v337 = vpack.c.bf16 %v335, %v334
      %v338 = vld [vmem:[%s6] sm:$0x1]
      %v339 = vld [vmem:[%s288] sm:$0xff]
      %v340 = vld [vmem:[%s288 + $0x8] sm:$0xff]
      %v341 = vld [vmem:[%s288 + $0x10] sm:$0xff]
      %v342 = vld [vmem:[%s288 + $0x18] sm:$0xff]
      %v343 = vld [vmem:[%s288 + $0x20] sm:$0xff]
      %v344 = vld [vmem:[%s288 + $0x28] sm:$0xff]
      %v345 = vld [vmem:[%s288 + $0x30] sm:$0xff]
      %v346 = vld [vmem:[%s288 + $0x38] sm:$0xff]
      %v347 = vld [vmem:[%s288 + $0x40] sm:$0xff]
      %v348 = vld [vmem:[%s288 + $0x48] sm:$0xff]
      %v349 = vld [vmem:[%s288 + $0x50] sm:$0xff]
      %v350 = vld [vmem:[%s288 + $0x58] sm:$0xff]
      %v351 = vld [vmem:[%s288 + $0x60] sm:$0xff]
      %v352 = vld [vmem:[%s288 + $0x68] sm:$0xff]
      %v353 = vld [vmem:[%s288 + $0x70] sm:$0xff]
      %v354 = vld [vmem:[%s288 + $0x78] sm:$0xff]
      %v355 = vld [vmem:[%s293] sm:$0xff]
      %v356 = vld [vmem:[%s293 + $0x8] sm:$0xff]
      %v357 = vld [vmem:[%s293 + $0x10] sm:$0xff]
      %v358 = vld [vmem:[%s293 + $0x18] sm:$0xff]
      %v359 = vld [vmem:[%s293 + $0x20] sm:$0xff]
      %v360 = vld [vmem:[%s293 + $0x28] sm:$0xff]
      %v361 = vld [vmem:[%s293 + $0x30] sm:$0xff]
      %v362 = vld [vmem:[%s293 + $0x38] sm:$0xff]
      %v363 = vld [vmem:[%s293 + $0x40] sm:$0xff]
      %v364 = vld [vmem:[%s293 + $0x48] sm:$0xff]
      %v365 = vld [vmem:[%s293 + $0x50] sm:$0xff]
      %v366 = vld [vmem:[%s293 + $0x58] sm:$0xff]
      %v367 = vld [vmem:[%s293 + $0x60] sm:$0xff]
      %v368 = vld [vmem:[%s293 + $0x68] sm:$0xff]
      %v369 = vld [vmem:[%s293 + $0x70] sm:$0xff]
      %v370 = vld [vmem:[%s293 + $0x78] sm:$0xff]
      %v371 = vpack.c.bf16 %v340, %v339
      %v372 = vpack.c.bf16 %v342, %v341
      %v373 = vpack.c.bf16 %v344, %v343
      %v374 = vpack.c.bf16 %v346, %v345
      %v375 = vpack.c.bf16 %v348, %v347
      %v376 = vpack.c.bf16 %v350, %v349
      %v377 = vpack.c.bf16 %v352, %v351
      %v378 = vpack.c.bf16 %v354, %v353
      %379 = vmatprep.subr.bf16.mxu0 0
      %380 = vmatpush1.bf16.msra.mxu0 %v316
      %381 = vmatprep.subr.bf16.mxu0 0
      %382 = vmatpush1.bf16.msra.mxu0 %v317
      %383 = vmatprep.subr.bf16.mxu0 0
      %384 = vmatpush1.bf16.msra.mxu0 %v318
      %385 = vmatprep.subr.bf16.mxu0 0
      %386 = vmatpush1.bf16.msra.mxu0 %v319
      %387 = vmatprep.subr.bf16.mxu0 0
      %388 = vmatpush1.bf16.msra.mxu0 %v320
      %389 = vmatprep.subr.bf16.mxu0 0
      %390 = vmatpush1.bf16.msra.mxu0 %v321
      %391 = vmatprep.subr.bf16.mxu0 0
      %392 = vmatpush1.bf16.msra.mxu0 %v322
      %393 = vmatprep.subr.bf16.mxu0 0
      %394 = vmatpush1.bf16.msra.mxu0 %v323
      %395 = vmatprep.subr.bf16.mxu0 0
      %396 = vmatpush1.bf16.msra.mxu0 0
      %397 = vmatprep.subr.bf16.mxu0 0
      %398 = vmatpush1.bf16.msra.mxu0 0
      %399 = vmatprep.subr.bf16.mxu0 0
      %400 = vmatpush1.bf16.msra.mxu0 0
      %401 = vmatprep.subr.bf16.mxu0 0
      %402 = vmatpush1.bf16.msra.mxu0 0
      %403 = vmatprep.subr.bf16.mxu0 0
      %404 = vmatpush1.bf16.msra.mxu0 0
      %405 = vmatprep.subr.bf16.mxu0 0
      %406 = vmatpush1.bf16.msra.mxu0 0
      %407 = vmatprep.subr.bf16.mxu0 0
      %408 = vmatpush1.bf16.msra.mxu0 0
      %409 = vmatprep.subr.bf16.mxu0 0
      %410 = vmatpush1.bf16.msra.mxu0 0
      %411 = vmatprep.mubr.bf16.mxu0 0
      %412 = vmatmul.mubr.bf16.gmra.mrb[0].mxu0 %v371
      %v413 = vpop.f32.mrb[0].mxu0
      %v414 = vadd.f32 0.0, %v413
      %v415 = vpop.f32.mrb[0].mxu0
      %v416 = vpop.f32.mrb[0].mxu0
      %v417 = vadd.f32 0.0, %v416
      %v418 = vpop.f32.mrb[0].mxu0
      %419 = vmatprep.mubr.bf16.mxu0 0
      %420 = vmatmul.mubr.bf16.gmra.mrb[0].mxu0 %v372
      %v421 = vpop.f32.mrb[0].mxu0
      %v422 = vadd.f32 0.0, %v421
      %v423 = vpop.f32.mrb[0].mxu0
      %v424 = vpop.f32.mrb[0].mxu0
      %v425 = vadd.f32 0.0, %v424
      %v426 = vpop.f32.mrb[0].mxu0
      %427 = vmatprep.mubr.bf16.mxu0 0
      %428 = vmatmul.mubr.bf16.gmra.mrb[0].mxu0 %v373
      %v429 = vpop.f32.mrb[0].mxu0
      %v430 = vadd.f32 0.0, %v429
      %v431 = vpop.f32.mrb[0].mxu0
      %v432 = vpop.f32.mrb[0].mxu0
      %v433 = vadd.f32 0.0, %v432
      %v434 = vpop.f32.mrb[0].mxu0
      %435 = vmatprep.mubr.bf16.mxu0 0
      %436 = vmatmul.mubr.bf16.gmra.mrb[0].mxu0 %v374
      %v437 = vpop.f32.mrb[0].mxu0
      %v438 = vadd.f32 0.0, %v437
      %v439 = vpop.f32.mrb[0].mxu0
      %v440 = vpop.f32.mrb[0].mxu0
      %v441 = vadd.f32 0.0, %v440
      %v442 = vpop.f32.mrb[0].mxu0
      %443 = vmatprep.mubr.bf16.mxu0 0
      %444 = vmatmul.mubr.bf16.gmra.mrb[0].mxu0 %v375
      %v445 = vpop.f32.mrb[0].mxu0
      %v446 = vadd.f32 0.0, %v445
      %v447 = vpop.f32.mrb[0].mxu0
      %v448 = vpop.f32.mrb[0].mxu0
      %v449 = vadd.f32 0.0, %v448
      %v450 = vpop.f32.mrb[0].mxu0
      %451 = vmatprep.mubr.bf16.mxu0 0
      %452 = vmatmul.mubr.bf16.gmra.mrb[0].mxu0 %v376
      %v453 = vpop.f32.mrb[0].mxu0
      %v454 = vadd.f32 0.0, %v453
      %v455 = vpop.f32.mrb[0].mxu0
      %v456 = vpop.f32.mrb[0].mxu0
      %v457 = vadd.f32 0.0, %v456
      %v458 = vpop.f32.mrb[0].mxu0
      %459 = vmatprep.mubr.bf16.mxu0 0
      %460 = vmatmul.mubr.bf16.gmra.mrb[0].mxu0 %v377
      %v461 = vpop.f32.mrb[0].mxu0
      %v462 = vadd.f32 0.0, %v461
      %v463 = vpop.f32.mrb[0].mxu0
      %v464 = vpop.f32.mrb[0].mxu0
      %v465 = vadd.f32 0.0, %v464
      %v466 = vpop.f32.mrb[0].mxu0
      %467 = vmatprep.mubr.bf16.mxu0 0
      %468 = vmatmul.mubr.bf16.gmra.mrb[0].mxu0 %v378
      %v469 = vpop.f32.mrb[0].mxu0
      %v470 = vadd.f32 0.0, %v469
      %v471 = vpop.f32.mrb[0].mxu0
      %v472 = vpop.f32.mrb[0].mxu0
      %v473 = vadd.f32 0.0, %v472
      %v474 = vpop.f32.mrb[0].mxu0
      %475 = vdwg.mxu0
      %v476 = vpack.c.bf16 %v417, %v414
      %v477 = vpack.c.bf16 %v425, %v422
      %v478 = vpack.c.bf16 %v433, %v430
      %v479 = vpack.c.bf16 %v441, %v438
      %v480 = vpack.c.bf16 %v449, %v446
      %v481 = vpack.c.bf16 %v457, %v454
      %v482 = vpack.c.bf16 %v465, %v462
      %v483 = vpack.c.bf16 %v473, %v470
      %vm484 = vcmask 261120
      %v486 = vsel %vm484, %v476, 0
      %v489 = vsel %vm484, %v477, 0
      %v492 = vsel %vm484, %v478, 0
      %v495 = vsel %vm484, %v479, 0
      %v498 = vsel %vm484, %v480, 0
      %v501 = vsel %vm484, %v481, 0
      %v504 = vsel %vm484, %v482, 0
      %v507 = vsel %vm484, %v483, 0
      %509 = vmatprep.subr.bf16.mxu0 0
      %510 = vmatpush1.bf16.msra.mxu0 %v328
      %511 = vmatprep.subr.bf16.mxu0 0
      %512 = vmatpush1.bf16.msra.mxu0 %v329
      %513 = vmatprep.subr.bf16.mxu0 0
      %514 = vmatpush1.bf16.msra.mxu0 0
      %515 = vmatprep.subr.bf16.mxu0 0
      %516 = vmatpush1.bf16.msra.mxu0 0
      %517 = vmatprep.subr.bf16.mxu0 0
      %518 = vmatpush1.bf16.msra.mxu0 0
      %519 = vmatprep.subr.bf16.mxu0 0
      %520 = vmatpush1.bf16.msra.mxu0 0
      %521 = vmatprep.subr.bf16.mxu0 0
      %522 = vmatpush1.bf16.msra.mxu0 0
      %523 = vmatprep.subr.bf16.mxu0 0
      %524 = vmatpush1.bf16.msra.mxu0 0
      %525 = vmatprep.subr.bf16.mxu0 0
      %526 = vmatpush1.bf16.msra.mxu0 0
      %527 = vmatprep.subr.bf16.mxu0 0
      %528 = vmatpush1.bf16.msra.mxu0 0
      %529 = vmatprep.subr.bf16.mxu0 0
      %530 = vmatpush1.bf16.msra.mxu0 0
      %531 = vmatprep.subr.bf16.mxu0 0
      %532 = vmatpush1.bf16.msra.mxu0 0
      %533 = vmatprep.subr.bf16.mxu0 0
      %534 = vmatpush1.bf16.msra.mxu0 0
      %535 = vmatprep.subr.bf16.mxu0 0
      %536 = vmatpush1.bf16.msra.mxu0 0
      %537 = vmatprep.subr.bf16.mxu0 0
      %538 = vmatpush1.bf16.msra.mxu0 0
      %539 = vmatprep.subr.bf16.mxu0 0
      %540 = vmatpush1.bf16.msra.mxu0 0
      %541 = vmatprep.mubr.bf16.mxu0 0
      %542 = vmatmul.mubr.bf16.gmra.mrb[0].mxu0 %v486
      %v543 = vpop.f32.mrb[0].mxu0
      %v544 = vadd.f32 0.0, %v543
      %v545 = vpop.f32.mrb[0].mxu0
      %v546 = vpop.f32.mrb[0].mxu0
      %v547 = vadd.f32 0.0, %v546
      %v548 = vpop.f32.mrb[0].mxu0
      %549 = vmatprep.mubr.bf16.mxu0 0
      %550 = vmatmul.mubr.bf16.gmra.mrb[0].mxu0 %v489
      %v551 = vpop.f32.mrb[0].mxu0
      %v552 = vadd.f32 0.0, %v551
      %v553 = vpop.f32.mrb[0].mxu0
      %v554 = vpop.f32.mrb[0].mxu0
      %v555 = vadd.f32 0.0, %v554
      %v556 = vpop.f32.mrb[0].mxu0
      %557 = vmatprep.mubr.bf16.mxu0 0
      %558 = vmatmul.mubr.bf16.gmra.mrb[0].mxu0 %v492
      %v559 = vpop.f32.mrb[0].mxu0
      %v560 = vadd.f32 0.0, %v559
      %v561 = vpop.f32.mrb[0].mxu0
      %v562 = vpop.f32.mrb[0].mxu0
      %v563 = vadd.f32 0.0, %v562
      %v564 = vpop.f32.mrb[0].mxu0
      %565 = vmatprep.mubr.bf16.mxu0 0
      %566 = vmatmul.mubr.bf16.gmra.mrb[0].mxu0 %v495
      %v567 = vpop.f32.mrb[0].mxu0
      %v568 = vadd.f32 0.0, %v567
      %v569 = vpop.f32.mrb[0].mxu0
      %v570 = vpop.f32.mrb[0].mxu0
      %v571 = vadd.f32 0.0, %v570
      %v572 = vpop.f32.mrb[0].mxu0
      %573 = vmatprep.mubr.bf16.mxu0 0
      %574 = vmatmul.mubr.bf16.gmra.mrb[0].mxu0 %v498
      %v575 = vpop.f32.mrb[0].mxu0
      %v576 = vadd.f32 0.0, %v575
      %v577 = vpop.f32.mrb[0].mxu0
      %v578 = vpop.f32.mrb[0].mxu0
      %v579 = vadd.f32 0.0, %v578
      %v580 = vpop.f32.mrb[0].mxu0
      %581 = vmatprep.mubr.bf16.mxu0 0
      %582 = vmatmul.mubr.bf16.gmra.mrb[0].mxu0 %v501
      %v583 = vpop.f32.mrb[0].mxu0
      %v584 = vadd.f32 0.0, %v583
      %v585 = vpop.f32.mrb[0].mxu0
      %v586 = vpop.f32.mrb[0].mxu0
      %v587 = vadd.f32 0.0, %v586
      %v588 = vpop.f32.mrb[0].mxu0
      %589 = vmatprep.mubr.bf16.mxu0 0
      %590 = vmatmul.mubr.bf16.gmra.mrb[0].mxu0 %v504
      %v591 = vpop.f32.mrb[0].mxu0
      %v592 = vadd.f32 0.0, %v591
      %v593 = vpop.f32.mrb[0].mxu0
      %v594 = vpop.f32.mrb[0].mxu0
      %v595 = vadd.f32 0.0, %v594
      %v596 = vpop.f32.mrb[0].mxu0
      %597 = vmatprep.mubr.bf16.mxu0 0
      %598 = vmatmul.mubr.bf16.gmra.mrb[0].mxu0 %v507
      %v599 = vpop.f32.mrb[0].mxu0
      %v600 = vadd.f32 0.0, %v599
      %v601 = vpop.f32.mrb[0].mxu0
      %v602 = vpop.f32.mrb[0].mxu0
      %v603 = vadd.f32 0.0, %v602
      %v604 = vpop.f32.mrb[0].mxu0
      %605 = vdwg.mxu0
      %v607 = vsel %vm484, %v331, 0
      %609 = vmatprep.subr.bf16.mxu0 0
      %610 = vmatpush1.bf16.xpose.msra.mxu0 %v486
      %611 = vmatprep.subr.bf16.mxu0 0
      %612 = vmatpush1.bf16.xpose.msra.mxu0 %v489
      %613 = vmatprep.subr.bf16.mxu0 0
      %614 = vmatpush1.bf16.xpose.msra.mxu0 %v492
      %615 = vmatprep.subr.bf16.mxu0 0
      %616 = vmatpush1.bf16.xpose.msra.mxu0 %v495
      %617 = vmatprep.subr.bf16.mxu0 0
      %618 = vmatpush1.bf16.xpose.msra.mxu0 %v498
      %619 = vmatprep.subr.bf16.mxu0 0
      %620 = vmatpush1.bf16.xpose.msra.mxu0 %v501
      %621 = vmatprep.subr.bf16.mxu0 0
      %622 = vmatpush1.bf16.xpose.msra.mxu0 %v504
      %623 = vmatprep.subr.bf16.mxu0 0
      %624 = vmatpush1.bf16.xpose.msra.mxu0 %v507
      %625 = vmatprep.subr.bf16.mxu0 0
      %626 = vmatpush1.bf16.xpose.msra.mxu0 0
      %627 = vmatprep.subr.bf16.mxu0 0
      %628 = vmatpush1.bf16.xpose.msra.mxu0 0
      %629 = vmatprep.subr.bf16.mxu0 0
      %630 = vmatpush1.bf16.xpose.msra.mxu0 0
      %631 = vmatprep.subr.bf16.mxu0 0
      %632 = vmatpush1.bf16.xpose.msra.mxu0 0
      %633 = vmatprep.subr.bf16.mxu0 0
      %634 = vmatpush1.bf16.xpose.msra.mxu0 0
      %635 = vmatprep.subr.bf16.mxu0 0
      %636 = vmatpush1.bf16.xpose.msra.mxu0 0
      %637 = vmatprep.subr.bf16.mxu0 0
      %638 = vmatpush1.bf16.xpose.msra.mxu0 0
      %639 = vmatprep.subr.bf16.mxu0 0
      %640 = vmatpush1.bf16.xpose.msra.mxu0 0
      %641 = vmatprep.mubr.bf16.mxu0 0
      %642 = vmatmul.mubr.bf16.gmra.mrb[0].mxu0 %v607
      %v643 = vpop.f32.mrb[0].mxu0
      %v644 = vadd.f32 0.0, %v643
      %v645 = vpop.f32.mrb[0].mxu0
      %v646 = vpop.f32.mrb[0].mxu0
      %v647 = vpop.f32.mrb[0].mxu0
      %648 = vdwg.mxu0
      %650 = vset.pattern.permute.xlu0 0
      %651 = vperm.xlu0 %650, %v544
      %v652 = vpop.permute.xlu0 %651
      %655 = vset.pattern.permute.xlu0 0
      %656 = vperm.xlu0 %655, %v547
      %v657 = vpop.permute.xlu0 %656
      %660 = vset.pattern.permute.xlu0 0
      %661 = vperm.xlu0 %660, %v552
      %v662 = vpop.permute.xlu0 %661
      %665 = vset.pattern.permute.xlu0 0
      %666 = vperm.xlu0 %665, %v555
      %v667 = vpop.permute.xlu0 %666
      %670 = vset.pattern.permute.xlu0 0
      %671 = vperm.xlu0 %670, %v560
      %v672 = vpop.permute.xlu0 %671
      %675 = vset.pattern.permute.xlu0 0
      %676 = vperm.xlu0 %675, %v563
      %v677 = vpop.permute.xlu0 %676
      %680 = vset.pattern.permute.xlu0 0
      %681 = vperm.xlu0 %680, %v568
      %v682 = vpop.permute.xlu0 %681
      %685 = vset.pattern.permute.xlu0 0
      %686 = vperm.xlu0 %685, %v571
      %v687 = vpop.permute.xlu0 %686
      %690 = vset.pattern.permute.xlu0 0
      %691 = vperm.xlu0 %690, %v576
      %v692 = vpop.permute.xlu0 %691
      %695 = vset.pattern.permute.xlu0 0
      %696 = vperm.xlu0 %695, %v579
      %v697 = vpop.permute.xlu0 %696
      %700 = vset.pattern.permute.xlu0 0
      %701 = vperm.xlu0 %700, %v584
      %v702 = vpop.permute.xlu0 %701
      %705 = vset.pattern.permute.xlu0 0
      %706 = vperm.xlu0 %705, %v587
      %v707 = vpop.permute.xlu0 %706
      %710 = vset.pattern.permute.xlu0 0
      %711 = vperm.xlu0 %710, %v592
      %v712 = vpop.permute.xlu0 %711
      %715 = vset.pattern.permute.xlu0 0
      %716 = vperm.xlu0 %715, %v595
      %v717 = vpop.permute.xlu0 %716
      %720 = vset.pattern.permute.xlu0 0
      %721 = vperm.xlu0 %720, %v600
      %v722 = vpop.permute.xlu0 %721
      %725 = vset.pattern.permute.xlu0 0
      %726 = vperm.xlu0 %725, %v603
      %v727 = vpop.permute.xlu0 %726
      %v729 = vlaneseq
      %v730 = vshrl.u32 %v729, 7
      %v731 = vsub.s32 0, %v730
      %v732 = vrot.slane %v644, %v731
      %v733 = vadd.f32 %v652, %v732
      %v734 = vadd.f32 %v657, %v732
      %v735 = vadd.f32 %v662, %v732
      %v736 = vadd.f32 %v667, %v732
      %v737 = vadd.f32 %v672, %v732
      %v738 = vadd.f32 %v677, %v732
      %v739 = vadd.f32 %v682, %v732
      %v740 = vadd.f32 %v687, %v732
      %v741 = vadd.f32 %v692, %v732
      %v742 = vadd.f32 %v697, %v732
      %v743 = vadd.f32 %v702, %v732
      %v744 = vadd.f32 %v707, %v732
      %v745 = vadd.f32 %v712, %v732
      %v746 = vadd.f32 %v717, %v732
      %v747 = vadd.f32 %v722, %v732
      %v748 = vadd.f32 %v727, %v732
      %vm749 = vcmp.gt.f32.partialorder %v733, 0.0
      %vm750 = vcmp.gt.f32.partialorder %v734, 0.0
      %vm751 = vcmp.gt.f32.partialorder %v735, 0.0
      %vm752 = vcmp.gt.f32.partialorder %v736, 0.0
      %vm753 = vcmp.gt.f32.partialorder %v737, 0.0
      %vm754 = vcmp.gt.f32.partialorder %v738, 0.0
      %vm755 = vcmp.gt.f32.partialorder %v739, 0.0
      %vm756 = vcmp.gt.f32.partialorder %v740, 0.0
      %vm757 = vcmp.gt.f32.partialorder %v741, 0.0
      %vm758 = vcmp.gt.f32.partialorder %v742, 0.0
      %vm759 = vcmp.gt.f32.partialorder %v743, 0.0
      %vm760 = vcmp.gt.f32.partialorder %v744, 0.0
      %vm761 = vcmp.gt.f32.partialorder %v745, 0.0
      %vm762 = vcmp.gt.f32.partialorder %v746, 0.0
      %vm763 = vcmp.gt.f32.partialorder %v747, 0.0
      %vm764 = vcmp.gt.f32.partialorder %v748, 0.0
      %v765 = vmul.f32 %v733, 0.1
      %v766 = vmul.f32 %v734, 0.1
      %v767 = vmul.f32 %v735, 0.1
      %v768 = vmul.f32 %v736, 0.1
      %v769 = vmul.f32 %v737, 0.1
      %v770 = vmul.f32 %v738, 0.1
      %v771 = vmul.f32 %v739, 0.1
      %v772 = vmul.f32 %v740, 0.1
      %v773 = vmul.f32 %v741, 0.1
      %v774 = vmul.f32 %v742, 0.1
      %v775 = vmul.f32 %v743, 0.1
      %v776 = vmul.f32 %v744, 0.1
      %v777 = vmul.f32 %v745, 0.1
      %v778 = vmul.f32 %v746, 0.1
      %v779 = vmul.f32 %v747, 0.1
      %v780 = vmul.f32 %v748, 0.1
      %v781 = vsel %vm749, %v733, %v765
      %v782 = vsel %vm750, %v734, %v766
      %v783 = vsel %vm751, %v735, %v767
      %v784 = vsel %vm752, %v736, %v768
      %v785 = vsel %vm753, %v737, %v769
      %v786 = vsel %vm754, %v738, %v770
      %v787 = vsel %vm755, %v739, %v771
      %v788 = vsel %vm756, %v740, %v772
      %v789 = vsel %vm757, %v741, %v773
      %v790 = vsel %vm758, %v742, %v774
      %v791 = vsel %vm759, %v743, %v775
      %v792 = vsel %vm760, %v744, %v776
      %v793 = vsel %vm761, %v745, %v777
      %v794 = vsel %vm762, %v746, %v778
      %v795 = vsel %vm763, %v747, %v779
      %v796 = vsel %vm764, %v748, %v780
      %vm797 = vcmp.gt.f32.partialorder %v355, 0.0
      %vm798 = vcmp.gt.f32.partialorder %v356, 0.0
      %vm799 = vcmp.gt.f32.partialorder %v357, 0.0
      %vm800 = vcmp.gt.f32.partialorder %v358, 0.0
      %vm801 = vcmp.gt.f32.partialorder %v359, 0.0
      %vm802 = vcmp.gt.f32.partialorder %v360, 0.0
      %vm803 = vcmp.gt.f32.partialorder %v361, 0.0
      %vm804 = vcmp.gt.f32.partialorder %v362, 0.0
      %vm805 = vcmp.gt.f32.partialorder %v363, 0.0
      %vm806 = vcmp.gt.f32.partialorder %v364, 0.0
      %vm807 = vcmp.gt.f32.partialorder %v365, 0.0
      %vm808 = vcmp.gt.f32.partialorder %v366, 0.0
      %vm809 = vcmp.gt.f32.partialorder %v367, 0.0
      %vm810 = vcmp.gt.f32.partialorder %v368, 0.0
      %vm811 = vcmp.gt.f32.partialorder %v369, 0.0
      %vm812 = vcmp.gt.f32.partialorder %v370, 0.0
      %v813 = vsel %vm797, %v781, -9e+15
      %v814 = vsel %vm798, %v782, -9e+15
      %v815 = vsel %vm799, %v783, -9e+15
      %v816 = vsel %vm800, %v784, -9e+15
      %v817 = vsel %vm801, %v785, -9e+15
      %v818 = vsel %vm802, %v786, -9e+15
      %v819 = vsel %vm803, %v787, -9e+15
      %v820 = vsel %vm804, %v788, -9e+15
      %v821 = vsel %vm805, %v789, -9e+15
      %v822 = vsel %vm806, %v790, -9e+15
      %v823 = vsel %vm807, %v791, -9e+15
      %v824 = vsel %vm808, %v792, -9e+15
      %v825 = vsel %vm809, %v793, -9e+15
      %v826 = vsel %vm810, %v794, -9e+15
      %v827 = vsel %vm811, %v795, -9e+15
      %v828 = vsel %vm812, %v796, -9e+15
      %829 = vmax.xlane.f32.xlu0 %v813
      %v830 = vpop.xlane.xlu0 %829
      %831 = vmax.xlane.f32.xlu0 %v814
      %v832 = vpop.xlane.xlu0 %831
      %833 = vmax.xlane.f32.xlu0 %v815
      %v834 = vpop.xlane.xlu0 %833
      %835 = vmax.xlane.f32.xlu0 %v816
      %v836 = vpop.xlane.xlu0 %835
      %837 = vmax.xlane.f32.xlu0 %v817
      %v838 = vpop.xlane.xlu0 %837
      %839 = vmax.xlane.f32.xlu0 %v818
      %v840 = vpop.xlane.xlu0 %839
      %841 = vmax.xlane.f32.xlu0 %v819
      %v842 = vpop.xlane.xlu0 %841
      %843 = vmax.xlane.f32.xlu0 %v820
      %v844 = vpop.xlane.xlu0 %843
      %845 = vmax.xlane.f32.xlu0 %v821
      %v846 = vpop.xlane.xlu0 %845
      %847 = vmax.xlane.f32.xlu0 %v822
      %v848 = vpop.xlane.xlu0 %847
      %849 = vmax.xlane.f32.xlu0 %v823
      %v850 = vpop.xlane.xlu0 %849
      %851 = vmax.xlane.f32.xlu0 %v824
      %v852 = vpop.xlane.xlu0 %851
      %853 = vmax.xlane.f32.xlu0 %v825
      %v854 = vpop.xlane.xlu0 %853
      %855 = vmax.xlane.f32.xlu0 %v826
      %v856 = vpop.xlane.xlu0 %855
      %857 = vmax.xlane.f32.xlu0 %v827
      %v858 = vpop.xlane.xlu0 %857
      %859 = vmax.xlane.f32.xlu0 %v828
      %v860 = vpop.xlane.xlu0 %859
      %v861 = vsub.f32 %v813, %v830
      %v862 = vsub.f32 %v814, %v832
      %v863 = vsub.f32 %v815, %v834
      %v864 = vsub.f32 %v816, %v836
      %v865 = vsub.f32 %v817, %v838
      %v866 = vsub.f32 %v818, %v840
      %v867 = vsub.f32 %v819, %v842
      %v868 = vsub.f32 %v820, %v844
      %v869 = vsub.f32 %v821, %v846
      %v870 = vsub.f32 %v822, %v848
      %v871 = vsub.f32 %v823, %v850
      %v872 = vsub.f32 %v824, %v852
      %v873 = vsub.f32 %v825, %v854
      %v874 = vsub.f32 %v826, %v856
      %v875 = vsub.f32 %v827, %v858
      %v876 = vsub.f32 %v828, %v860
      %v877 = vmul.f32 %v861, 1.442695
      %v878 = vpow.pop %v877
      %v879 = vmul.f32 %v862, 1.442695
      %v880 = vpow.pop %v879
      %v881 = vmul.f32 %v863, 1.442695
      %v882 = vpow.pop %v881
      %v883 = vmul.f32 %v864, 1.442695
      %v884 = vpow.pop %v883
      %v885 = vmul.f32 %v865, 1.442695
      %v886 = vpow.pop %v885
      %v887 = vmul.f32 %v866, 1.442695
      %v888 = vpow.pop %v887
      %v889 = vmul.f32 %v867, 1.442695
      %v890 = vpow.pop %v889
      %v891 = vmul.f32 %v868, 1.442695
      %v892 = vpow.pop %v891
      %v893 = vmul.f32 %v869, 1.442695
      %v894 = vpow.pop %v893
      %v895 = vmul.f32 %v870, 1.442695
      %v896 = vpow.pop %v895
      %v897 = vmul.f32 %v871, 1.442695
      %v898 = vpow.pop %v897
      %v899 = vmul.f32 %v872, 1.442695
      %v900 = vpow.pop %v899
      %v901 = vmul.f32 %v873, 1.442695
      %v902 = vpow.pop %v901
      %v903 = vmul.f32 %v874, 1.442695
      %v904 = vpow.pop %v903
      %v905 = vmul.f32 %v875, 1.442695
      %v906 = vpow.pop %v905
      %v907 = vmul.f32 %v876, 1.442695
      %v908 = vpow.pop %v907
      %909 = vadd.xlane.f32.xlu0 %v878
      %v910 = vpop.xlane.xlu0 %909
      %911 = vadd.xlane.f32.xlu0 %v880
      %v912 = vpop.xlane.xlu0 %911
      %913 = vadd.xlane.f32.xlu0 %v882
      %v914 = vpop.xlane.xlu0 %913
      %915 = vadd.xlane.f32.xlu0 %v884
      %v916 = vpop.xlane.xlu0 %915
      %917 = vadd.xlane.f32.xlu0 %v886
      %v918 = vpop.xlane.xlu0 %917
      %919 = vadd.xlane.f32.xlu0 %v888
      %v920 = vpop.xlane.xlu0 %919
      %921 = vadd.xlane.f32.xlu0 %v890
      %v922 = vpop.xlane.xlu0 %921
      %923 = vadd.xlane.f32.xlu0 %v892
      %v924 = vpop.xlane.xlu0 %923
      %925 = vadd.xlane.f32.xlu0 %v894
      %v926 = vpop.xlane.xlu0 %925
      %927 = vadd.xlane.f32.xlu0 %v896
      %v928 = vpop.xlane.xlu0 %927
      %929 = vadd.xlane.f32.xlu0 %v898
      %v930 = vpop.xlane.xlu0 %929
      %931 = vadd.xlane.f32.xlu0 %v900
      %v932 = vpop.xlane.xlu0 %931
      %933 = vadd.xlane.f32.xlu0 %v902
      %v934 = vpop.xlane.xlu0 %933
      %935 = vadd.xlane.f32.xlu0 %v904
      %v936 = vpop.xlane.xlu0 %935
      %937 = vadd.xlane.f32.xlu0 %v906
      %v938 = vpop.xlane.xlu0 %937
      %939 = vadd.xlane.f32.xlu0 %v908
      %v940 = vpop.xlane.xlu0 %939
      %v941 = vrcp.pop %v910
      %v942 = vrcp.pop %v912
      %v943 = vrcp.pop %v914
      %v944 = vrcp.pop %v916
      %v945 = vrcp.pop %v918
      %v946 = vrcp.pop %v920
      %v947 = vrcp.pop %v922
      %v948 = vrcp.pop %v924
      %v949 = vrcp.pop %v926
      %v950 = vrcp.pop %v928
      %v951 = vrcp.pop %v930
      %v952 = vrcp.pop %v932
      %v953 = vrcp.pop %v934
      %v954 = vrcp.pop %v936
      %v955 = vrcp.pop %v938
      %v956 = vrcp.pop %v940
      %v957 = vmul.f32 %v878, %v941
      %v958 = vmul.f32 %v880, %v942
      %v959 = vmul.f32 %v882, %v943
      %v960 = vmul.f32 %v884, %v944
      %v961 = vmul.f32 %v886, %v945
      %v962 = vmul.f32 %v888, %v946
      %v963 = vmul.f32 %v890, %v947
      %v964 = vmul.f32 %v892, %v948
      %v965 = vmul.f32 %v894, %v949
      %v966 = vmul.f32 %v896, %v950
      %v967 = vmul.f32 %v898, %v951
      %v968 = vmul.f32 %v900, %v952
      %v969 = vmul.f32 %v902, %v953
      %v970 = vmul.f32 %v904, %v954
      %v971 = vmul.f32 %v906, %v955
      %v972 = vmul.f32 %v908, %v956
      %v973 = vpack.c.bf16 %v958, %v957
      %v974 = vpack.c.bf16 %v960, %v959
      %v975 = vpack.c.bf16 %v962, %v961
      %v976 = vpack.c.bf16 %v964, %v963
      %v977 = vpack.c.bf16 %v966, %v965
      %v978 = vpack.c.bf16 %v968, %v967
      %v979 = vpack.c.bf16 %v970, %v969
      %v980 = vpack.c.bf16 %v972, %v971
      %981 = vmatprep.subr.bf16.mxu0 0
      %982 = vmatpush1.bf16.msra.mxu0 %v476
      %983 = vmatprep.subr.bf16.mxu0 0
      %984 = vmatpush1.bf16.msra.mxu0 %v477
      %985 = vmatprep.subr.bf16.mxu0 0
      %986 = vmatpush1.bf16.msra.mxu0 %v478
      %987 = vmatprep.subr.bf16.mxu0 0
      %988 = vmatpush1.bf16.msra.mxu0 %v479
      %989 = vmatprep.subr.bf16.mxu0 0
      %990 = vmatpush1.bf16.msra.mxu0 %v480
      %991 = vmatprep.subr.bf16.mxu0 0
      %992 = vmatpush1.bf16.msra.mxu0 %v481
      %993 = vmatprep.subr.bf16.mxu0 0
      %994 = vmatpush1.bf16.msra.mxu0 %v482
      %995 = vmatprep.subr.bf16.mxu0 0
      %996 = vmatpush1.bf16.msra.mxu0 %v483
      %997 = vmatprep.subr.bf16.mxu0 0
      %998 = vmatpush1.bf16.msra.mxu0 0
      %999 = vmatprep.subr.bf16.mxu0 0
      %1000 = vmatpush1.bf16.msra.mxu0 0
      %1001 = vmatprep.subr.bf16.mxu0 0
      %1002 = vmatpush1.bf16.msra.mxu0 0
      %1003 = vmatprep.subr.bf16.mxu0 0
      %1004 = vmatpush1.bf16.msra.mxu0 0
      %1005 = vmatprep.subr.bf16.mxu0 0
      %1006 = vmatpush1.bf16.msra.mxu0 0
      %1007 = vmatprep.subr.bf16.mxu0 0
      %1008 = vmatpush1.bf16.msra.mxu0 0
      %1009 = vmatprep.subr.bf16.mxu0 0
      %1010 = vmatpush1.bf16.msra.mxu0 0
      %1011 = vmatprep.subr.bf16.mxu0 0
      %1012 = vmatpush1.bf16.msra.mxu0 0
      %1013 = vmatprep.mubr.bf16.mxu0 0
      %1014 = vmatmul.mubr.bf16.gmra.mrb[0].mxu0 %v973
      %v1015 = vpop.f32.mrb[0].mxu0
      %v1016 = vadd.f32 0.0, %v1015
      %v1017 = vpop.f32.mrb[0].mxu0
      %v1018 = vpop.f32.mrb[0].mxu0
      %v1019 = vadd.f32 0.0, %v1018
      %v1020 = vpop.f32.mrb[0].mxu0
      %1021 = vmatprep.mubr.bf16.mxu0 0
      %1022 = vmatmul.mubr.bf16.gmra.mrb[0].mxu0 %v974
      %v1023 = vpop.f32.mrb[0].mxu0
      %v1024 = vadd.f32 0.0, %v1023
      %v1025 = vpop.f32.mrb[0].mxu0
      %v1026 = vpop.f32.mrb[0].mxu0
      %v1027 = vadd.f32 0.0, %v1026
      %v1028 = vpop.f32.mrb[0].mxu0
      %1029 = vmatprep.mubr.bf16.mxu0 0
      %1030 = vmatmul.mubr.bf16.gmra.mrb[0].mxu0 %v975
      %v1031 = vpop.f32.mrb[0].mxu0
      %v1032 = vadd.f32 0.0, %v1031
      %v1033 = vpop.f32.mrb[0].mxu0
      %v1034 = vpop.f32.mrb[0].mxu0
      %v1035 = vadd.f32 0.0, %v1034
      %v1036 = vpop.f32.mrb[0].mxu0
      %1037 = vmatprep.mubr.bf16.mxu0 0
      %1038 = vmatmul.mubr.bf16.gmra.mrb[0].mxu0 %v976
      %v1039 = vpop.f32.mrb[0].mxu0
      %v1040 = vadd.f32 0.0, %v1039
      %v1041 = vpop.f32.mrb[0].mxu0
      %v1042 = vpop.f32.mrb[0].mxu0
      %v1043 = vadd.f32 0.0, %v1042
      %v1044 = vpop.f32.mrb[0].mxu0
      %1045 = vmatprep.mubr.bf16.mxu0 0
      %1046 = vmatmul.mubr.bf16.gmra.mrb[0].mxu0 %v977
      %v1047 = vpop.f32.mrb[0].mxu0
      %v1048 = vadd.f32 0.0, %v1047
      %v1049 = vpop.f32.mrb[0].mxu0
      %v1050 = vpop.f32.mrb[0].mxu0
      %v1051 = vadd.f32 0.0, %v1050
      %v1052 = vpop.f32.mrb[0].mxu0
      %1053 = vmatprep.mubr.bf16.mxu0 0
      %1054 = vmatmul.mubr.bf16.gmra.mrb[0].mxu0 %v978
      %v1055 = vpop.f32.mrb[0].mxu0
      %v1056 = vadd.f32 0.0, %v1055
      %v1057 = vpop.f32.mrb[0].mxu0
      %v1058 = vpop.f32.mrb[0].mxu0
      %v1059 = vadd.f32 0.0, %v1058
      %v1060 = vpop.f32.mrb[0].mxu0
      %1061 = vmatprep.mubr.bf16.mxu0 0
      %1062 = vmatmul.mubr.bf16.gmra.mrb[0].mxu0 %v979
      %v1063 = vpop.f32.mrb[0].mxu0
      %v1064 = vadd.f32 0.0, %v1063
      %v1065 = vpop.f32.mrb[0].mxu0
      %v1066 = vpop.f32.mrb[0].mxu0
      %v1067 = vadd.f32 0.0, %v1066
      %v1068 = vpop.f32.mrb[0].mxu0
      %1069 = vmatprep.mubr.bf16.mxu0 0
      %1070 = vmatmul.mubr.bf16.gmra.mrb[0].mxu0 %v980
      %v1071 = vpop.f32.mrb[0].mxu0
      %v1072 = vadd.f32 0.0, %v1071
      %v1073 = vpop.f32.mrb[0].mxu0
      %v1074 = vpop.f32.mrb[0].mxu0
      %v1075 = vadd.f32 0.0, %v1074
      %v1076 = vpop.f32.mrb[0].mxu0
      %1077 = vdwg.mxu0
      %v1078 = vmul.f32 %v1016, %v1016
      %v1079 = vmul.f32 %v1019, %v1019
      %v1080 = vmul.f32 %v1024, %v1024
      %v1081 = vmul.f32 %v1027, %v1027
      %v1082 = vmul.f32 %v1032, %v1032
      %v1083 = vmul.f32 %v1035, %v1035
      %v1084 = vmul.f32 %v1040, %v1040
      %v1085 = vmul.f32 %v1043, %v1043
      %v1086 = vmul.f32 %v1048, %v1048
      %v1087 = vmul.f32 %v1051, %v1051
      %v1088 = vmul.f32 %v1056, %v1056
      %v1089 = vmul.f32 %v1059, %v1059
      %v1090 = vmul.f32 %v1064, %v1064
      %v1091 = vmul.f32 %v1067, %v1067
      %v1092 = vmul.f32 %v1072, %v1072
      %v1093 = vmul.f32 %v1075, %v1075
      %vm1094 = vcmask 64512
      %v1095 = vsel %vm1094, %v1078, 0.0
      %1096 = vadd.xlane.f32.xlu0 %v1095
      %v1097 = vpop.xlane.xlu0 %1096
      %v1098 = vsel %vm1094, %v1079, 0.0
      %1099 = vadd.xlane.f32.xlu0 %v1098
      %v1100 = vpop.xlane.xlu0 %1099
      %v1101 = vsel %vm1094, %v1080, 0.0
      %1102 = vadd.xlane.f32.xlu0 %v1101
      %v1103 = vpop.xlane.xlu0 %1102
      %v1104 = vsel %vm1094, %v1081, 0.0
      %1105 = vadd.xlane.f32.xlu0 %v1104
      %v1106 = vpop.xlane.xlu0 %1105
      %v1107 = vsel %vm1094, %v1082, 0.0
      %1108 = vadd.xlane.f32.xlu0 %v1107
      %v1109 = vpop.xlane.xlu0 %1108
      %v1110 = vsel %vm1094, %v1083, 0.0
      %1111 = vadd.xlane.f32.xlu0 %v1110
      %v1112 = vpop.xlane.xlu0 %1111
      %v1113 = vsel %vm1094, %v1084, 0.0
      %1114 = vadd.xlane.f32.xlu0 %v1113
      %v1115 = vpop.xlane.xlu0 %1114
      %v1116 = vsel %vm1094, %v1085, 0.0
      %1117 = vadd.xlane.f32.xlu0 %v1116
      %v1118 = vpop.xlane.xlu0 %1117
      %v1119 = vsel %vm1094, %v1086, 0.0
      %1120 = vadd.xlane.f32.xlu0 %v1119
      %v1121 = vpop.xlane.xlu0 %1120
      %v1122 = vsel %vm1094, %v1087, 0.0
      %1123 = vadd.xlane.f32.xlu0 %v1122
      %v1124 = vpop.xlane.xlu0 %1123
      %v1125 = vsel %vm1094, %v1088, 0.0
      %1126 = vadd.xlane.f32.xlu0 %v1125
      %v1127 = vpop.xlane.xlu0 %1126
      %v1128 = vsel %vm1094, %v1089, 0.0
      %1129 = vadd.xlane.f32.xlu0 %v1128
      %v1130 = vpop.xlane.xlu0 %1129
      %v1131 = vsel %vm1094, %v1090, 0.0
      %1132 = vadd.xlane.f32.xlu0 %v1131
      %v1133 = vpop.xlane.xlu0 %1132
      %v1134 = vsel %vm1094, %v1091, 0.0
      %1135 = vadd.xlane.f32.xlu0 %v1134
      %v1136 = vpop.xlane.xlu0 %1135
      %v1137 = vsel %vm1094, %v1092, 0.0
      %1138 = vadd.xlane.f32.xlu0 %v1137
      %v1139 = vpop.xlane.xlu0 %1138
      %v1140 = vsel %vm1094, %v1093, 0.0
      %1141 = vadd.xlane.f32.xlu0 %v1140
      %v1142 = vpop.xlane.xlu0 %1141
      %v1143 = vrsqrt.pop %v1097
      %v1144 = vmul.f32 %v1097, %v1143
      %vm1145 = vcmp.eq.f32.partialorder %v1097, inf
      %v1146 = vsel %vm1145, %v1097, %v1144
      %vm1147 = vcmp.eq.f32.partialorder %v1097, 0.0
      %v1148 = vand.u32 %v1097, 2147483648
      %v1149 = vsel %vm1147, %v1148, %v1146
      %v1150 = vrsqrt.pop %v1100
      %v1151 = vmul.f32 %v1100, %v1150
      %vm1152 = vcmp.eq.f32.partialorder %v1100, inf
      %v1153 = vsel %vm1152, %v1100, %v1151
      %vm1154 = vcmp.eq.f32.partialorder %v1100, 0.0
      %v1155 = vand.u32 %v1100, 2147483648
      %v1156 = vsel %vm1154, %v1155, %v1153
      %v1157 = vrsqrt.pop %v1103
      %v1158 = vmul.f32 %v1103, %v1157
      %vm1159 = vcmp.eq.f32.partialorder %v1103, inf
      %v1160 = vsel %vm1159, %v1103, %v1158
      %vm1161 = vcmp.eq.f32.partialorder %v1103, 0.0
      %v1162 = vand.u32 %v1103, 2147483648
      %v1163 = vsel %vm1161, %v1162, %v1160
      %v1164 = vrsqrt.pop %v1106
      %v1165 = vmul.f32 %v1106, %v1164
      %vm1166 = vcmp.eq.f32.partialorder %v1106, inf
      %v1167 = vsel %vm1166, %v1106, %v1165
      %vm1168 = vcmp.eq.f32.partialorder %v1106, 0.0
      %v1169 = vand.u32 %v1106, 2147483648
      %v1170 = vsel %vm1168, %v1169, %v1167
      %v1171 = vrsqrt.pop %v1109
      %v1172 = vmul.f32 %v1109, %v1171
      %vm1173 = vcmp.eq.f32.partialorder %v1109, inf
      %v1174 = vsel %vm1173, %v1109, %v1172
      %vm1175 = vcmp.eq.f32.partialorder %v1109, 0.0
      %v1176 = vand.u32 %v1109, 2147483648
      %v1177 = vsel %vm1175, %v1176, %v1174
      %v1178 = vrsqrt.pop %v1112
      %v1179 = vmul.f32 %v1112, %v1178
      %vm1180 = vcmp.eq.f32.partialorder %v1112, inf
      %v1181 = vsel %vm1180, %v1112, %v1179
      %vm1182 = vcmp.eq.f32.partialorder %v1112, 0.0
      %v1183 = vand.u32 %v1112, 2147483648
      %v1184 = vsel %vm1182, %v1183, %v1181
      %v1185 = vrsqrt.pop %v1115
      %v1186 = vmul.f32 %v1115, %v1185
      %vm1187 = vcmp.eq.f32.partialorder %v1115, inf
      %v1188 = vsel %vm1187, %v1115, %v1186
      %vm1189 = vcmp.eq.f32.partialorder %v1115, 0.0
      %v1190 = vand.u32 %v1115, 2147483648
      %v1191 = vsel %vm1189, %v1190, %v1188
      %v1192 = vrsqrt.pop %v1118
      %v1193 = vmul.f32 %v1118, %v1192
      %vm1194 = vcmp.eq.f32.partialorder %v1118, inf
      %v1195 = vsel %vm1194, %v1118, %v1193
      %vm1196 = vcmp.eq.f32.partialorder %v1118, 0.0
      %v1197 = vand.u32 %v1118, 2147483648
      %v1198 = vsel %vm1196, %v1197, %v1195
      %v1199 = vrsqrt.pop %v1121
      %v1200 = vmul.f32 %v1121, %v1199
      %vm1201 = vcmp.eq.f32.partialorder %v1121, inf
      %v1202 = vsel %vm1201, %v1121, %v1200
      %vm1203 = vcmp.eq.f32.partialorder %v1121, 0.0
      %v1204 = vand.u32 %v1121, 2147483648
      %v1205 = vsel %vm1203, %v1204, %v1202
      %v1206 = vrsqrt.pop %v1124
      %v1207 = vmul.f32 %v1124, %v1206
      %vm1208 = vcmp.eq.f32.partialorder %v1124, inf
      %v1209 = vsel %vm1208, %v1124, %v1207
      %vm1210 = vcmp.eq.f32.partialorder %v1124, 0.0
      %v1211 = vand.u32 %v1124, 2147483648
      %v1212 = vsel %vm1210, %v1211, %v1209
      %v1213 = vrsqrt.pop %v1127
      %v1214 = vmul.f32 %v1127, %v1213
      %vm1215 = vcmp.eq.f32.partialorder %v1127, inf
      %v1216 = vsel %vm1215, %v1127, %v1214
      %vm1217 = vcmp.eq.f32.partialorder %v1127, 0.0
      %v1218 = vand.u32 %v1127, 2147483648
      %v1219 = vsel %vm1217, %v1218, %v1216
      %v1220 = vrsqrt.pop %v1130
      %v1221 = vmul.f32 %v1130, %v1220
      %vm1222 = vcmp.eq.f32.partialorder %v1130, inf
      %v1223 = vsel %vm1222, %v1130, %v1221
      %vm1224 = vcmp.eq.f32.partialorder %v1130, 0.0
      %v1225 = vand.u32 %v1130, 2147483648
      %v1226 = vsel %vm1224, %v1225, %v1223
      %v1227 = vrsqrt.pop %v1133
      %v1228 = vmul.f32 %v1133, %v1227
      %vm1229 = vcmp.eq.f32.partialorder %v1133, inf
      %v1230 = vsel %vm1229, %v1133, %v1228
      %vm1231 = vcmp.eq.f32.partialorder %v1133, 0.0
      %v1232 = vand.u32 %v1133, 2147483648
      %v1233 = vsel %vm1231, %v1232, %v1230
      %v1234 = vrsqrt.pop %v1136
      %v1235 = vmul.f32 %v1136, %v1234
      %vm1236 = vcmp.eq.f32.partialorder %v1136, inf
      %v1237 = vsel %vm1236, %v1136, %v1235
      %vm1238 = vcmp.eq.f32.partialorder %v1136, 0.0
      %v1239 = vand.u32 %v1136, 2147483648
      %v1240 = vsel %vm1238, %v1239, %v1237
      %v1241 = vrsqrt.pop %v1139
      %v1242 = vmul.f32 %v1139, %v1241
      %vm1243 = vcmp.eq.f32.partialorder %v1139, inf
      %v1244 = vsel %vm1243, %v1139, %v1242
      %vm1245 = vcmp.eq.f32.partialorder %v1139, 0.0
      %v1246 = vand.u32 %v1139, 2147483648
      %v1247 = vsel %vm1245, %v1246, %v1244
      %v1248 = vrsqrt.pop %v1142
      %v1249 = vmul.f32 %v1142, %v1248
      %vm1250 = vcmp.eq.f32.partialorder %v1142, inf
      %v1251 = vsel %vm1250, %v1142, %v1249
      %vm1252 = vcmp.eq.f32.partialorder %v1142, 0.0
      %v1253 = vand.u32 %v1142, 2147483648
      %v1254 = vsel %vm1252, %v1253, %v1251
      %v1255 = vmax.f32 %v1149, 1e-15
      %v1256 = vmax.f32 %v1156, 1e-15
      %v1257 = vmax.f32 %v1163, 1e-15
      %v1258 = vmax.f32 %v1170, 1e-15
      %v1259 = vmax.f32 %v1177, 1e-15
      %v1260 = vmax.f32 %v1184, 1e-15
      %v1261 = vmax.f32 %v1191, 1e-15
      %v1262 = vmax.f32 %v1198, 1e-15
      %v1263 = vmax.f32 %v1205, 1e-15
      %v1264 = vmax.f32 %v1212, 1e-15
      %v1265 = vmax.f32 %v1219, 1e-15
      %v1266 = vmax.f32 %v1226, 1e-15
      %v1267 = vmax.f32 %v1233, 1e-15
      %v1268 = vmax.f32 %v1240, 1e-15
      %v1269 = vmax.f32 %v1247, 1e-15
      %v1270 = vmax.f32 %v1254, 1e-15
      %vm1271 = vcmp.gt.f32.partialorder %v1255, 0.996
      %vm1272 = vcmp.gt.f32.partialorder %v1256, 0.996
      %vm1273 = vcmp.gt.f32.partialorder %v1257, 0.996
      %vm1274 = vcmp.gt.f32.partialorder %v1258, 0.996
      %vm1275 = vcmp.gt.f32.partialorder %v1259, 0.996
      %vm1276 = vcmp.gt.f32.partialorder %v1260, 0.996
      %vm1277 = vcmp.gt.f32.partialorder %v1261, 0.996
      %vm1278 = vcmp.gt.f32.partialorder %v1262, 0.996
      %vm1279 = vcmp.gt.f32.partialorder %v1263, 0.996
      %vm1280 = vcmp.gt.f32.partialorder %v1264, 0.996
      %vm1281 = vcmp.gt.f32.partialorder %v1265, 0.996
      %vm1282 = vcmp.gt.f32.partialorder %v1266, 0.996
      %vm1283 = vcmp.gt.f32.partialorder %v1267, 0.996
      %vm1284 = vcmp.gt.f32.partialorder %v1268, 0.996
      %vm1285 = vcmp.gt.f32.partialorder %v1269, 0.996
      %vm1286 = vcmp.gt.f32.partialorder %v1270, 0.996
      %v1287 = vrcp.pop %v1255
      %v1288 = vmul.f32 %v1016, %v1287
      %v1289 = vrcp.pop %v1256
      %v1290 = vmul.f32 %v1019, %v1289
      %v1291 = vrcp.pop %v1257
      %v1292 = vmul.f32 %v1024, %v1291
      %v1293 = vrcp.pop %v1258
      %v1294 = vmul.f32 %v1027, %v1293
      %v1295 = vrcp.pop %v1259
      %v1296 = vmul.f32 %v1032, %v1295
      %v1297 = vrcp.pop %v1260
      %v1298 = vmul.f32 %v1035, %v1297
      %v1299 = vrcp.pop %v1261
      %v1300 = vmul.f32 %v1040, %v1299
      %v1301 = vrcp.pop %v1262
      %v1302 = vmul.f32 %v1043, %v1301
      %v1303 = vrcp.pop %v1263
      %v1304 = vmul.f32 %v1048, %v1303
      %v1305 = vrcp.pop %v1264
      %v1306 = vmul.f32 %v1051, %v1305
      %v1307 = vrcp.pop %v1265
      %v1308 = vmul.f32 %v1056, %v1307
      %v1309 = vrcp.pop %v1266
      %v1310 = vmul.f32 %v1059, %v1309
      %v1311 = vrcp.pop %v1267
      %v1312 = vmul.f32 %v1064, %v1311
      %v1313 = vrcp.pop %v1268
      %v1314 = vmul.f32 %v1067, %v1313
      %v1315 = vrcp.pop %v1269
      %v1316 = vmul.f32 %v1072, %v1315
      %v1317 = vrcp.pop %v1270
      %v1318 = vmul.f32 %v1075, %v1317
      %v1319 = vmul.f32 %v1288, 0.996
      %v1320 = vmul.f32 %v1290, 0.996
      %v1321 = vmul.f32 %v1292, 0.996
      %v1322 = vmul.f32 %v1294, 0.996
      %v1323 = vmul.f32 %v1296, 0.996
      %v1324 = vmul.f32 %v1298, 0.996
      %v1325 = vmul.f32 %v1300, 0.996
      %v1326 = vmul.f32 %v1302, 0.996
      %v1327 = vmul.f32 %v1304, 0.996
      %v1328 = vmul.f32 %v1306, 0.996
      %v1329 = vmul.f32 %v1308, 0.996
      %v1330 = vmul.f32 %v1310, 0.996
      %v1331 = vmul.f32 %v1312, 0.996
      %v1332 = vmul.f32 %v1314, 0.996
      %v1333 = vmul.f32 %v1316, 0.996
      %v1334 = vmul.f32 %v1318, 0.996
      %v1335 = vsel %vm1271, 1, 0
      %v1336 = vsel %vm1272, 1, 0
      %v1337 = vsel %vm1273, 1, 0
      %v1338 = vsel %vm1274, 1, 0
      %v1339 = vsel %vm1275, 1, 0
      %v1340 = vsel %vm1276, 1, 0
      %v1341 = vsel %vm1277, 1, 0
      %v1342 = vsel %vm1278, 1, 0
      %v1343 = vsel %vm1279, 1, 0
      %v1344 = vsel %vm1280, 1, 0
      %v1345 = vsel %vm1281, 1, 0
      %v1346 = vsel %vm1282, 1, 0
      %v1347 = vsel %vm1283, 1, 0
      %v1348 = vsel %vm1284, 1, 0
      %v1349 = vsel %vm1285, 1, 0
      %v1350 = vsel %vm1286, 1, 0
      %vm1351 = vcmp.eq.s32.totalorder %v1335, 1
      %vm1352 = vcmp.eq.s32.totalorder %v1336, 1
      %vm1353 = vcmp.eq.s32.totalorder %v1337, 1
      %vm1354 = vcmp.eq.s32.totalorder %v1338, 1
      %vm1355 = vcmp.eq.s32.totalorder %v1339, 1
      %vm1356 = vcmp.eq.s32.totalorder %v1340, 1
      %vm1357 = vcmp.eq.s32.totalorder %v1341, 1
      %vm1358 = vcmp.eq.s32.totalorder %v1342, 1
      %vm1359 = vcmp.eq.s32.totalorder %v1343, 1
      %vm1360 = vcmp.eq.s32.totalorder %v1344, 1
      %vm1361 = vcmp.eq.s32.totalorder %v1345, 1
      %vm1362 = vcmp.eq.s32.totalorder %v1346, 1
      %vm1363 = vcmp.eq.s32.totalorder %v1347, 1
      %vm1364 = vcmp.eq.s32.totalorder %v1348, 1
      %vm1365 = vcmp.eq.s32.totalorder %v1349, 1
      %vm1366 = vcmp.eq.s32.totalorder %v1350, 1
      %v1367 = vsel %vm1351, %v1319, %v1016
      %v1368 = vsel %vm1352, %v1320, %v1019
      %v1369 = vsel %vm1353, %v1321, %v1024
      %v1370 = vsel %vm1354, %v1322, %v1027
      %v1371 = vsel %vm1355, %v1323, %v1032
      %v1372 = vsel %vm1356, %v1324, %v1035
      %v1373 = vsel %vm1357, %v1325, %v1040
      %v1374 = vsel %vm1358, %v1326, %v1043
      %v1375 = vsel %vm1359, %v1327, %v1048
      %v1376 = vsel %vm1360, %v1328, %v1051
      %v1377 = vsel %vm1361, %v1329, %v1056
      %v1378 = vsel %vm1362, %v1330, %v1059
      %v1379 = vsel %vm1363, %v1331, %v1064
      %v1380 = vsel %vm1364, %v1332, %v1067
      %v1381 = vsel %vm1365, %v1333, %v1072
      %v1382 = vsel %vm1366, %v1334, %v1075
      %v1383 = vmin.f32 %v1255, 0.996
      %v1384 = vmin.f32 %v1256, 0.996
      %v1385 = vmin.f32 %v1257, 0.996
      %v1386 = vmin.f32 %v1258, 0.996
      %v1387 = vmin.f32 %v1259, 0.996
      %v1388 = vmin.f32 %v1260, 0.996
      %v1389 = vmin.f32 %v1261, 0.996
      %v1390 = vmin.f32 %v1262, 0.996
      %v1391 = vmin.f32 %v1263, 0.996
      %v1392 = vmin.f32 %v1264, 0.996
      %v1393 = vmin.f32 %v1265, 0.996
      %v1394 = vmin.f32 %v1266, 0.996
      %v1395 = vmin.f32 %v1267, 0.996
      %v1396 = vmin.f32 %v1268, 0.996
      %v1397 = vmin.f32 %v1269, 0.996
      %v1398 = vmin.f32 %v1270, 0.996
      %v1399 = vmax.f32 %v1383, -0.9999999
      %v1400 = vmax.f32 %v1384, -0.9999999
      %v1401 = vmax.f32 %v1385, -0.9999999
      %v1402 = vmax.f32 %v1386, -0.9999999
      %v1403 = vmax.f32 %v1387, -0.9999999
      %v1404 = vmax.f32 %v1388, -0.9999999
      %v1405 = vmax.f32 %v1389, -0.9999999
      %v1406 = vmax.f32 %v1390, -0.9999999
      %v1407 = vmax.f32 %v1391, -0.9999999
      %v1408 = vmax.f32 %v1392, -0.9999999
      %v1409 = vmax.f32 %v1393, -0.9999999
      %v1410 = vmax.f32 %v1394, -0.9999999
      %v1411 = vmax.f32 %v1395, -0.9999999
      %v1412 = vmax.f32 %v1396, -0.9999999
      %v1413 = vmax.f32 %v1397, -0.9999999
      %v1414 = vmax.f32 %v1398, -0.9999999
      %v1415 = vmin.f32 %v1399, 0.9999999
      %v1416 = vmin.f32 %v1400, 0.9999999
      %v1417 = vmin.f32 %v1401, 0.9999999
      %v1418 = vmin.f32 %v1402, 0.9999999
      %v1419 = vmin.f32 %v1403, 0.9999999
      %v1420 = vmin.f32 %v1404, 0.9999999
      %v1421 = vmin.f32 %v1405, 0.9999999
      %v1422 = vmin.f32 %v1406, 0.9999999
      %v1423 = vmin.f32 %v1407, 0.9999999
      %v1424 = vmin.f32 %v1408, 0.9999999
      %v1425 = vmin.f32 %v1409, 0.9999999
      %v1426 = vmin.f32 %v1410, 0.9999999
      %v1427 = vmin.f32 %v1411, 0.9999999
      %v1428 = vmin.f32 %v1412, 0.9999999
      %v1429 = vmin.f32 %v1413, 0.9999999
      %v1430 = vmin.f32 %v1414, 0.9999999
      %v1431 = vadd.f32 %v1415, 1.0
      %v1432 = vadd.f32 %v1416, 1.0
      %v1433 = vadd.f32 %v1417, 1.0
      %v1434 = vadd.f32 %v1418, 1.0
      %v1435 = vadd.f32 %v1419, 1.0
      %v1436 = vadd.f32 %v1420, 1.0
      %v1437 = vadd.f32 %v1421, 1.0
      %v1438 = vadd.f32 %v1422, 1.0
      %v1439 = vadd.f32 %v1423, 1.0
      %v1440 = vadd.f32 %v1424, 1.0
      %v1441 = vadd.f32 %v1425, 1.0
      %v1442 = vadd.f32 %v1426, 1.0
      %v1443 = vadd.f32 %v1427, 1.0
      %v1444 = vadd.f32 %v1428, 1.0
      %v1445 = vadd.f32 %v1429, 1.0
      %v1446 = vadd.f32 %v1430, 1.0
      %v1447 = vsub.f32 1.0, %v1415
      %v1448 = vsub.f32 1.0, %v1416
      %v1449 = vsub.f32 1.0, %v1417
      %v1450 = vsub.f32 1.0, %v1418
      %v1451 = vsub.f32 1.0, %v1419
      %v1452 = vsub.f32 1.0, %v1420
      %v1453 = vsub.f32 1.0, %v1421
      %v1454 = vsub.f32 1.0, %v1422
      %v1455 = vsub.f32 1.0, %v1423
      %v1456 = vsub.f32 1.0, %v1424
      %v1457 = vsub.f32 1.0, %v1425
      %v1458 = vsub.f32 1.0, %v1426
      %v1459 = vsub.f32 1.0, %v1427
      %v1460 = vsub.f32 1.0, %v1428
      %v1461 = vsub.f32 1.0, %v1429
      %v1462 = vsub.f32 1.0, %v1430
      %v1463 = vrcp.pop %v1447
      %v1464 = vmul.f32 %v1431, %v1463
      %v1465 = vrcp.pop %v1448
      %v1466 = vmul.f32 %v1432, %v1465
      %v1467 = vrcp.pop %v1449
      %v1468 = vmul.f32 %v1433, %v1467
      %v1469 = vrcp.pop %v1450
      %v1470 = vmul.f32 %v1434, %v1469
      %v1471 = vrcp.pop %v1451
      %v1472 = vmul.f32 %v1435, %v1471
      %v1473 = vrcp.pop %v1452
      %v1474 = vmul.f32 %v1436, %v1473
      %v1475 = vrcp.pop %v1453
      %v1476 = vmul.f32 %v1437, %v1475
      %v1477 = vrcp.pop %v1454
      %v1478 = vmul.f32 %v1438, %v1477
      %v1479 = vrcp.pop %v1455
      %v1480 = vmul.f32 %v1439, %v1479
      %v1481 = vrcp.pop %v1456
      %v1482 = vmul.f32 %v1440, %v1481
      %v1483 = vrcp.pop %v1457
      %v1484 = vmul.f32 %v1441, %v1483
      %v1485 = vrcp.pop %v1458
      %v1486 = vmul.f32 %v1442, %v1485
      %v1487 = vrcp.pop %v1459
      %v1488 = vmul.f32 %v1443, %v1487
      %v1489 = vrcp.pop %v1460
      %v1490 = vmul.f32 %v1444, %v1489
      %v1491 = vrcp.pop %v1461
      %v1492 = vmul.f32 %v1445, %v1491
      %v1493 = vrcp.pop %v1462
      %v1494 = vmul.f32 %v1446, %v1493
      %v1495 = vlog2.pop %v1464
      %v1496 = vmul.f32 %v1495, 0.6931472
      %v1497 = vlog2.pop %v1466
      %v1498 = vmul.f32 %v1497, 0.6931472
      %v1499 = vlog2.pop %v1468
      %v1500 = vmul.f32 %v1499, 0.6931472
      %v1501 = vlog2.pop %v1470
      %v1502 = vmul.f32 %v1501, 0.6931472
      %v1503 = vlog2.pop %v1472
      %v1504 = vmul.f32 %v1503, 0.6931472
      %v1505 = vlog2.pop %v1474
      %v1506 = vmul.f32 %v1505, 0.6931472
      %v1507 = vlog2.pop %v1476
      %v1508 = vmul.f32 %v1507, 0.6931472
      %v1509 = vlog2.pop %v1478
      %v1510 = vmul.f32 %v1509, 0.6931472
      %v1511 = vlog2.pop %v1480
      %v1512 = vmul.f32 %v1511, 0.6931472
      %v1513 = vlog2.pop %v1482
      %v1514 = vmul.f32 %v1513, 0.6931472
      %v1515 = vlog2.pop %v1484
      %v1516 = vmul.f32 %v1515, 0.6931472
      %v1517 = vlog2.pop %v1486
      %v1518 = vmul.f32 %v1517, 0.6931472
      %v1519 = vlog2.pop %v1488
      %v1520 = vmul.f32 %v1519, 0.6931472
      %v1521 = vlog2.pop %v1490
      %v1522 = vmul.f32 %v1521, 0.6931472
      %v1523 = vlog2.pop %v1492
      %v1524 = vmul.f32 %v1523, 0.6931472
      %v1525 = vlog2.pop %v1494
      %v1526 = vmul.f32 %v1525, 0.6931472
      %v1527 = vmul.f32 %v1496, 0.5
      %v1528 = vmul.f32 %v1498, 0.5
      %v1529 = vmul.f32 %v1500, 0.5
      %v1530 = vmul.f32 %v1502, 0.5
      %v1531 = vmul.f32 %v1504, 0.5
      %v1532 = vmul.f32 %v1506, 0.5
      %v1533 = vmul.f32 %v1508, 0.5
      %v1534 = vmul.f32 %v1510, 0.5
      %v1535 = vmul.f32 %v1512, 0.5
      %v1536 = vmul.f32 %v1514, 0.5
      %v1537 = vmul.f32 %v1516, 0.5
      %v1538 = vmul.f32 %v1518, 0.5
      %v1539 = vmul.f32 %v1520, 0.5
      %v1540 = vmul.f32 %v1522, 0.5
      %v1541 = vmul.f32 %v1524, 0.5
      %v1542 = vmul.f32 %v1526, 0.5
      %v1543 = vrcp.pop %v1383
      %v1544 = vrcp.pop %v1384
      %v1545 = vrcp.pop %v1385
      %v1546 = vrcp.pop %v1386
      %v1547 = vrcp.pop %v1387
      %v1548 = vrcp.pop %v1388
      %v1549 = vrcp.pop %v1389
      %v1550 = vrcp.pop %v1390
      %v1551 = vrcp.pop %v1391
      %v1552 = vrcp.pop %v1392
      %v1553 = vrcp.pop %v1393
      %v1554 = vrcp.pop %v1394
      %v1555 = vrcp.pop %v1395
      %v1556 = vrcp.pop %v1396
      %v1557 = vrcp.pop %v1397
      %v1558 = vrcp.pop %v1398
      %v1559 = vmul.f32 %v1527, %v1543
      %v1560 = vmul.f32 %v1528, %v1544
      %v1561 = vmul.f32 %v1529, %v1545
      %v1562 = vmul.f32 %v1530, %v1546
      %v1563 = vmul.f32 %v1531, %v1547
      %v1564 = vmul.f32 %v1532, %v1548
      %v1565 = vmul.f32 %v1533, %v1549
      %v1566 = vmul.f32 %v1534, %v1550
      %v1567 = vmul.f32 %v1535, %v1551
      %v1568 = vmul.f32 %v1536, %v1552
      %v1569 = vmul.f32 %v1537, %v1553
      %v1570 = vmul.f32 %v1538, %v1554
      %v1571 = vmul.f32 %v1539, %v1555
      %v1572 = vmul.f32 %v1540, %v1556
      %v1573 = vmul.f32 %v1541, %v1557
      %v1574 = vmul.f32 %v1542, %v1558
      %v1575 = vmul.f32 %v1559, %v1367
      %v1576 = vmul.f32 %v1560, %v1368
      %v1577 = vmul.f32 %v1561, %v1369
      %v1578 = vmul.f32 %v1562, %v1370
      %v1579 = vmul.f32 %v1563, %v1371
      %v1580 = vmul.f32 %v1564, %v1372
      %v1581 = vmul.f32 %v1565, %v1373
      %v1582 = vmul.f32 %v1566, %v1374
      %v1583 = vmul.f32 %v1567, %v1375
      %v1584 = vmul.f32 %v1568, %v1376
      %v1585 = vmul.f32 %v1569, %v1377
      %v1586 = vmul.f32 %v1570, %v1378
      %v1587 = vmul.f32 %v1571, %v1379
      %v1588 = vmul.f32 %v1572, %v1380
      %v1589 = vmul.f32 %v1573, %v1381
      %v1590 = vmul.f32 %v1574, %v1382
      %1591 = vset.pattern.permute.xlu0 1
      %1592 = vperm.xlu0 %1591, %v544
      %v1593 = vpop.permute.xlu0 %1592
      %1595 = vset.pattern.permute.xlu0 1
      %1596 = vperm.xlu0 %1595, %v547
      %v1597 = vpop.permute.xlu0 %1596
      %1599 = vset.pattern.permute.xlu0 1
      %1600 = vperm.xlu0 %1599, %v552
      %v1601 = vpop.permute.xlu0 %1600
      %1603 = vset.pattern.permute.xlu0 1
      %1604 = vperm.xlu0 %1603, %v555
      %v1605 = vpop.permute.xlu0 %1604
      %1607 = vset.pattern.permute.xlu0 1
      %1608 = vperm.xlu0 %1607, %v560
      %v1609 = vpop.permute.xlu0 %1608
      %1611 = vset.pattern.permute.xlu0 1
      %1612 = vperm.xlu0 %1611, %v563
      %v1613 = vpop.permute.xlu0 %1612
      %1615 = vset.pattern.permute.xlu0 1
      %1616 = vperm.xlu0 %1615, %v568
      %v1617 = vpop.permute.xlu0 %1616
      %1619 = vset.pattern.permute.xlu0 1
      %1620 = vperm.xlu0 %1619, %v571
      %v1621 = vpop.permute.xlu0 %1620
      %1623 = vset.pattern.permute.xlu0 1
      %1624 = vperm.xlu0 %1623, %v576
      %v1625 = vpop.permute.xlu0 %1624
      %1627 = vset.pattern.permute.xlu0 1
      %1628 = vperm.xlu0 %1627, %v579
      %v1629 = vpop.permute.xlu0 %1628
      %1631 = vset.pattern.permute.xlu0 1
      %1632 = vperm.xlu0 %1631, %v584
      %v1633 = vpop.permute.xlu0 %1632
      %1635 = vset.pattern.permute.xlu0 1
      %1636 = vperm.xlu0 %1635, %v587
      %v1637 = vpop.permute.xlu0 %1636
      %1639 = vset.pattern.permute.xlu0 1
      %1640 = vperm.xlu0 %1639, %v592
      %v1641 = vpop.permute.xlu0 %1640
      %1643 = vset.pattern.permute.xlu0 1
      %1644 = vperm.xlu0 %1643, %v595
      %v1645 = vpop.permute.xlu0 %1644
      %1647 = vset.pattern.permute.xlu0 1
      %1648 = vperm.xlu0 %1647, %v600
      %v1649 = vpop.permute.xlu0 %1648
      %1651 = vset.pattern.permute.xlu0 1
      %1652 = vperm.xlu0 %1651, %v603
      %v1653 = vpop.permute.xlu0 %1652
      %v1655 = vlaneseq
      %v1656 = vshrl.u32 %v1655, 7
      %v1657 = vsub.s32 1, %v1656
      %v1658 = vrot.slane %v644, %v1657
      %v1659 = vadd.f32 %v1593, %v1658
      %v1660 = vadd.f32 %v1597, %v1658
      %v1661 = vadd.f32 %v1601, %v1658
      %v1662 = vadd.f32 %v1605, %v1658
      %v1663 = vadd.f32 %v1609, %v1658
      %v1664 = vadd.f32 %v1613, %v1658
      %v1665 = vadd.f32 %v1617, %v1658
      %v1666 = vadd.f32 %v1621, %v1658
      %v1667 = vadd.f32 %v1625, %v1658
      %v1668 = vadd.f32 %v1629, %v1658
      %v1669 = vadd.f32 %v1633, %v1658
      %v1670 = vadd.f32 %v1637, %v1658
      %v1671 = vadd.f32 %v1641, %v1658
      %v1672 = vadd.f32 %v1645, %v1658
      %v1673 = vadd.f32 %v1649, %v1658
      %v1674 = vadd.f32 %v1653, %v1658
      %vm1675 = vcmp.gt.f32.partialorder %v1659, 0.0
      %vm1676 = vcmp.gt.f32.partialorder %v1660, 0.0
      %vm1677 = vcmp.gt.f32.partialorder %v1661, 0.0
      %vm1678 = vcmp.gt.f32.partialorder %v1662, 0.0
      %vm1679 = vcmp.gt.f32.partialorder %v1663, 0.0
      %vm1680 = vcmp.gt.f32.partialorder %v1664, 0.0
      %vm1681 = vcmp.gt.f32.partialorder %v1665, 0.0
      %vm1682 = vcmp.gt.f32.partialorder %v1666, 0.0
      %vm1683 = vcmp.gt.f32.partialorder %v1667, 0.0
      %vm1684 = vcmp.gt.f32.partialorder %v1668, 0.0
      %vm1685 = vcmp.gt.f32.partialorder %v1669, 0.0
      %vm1686 = vcmp.gt.f32.partialorder %v1670, 0.0
      %vm1687 = vcmp.gt.f32.partialorder %v1671, 0.0
      %vm1688 = vcmp.gt.f32.partialorder %v1672, 0.0
      %vm1689 = vcmp.gt.f32.partialorder %v1673, 0.0
      %vm1690 = vcmp.gt.f32.partialorder %v1674, 0.0
      %v1691 = vmul.f32 %v1659, 0.1
      %v1692 = vmul.f32 %v1660, 0.1
      %v1693 = vmul.f32 %v1661, 0.1
      %v1694 = vmul.f32 %v1662, 0.1
      %v1695 = vmul.f32 %v1663, 0.1
      %v1696 = vmul.f32 %v1664, 0.1
      %v1697 = vmul.f32 %v1665, 0.1
      %v1698 = vmul.f32 %v1666, 0.1
      %v1699 = vmul.f32 %v1667, 0.1
      %v1700 = vmul.f32 %v1668, 0.1
      %v1701 = vmul.f32 %v1669, 0.1
      %v1702 = vmul.f32 %v1670, 0.1
      %v1703 = vmul.f32 %v1671, 0.1
      %v1704 = vmul.f32 %v1672, 0.1
      %v1705 = vmul.f32 %v1673, 0.1
      %v1706 = vmul.f32 %v1674, 0.1
      %v1707 = vsel %vm1675, %v1659, %v1691
      %v1708 = vsel %vm1676, %v1660, %v1692
      %v1709 = vsel %vm1677, %v1661, %v1693
      %v1710 = vsel %vm1678, %v1662, %v1694
      %v1711 = vsel %vm1679, %v1663, %v1695
      %v1712 = vsel %vm1680, %v1664, %v1696
      %v1713 = vsel %vm1681, %v1665, %v1697
      %v1714 = vsel %vm1682, %v1666, %v1698
      %v1715 = vsel %vm1683, %v1667, %v1699
      %v1716 = vsel %vm1684, %v1668, %v1700
      %v1717 = vsel %vm1685, %v1669, %v1701
      %v1718 = vsel %vm1686, %v1670, %v1702
      %v1719 = vsel %vm1687, %v1671, %v1703
      %v1720 = vsel %vm1688, %v1672, %v1704
      %v1721 = vsel %vm1689, %v1673, %v1705
      %v1722 = vsel %vm1690, %v1674, %v1706
      %v1723 = vsel %vm797, %v1707, -9e+15
      %v1724 = vsel %vm798, %v1708, -9e+15
      %v1725 = vsel %vm799, %v1709, -9e+15
      %v1726 = vsel %vm800, %v1710, -9e+15
      %v1727 = vsel %vm801, %v1711, -9e+15
      %v1728 = vsel %vm802, %v1712, -9e+15
      %v1729 = vsel %vm803, %v1713, -9e+15
      %v1730 = vsel %vm804, %v1714, -9e+15
      %v1731 = vsel %vm805, %v1715, -9e+15
      %v1732 = vsel %vm806, %v1716, -9e+15
      %v1733 = vsel %vm807, %v1717, -9e+15
      %v1734 = vsel %vm808, %v1718, -9e+15
      %v1735 = vsel %vm809, %v1719, -9e+15
      %v1736 = vsel %vm810, %v1720, -9e+15
      %v1737 = vsel %vm811, %v1721, -9e+15
      %v1738 = vsel %vm812, %v1722, -9e+15
      %1739 = vmax.xlane.f32.xlu0 %v1723
      %v1740 = vpop.xlane.xlu0 %1739
      %1741 = vmax.xlane.f32.xlu0 %v1724
      %v1742 = vpop.xlane.xlu0 %1741
      %1743 = vmax.xlane.f32.xlu0 %v1725
      %v1744 = vpop.xlane.xlu0 %1743
      %1745 = vmax.xlane.f32.xlu0 %v1726
      %v1746 = vpop.xlane.xlu0 %1745
      %1747 = vmax.xlane.f32.xlu0 %v1727
      %v1748 = vpop.xlane.xlu0 %1747
      %1749 = vmax.xlane.f32.xlu0 %v1728
      %v1750 = vpop.xlane.xlu0 %1749
      %1751 = vmax.xlane.f32.xlu0 %v1729
      %v1752 = vpop.xlane.xlu0 %1751
      %1753 = vmax.xlane.f32.xlu0 %v1730
      %v1754 = vpop.xlane.xlu0 %1753
      %1755 = vmax.xlane.f32.xlu0 %v1731
      %v1756 = vpop.xlane.xlu0 %1755
      %1757 = vmax.xlane.f32.xlu0 %v1732
      %v1758 = vpop.xlane.xlu0 %1757
      %1759 = vmax.xlane.f32.xlu0 %v1733
      %v1760 = vpop.xlane.xlu0 %1759
      %1761 = vmax.xlane.f32.xlu0 %v1734
      %v1762 = vpop.xlane.xlu0 %1761
      %1763 = vmax.xlane.f32.xlu0 %v1735
      %v1764 = vpop.xlane.xlu0 %1763
      %1765 = vmax.xlane.f32.xlu0 %v1736
      %v1766 = vpop.xlane.xlu0 %1765
      %1767 = vmax.xlane.f32.xlu0 %v1737
      %v1768 = vpop.xlane.xlu0 %1767
      %1769 = vmax.xlane.f32.xlu0 %v1738
      %v1770 = vpop.xlane.xlu0 %1769
      %v1771 = vsub.f32 %v1723, %v1740
      %v1772 = vsub.f32 %v1724, %v1742
      %v1773 = vsub.f32 %v1725, %v1744
      %v1774 = vsub.f32 %v1726, %v1746
      %v1775 = vsub.f32 %v1727, %v1748
      %v1776 = vsub.f32 %v1728, %v1750
      %v1777 = vsub.f32 %v1729, %v1752
      %v1778 = vsub.f32 %v1730, %v1754
      %v1779 = vsub.f32 %v1731, %v1756
      %v1780 = vsub.f32 %v1732, %v1758
      %v1781 = vsub.f32 %v1733, %v1760
      %v1782 = vsub.f32 %v1734, %v1762
      %v1783 = vsub.f32 %v1735, %v1764
      %v1784 = vsub.f32 %v1736, %v1766
      %v1785 = vsub.f32 %v1737, %v1768
      %v1786 = vsub.f32 %v1738, %v1770
      %v1787 = vmul.f32 %v1771, 1.442695
      %v1788 = vpow.pop %v1787
      %v1789 = vmul.f32 %v1772, 1.442695
      %v1790 = vpow.pop %v1789
      %v1791 = vmul.f32 %v1773, 1.442695
      %v1792 = vpow.pop %v1791
      %v1793 = vmul.f32 %v1774, 1.442695
      %v1794 = vpow.pop %v1793
      %v1795 = vmul.f32 %v1775, 1.442695
      %v1796 = vpow.pop %v1795
      %v1797 = vmul.f32 %v1776, 1.442695
      %v1798 = vpow.pop %v1797
      %v1799 = vmul.f32 %v1777, 1.442695
      %v1800 = vpow.pop %v1799
      %v1801 = vmul.f32 %v1778, 1.442695
      %v1802 = vpow.pop %v1801
      %v1803 = vmul.f32 %v1779, 1.442695
      %v1804 = vpow.pop %v1803
      %v1805 = vmul.f32 %v1780, 1.442695
      %v1806 = vpow.pop %v1805
      %v1807 = vmul.f32 %v1781, 1.442695
      %v1808 = vpow.pop %v1807
      %v1809 = vmul.f32 %v1782, 1.442695
      %v1810 = vpow.pop %v1809
      %v1811 = vmul.f32 %v1783, 1.442695
      %v1812 = vpow.pop %v1811
      %v1813 = vmul.f32 %v1784, 1.442695
      %v1814 = vpow.pop %v1813
      %v1815 = vmul.f32 %v1785, 1.442695
      %v1816 = vpow.pop %v1815
      %v1817 = vmul.f32 %v1786, 1.442695
      %v1818 = vpow.pop %v1817
      %1819 = vadd.xlane.f32.xlu0 %v1788
      %v1820 = vpop.xlane.xlu0 %1819
      %1821 = vadd.xlane.f32.xlu0 %v1790
      %v1822 = vpop.xlane.xlu0 %1821
      %1823 = vadd.xlane.f32.xlu0 %v1792
      %v1824 = vpop.xlane.xlu0 %1823
      %1825 = vadd.xlane.f32.xlu0 %v1794
      %v1826 = vpop.xlane.xlu0 %1825
      %1827 = vadd.xlane.f32.xlu0 %v1796
      %v1828 = vpop.xlane.xlu0 %1827
      %1829 = vadd.xlane.f32.xlu0 %v1798
      %v1830 = vpop.xlane.xlu0 %1829
      %1831 = vadd.xlane.f32.xlu0 %v1800
      %v1832 = vpop.xlane.xlu0 %1831
      %1833 = vadd.xlane.f32.xlu0 %v1802
      %v1834 = vpop.xlane.xlu0 %1833
      %1835 = vadd.xlane.f32.xlu0 %v1804
      %v1836 = vpop.xlane.xlu0 %1835
      %1837 = vadd.xlane.f32.xlu0 %v1806
      %v1838 = vpop.xlane.xlu0 %1837
      %1839 = vadd.xlane.f32.xlu0 %v1808
      %v1840 = vpop.xlane.xlu0 %1839
      %1841 = vadd.xlane.f32.xlu0 %v1810
      %v1842 = vpop.xlane.xlu0 %1841
      %1843 = vadd.xlane.f32.xlu0 %v1812
      %v1844 = vpop.xlane.xlu0 %1843
      %1845 = vadd.xlane.f32.xlu0 %v1814
      %v1846 = vpop.xlane.xlu0 %1845
      %1847 = vadd.xlane.f32.xlu0 %v1816
      %v1848 = vpop.xlane.xlu0 %1847
      %1849 = vadd.xlane.f32.xlu0 %v1818
      %v1850 = vpop.xlane.xlu0 %1849
      %v1851 = vrcp.pop %v1820
      %v1852 = vrcp.pop %v1822
      %v1853 = vrcp.pop %v1824
      %v1854 = vrcp.pop %v1826
      %v1855 = vrcp.pop %v1828
      %v1856 = vrcp.pop %v1830
      %v1857 = vrcp.pop %v1832
      %v1858 = vrcp.pop %v1834
      %v1859 = vrcp.pop %v1836
      %v1860 = vrcp.pop %v1838
      %v1861 = vrcp.pop %v1840
      %v1862 = vrcp.pop %v1842
      %v1863 = vrcp.pop %v1844
      %v1864 = vrcp.pop %v1846
      %v1865 = vrcp.pop %v1848
      %v1866 = vrcp.pop %v1850
      %v1867 = vmul.f32 %v1788, %v1851
      %v1868 = vmul.f32 %v1790, %v1852
      %v1869 = vmul.f32 %v1792, %v1853
      %v1870 = vmul.f32 %v1794, %v1854
      %v1871 = vmul.f32 %v1796, %v1855
      %v1872 = vmul.f32 %v1798, %v1856
      %v1873 = vmul.f32 %v1800, %v1857
      %v1874 = vmul.f32 %v1802, %v1858
      %v1875 = vmul.f32 %v1804, %v1859
      %v1876 = vmul.f32 %v1806, %v1860
      %v1877 = vmul.f32 %v1808, %v1861
      %v1878 = vmul.f32 %v1810, %v1862
      %v1879 = vmul.f32 %v1812, %v1863
      %v1880 = vmul.f32 %v1814, %v1864
      %v1881 = vmul.f32 %v1816, %v1865
      %v1882 = vmul.f32 %v1818, %v1866
      %v1883 = vpack.c.bf16 %v1868, %v1867
      %v1884 = vpack.c.bf16 %v1870, %v1869
      %v1885 = vpack.c.bf16 %v1872, %v1871
      %v1886 = vpack.c.bf16 %v1874, %v1873
      %v1887 = vpack.c.bf16 %v1876, %v1875
      %v1888 = vpack.c.bf16 %v1878, %v1877
      %v1889 = vpack.c.bf16 %v1880, %v1879
      %v1890 = vpack.c.bf16 %v1882, %v1881
      %1899 = vrot.lane.b32.xlu0 %v476, 120
      %v1900 = vpop.permute.xlu0 %1899
      %1901 = vrot.lane.b32.xlu0 %v477, 120
      %v1902 = vpop.permute.xlu0 %1901
      %1903 = vrot.lane.b32.xlu0 %v478, 120
      %v1904 = vpop.permute.xlu0 %1903
      %1905 = vrot.lane.b32.xlu0 %v479, 120
      %v1906 = vpop.permute.xlu0 %1905
      %1907 = vrot.lane.b32.xlu0 %v480, 120
      %v1908 = vpop.permute.xlu0 %1907
      %1909 = vrot.lane.b32.xlu0 %v481, 120
      %v1910 = vpop.permute.xlu0 %1909
      %1911 = vrot.lane.b32.xlu0 %v482, 120
      %v1912 = vpop.permute.xlu0 %1911
      %1913 = vrot.lane.b32.xlu0 %v483, 120
      %v1914 = vpop.permute.xlu0 %1913
      %1923 = vmatprep.subr.bf16.mxu0 0
      %1924 = vmatpush1.bf16.msra.mxu0 %v1900
      %1925 = vmatprep.subr.bf16.mxu0 0
      %1926 = vmatpush1.bf16.msra.mxu0 %v1902
      %1927 = vmatprep.subr.bf16.mxu0 0
      %1928 = vmatpush1.bf16.msra.mxu0 %v1904
      %1929 = vmatprep.subr.bf16.mxu0 0
      %1930 = vmatpush1.bf16.msra.mxu0 %v1906
      %1931 = vmatprep.subr.bf16.mxu0 0
      %1932 = vmatpush1.bf16.msra.mxu0 %v1908
      %1933 = vmatprep.subr.bf16.mxu0 0
      %1934 = vmatpush1.bf16.msra.mxu0 %v1910
      %1935 = vmatprep.subr.bf16.mxu0 0
      %1936 = vmatpush1.bf16.msra.mxu0 %v1912
      %1937 = vmatprep.subr.bf16.mxu0 0
      %1938 = vmatpush1.bf16.msra.mxu0 %v1914
      %1939 = vmatprep.subr.bf16.mxu0 0
      %1940 = vmatpush1.bf16.msra.mxu0 0
      %1941 = vmatprep.subr.bf16.mxu0 0
      %1942 = vmatpush1.bf16.msra.mxu0 0
      %1943 = vmatprep.subr.bf16.mxu0 0
      %1944 = vmatpush1.bf16.msra.mxu0 0
      %1945 = vmatprep.subr.bf16.mxu0 0
      %1946 = vmatpush1.bf16.msra.mxu0 0
      %1947 = vmatprep.subr.bf16.mxu0 0
      %1948 = vmatpush1.bf16.msra.mxu0 0
      %1949 = vmatprep.subr.bf16.mxu0 0
      %1950 = vmatpush1.bf16.msra.mxu0 0
      %1951 = vmatprep.subr.bf16.mxu0 0
      %1952 = vmatpush1.bf16.msra.mxu0 0
      %1953 = vmatprep.subr.bf16.mxu0 0
      %1954 = vmatpush1.bf16.msra.mxu0 0
      %1955 = vmatprep.mubr.bf16.mxu0 0
      %1956 = vmatmul.mubr.bf16.gmra.mrb[0].mxu0 %v1883
      %v1957 = vpop.f32.mrb[0].mxu0
      %v1958 = vadd.f32 0.0, %v1957
      %v1959 = vpop.f32.mrb[0].mxu0
      %v1960 = vpop.f32.mrb[0].mxu0
      %v1961 = vadd.f32 0.0, %v1960
      %v1962 = vpop.f32.mrb[0].mxu0
      %1963 = vmatprep.mubr.bf16.mxu0 0
      %1964 = vmatmul.mubr.bf16.gmra.mrb[0].mxu0 %v1884
      %v1965 = vpop.f32.mrb[0].mxu0
      %v1966 = vadd.f32 0.0, %v1965
      %v1967 = vpop.f32.mrb[0].mxu0
      %v1968 = vpop.f32.mrb[0].mxu0
      %v1969 = vadd.f32 0.0, %v1968
      %v1970 = vpop.f32.mrb[0].mxu0
      %1971 = vmatprep.mubr.bf16.mxu0 0
      %1972 = vmatmul.mubr.bf16.gmra.mrb[0].mxu0 %v1885
      %v1973 = vpop.f32.mrb[0].mxu0
      %v1974 = vadd.f32 0.0, %v1973
      %v1975 = vpop.f32.mrb[0].mxu0
      %v1976 = vpop.f32.mrb[0].mxu0
      %v1977 = vadd.f32 0.0, %v1976
      %v1978 = vpop.f32.mrb[0].mxu0
      %1979 = vmatprep.mubr.bf16.mxu0 0
      %1980 = vmatmul.mubr.bf16.gmra.mrb[0].mxu0 %v1886
      %v1981 = vpop.f32.mrb[0].mxu0
      %v1982 = vadd.f32 0.0, %v1981
      %v1983 = vpop.f32.mrb[0].mxu0
      %v1984 = vpop.f32.mrb[0].mxu0
      %v1985 = vadd.f32 0.0, %v1984
      %v1986 = vpop.f32.mrb[0].mxu0
      %1987 = vmatprep.mubr.bf16.mxu0 0
      %1988 = vmatmul.mubr.bf16.gmra.mrb[0].mxu0 %v1887
      %v1989 = vpop.f32.mrb[0].mxu0
      %v1990 = vadd.f32 0.0, %v1989
      %v1991 = vpop.f32.mrb[0].mxu0
      %v1992 = vpop.f32.mrb[0].mxu0
      %v1993 = vadd.f32 0.0, %v1992
      %v1994 = vpop.f32.mrb[0].mxu0
      %1995 = vmatprep.mubr.bf16.mxu0 0
      %1996 = vmatmul.mubr.bf16.gmra.mrb[0].mxu0 %v1888
      %v1997 = vpop.f32.mrb[0].mxu0
      %v1998 = vadd.f32 0.0, %v1997
      %v1999 = vpop.f32.mrb[0].mxu0
      %v2000 = vpop.f32.mrb[0].mxu0
      %v2001 = vadd.f32 0.0, %v2000
      %v2002 = vpop.f32.mrb[0].mxu0
      %2003 = vmatprep.mubr.bf16.mxu0 0
      %2004 = vmatmul.mubr.bf16.gmra.mrb[0].mxu0 %v1889
      %v2005 = vpop.f32.mrb[0].mxu0
      %v2006 = vadd.f32 0.0, %v2005
      %v2007 = vpop.f32.mrb[0].mxu0
      %v2008 = vpop.f32.mrb[0].mxu0
      %v2009 = vadd.f32 0.0, %v2008
      %v2010 = vpop.f32.mrb[0].mxu0
      %2011 = vmatprep.mubr.bf16.mxu0 0
      %2012 = vmatmul.mubr.bf16.gmra.mrb[0].mxu0 %v1890
      %v2013 = vpop.f32.mrb[0].mxu0
      %v2014 = vadd.f32 0.0, %v2013
      %v2015 = vpop.f32.mrb[0].mxu0
      %v2016 = vpop.f32.mrb[0].mxu0
      %v2017 = vadd.f32 0.0, %v2016
      %v2018 = vpop.f32.mrb[0].mxu0
      %2019 = vdwg.mxu0
      %v2020 = vmul.f32 %v1958, %v1958
      %v2021 = vmul.f32 %v1961, %v1961
      %v2022 = vmul.f32 %v1966, %v1966
      %v2023 = vmul.f32 %v1969, %v1969
      %v2024 = vmul.f32 %v1974, %v1974
      %v2025 = vmul.f32 %v1977, %v1977
      %v2026 = vmul.f32 %v1982, %v1982
      %v2027 = vmul.f32 %v1985, %v1985
      %v2028 = vmul.f32 %v1990, %v1990
      %v2029 = vmul.f32 %v1993, %v1993
      %v2030 = vmul.f32 %v1998, %v1998
      %v2031 = vmul.f32 %v2001, %v2001
      %v2032 = vmul.f32 %v2006, %v2006
      %v2033 = vmul.f32 %v2009, %v2009
      %v2034 = vmul.f32 %v2014, %v2014
      %v2035 = vmul.f32 %v2017, %v2017
      %v2036 = vsel %vm1094, %v2020, 0.0
      %2037 = vadd.xlane.f32.xlu0 %v2036
      %v2038 = vpop.xlane.xlu0 %2037
      %v2039 = vsel %vm1094, %v2021, 0.0
      %2040 = vadd.xlane.f32.xlu0 %v2039
      %v2041 = vpop.xlane.xlu0 %2040
      %v2042 = vsel %vm1094, %v2022, 0.0
      %2043 = vadd.xlane.f32.xlu0 %v2042
      %v2044 = vpop.xlane.xlu0 %2043
      %v2045 = vsel %vm1094, %v2023, 0.0
      %2046 = vadd.xlane.f32.xlu0 %v2045
      %v2047 = vpop.xlane.xlu0 %2046
      %v2048 = vsel %vm1094, %v2024, 0.0
      %2049 = vadd.xlane.f32.xlu0 %v2048
      %v2050 = vpop.xlane.xlu0 %2049
      %v2051 = vsel %vm1094, %v2025, 0.0
      %2052 = vadd.xlane.f32.xlu0 %v2051
      %v2053 = vpop.xlane.xlu0 %2052
      %v2054 = vsel %vm1094, %v2026, 0.0
      %2055 = vadd.xlane.f32.xlu0 %v2054
      %v2056 = vpop.xlane.xlu0 %2055
      %v2057 = vsel %vm1094, %v2027, 0.0
      %2058 = vadd.xlane.f32.xlu0 %v2057
      %v2059 = vpop.xlane.xlu0 %2058
      %v2060 = vsel %vm1094, %v2028, 0.0
      %2061 = vadd.xlane.f32.xlu0 %v2060
      %v2062 = vpop.xlane.xlu0 %2061
      %v2063 = vsel %vm1094, %v2029, 0.0
      %2064 = vadd.xlane.f32.xlu0 %v2063
      %v2065 = vpop.xlane.xlu0 %2064
      %v2066 = vsel %vm1094, %v2030, 0.0
      %2067 = vadd.xlane.f32.xlu0 %v2066
      %v2068 = vpop.xlane.xlu0 %2067
      %v2069 = vsel %vm1094, %v2031, 0.0
      %2070 = vadd.xlane.f32.xlu0 %v2069
      %v2071 = vpop.xlane.xlu0 %2070
      %v2072 = vsel %vm1094, %v2032, 0.0
      %2073 = vadd.xlane.f32.xlu0 %v2072
      %v2074 = vpop.xlane.xlu0 %2073
      %v2075 = vsel %vm1094, %v2033, 0.0
      %2076 = vadd.xlane.f32.xlu0 %v2075
      %v2077 = vpop.xlane.xlu0 %2076
      %v2078 = vsel %vm1094, %v2034, 0.0
      %2079 = vadd.xlane.f32.xlu0 %v2078
      %v2080 = vpop.xlane.xlu0 %2079
      %v2081 = vsel %vm1094, %v2035, 0.0
      %2082 = vadd.xlane.f32.xlu0 %v2081
      %v2083 = vpop.xlane.xlu0 %2082
      %v2084 = vrsqrt.pop %v2038
      %v2085 = vmul.f32 %v2038, %v2084
      %vm2086 = vcmp.eq.f32.partialorder %v2038, inf
      %v2087 = vsel %vm2086, %v2038, %v2085
      %vm2088 = vcmp.eq.f32.partialorder %v2038, 0.0
      %v2089 = vand.u32 %v2038, 2147483648
      %v2090 = vsel %vm2088, %v2089, %v2087
      %v2091 = vrsqrt.pop %v2041
      %v2092 = vmul.f32 %v2041, %v2091
      %vm2093 = vcmp.eq.f32.partialorder %v2041, inf
      %v2094 = vsel %vm2093, %v2041, %v2092
      %vm2095 = vcmp.eq.f32.partialorder %v2041, 0.0
      %v2096 = vand.u32 %v2041, 2147483648
      %v2097 = vsel %vm2095, %v2096, %v2094
      %v2098 = vrsqrt.pop %v2044
      %v2099 = vmul.f32 %v2044, %v2098
      %vm2100 = vcmp.eq.f32.partialorder %v2044, inf
      %v2101 = vsel %vm2100, %v2044, %v2099
      %vm2102 = vcmp.eq.f32.partialorder %v2044, 0.0
      %v2103 = vand.u32 %v2044, 2147483648
      %v2104 = vsel %vm2102, %v2103, %v2101
      %v2105 = vrsqrt.pop %v2047
      %v2106 = vmul.f32 %v2047, %v2105
      %vm2107 = vcmp.eq.f32.partialorder %v2047, inf
      %v2108 = vsel %vm2107, %v2047, %v2106
      %vm2109 = vcmp.eq.f32.partialorder %v2047, 0.0
      %v2110 = vand.u32 %v2047, 2147483648
      %v2111 = vsel %vm2109, %v2110, %v2108
      %v2112 = vrsqrt.pop %v2050
      %v2113 = vmul.f32 %v2050, %v2112
      %vm2114 = vcmp.eq.f32.partialorder %v2050, inf
      %v2115 = vsel %vm2114, %v2050, %v2113
      %vm2116 = vcmp.eq.f32.partialorder %v2050, 0.0
      %v2117 = vand.u32 %v2050, 2147483648
      %v2118 = vsel %vm2116, %v2117, %v2115
      %v2119 = vrsqrt.pop %v2053
      %v2120 = vmul.f32 %v2053, %v2119
      %vm2121 = vcmp.eq.f32.partialorder %v2053, inf
      %v2122 = vsel %vm2121, %v2053, %v2120
      %vm2123 = vcmp.eq.f32.partialorder %v2053, 0.0
      %v2124 = vand.u32 %v2053, 2147483648
      %v2125 = vsel %vm2123, %v2124, %v2122
      %v2126 = vrsqrt.pop %v2056
      %v2127 = vmul.f32 %v2056, %v2126
      %vm2128 = vcmp.eq.f32.partialorder %v2056, inf
      %v2129 = vsel %vm2128, %v2056, %v2127
      %vm2130 = vcmp.eq.f32.partialorder %v2056, 0.0
      %v2131 = vand.u32 %v2056, 2147483648
      %v2132 = vsel %vm2130, %v2131, %v2129
      %v2133 = vrsqrt.pop %v2059
      %v2134 = vmul.f32 %v2059, %v2133
      %vm2135 = vcmp.eq.f32.partialorder %v2059, inf
      %v2136 = vsel %vm2135, %v2059, %v2134
      %vm2137 = vcmp.eq.f32.partialorder %v2059, 0.0
      %v2138 = vand.u32 %v2059, 2147483648
      %v2139 = vsel %vm2137, %v2138, %v2136
      %v2140 = vrsqrt.pop %v2062
      %v2141 = vmul.f32 %v2062, %v2140
      %vm2142 = vcmp.eq.f32.partialorder %v2062, inf
      %v2143 = vsel %vm2142, %v2062, %v2141
      %vm2144 = vcmp.eq.f32.partialorder %v2062, 0.0
      %v2145 = vand.u32 %v2062, 2147483648
      %v2146 = vsel %vm2144, %v2145, %v2143
      %v2147 = vrsqrt.pop %v2065
      %v2148 = vmul.f32 %v2065, %v2147
      %vm2149 = vcmp.eq.f32.partialorder %v2065, inf
      %v2150 = vsel %vm2149, %v2065, %v2148
      %vm2151 = vcmp.eq.f32.partialorder %v2065, 0.0
      %v2152 = vand.u32 %v2065, 2147483648
      %v2153 = vsel %vm2151, %v2152, %v2150
      %v2154 = vrsqrt.pop %v2068
      %v2155 = vmul.f32 %v2068, %v2154
      %vm2156 = vcmp.eq.f32.partialorder %v2068, inf
      %v2157 = vsel %vm2156, %v2068, %v2155
      %vm2158 = vcmp.eq.f32.partialorder %v2068, 0.0
      %v2159 = vand.u32 %v2068, 2147483648
      %v2160 = vsel %vm2158, %v2159, %v2157
      %v2161 = vrsqrt.pop %v2071
      %v2162 = vmul.f32 %v2071, %v2161
      %vm2163 = vcmp.eq.f32.partialorder %v2071, inf
      %v2164 = vsel %vm2163, %v2071, %v2162
      %vm2165 = vcmp.eq.f32.partialorder %v2071, 0.0
      %v2166 = vand.u32 %v2071, 2147483648
      %v2167 = vsel %vm2165, %v2166, %v2164
      %v2168 = vrsqrt.pop %v2074
      %v2169 = vmul.f32 %v2074, %v2168
      %vm2170 = vcmp.eq.f32.partialorder %v2074, inf
      %v2171 = vsel %vm2170, %v2074, %v2169
      %vm2172 = vcmp.eq.f32.partialorder %v2074, 0.0
      %v2173 = vand.u32 %v2074, 2147483648
      %v2174 = vsel %vm2172, %v2173, %v2171
      %v2175 = vrsqrt.pop %v2077
      %v2176 = vmul.f32 %v2077, %v2175
      %vm2177 = vcmp.eq.f32.partialorder %v2077, inf
      %v2178 = vsel %vm2177, %v2077, %v2176
      %vm2179 = vcmp.eq.f32.partialorder %v2077, 0.0
      %v2180 = vand.u32 %v2077, 2147483648
      %v2181 = vsel %vm2179, %v2180, %v2178
      %v2182 = vrsqrt.pop %v2080
      %v2183 = vmul.f32 %v2080, %v2182
      %vm2184 = vcmp.eq.f32.partialorder %v2080, inf
      %v2185 = vsel %vm2184, %v2080, %v2183
      %vm2186 = vcmp.eq.f32.partialorder %v2080, 0.0
      %v2187 = vand.u32 %v2080, 2147483648
      %v2188 = vsel %vm2186, %v2187, %v2185
      %v2189 = vrsqrt.pop %v2083
      %v2190 = vmul.f32 %v2083, %v2189
      %vm2191 = vcmp.eq.f32.partialorder %v2083, inf
      %v2192 = vsel %vm2191, %v2083, %v2190
      %vm2193 = vcmp.eq.f32.partialorder %v2083, 0.0
      %v2194 = vand.u32 %v2083, 2147483648
      %v2195 = vsel %vm2193, %v2194, %v2192
      %v2196 = vmax.f32 %v2090, 1e-15
      %v2197 = vmax.f32 %v2097, 1e-15
      %v2198 = vmax.f32 %v2104, 1e-15
      %v2199 = vmax.f32 %v2111, 1e-15
      %v2200 = vmax.f32 %v2118, 1e-15
      %v2201 = vmax.f32 %v2125, 1e-15
      %v2202 = vmax.f32 %v2132, 1e-15
      %v2203 = vmax.f32 %v2139, 1e-15
      %v2204 = vmax.f32 %v2146, 1e-15
      %v2205 = vmax.f32 %v2153, 1e-15
      %v2206 = vmax.f32 %v2160, 1e-15
      %v2207 = vmax.f32 %v2167, 1e-15
      %v2208 = vmax.f32 %v2174, 1e-15
      %v2209 = vmax.f32 %v2181, 1e-15
      %v2210 = vmax.f32 %v2188, 1e-15
      %v2211 = vmax.f32 %v2195, 1e-15
      %vm2212 = vcmp.gt.f32.partialorder %v2196, 0.996
      %vm2213 = vcmp.gt.f32.partialorder %v2197, 0.996
      %vm2214 = vcmp.gt.f32.partialorder %v2198, 0.996
      %vm2215 = vcmp.gt.f32.partialorder %v2199, 0.996
      %vm2216 = vcmp.gt.f32.partialorder %v2200, 0.996
      %vm2217 = vcmp.gt.f32.partialorder %v2201, 0.996
      %vm2218 = vcmp.gt.f32.partialorder %v2202, 0.996
      %vm2219 = vcmp.gt.f32.partialorder %v2203, 0.996
      %vm2220 = vcmp.gt.f32.partialorder %v2204, 0.996
      %vm2221 = vcmp.gt.f32.partialorder %v2205, 0.996
      %vm2222 = vcmp.gt.f32.partialorder %v2206, 0.996
      %vm2223 = vcmp.gt.f32.partialorder %v2207, 0.996
      %vm2224 = vcmp.gt.f32.partialorder %v2208, 0.996
      %vm2225 = vcmp.gt.f32.partialorder %v2209, 0.996
      %vm2226 = vcmp.gt.f32.partialorder %v2210, 0.996
      %vm2227 = vcmp.gt.f32.partialorder %v2211, 0.996
      %v2228 = vrcp.pop %v2196
      %v2229 = vmul.f32 %v1958, %v2228
      %v2230 = vrcp.pop %v2197
      %v2231 = vmul.f32 %v1961, %v2230
      %v2232 = vrcp.pop %v2198
      %v2233 = vmul.f32 %v1966, %v2232
      %v2234 = vrcp.pop %v2199
      %v2235 = vmul.f32 %v1969, %v2234
      %v2236 = vrcp.pop %v2200
      %v2237 = vmul.f32 %v1974, %v2236
      %v2238 = vrcp.pop %v2201
      %v2239 = vmul.f32 %v1977, %v2238
      %v2240 = vrcp.pop %v2202
      %v2241 = vmul.f32 %v1982, %v2240
      %v2242 = vrcp.pop %v2203
      %v2243 = vmul.f32 %v1985, %v2242
      %v2244 = vrcp.pop %v2204
      %v2245 = vmul.f32 %v1990, %v2244
      %v2246 = vrcp.pop %v2205
      %v2247 = vmul.f32 %v1993, %v2246
      %v2248 = vrcp.pop %v2206
      %v2249 = vmul.f32 %v1998, %v2248
      %v2250 = vrcp.pop %v2207
      %v2251 = vmul.f32 %v2001, %v2250
      %v2252 = vrcp.pop %v2208
      %v2253 = vmul.f32 %v2006, %v2252
      %v2254 = vrcp.pop %v2209
      %v2255 = vmul.f32 %v2009, %v2254
      %v2256 = vrcp.pop %v2210
      %v2257 = vmul.f32 %v2014, %v2256
      %v2258 = vrcp.pop %v2211
      %v2259 = vmul.f32 %v2017, %v2258
      %v2260 = vmul.f32 %v2229, 0.996
      %v2261 = vmul.f32 %v2231, 0.996
      %v2262 = vmul.f32 %v2233, 0.996
      %v2263 = vmul.f32 %v2235, 0.996
      %v2264 = vmul.f32 %v2237, 0.996
      %v2265 = vmul.f32 %v2239, 0.996
      %v2266 = vmul.f32 %v2241, 0.996
      %v2267 = vmul.f32 %v2243, 0.996
      %v2268 = vmul.f32 %v2245, 0.996
      %v2269 = vmul.f32 %v2247, 0.996
      %v2270 = vmul.f32 %v2249, 0.996
      %v2271 = vmul.f32 %v2251, 0.996
      %v2272 = vmul.f32 %v2253, 0.996
      %v2273 = vmul.f32 %v2255, 0.996
      %v2274 = vmul.f32 %v2257, 0.996
      %v2275 = vmul.f32 %v2259, 0.996
      %v2276 = vsel %vm2212, 1, 0
      %v2277 = vsel %vm2213, 1, 0
      %v2278 = vsel %vm2214, 1, 0
      %v2279 = vsel %vm2215, 1, 0
      %v2280 = vsel %vm2216, 1, 0
      %v2281 = vsel %vm2217, 1, 0
      %v2282 = vsel %vm2218, 1, 0
      %v2283 = vsel %vm2219, 1, 0
      %v2284 = vsel %vm2220, 1, 0
      %v2285 = vsel %vm2221, 1, 0
      %v2286 = vsel %vm2222, 1, 0
      %v2287 = vsel %vm2223, 1, 0
      %v2288 = vsel %vm2224, 1, 0
      %v2289 = vsel %vm2225, 1, 0
      %v2290 = vsel %vm2226, 1, 0
      %v2291 = vsel %vm2227, 1, 0
      %vm2292 = vcmp.eq.s32.totalorder %v2276, 1
      %vm2293 = vcmp.eq.s32.totalorder %v2277, 1
      %vm2294 = vcmp.eq.s32.totalorder %v2278, 1
      %vm2295 = vcmp.eq.s32.totalorder %v2279, 1
      %vm2296 = vcmp.eq.s32.totalorder %v2280, 1
      %vm2297 = vcmp.eq.s32.totalorder %v2281, 1
      %vm2298 = vcmp.eq.s32.totalorder %v2282, 1
      %vm2299 = vcmp.eq.s32.totalorder %v2283, 1
      %vm2300 = vcmp.eq.s32.totalorder %v2284, 1
      %vm2301 = vcmp.eq.s32.totalorder %v2285, 1
      %vm2302 = vcmp.eq.s32.totalorder %v2286, 1
      %vm2303 = vcmp.eq.s32.totalorder %v2287, 1
      %vm2304 = vcmp.eq.s32.totalorder %v2288, 1
      %vm2305 = vcmp.eq.s32.totalorder %v2289, 1
      %vm2306 = vcmp.eq.s32.totalorder %v2290, 1
      %vm2307 = vcmp.eq.s32.totalorder %v2291, 1
      %v2308 = vsel %vm2292, %v2260, %v1958
      %v2309 = vsel %vm2293, %v2261, %v1961
      %v2310 = vsel %vm2294, %v2262, %v1966
      %v2311 = vsel %vm2295, %v2263, %v1969
      %v2312 = vsel %vm2296, %v2264, %v1974
      %v2313 = vsel %vm2297, %v2265, %v1977
      %v2314 = vsel %vm2298, %v2266, %v1982
      %v2315 = vsel %vm2299, %v2267, %v1985
      %v2316 = vsel %vm2300, %v2268, %v1990
      %v2317 = vsel %vm2301, %v2269, %v1993
      %v2318 = vsel %vm2302, %v2270, %v1998
      %v2319 = vsel %vm2303, %v2271, %v2001
      %v2320 = vsel %vm2304, %v2272, %v2006
      %v2321 = vsel %vm2305, %v2273, %v2009
      %v2322 = vsel %vm2306, %v2274, %v2014
      %v2323 = vsel %vm2307, %v2275, %v2017
      %v2324 = vmin.f32 %v2196, 0.996
      %v2325 = vmin.f32 %v2197, 0.996
      %v2326 = vmin.f32 %v2198, 0.996
      %v2327 = vmin.f32 %v2199, 0.996
      %v2328 = vmin.f32 %v2200, 0.996
      %v2329 = vmin.f32 %v2201, 0.996
      %v2330 = vmin.f32 %v2202, 0.996
      %v2331 = vmin.f32 %v2203, 0.996
      %v2332 = vmin.f32 %v2204, 0.996
      %v2333 = vmin.f32 %v2205, 0.996
      %v2334 = vmin.f32 %v2206, 0.996
      %v2335 = vmin.f32 %v2207, 0.996
      %v2336 = vmin.f32 %v2208, 0.996
      %v2337 = vmin.f32 %v2209, 0.996
      %v2338 = vmin.f32 %v2210, 0.996
      %v2339 = vmin.f32 %v2211, 0.996
      %v2340 = vmax.f32 %v2324, -0.9999999
      %v2341 = vmax.f32 %v2325, -0.9999999
      %v2342 = vmax.f32 %v2326, -0.9999999
      %v2343 = vmax.f32 %v2327, -0.9999999
      %v2344 = vmax.f32 %v2328, -0.9999999
      %v2345 = vmax.f32 %v2329, -0.9999999
      %v2346 = vmax.f32 %v2330, -0.9999999
      %v2347 = vmax.f32 %v2331, -0.9999999
      %v2348 = vmax.f32 %v2332, -0.9999999
      %v2349 = vmax.f32 %v2333, -0.9999999
      %v2350 = vmax.f32 %v2334, -0.9999999
      %v2351 = vmax.f32 %v2335, -0.9999999
      %v2352 = vmax.f32 %v2336, -0.9999999
      %v2353 = vmax.f32 %v2337, -0.9999999
      %v2354 = vmax.f32 %v2338, -0.9999999
      %v2355 = vmax.f32 %v2339, -0.9999999
      %v2356 = vmin.f32 %v2340, 0.9999999
      %v2357 = vmin.f32 %v2341, 0.9999999
      %v2358 = vmin.f32 %v2342, 0.9999999
      %v2359 = vmin.f32 %v2343, 0.9999999
      %v2360 = vmin.f32 %v2344, 0.9999999
      %v2361 = vmin.f32 %v2345, 0.9999999
      %v2362 = vmin.f32 %v2346, 0.9999999
      %v2363 = vmin.f32 %v2347, 0.9999999
      %v2364 = vmin.f32 %v2348, 0.9999999
      %v2365 = vmin.f32 %v2349, 0.9999999
      %v2366 = vmin.f32 %v2350, 0.9999999
      %v2367 = vmin.f32 %v2351, 0.9999999
      %v2368 = vmin.f32 %v2352, 0.9999999
      %v2369 = vmin.f32 %v2353, 0.9999999
      %v2370 = vmin.f32 %v2354, 0.9999999
      %v2371 = vmin.f32 %v2355, 0.9999999
      %v2372 = vadd.f32 %v2356, 1.0
      %v2373 = vadd.f32 %v2357, 1.0
      %v2374 = vadd.f32 %v2358, 1.0
      %v2375 = vadd.f32 %v2359, 1.0
      %v2376 = vadd.f32 %v2360, 1.0
      %v2377 = vadd.f32 %v2361, 1.0
      %v2378 = vadd.f32 %v2362, 1.0
      %v2379 = vadd.f32 %v2363, 1.0
      %v2380 = vadd.f32 %v2364, 1.0
      %v2381 = vadd.f32 %v2365, 1.0
      %v2382 = vadd.f32 %v2366, 1.0
      %v2383 = vadd.f32 %v2367, 1.0
      %v2384 = vadd.f32 %v2368, 1.0
      %v2385 = vadd.f32 %v2369, 1.0
      %v2386 = vadd.f32 %v2370, 1.0
      %v2387 = vadd.f32 %v2371, 1.0
      %v2388 = vsub.f32 1.0, %v2356
      %v2389 = vsub.f32 1.0, %v2357
      %v2390 = vsub.f32 1.0, %v2358
      %v2391 = vsub.f32 1.0, %v2359
      %v2392 = vsub.f32 1.0, %v2360
      %v2393 = vsub.f32 1.0, %v2361
      %v2394 = vsub.f32 1.0, %v2362
      %v2395 = vsub.f32 1.0, %v2363
      %v2396 = vsub.f32 1.0, %v2364
      %v2397 = vsub.f32 1.0, %v2365
      %v2398 = vsub.f32 1.0, %v2366
      %v2399 = vsub.f32 1.0, %v2367
      %v2400 = vsub.f32 1.0, %v2368
      %v2401 = vsub.f32 1.0, %v2369
      %v2402 = vsub.f32 1.0, %v2370
      %v2403 = vsub.f32 1.0, %v2371
      %v2404 = vrcp.pop %v2388
      %v2405 = vmul.f32 %v2372, %v2404
      %v2406 = vrcp.pop %v2389
      %v2407 = vmul.f32 %v2373, %v2406
      %v2408 = vrcp.pop %v2390
      %v2409 = vmul.f32 %v2374, %v2408
      %v2410 = vrcp.pop %v2391
      %v2411 = vmul.f32 %v2375, %v2410
      %v2412 = vrcp.pop %v2392
      %v2413 = vmul.f32 %v2376, %v2412
      %v2414 = vrcp.pop %v2393
      %v2415 = vmul.f32 %v2377, %v2414
      %v2416 = vrcp.pop %v2394
      %v2417 = vmul.f32 %v2378, %v2416
      %v2418 = vrcp.pop %v2395
      %v2419 = vmul.f32 %v2379, %v2418
      %v2420 = vrcp.pop %v2396
      %v2421 = vmul.f32 %v2380, %v2420
      %v2422 = vrcp.pop %v2397
      %v2423 = vmul.f32 %v2381, %v2422
      %v2424 = vrcp.pop %v2398
      %v2425 = vmul.f32 %v2382, %v2424
      %v2426 = vrcp.pop %v2399
      %v2427 = vmul.f32 %v2383, %v2426
      %v2428 = vrcp.pop %v2400
      %v2429 = vmul.f32 %v2384, %v2428
      %v2430 = vrcp.pop %v2401
      %v2431 = vmul.f32 %v2385, %v2430
      %v2432 = vrcp.pop %v2402
      %v2433 = vmul.f32 %v2386, %v2432
      %v2434 = vrcp.pop %v2403
      %v2435 = vmul.f32 %v2387, %v2434
      %v2436 = vlog2.pop %v2405
      %v2437 = vmul.f32 %v2436, 0.6931472
      %v2438 = vlog2.pop %v2407
      %v2439 = vmul.f32 %v2438, 0.6931472
      %v2440 = vlog2.pop %v2409
      %v2441 = vmul.f32 %v2440, 0.6931472
      %v2442 = vlog2.pop %v2411
      %v2443 = vmul.f32 %v2442, 0.6931472
      %v2444 = vlog2.pop %v2413
      %v2445 = vmul.f32 %v2444, 0.6931472
      %v2446 = vlog2.pop %v2415
      %v2447 = vmul.f32 %v2446, 0.6931472
      %v2448 = vlog2.pop %v2417
      %v2449 = vmul.f32 %v2448, 0.6931472
      %v2450 = vlog2.pop %v2419
      %v2451 = vmul.f32 %v2450, 0.6931472
      %v2452 = vlog2.pop %v2421
      %v2453 = vmul.f32 %v2452, 0.6931472
      %v2454 = vlog2.pop %v2423
      %v2455 = vmul.f32 %v2454, 0.6931472
      %v2456 = vlog2.pop %v2425
      %v2457 = vmul.f32 %v2456, 0.6931472
      %v2458 = vlog2.pop %v2427
      %v2459 = vmul.f32 %v2458, 0.6931472
      %v2460 = vlog2.pop %v2429
      %v2461 = vmul.f32 %v2460, 0.6931472
      %v2462 = vlog2.pop %v2431
      %v2463 = vmul.f32 %v2462, 0.6931472
      %v2464 = vlog2.pop %v2433
      %v2465 = vmul.f32 %v2464, 0.6931472
      %v2466 = vlog2.pop %v2435
      %v2467 = vmul.f32 %v2466, 0.6931472
      %v2468 = vmul.f32 %v2437, 0.5
      %v2469 = vmul.f32 %v2439, 0.5
      %v2470 = vmul.f32 %v2441, 0.5
      %v2471 = vmul.f32 %v2443, 0.5
      %v2472 = vmul.f32 %v2445, 0.5
      %v2473 = vmul.f32 %v2447, 0.5
      %v2474 = vmul.f32 %v2449, 0.5
      %v2475 = vmul.f32 %v2451, 0.5
      %v2476 = vmul.f32 %v2453, 0.5
      %v2477 = vmul.f32 %v2455, 0.5
      %v2478 = vmul.f32 %v2457, 0.5
      %v2479 = vmul.f32 %v2459, 0.5
      %v2480 = vmul.f32 %v2461, 0.5
      %v2481 = vmul.f32 %v2463, 0.5
      %v2482 = vmul.f32 %v2465, 0.5
      %v2483 = vmul.f32 %v2467, 0.5
      %v2484 = vrcp.pop %v2324
      %v2485 = vrcp.pop %v2325
      %v2486 = vrcp.pop %v2326
      %v2487 = vrcp.pop %v2327
      %v2488 = vrcp.pop %v2328
      %v2489 = vrcp.pop %v2329
      %v2490 = vrcp.pop %v2330
      %v2491 = vrcp.pop %v2331
      %v2492 = vrcp.pop %v2332
      %v2493 = vrcp.pop %v2333
      %v2494 = vrcp.pop %v2334
      %v2495 = vrcp.pop %v2335
      %v2496 = vrcp.pop %v2336
      %v2497 = vrcp.pop %v2337
      %v2498 = vrcp.pop %v2338
      %v2499 = vrcp.pop %v2339
      %v2500 = vmul.f32 %v2468, %v2484
      %v2501 = vmul.f32 %v2469, %v2485
      %v2502 = vmul.f32 %v2470, %v2486
      %v2503 = vmul.f32 %v2471, %v2487
      %v2504 = vmul.f32 %v2472, %v2488
      %v2505 = vmul.f32 %v2473, %v2489
      %v2506 = vmul.f32 %v2474, %v2490
      %v2507 = vmul.f32 %v2475, %v2491
      %v2508 = vmul.f32 %v2476, %v2492
      %v2509 = vmul.f32 %v2477, %v2493
      %v2510 = vmul.f32 %v2478, %v2494
      %v2511 = vmul.f32 %v2479, %v2495
      %v2512 = vmul.f32 %v2480, %v2496
      %v2513 = vmul.f32 %v2481, %v2497
      %v2514 = vmul.f32 %v2482, %v2498
      %v2515 = vmul.f32 %v2483, %v2499
      %v2516 = vmul.f32 %v2500, %v2308
      %v2517 = vmul.f32 %v2501, %v2309
      %v2518 = vmul.f32 %v2502, %v2310
      %v2519 = vmul.f32 %v2503, %v2311
      %v2520 = vmul.f32 %v2504, %v2312
      %v2521 = vmul.f32 %v2505, %v2313
      %v2522 = vmul.f32 %v2506, %v2314
      %v2523 = vmul.f32 %v2507, %v2315
      %v2524 = vmul.f32 %v2508, %v2316
      %v2525 = vmul.f32 %v2509, %v2317
      %v2526 = vmul.f32 %v2510, %v2318
      %v2527 = vmul.f32 %v2511, %v2319
      %v2528 = vmul.f32 %v2512, %v2320
      %v2529 = vmul.f32 %v2513, %v2321
      %v2530 = vmul.f32 %v2514, %v2322
      %v2531 = vmul.f32 %v2515, %v2323
      %2532 = vset.pattern.permute.xlu0 2
      %2533 = vperm.xlu0 %2532, %v544
      %v2534 = vpop.permute.xlu0 %2533
      %2536 = vset.pattern.permute.xlu0 2
      %2537 = vperm.xlu0 %2536, %v547
      %v2538 = vpop.permute.xlu0 %2537
      %2540 = vset.pattern.permute.xlu0 2
      %2541 = vperm.xlu0 %2540, %v552
      %v2542 = vpop.permute.xlu0 %2541
      %2544 = vset.pattern.permute.xlu0 2
      %2545 = vperm.xlu0 %2544, %v555
      %v2546 = vpop.permute.xlu0 %2545
      %2548 = vset.pattern.permute.xlu0 2
      %2549 = vperm.xlu0 %2548, %v560
      %v2550 = vpop.permute.xlu0 %2549
      %2552 = vset.pattern.permute.xlu0 2
      %2553 = vperm.xlu0 %2552, %v563
      %v2554 = vpop.permute.xlu0 %2553
      %2556 = vset.pattern.permute.xlu0 2
      %2557 = vperm.xlu0 %2556, %v568
      %v2558 = vpop.permute.xlu0 %2557
      %2560 = vset.pattern.permute.xlu0 2
      %2561 = vperm.xlu0 %2560, %v571
      %v2562 = vpop.permute.xlu0 %2561
      %2564 = vset.pattern.permute.xlu0 2
      %2565 = vperm.xlu0 %2564, %v576
      %v2566 = vpop.permute.xlu0 %2565
      %2568 = vset.pattern.permute.xlu0 2
      %2569 = vperm.xlu0 %2568, %v579
      %v2570 = vpop.permute.xlu0 %2569
      %2572 = vset.pattern.permute.xlu0 2
      %2573 = vperm.xlu0 %2572, %v584
      %v2574 = vpop.permute.xlu0 %2573
      %2576 = vset.pattern.permute.xlu0 2
      %2577 = vperm.xlu0 %2576, %v587
      %v2578 = vpop.permute.xlu0 %2577
      %2580 = vset.pattern.permute.xlu0 2
      %2581 = vperm.xlu0 %2580, %v592
      %v2582 = vpop.permute.xlu0 %2581
      %2584 = vset.pattern.permute.xlu0 2
      %2585 = vperm.xlu0 %2584, %v595
      %v2586 = vpop.permute.xlu0 %2585
      %2588 = vset.pattern.permute.xlu0 2
      %2589 = vperm.xlu0 %2588, %v600
      %v2590 = vpop.permute.xlu0 %2589
      %2592 = vset.pattern.permute.xlu0 2
      %2593 = vperm.xlu0 %2592, %v603
      %v2594 = vpop.permute.xlu0 %2593
      %v2596 = vlaneseq
      %v2597 = vshrl.u32 %v2596, 7
      %v2598 = vsub.s32 2, %v2597
      %v2599 = vrot.slane %v644, %v2598
      %v2600 = vadd.f32 %v2534, %v2599
      %v2601 = vadd.f32 %v2538, %v2599
      %v2602 = vadd.f32 %v2542, %v2599
      %v2603 = vadd.f32 %v2546, %v2599
      %v2604 = vadd.f32 %v2550, %v2599
      %v2605 = vadd.f32 %v2554, %v2599
      %v2606 = vadd.f32 %v2558, %v2599
      %v2607 = vadd.f32 %v2562, %v2599
      %v2608 = vadd.f32 %v2566, %v2599
      %v2609 = vadd.f32 %v2570, %v2599
      %v2610 = vadd.f32 %v2574, %v2599
      %v2611 = vadd.f32 %v2578, %v2599
      %v2612 = vadd.f32 %v2582, %v2599
      %v2613 = vadd.f32 %v2586, %v2599
      %v2614 = vadd.f32 %v2590, %v2599
      %v2615 = vadd.f32 %v2594, %v2599
      %vm2616 = vcmp.gt.f32.partialorder %v2600, 0.0
      %vm2617 = vcmp.gt.f32.partialorder %v2601, 0.0
      %vm2618 = vcmp.gt.f32.partialorder %v2602, 0.0
      %vm2619 = vcmp.gt.f32.partialorder %v2603, 0.0
      %vm2620 = vcmp.gt.f32.partialorder %v2604, 0.0
      %vm2621 = vcmp.gt.f32.partialorder %v2605, 0.0
      %vm2622 = vcmp.gt.f32.partialorder %v2606, 0.0
      %vm2623 = vcmp.gt.f32.partialorder %v2607, 0.0
      %vm2624 = vcmp.gt.f32.partialorder %v2608, 0.0
      %vm2625 = vcmp.gt.f32.partialorder %v2609, 0.0
      %vm2626 = vcmp.gt.f32.partialorder %v2610, 0.0
      %vm2627 = vcmp.gt.f32.partialorder %v2611, 0.0
      %vm2628 = vcmp.gt.f32.partialorder %v2612, 0.0
      %vm2629 = vcmp.gt.f32.partialorder %v2613, 0.0
      %vm2630 = vcmp.gt.f32.partialorder %v2614, 0.0
      %vm2631 = vcmp.gt.f32.partialorder %v2615, 0.0
      %v2632 = vmul.f32 %v2600, 0.1
      %v2633 = vmul.f32 %v2601, 0.1
      %v2634 = vmul.f32 %v2602, 0.1
      %v2635 = vmul.f32 %v2603, 0.1
      %v2636 = vmul.f32 %v2604, 0.1
      %v2637 = vmul.f32 %v2605, 0.1
      %v2638 = vmul.f32 %v2606, 0.1
      %v2639 = vmul.f32 %v2607, 0.1
      %v2640 = vmul.f32 %v2608, 0.1
      %v2641 = vmul.f32 %v2609, 0.1
      %v2642 = vmul.f32 %v2610, 0.1
      %v2643 = vmul.f32 %v2611, 0.1
      %v2644 = vmul.f32 %v2612, 0.1
      %v2645 = vmul.f32 %v2613, 0.1
      %v2646 = vmul.f32 %v2614, 0.1
      %v2647 = vmul.f32 %v2615, 0.1
      %v2648 = vsel %vm2616, %v2600, %v2632
      %v2649 = vsel %vm2617, %v2601, %v2633
      %v2650 = vsel %vm2618, %v2602, %v2634
      %v2651 = vsel %vm2619, %v2603, %v2635
      %v2652 = vsel %vm2620, %v2604, %v2636
      %v2653 = vsel %vm2621, %v2605, %v2637
      %v2654 = vsel %vm2622, %v2606, %v2638
      %v2655 = vsel %vm2623, %v2607, %v2639
      %v2656 = vsel %vm2624, %v2608, %v2640
      %v2657 = vsel %vm2625, %v2609, %v2641
      %v2658 = vsel %vm2626, %v2610, %v2642
      %v2659 = vsel %vm2627, %v2611, %v2643
      %v2660 = vsel %vm2628, %v2612, %v2644
      %v2661 = vsel %vm2629, %v2613, %v2645
      %v2662 = vsel %vm2630, %v2614, %v2646
      %v2663 = vsel %vm2631, %v2615, %v2647
      %v2664 = vsel %vm797, %v2648, -9e+15
      %v2665 = vsel %vm798, %v2649, -9e+15
      %v2666 = vsel %vm799, %v2650, -9e+15
      %v2667 = vsel %vm800, %v2651, -9e+15
      %v2668 = vsel %vm801, %v2652, -9e+15
      %v2669 = vsel %vm802, %v2653, -9e+15
      %v2670 = vsel %vm803, %v2654, -9e+15
      %v2671 = vsel %vm804, %v2655, -9e+15
      %v2672 = vsel %vm805, %v2656, -9e+15
      %v2673 = vsel %vm806, %v2657, -9e+15
      %v2674 = vsel %vm807, %v2658, -9e+15
      %v2675 = vsel %vm808, %v2659, -9e+15
      %v2676 = vsel %vm809, %v2660, -9e+15
      %v2677 = vsel %vm810, %v2661, -9e+15
      %v2678 = vsel %vm811, %v2662, -9e+15
      %v2679 = vsel %vm812, %v2663, -9e+15
      %2680 = vmax.xlane.f32.xlu0 %v2664
      %v2681 = vpop.xlane.xlu0 %2680
      %2682 = vmax.xlane.f32.xlu0 %v2665
      %v2683 = vpop.xlane.xlu0 %2682
      %2684 = vmax.xlane.f32.xlu0 %v2666
      %v2685 = vpop.xlane.xlu0 %2684
      %2686 = vmax.xlane.f32.xlu0 %v2667
      %v2687 = vpop.xlane.xlu0 %2686
      %2688 = vmax.xlane.f32.xlu0 %v2668
      %v2689 = vpop.xlane.xlu0 %2688
      %2690 = vmax.xlane.f32.xlu0 %v2669
      %v2691 = vpop.xlane.xlu0 %2690
      %2692 = vmax.xlane.f32.xlu0 %v2670
      %v2693 = vpop.xlane.xlu0 %2692
      %2694 = vmax.xlane.f32.xlu0 %v2671
      %v2695 = vpop.xlane.xlu0 %2694
      %2696 = vmax.xlane.f32.xlu0 %v2672
      %v2697 = vpop.xlane.xlu0 %2696
      %2698 = vmax.xlane.f32.xlu0 %v2673
      %v2699 = vpop.xlane.xlu0 %2698
      %2700 = vmax.xlane.f32.xlu0 %v2674
      %v2701 = vpop.xlane.xlu0 %2700
      %2702 = vmax.xlane.f32.xlu0 %v2675
      %v2703 = vpop.xlane.xlu0 %2702
      %2704 = vmax.xlane.f32.xlu0 %v2676
      %v2705 = vpop.xlane.xlu0 %2704
      %2706 = vmax.xlane.f32.xlu0 %v2677
      %v2707 = vpop.xlane.xlu0 %2706
      %2708 = vmax.xlane.f32.xlu0 %v2678
      %v2709 = vpop.xlane.xlu0 %2708
      %2710 = vmax.xlane.f32.xlu0 %v2679
      %v2711 = vpop.xlane.xlu0 %2710
      %v2712 = vsub.f32 %v2664, %v2681
      %v2713 = vsub.f32 %v2665, %v2683
      %v2714 = vsub.f32 %v2666, %v2685
      %v2715 = vsub.f32 %v2667, %v2687
      %v2716 = vsub.f32 %v2668, %v2689
      %v2717 = vsub.f32 %v2669, %v2691
      %v2718 = vsub.f32 %v2670, %v2693
      %v2719 = vsub.f32 %v2671, %v2695
      %v2720 = vsub.f32 %v2672, %v2697
      %v2721 = vsub.f32 %v2673, %v2699
      %v2722 = vsub.f32 %v2674, %v2701
      %v2723 = vsub.f32 %v2675, %v2703
      %v2724 = vsub.f32 %v2676, %v2705
      %v2725 = vsub.f32 %v2677, %v2707
      %v2726 = vsub.f32 %v2678, %v2709
      %v2727 = vsub.f32 %v2679, %v2711
      %v2728 = vmul.f32 %v2712, 1.442695
      %v2729 = vpow.pop %v2728
      %v2730 = vmul.f32 %v2713, 1.442695
      %v2731 = vpow.pop %v2730
      %v2732 = vmul.f32 %v2714, 1.442695
      %v2733 = vpow.pop %v2732
      %v2734 = vmul.f32 %v2715, 1.442695
      %v2735 = vpow.pop %v2734
      %v2736 = vmul.f32 %v2716, 1.442695
      %v2737 = vpow.pop %v2736
      %v2738 = vmul.f32 %v2717, 1.442695
      %v2739 = vpow.pop %v2738
      %v2740 = vmul.f32 %v2718, 1.442695
      %v2741 = vpow.pop %v2740
      %v2742 = vmul.f32 %v2719, 1.442695
      %v2743 = vpow.pop %v2742
      %v2744 = vmul.f32 %v2720, 1.442695
      %v2745 = vpow.pop %v2744
      %v2746 = vmul.f32 %v2721, 1.442695
      %v2747 = vpow.pop %v2746
      %v2748 = vmul.f32 %v2722, 1.442695
      %v2749 = vpow.pop %v2748
      %v2750 = vmul.f32 %v2723, 1.442695
      %v2751 = vpow.pop %v2750
      %v2752 = vmul.f32 %v2724, 1.442695
      %v2753 = vpow.pop %v2752
      %v2754 = vmul.f32 %v2725, 1.442695
      %v2755 = vpow.pop %v2754
      %v2756 = vmul.f32 %v2726, 1.442695
      %v2757 = vpow.pop %v2756
      %v2758 = vmul.f32 %v2727, 1.442695
      %v2759 = vpow.pop %v2758
      %2760 = vadd.xlane.f32.xlu0 %v2729
      %v2761 = vpop.xlane.xlu0 %2760
      %2762 = vadd.xlane.f32.xlu0 %v2731
      %v2763 = vpop.xlane.xlu0 %2762
      %2764 = vadd.xlane.f32.xlu0 %v2733
      %v2765 = vpop.xlane.xlu0 %2764
      %2766 = vadd.xlane.f32.xlu0 %v2735
      %v2767 = vpop.xlane.xlu0 %2766
      %2768 = vadd.xlane.f32.xlu0 %v2737
      %v2769 = vpop.xlane.xlu0 %2768
      %2770 = vadd.xlane.f32.xlu0 %v2739
      %v2771 = vpop.xlane.xlu0 %2770
      %2772 = vadd.xlane.f32.xlu0 %v2741
      %v2773 = vpop.xlane.xlu0 %2772
      %2774 = vadd.xlane.f32.xlu0 %v2743
      %v2775 = vpop.xlane.xlu0 %2774
      %2776 = vadd.xlane.f32.xlu0 %v2745
      %v2777 = vpop.xlane.xlu0 %2776
      %2778 = vadd.xlane.f32.xlu0 %v2747
      %v2779 = vpop.xlane.xlu0 %2778
      %2780 = vadd.xlane.f32.xlu0 %v2749
      %v2781 = vpop.xlane.xlu0 %2780
      %2782 = vadd.xlane.f32.xlu0 %v2751
      %v2783 = vpop.xlane.xlu0 %2782
      %2784 = vadd.xlane.f32.xlu0 %v2753
      %v2785 = vpop.xlane.xlu0 %2784
      %2786 = vadd.xlane.f32.xlu0 %v2755
      %v2787 = vpop.xlane.xlu0 %2786
      %2788 = vadd.xlane.f32.xlu0 %v2757
      %v2789 = vpop.xlane.xlu0 %2788
      %2790 = vadd.xlane.f32.xlu0 %v2759
      %v2791 = vpop.xlane.xlu0 %2790
      %v2792 = vrcp.pop %v2761
      %v2793 = vrcp.pop %v2763
      %v2794 = vrcp.pop %v2765
      %v2795 = vrcp.pop %v2767
      %v2796 = vrcp.pop %v2769
      %v2797 = vrcp.pop %v2771
      %v2798 = vrcp.pop %v2773
      %v2799 = vrcp.pop %v2775
      %v2800 = vrcp.pop %v2777
      %v2801 = vrcp.pop %v2779
      %v2802 = vrcp.pop %v2781
      %v2803 = vrcp.pop %v2783
      %v2804 = vrcp.pop %v2785
      %v2805 = vrcp.pop %v2787
      %v2806 = vrcp.pop %v2789
      %v2807 = vrcp.pop %v2791
      %v2808 = vmul.f32 %v2729, %v2792
      %v2809 = vmul.f32 %v2731, %v2793
      %v2810 = vmul.f32 %v2733, %v2794
      %v2811 = vmul.f32 %v2735, %v2795
      %v2812 = vmul.f32 %v2737, %v2796
      %v2813 = vmul.f32 %v2739, %v2797
      %v2814 = vmul.f32 %v2741, %v2798
      %v2815 = vmul.f32 %v2743, %v2799
      %v2816 = vmul.f32 %v2745, %v2800
      %v2817 = vmul.f32 %v2747, %v2801
      %v2818 = vmul.f32 %v2749, %v2802
      %v2819 = vmul.f32 %v2751, %v2803
      %v2820 = vmul.f32 %v2753, %v2804
      %v2821 = vmul.f32 %v2755, %v2805
      %v2822 = vmul.f32 %v2757, %v2806
      %v2823 = vmul.f32 %v2759, %v2807
      %v2824 = vpack.c.bf16 %v2809, %v2808
      %v2825 = vpack.c.bf16 %v2811, %v2810
      %v2826 = vpack.c.bf16 %v2813, %v2812
      %v2827 = vpack.c.bf16 %v2815, %v2814
      %v2828 = vpack.c.bf16 %v2817, %v2816
      %v2829 = vpack.c.bf16 %v2819, %v2818
      %v2830 = vpack.c.bf16 %v2821, %v2820
      %v2831 = vpack.c.bf16 %v2823, %v2822
      %2832 = vrot.lane.b32.xlu0 %v476, 112
      %v2833 = vpop.permute.xlu0 %2832
      %2834 = vrot.lane.b32.xlu0 %v477, 112
      %v2835 = vpop.permute.xlu0 %2834
      %2836 = vrot.lane.b32.xlu0 %v478, 112
      %v2837 = vpop.permute.xlu0 %2836
      %2838 = vrot.lane.b32.xlu0 %v479, 112
      %v2839 = vpop.permute.xlu0 %2838
      %2840 = vrot.lane.b32.xlu0 %v480, 112
      %v2841 = vpop.permute.xlu0 %2840
      %2842 = vrot.lane.b32.xlu0 %v481, 112
      %v2843 = vpop.permute.xlu0 %2842
      %2844 = vrot.lane.b32.xlu0 %v482, 112
      %v2845 = vpop.permute.xlu0 %2844
      %2846 = vrot.lane.b32.xlu0 %v483, 112
      %v2847 = vpop.permute.xlu0 %2846
      %2856 = vmatprep.subr.bf16.mxu0 0
      %2857 = vmatpush1.bf16.msra.mxu0 %v2833
      %2858 = vmatprep.subr.bf16.mxu0 0
      %2859 = vmatpush1.bf16.msra.mxu0 %v2835
      %2860 = vmatprep.subr.bf16.mxu0 0
      %2861 = vmatpush1.bf16.msra.mxu0 %v2837
      %2862 = vmatprep.subr.bf16.mxu0 0
      %2863 = vmatpush1.bf16.msra.mxu0 %v2839
      %2864 = vmatprep.subr.bf16.mxu0 0
      %2865 = vmatpush1.bf16.msra.mxu0 %v2841
      %2866 = vmatprep.subr.bf16.mxu0 0
      %2867 = vmatpush1.bf16.msra.mxu0 %v2843
      %2868 = vmatprep.subr.bf16.mxu0 0
      %2869 = vmatpush1.bf16.msra.mxu0 %v2845
      %2870 = vmatprep.subr.bf16.mxu0 0
      %2871 = vmatpush1.bf16.msra.mxu0 %v2847
      %2872 = vmatprep.subr.bf16.mxu0 0
      %2873 = vmatpush1.bf16.msra.mxu0 0
      %2874 = vmatprep.subr.bf16.mxu0 0
      %2875 = vmatpush1.bf16.msra.mxu0 0
      %2876 = vmatprep.subr.bf16.mxu0 0
      %2877 = vmatpush1.bf16.msra.mxu0 0
      %2878 = vmatprep.subr.bf16.mxu0 0
      %2879 = vmatpush1.bf16.msra.mxu0 0
      %2880 = vmatprep.subr.bf16.mxu0 0
      %2881 = vmatpush1.bf16.msra.mxu0 0
      %2882 = vmatprep.subr.bf16.mxu0 0
      %2883 = vmatpush1.bf16.msra.mxu0 0
      %2884 = vmatprep.subr.bf16.mxu0 0
      %2885 = vmatpush1.bf16.msra.mxu0 0
      %2886 = vmatprep.subr.bf16.mxu0 0
      %2887 = vmatpush1.bf16.msra.mxu0 0
      %2888 = vmatprep.mubr.bf16.mxu0 0
      %2889 = vmatmul.mubr.bf16.gmra.mrb[0].mxu0 %v2824
      %v2890 = vpop.f32.mrb[0].mxu0
      %v2891 = vadd.f32 0.0, %v2890
      %v2892 = vpop.f32.mrb[0].mxu0
      %v2893 = vpop.f32.mrb[0].mxu0
      %v2894 = vadd.f32 0.0, %v2893
      %v2895 = vpop.f32.mrb[0].mxu0
      %2896 = vmatprep.mubr.bf16.mxu0 0
      %2897 = vmatmul.mubr.bf16.gmra.mrb[0].mxu0 %v2825
      %v2898 = vpop.f32.mrb[0].mxu0
      %v2899 = vadd.f32 0.0, %v2898
      %v2900 = vpop.f32.mrb[0].mxu0
      %v2901 = vpop.f32.mrb[0].mxu0
      %v2902 = vadd.f32 0.0, %v2901
      %v2903 = vpop.f32.mrb[0].mxu0
      %2904 = vmatprep.mubr.bf16.mxu0 0
      %2905 = vmatmul.mubr.bf16.gmra.mrb[0].mxu0 %v2826
      %v2906 = vpop.f32.mrb[0].mxu0
      %v2907 = vadd.f32 0.0, %v2906
      %v2908 = vpop.f32.mrb[0].mxu0
      %v2909 = vpop.f32.mrb[0].mxu0
      %v2910 = vadd.f32 0.0, %v2909
      %v2911 = vpop.f32.mrb[0].mxu0
      %2912 = vmatprep.mubr.bf16.mxu0 0
      %2913 = vmatmul.mubr.bf16.gmra.mrb[0].mxu0 %v2827
      %v2914 = vpop.f32.mrb[0].mxu0
      %v2915 = vadd.f32 0.0, %v2914
      %v2916 = vpop.f32.mrb[0].mxu0
      %v2917 = vpop.f32.mrb[0].mxu0
      %v2918 = vadd.f32 0.0, %v2917
      %v2919 = vpop.f32.mrb[0].mxu0
      %2920 = vmatprep.mubr.bf16.mxu0 0
      %2921 = vmatmul.mubr.bf16.gmra.mrb[0].mxu0 %v2828
      %v2922 = vpop.f32.mrb[0].mxu0
      %v2923 = vadd.f32 0.0, %v2922
      %v2924 = vpop.f32.mrb[0].mxu0
      %v2925 = vpop.f32.mrb[0].mxu0
      %v2926 = vadd.f32 0.0, %v2925
      %v2927 = vpop.f32.mrb[0].mxu0
      %2928 = vmatprep.mubr.bf16.mxu0 0
      %2929 = vmatmul.mubr.bf16.gmra.mrb[0].mxu0 %v2829
      %v2930 = vpop.f32.mrb[0].mxu0
      %v2931 = vadd.f32 0.0, %v2930
      %v2932 = vpop.f32.mrb[0].mxu0
      %v2933 = vpop.f32.mrb[0].mxu0
      %v2934 = vadd.f32 0.0, %v2933
      %v2935 = vpop.f32.mrb[0].mxu0
      %2936 = vmatprep.mubr.bf16.mxu0 0
      %2937 = vmatmul.mubr.bf16.gmra.mrb[0].mxu0 %v2830
      %v2938 = vpop.f32.mrb[0].mxu0
      %v2939 = vadd.f32 0.0, %v2938
      %v2940 = vpop.f32.mrb[0].mxu0
      %v2941 = vpop.f32.mrb[0].mxu0
      %v2942 = vadd.f32 0.0, %v2941
      %v2943 = vpop.f32.mrb[0].mxu0
      %2944 = vmatprep.mubr.bf16.mxu0 0
      %2945 = vmatmul.mubr.bf16.gmra.mrb[0].mxu0 %v2831
      %v2946 = vpop.f32.mrb[0].mxu0
      %v2947 = vadd.f32 0.0, %v2946
      %v2948 = vpop.f32.mrb[0].mxu0
      %v2949 = vpop.f32.mrb[0].mxu0
      %v2950 = vadd.f32 0.0, %v2949
      %v2951 = vpop.f32.mrb[0].mxu0
      %2952 = vdwg.mxu0
      %v2953 = vmul.f32 %v2891, %v2891
      %v2954 = vmul.f32 %v2894, %v2894
      %v2955 = vmul.f32 %v2899, %v2899
      %v2956 = vmul.f32 %v2902, %v2902
      %v2957 = vmul.f32 %v2907, %v2907
      %v2958 = vmul.f32 %v2910, %v2910
      %v2959 = vmul.f32 %v2915, %v2915
      %v2960 = vmul.f32 %v2918, %v2918
      %v2961 = vmul.f32 %v2923, %v2923
      %v2962 = vmul.f32 %v2926, %v2926
      %v2963 = vmul.f32 %v2931, %v2931
      %v2964 = vmul.f32 %v2934, %v2934
      %v2965 = vmul.f32 %v2939, %v2939
      %v2966 = vmul.f32 %v2942, %v2942
      %v2967 = vmul.f32 %v2947, %v2947
      %v2968 = vmul.f32 %v2950, %v2950
      %v2969 = vsel %vm1094, %v2953, 0.0
      %2970 = vadd.xlane.f32.xlu0 %v2969
      %v2971 = vpop.xlane.xlu0 %2970
      %v2972 = vsel %vm1094, %v2954, 0.0
      %2973 = vadd.xlane.f32.xlu0 %v2972
      %v2974 = vpop.xlane.xlu0 %2973
      %v2975 = vsel %vm1094, %v2955, 0.0
      %2976 = vadd.xlane.f32.xlu0 %v2975
      %v2977 = vpop.xlane.xlu0 %2976
      %v2978 = vsel %vm1094, %v2956, 0.0
      %2979 = vadd.xlane.f32.xlu0 %v2978
      %v2980 = vpop.xlane.xlu0 %2979
      %v2981 = vsel %vm1094, %v2957, 0.0
      %2982 = vadd.xlane.f32.xlu0 %v2981
      %v2983 = vpop.xlane.xlu0 %2982
      %v2984 = vsel %vm1094, %v2958, 0.0
      %2985 = vadd.xlane.f32.xlu0 %v2984
      %v2986 = vpop.xlane.xlu0 %2985
      %v2987 = vsel %vm1094, %v2959, 0.0
      %2988 = vadd.xlane.f32.xlu0 %v2987
      %v2989 = vpop.xlane.xlu0 %2988
      %v2990 = vsel %vm1094, %v2960, 0.0
      %2991 = vadd.xlane.f32.xlu0 %v2990
      %v2992 = vpop.xlane.xlu0 %2991
      %v2993 = vsel %vm1094, %v2961, 0.0
      %2994 = vadd.xlane.f32.xlu0 %v2993
      %v2995 = vpop.xlane.xlu0 %2994
      %v2996 = vsel %vm1094, %v2962, 0.0
      %2997 = vadd.xlane.f32.xlu0 %v2996
      %v2998 = vpop.xlane.xlu0 %2997
      %v2999 = vsel %vm1094, %v2963, 0.0
      %3000 = vadd.xlane.f32.xlu0 %v2999
      %v3001 = vpop.xlane.xlu0 %3000
      %v3002 = vsel %vm1094, %v2964, 0.0
      %3003 = vadd.xlane.f32.xlu0 %v3002
      %v3004 = vpop.xlane.xlu0 %3003
      %v3005 = vsel %vm1094, %v2965, 0.0
      %3006 = vadd.xlane.f32.xlu0 %v3005
      %v3007 = vpop.xlane.xlu0 %3006
      %v3008 = vsel %vm1094, %v2966, 0.0
      %3009 = vadd.xlane.f32.xlu0 %v3008
      %v3010 = vpop.xlane.xlu0 %3009
      %v3011 = vsel %vm1094, %v2967, 0.0
      %3012 = vadd.xlane.f32.xlu0 %v3011
      %v3013 = vpop.xlane.xlu0 %3012
      %v3014 = vsel %vm1094, %v2968, 0.0
      %3015 = vadd.xlane.f32.xlu0 %v3014
      %v3016 = vpop.xlane.xlu0 %3015
      %v3017 = vrsqrt.pop %v2971
      %v3018 = vmul.f32 %v2971, %v3017
      %vm3019 = vcmp.eq.f32.partialorder %v2971, inf
      %v3020 = vsel %vm3019, %v2971, %v3018
      %vm3021 = vcmp.eq.f32.partialorder %v2971, 0.0
      %v3022 = vand.u32 %v2971, 2147483648
      %v3023 = vsel %vm3021, %v3022, %v3020
      %v3024 = vrsqrt.pop %v2974
      %v3025 = vmul.f32 %v2974, %v3024
      %vm3026 = vcmp.eq.f32.partialorder %v2974, inf
      %v3027 = vsel %vm3026, %v2974, %v3025
      %vm3028 = vcmp.eq.f32.partialorder %v2974, 0.0
      %v3029 = vand.u32 %v2974, 2147483648
      %v3030 = vsel %vm3028, %v3029, %v3027
      %v3031 = vrsqrt.pop %v2977
      %v3032 = vmul.f32 %v2977, %v3031
      %vm3033 = vcmp.eq.f32.partialorder %v2977, inf
      %v3034 = vsel %vm3033, %v2977, %v3032
      %vm3035 = vcmp.eq.f32.partialorder %v2977, 0.0
      %v3036 = vand.u32 %v2977, 2147483648
      %v3037 = vsel %vm3035, %v3036, %v3034
      %v3038 = vrsqrt.pop %v2980
      %v3039 = vmul.f32 %v2980, %v3038
      %vm3040 = vcmp.eq.f32.partialorder %v2980, inf
      %v3041 = vsel %vm3040, %v2980, %v3039
      %vm3042 = vcmp.eq.f32.partialorder %v2980, 0.0
      %v3043 = vand.u32 %v2980, 2147483648
      %v3044 = vsel %vm3042, %v3043, %v3041
      %v3045 = vrsqrt.pop %v2983
      %v3046 = vmul.f32 %v2983, %v3045
      %vm3047 = vcmp.eq.f32.partialorder %v2983, inf
      %v3048 = vsel %vm3047, %v2983, %v3046
      %vm3049 = vcmp.eq.f32.partialorder %v2983, 0.0
      %v3050 = vand.u32 %v2983, 2147483648
      %v3051 = vsel %vm3049, %v3050, %v3048
      %v3052 = vrsqrt.pop %v2986
      %v3053 = vmul.f32 %v2986, %v3052
      %vm3054 = vcmp.eq.f32.partialorder %v2986, inf
      %v3055 = vsel %vm3054, %v2986, %v3053
      %vm3056 = vcmp.eq.f32.partialorder %v2986, 0.0
      %v3057 = vand.u32 %v2986, 2147483648
      %v3058 = vsel %vm3056, %v3057, %v3055
      %v3059 = vrsqrt.pop %v2989
      %v3060 = vmul.f32 %v2989, %v3059
      %vm3061 = vcmp.eq.f32.partialorder %v2989, inf
      %v3062 = vsel %vm3061, %v2989, %v3060
      %vm3063 = vcmp.eq.f32.partialorder %v2989, 0.0
      %v3064 = vand.u32 %v2989, 2147483648
      %v3065 = vsel %vm3063, %v3064, %v3062
      %v3066 = vrsqrt.pop %v2992
      %v3067 = vmul.f32 %v2992, %v3066
      %vm3068 = vcmp.eq.f32.partialorder %v2992, inf
      %v3069 = vsel %vm3068, %v2992, %v3067
      %vm3070 = vcmp.eq.f32.partialorder %v2992, 0.0
      %v3071 = vand.u32 %v2992, 2147483648
      %v3072 = vsel %vm3070, %v3071, %v3069
      %v3073 = vrsqrt.pop %v2995
      %v3074 = vmul.f32 %v2995, %v3073
      %vm3075 = vcmp.eq.f32.partialorder %v2995, inf
      %v3076 = vsel %vm3075, %v2995, %v3074
      %vm3077 = vcmp.eq.f32.partialorder %v2995, 0.0
      %v3078 = vand.u32 %v2995, 2147483648
      %v3079 = vsel %vm3077, %v3078, %v3076
      %v3080 = vrsqrt.pop %v2998
      %v3081 = vmul.f32 %v2998, %v3080
      %vm3082 = vcmp.eq.f32.partialorder %v2998, inf
      %v3083 = vsel %vm3082, %v2998, %v3081
      %vm3084 = vcmp.eq.f32.partialorder %v2998, 0.0
      %v3085 = vand.u32 %v2998, 2147483648
      %v3086 = vsel %vm3084, %v3085, %v3083
      %v3087 = vrsqrt.pop %v3001
      %v3088 = vmul.f32 %v3001, %v3087
      %vm3089 = vcmp.eq.f32.partialorder %v3001, inf
      %v3090 = vsel %vm3089, %v3001, %v3088
      %vm3091 = vcmp.eq.f32.partialorder %v3001, 0.0
      %v3092 = vand.u32 %v3001, 2147483648
      %v3093 = vsel %vm3091, %v3092, %v3090
      %v3094 = vrsqrt.pop %v3004
      %v3095 = vmul.f32 %v3004, %v3094
      %vm3096 = vcmp.eq.f32.partialorder %v3004, inf
      %v3097 = vsel %vm3096, %v3004, %v3095
      %vm3098 = vcmp.eq.f32.partialorder %v3004, 0.0
      %v3099 = vand.u32 %v3004, 2147483648
      %v3100 = vsel %vm3098, %v3099, %v3097
      %v3101 = vrsqrt.pop %v3007
      %v3102 = vmul.f32 %v3007, %v3101
      %vm3103 = vcmp.eq.f32.partialorder %v3007, inf
      %v3104 = vsel %vm3103, %v3007, %v3102
      %vm3105 = vcmp.eq.f32.partialorder %v3007, 0.0
      %v3106 = vand.u32 %v3007, 2147483648
      %v3107 = vsel %vm3105, %v3106, %v3104
      %v3108 = vrsqrt.pop %v3010
      %v3109 = vmul.f32 %v3010, %v3108
      %vm3110 = vcmp.eq.f32.partialorder %v3010, inf
      %v3111 = vsel %vm3110, %v3010, %v3109
      %vm3112 = vcmp.eq.f32.partialorder %v3010, 0.0
      %v3113 = vand.u32 %v3010, 2147483648
      %v3114 = vsel %vm3112, %v3113, %v3111
      %v3115 = vrsqrt.pop %v3013
      %v3116 = vmul.f32 %v3013, %v3115
      %vm3117 = vcmp.eq.f32.partialorder %v3013, inf
      %v3118 = vsel %vm3117, %v3013, %v3116
      %vm3119 = vcmp.eq.f32.partialorder %v3013, 0.0
      %v3120 = vand.u32 %v3013, 2147483648
      %v3121 = vsel %vm3119, %v3120, %v3118
      %v3122 = vrsqrt.pop %v3016
      %v3123 = vmul.f32 %v3016, %v3122
      %vm3124 = vcmp.eq.f32.partialorder %v3016, inf
      %v3125 = vsel %vm3124, %v3016, %v3123
      %vm3126 = vcmp.eq.f32.partialorder %v3016, 0.0
      %v3127 = vand.u32 %v3016, 2147483648
      %v3128 = vsel %vm3126, %v3127, %v3125
      %v3129 = vmax.f32 %v3023, 1e-15
      %v3130 = vmax.f32 %v3030, 1e-15
      %v3131 = vmax.f32 %v3037, 1e-15
      %v3132 = vmax.f32 %v3044, 1e-15
      %v3133 = vmax.f32 %v3051, 1e-15
      %v3134 = vmax.f32 %v3058, 1e-15
      %v3135 = vmax.f32 %v3065, 1e-15
      %v3136 = vmax.f32 %v3072, 1e-15
      %v3137 = vmax.f32 %v3079, 1e-15
      %v3138 = vmax.f32 %v3086, 1e-15
      %v3139 = vmax.f32 %v3093, 1e-15
      %v3140 = vmax.f32 %v3100, 1e-15
      %v3141 = vmax.f32 %v3107, 1e-15
      %v3142 = vmax.f32 %v3114, 1e-15
      %v3143 = vmax.f32 %v3121, 1e-15
      %v3144 = vmax.f32 %v3128, 1e-15
      %vm3145 = vcmp.gt.f32.partialorder %v3129, 0.996
      %vm3146 = vcmp.gt.f32.partialorder %v3130, 0.996
      %vm3147 = vcmp.gt.f32.partialorder %v3131, 0.996
      %vm3148 = vcmp.gt.f32.partialorder %v3132, 0.996
      %vm3149 = vcmp.gt.f32.partialorder %v3133, 0.996
      %vm3150 = vcmp.gt.f32.partialorder %v3134, 0.996
      %vm3151 = vcmp.gt.f32.partialorder %v3135, 0.996
      %vm3152 = vcmp.gt.f32.partialorder %v3136, 0.996
      %vm3153 = vcmp.gt.f32.partialorder %v3137, 0.996
      %vm3154 = vcmp.gt.f32.partialorder %v3138, 0.996
      %vm3155 = vcmp.gt.f32.partialorder %v3139, 0.996
      %vm3156 = vcmp.gt.f32.partialorder %v3140, 0.996
      %vm3157 = vcmp.gt.f32.partialorder %v3141, 0.996
      %vm3158 = vcmp.gt.f32.partialorder %v3142, 0.996
      %vm3159 = vcmp.gt.f32.partialorder %v3143, 0.996
      %vm3160 = vcmp.gt.f32.partialorder %v3144, 0.996
      %v3161 = vrcp.pop %v3129
      %v3162 = vmul.f32 %v2891, %v3161
      %v3163 = vrcp.pop %v3130
      %v3164 = vmul.f32 %v2894, %v3163
      %v3165 = vrcp.pop %v3131
      %v3166 = vmul.f32 %v2899, %v3165
      %v3167 = vrcp.pop %v3132
      %v3168 = vmul.f32 %v2902, %v3167
      %v3169 = vrcp.pop %v3133
      %v3170 = vmul.f32 %v2907, %v3169
      %v3171 = vrcp.pop %v3134
      %v3172 = vmul.f32 %v2910, %v3171
      %v3173 = vrcp.pop %v3135
      %v3174 = vmul.f32 %v2915, %v3173
      %v3175 = vrcp.pop %v3136
      %v3176 = vmul.f32 %v2918, %v3175
      %v3177 = vrcp.pop %v3137
      %v3178 = vmul.f32 %v2923, %v3177
      %v3179 = vrcp.pop %v3138
      %v3180 = vmul.f32 %v2926, %v3179
      %v3181 = vrcp.pop %v3139
      %v3182 = vmul.f32 %v2931, %v3181
      %v3183 = vrcp.pop %v3140
      %v3184 = vmul.f32 %v2934, %v3183
      %v3185 = vrcp.pop %v3141
      %v3186 = vmul.f32 %v2939, %v3185
      %v3187 = vrcp.pop %v3142
      %v3188 = vmul.f32 %v2942, %v3187
      %v3189 = vrcp.pop %v3143
      %v3190 = vmul.f32 %v2947, %v3189
      %v3191 = vrcp.pop %v3144
      %v3192 = vmul.f32 %v2950, %v3191
      %v3193 = vmul.f32 %v3162, 0.996
      %v3194 = vmul.f32 %v3164, 0.996
      %v3195 = vmul.f32 %v3166, 0.996
      %v3196 = vmul.f32 %v3168, 0.996
      %v3197 = vmul.f32 %v3170, 0.996
      %v3198 = vmul.f32 %v3172, 0.996
      %v3199 = vmul.f32 %v3174, 0.996
      %v3200 = vmul.f32 %v3176, 0.996
      %v3201 = vmul.f32 %v3178, 0.996
      %v3202 = vmul.f32 %v3180, 0.996
      %v3203 = vmul.f32 %v3182, 0.996
      %v3204 = vmul.f32 %v3184, 0.996
      %v3205 = vmul.f32 %v3186, 0.996
      %v3206 = vmul.f32 %v3188, 0.996
      %v3207 = vmul.f32 %v3190, 0.996
      %v3208 = vmul.f32 %v3192, 0.996
      %v3209 = vsel %vm3145, 1, 0
      %v3210 = vsel %vm3146, 1, 0
      %v3211 = vsel %vm3147, 1, 0
      %v3212 = vsel %vm3148, 1, 0
      %v3213 = vsel %vm3149, 1, 0
      %v3214 = vsel %vm3150, 1, 0
      %v3215 = vsel %vm3151, 1, 0
      %v3216 = vsel %vm3152, 1, 0
      %v3217 = vsel %vm3153, 1, 0
      %v3218 = vsel %vm3154, 1, 0
      %v3219 = vsel %vm3155, 1, 0
      %v3220 = vsel %vm3156, 1, 0
      %v3221 = vsel %vm3157, 1, 0
      %v3222 = vsel %vm3158, 1, 0
      %v3223 = vsel %vm3159, 1, 0
      %v3224 = vsel %vm3160, 1, 0
      %vm3225 = vcmp.eq.s32.totalorder %v3209, 1
      %vm3226 = vcmp.eq.s32.totalorder %v3210, 1
      %vm3227 = vcmp.eq.s32.totalorder %v3211, 1
      %vm3228 = vcmp.eq.s32.totalorder %v3212, 1
      %vm3229 = vcmp.eq.s32.totalorder %v3213, 1
      %vm3230 = vcmp.eq.s32.totalorder %v3214, 1
      %vm3231 = vcmp.eq.s32.totalorder %v3215, 1
      %vm3232 = vcmp.eq.s32.totalorder %v3216, 1
      %vm3233 = vcmp.eq.s32.totalorder %v3217, 1
      %vm3234 = vcmp.eq.s32.totalorder %v3218, 1
      %vm3235 = vcmp.eq.s32.totalorder %v3219, 1
      %vm3236 = vcmp.eq.s32.totalorder %v3220, 1
      %vm3237 = vcmp.eq.s32.totalorder %v3221, 1
      %vm3238 = vcmp.eq.s32.totalorder %v3222, 1
      %vm3239 = vcmp.eq.s32.totalorder %v3223, 1
      %vm3240 = vcmp.eq.s32.totalorder %v3224, 1
      %v3241 = vsel %vm3225, %v3193, %v2891
      %v3242 = vsel %vm3226, %v3194, %v2894
      %v3243 = vsel %vm3227, %v3195, %v2899
      %v3244 = vsel %vm3228, %v3196, %v2902
      %v3245 = vsel %vm3229, %v3197, %v2907
      %v3246 = vsel %vm3230, %v3198, %v2910
      %v3247 = vsel %vm3231, %v3199, %v2915
      %v3248 = vsel %vm3232, %v3200, %v2918
      %v3249 = vsel %vm3233, %v3201, %v2923
      %v3250 = vsel %vm3234, %v3202, %v2926
      %v3251 = vsel %vm3235, %v3203, %v2931
      %v3252 = vsel %vm3236, %v3204, %v2934
      %v3253 = vsel %vm3237, %v3205, %v2939
      %v3254 = vsel %vm3238, %v3206, %v2942
      %v3255 = vsel %vm3239, %v3207, %v2947
      %v3256 = vsel %vm3240, %v3208, %v2950
      %v3257 = vmin.f32 %v3129, 0.996
      %v3258 = vmin.f32 %v3130, 0.996
      %v3259 = vmin.f32 %v3131, 0.996
      %v3260 = vmin.f32 %v3132, 0.996
      %v3261 = vmin.f32 %v3133, 0.996
      %v3262 = vmin.f32 %v3134, 0.996
      %v3263 = vmin.f32 %v3135, 0.996
      %v3264 = vmin.f32 %v3136, 0.996
      %v3265 = vmin.f32 %v3137, 0.996
      %v3266 = vmin.f32 %v3138, 0.996
      %v3267 = vmin.f32 %v3139, 0.996
      %v3268 = vmin.f32 %v3140, 0.996
      %v3269 = vmin.f32 %v3141, 0.996
      %v3270 = vmin.f32 %v3142, 0.996
      %v3271 = vmin.f32 %v3143, 0.996
      %v3272 = vmin.f32 %v3144, 0.996
      %v3273 = vmax.f32 %v3257, -0.9999999
      %v3274 = vmax.f32 %v3258, -0.9999999
      %v3275 = vmax.f32 %v3259, -0.9999999
      %v3276 = vmax.f32 %v3260, -0.9999999
      %v3277 = vmax.f32 %v3261, -0.9999999
      %v3278 = vmax.f32 %v3262, -0.9999999
      %v3279 = vmax.f32 %v3263, -0.9999999
      %v3280 = vmax.f32 %v3264, -0.9999999
      %v3281 = vmax.f32 %v3265, -0.9999999
      %v3282 = vmax.f32 %v3266, -0.9999999
      %v3283 = vmax.f32 %v3267, -0.9999999
      %v3284 = vmax.f32 %v3268, -0.9999999
      %v3285 = vmax.f32 %v3269, -0.9999999
      %v3286 = vmax.f32 %v3270, -0.9999999
      %v3287 = vmax.f32 %v3271, -0.9999999
      %v3288 = vmax.f32 %v3272, -0.9999999
      %v3289 = vmin.f32 %v3273, 0.9999999
      %v3290 = vmin.f32 %v3274, 0.9999999
      %v3291 = vmin.f32 %v3275, 0.9999999
      %v3292 = vmin.f32 %v3276, 0.9999999
      %v3293 = vmin.f32 %v3277, 0.9999999
      %v3294 = vmin.f32 %v3278, 0.9999999
      %v3295 = vmin.f32 %v3279, 0.9999999
      %v3296 = vmin.f32 %v3280, 0.9999999
      %v3297 = vmin.f32 %v3281, 0.9999999
      %v3298 = vmin.f32 %v3282, 0.9999999
      %v3299 = vmin.f32 %v3283, 0.9999999
      %v3300 = vmin.f32 %v3284, 0.9999999
      %v3301 = vmin.f32 %v3285, 0.9999999
      %v3302 = vmin.f32 %v3286, 0.9999999
      %v3303 = vmin.f32 %v3287, 0.9999999
      %v3304 = vmin.f32 %v3288, 0.9999999
      %v3305 = vadd.f32 %v3289, 1.0
      %v3306 = vadd.f32 %v3290, 1.0
      %v3307 = vadd.f32 %v3291, 1.0
      %v3308 = vadd.f32 %v3292, 1.0
      %v3309 = vadd.f32 %v3293, 1.0
      %v3310 = vadd.f32 %v3294, 1.0
      %v3311 = vadd.f32 %v3295, 1.0
      %v3312 = vadd.f32 %v3296, 1.0
      %v3313 = vadd.f32 %v3297, 1.0
      %v3314 = vadd.f32 %v3298, 1.0
      %v3315 = vadd.f32 %v3299, 1.0
      %v3316 = vadd.f32 %v3300, 1.0
      %v3317 = vadd.f32 %v3301, 1.0
      %v3318 = vadd.f32 %v3302, 1.0
      %v3319 = vadd.f32 %v3303, 1.0
      %v3320 = vadd.f32 %v3304, 1.0
      %v3321 = vsub.f32 1.0, %v3289
      %v3322 = vsub.f32 1.0, %v3290
      %v3323 = vsub.f32 1.0, %v3291
      %v3324 = vsub.f32 1.0, %v3292
      %v3325 = vsub.f32 1.0, %v3293
      %v3326 = vsub.f32 1.0, %v3294
      %v3327 = vsub.f32 1.0, %v3295
      %v3328 = vsub.f32 1.0, %v3296
      %v3329 = vsub.f32 1.0, %v3297
      %v3330 = vsub.f32 1.0, %v3298
      %v3331 = vsub.f32 1.0, %v3299
      %v3332 = vsub.f32 1.0, %v3300
      %v3333 = vsub.f32 1.0, %v3301
      %v3334 = vsub.f32 1.0, %v3302
      %v3335 = vsub.f32 1.0, %v3303
      %v3336 = vsub.f32 1.0, %v3304
      %v3337 = vrcp.pop %v3321
      %v3338 = vmul.f32 %v3305, %v3337
      %v3339 = vrcp.pop %v3322
      %v3340 = vmul.f32 %v3306, %v3339
      %v3341 = vrcp.pop %v3323
      %v3342 = vmul.f32 %v3307, %v3341
      %v3343 = vrcp.pop %v3324
      %v3344 = vmul.f32 %v3308, %v3343
      %v3345 = vrcp.pop %v3325
      %v3346 = vmul.f32 %v3309, %v3345
      %v3347 = vrcp.pop %v3326
      %v3348 = vmul.f32 %v3310, %v3347
      %v3349 = vrcp.pop %v3327
      %v3350 = vmul.f32 %v3311, %v3349
      %v3351 = vrcp.pop %v3328
      %v3352 = vmul.f32 %v3312, %v3351
      %v3353 = vrcp.pop %v3329
      %v3354 = vmul.f32 %v3313, %v3353
      %v3355 = vrcp.pop %v3330
      %v3356 = vmul.f32 %v3314, %v3355
      %v3357 = vrcp.pop %v3331
      %v3358 = vmul.f32 %v3315, %v3357
      %v3359 = vrcp.pop %v3332
      %v3360 = vmul.f32 %v3316, %v3359
      %v3361 = vrcp.pop %v3333
      %v3362 = vmul.f32 %v3317, %v3361
      %v3363 = vrcp.pop %v3334
      %v3364 = vmul.f32 %v3318, %v3363
      %v3365 = vrcp.pop %v3335
      %v3366 = vmul.f32 %v3319, %v3365
      %v3367 = vrcp.pop %v3336
      %v3368 = vmul.f32 %v3320, %v3367
      %v3369 = vlog2.pop %v3338
      %v3370 = vmul.f32 %v3369, 0.6931472
      %v3371 = vlog2.pop %v3340
      %v3372 = vmul.f32 %v3371, 0.6931472
      %v3373 = vlog2.pop %v3342
      %v3374 = vmul.f32 %v3373, 0.6931472
      %v3375 = vlog2.pop %v3344
      %v3376 = vmul.f32 %v3375, 0.6931472
      %v3377 = vlog2.pop %v3346
      %v3378 = vmul.f32 %v3377, 0.6931472
      %v3379 = vlog2.pop %v3348
      %v3380 = vmul.f32 %v3379, 0.6931472
      %v3381 = vlog2.pop %v3350
      %v3382 = vmul.f32 %v3381, 0.6931472
      %v3383 = vlog2.pop %v3352
      %v3384 = vmul.f32 %v3383, 0.6931472
      %v3385 = vlog2.pop %v3354
      %v3386 = vmul.f32 %v3385, 0.6931472
      %v3387 = vlog2.pop %v3356
      %v3388 = vmul.f32 %v3387, 0.6931472
      %v3389 = vlog2.pop %v3358
      %v3390 = vmul.f32 %v3389, 0.6931472
      %v3391 = vlog2.pop %v3360
      %v3392 = vmul.f32 %v3391, 0.6931472
      %v3393 = vlog2.pop %v3362
      %v3394 = vmul.f32 %v3393, 0.6931472
      %v3395 = vlog2.pop %v3364
      %v3396 = vmul.f32 %v3395, 0.6931472
      %v3397 = vlog2.pop %v3366
      %v3398 = vmul.f32 %v3397, 0.6931472
      %v3399 = vlog2.pop %v3368
      %v3400 = vmul.f32 %v3399, 0.6931472
      %v3401 = vmul.f32 %v3370, 0.5
      %v3402 = vmul.f32 %v3372, 0.5
      %v3403 = vmul.f32 %v3374, 0.5
      %v3404 = vmul.f32 %v3376, 0.5
      %v3405 = vmul.f32 %v3378, 0.5
      %v3406 = vmul.f32 %v3380, 0.5
      %v3407 = vmul.f32 %v3382, 0.5
      %v3408 = vmul.f32 %v3384, 0.5
      %v3409 = vmul.f32 %v3386, 0.5
      %v3410 = vmul.f32 %v3388, 0.5
      %v3411 = vmul.f32 %v3390, 0.5
      %v3412 = vmul.f32 %v3392, 0.5
      %v3413 = vmul.f32 %v3394, 0.5
      %v3414 = vmul.f32 %v3396, 0.5
      %v3415 = vmul.f32 %v3398, 0.5
      %v3416 = vmul.f32 %v3400, 0.5
      %v3417 = vrcp.pop %v3257
      %v3418 = vrcp.pop %v3258
      %v3419 = vrcp.pop %v3259
      %v3420 = vrcp.pop %v3260
      %v3421 = vrcp.pop %v3261
      %v3422 = vrcp.pop %v3262
      %v3423 = vrcp.pop %v3263
      %v3424 = vrcp.pop %v3264
      %v3425 = vrcp.pop %v3265
      %v3426 = vrcp.pop %v3266
      %v3427 = vrcp.pop %v3267
      %v3428 = vrcp.pop %v3268
      %v3429 = vrcp.pop %v3269
      %v3430 = vrcp.pop %v3270
      %v3431 = vrcp.pop %v3271
      %v3432 = vrcp.pop %v3272
      %v3433 = vmul.f32 %v3401, %v3417
      %v3434 = vmul.f32 %v3402, %v3418
      %v3435 = vmul.f32 %v3403, %v3419
      %v3436 = vmul.f32 %v3404, %v3420
      %v3437 = vmul.f32 %v3405, %v3421
      %v3438 = vmul.f32 %v3406, %v3422
      %v3439 = vmul.f32 %v3407, %v3423
      %v3440 = vmul.f32 %v3408, %v3424
      %v3441 = vmul.f32 %v3409, %v3425
      %v3442 = vmul.f32 %v3410, %v3426
      %v3443 = vmul.f32 %v3411, %v3427
      %v3444 = vmul.f32 %v3412, %v3428
      %v3445 = vmul.f32 %v3413, %v3429
      %v3446 = vmul.f32 %v3414, %v3430
      %v3447 = vmul.f32 %v3415, %v3431
      %v3448 = vmul.f32 %v3416, %v3432
      %v3449 = vmul.f32 %v3433, %v3241
      %v3450 = vmul.f32 %v3434, %v3242
      %v3451 = vmul.f32 %v3435, %v3243
      %v3452 = vmul.f32 %v3436, %v3244
      %v3453 = vmul.f32 %v3437, %v3245
      %v3454 = vmul.f32 %v3438, %v3246
      %v3455 = vmul.f32 %v3439, %v3247
      %v3456 = vmul.f32 %v3440, %v3248
      %v3457 = vmul.f32 %v3441, %v3249
      %v3458 = vmul.f32 %v3442, %v3250
      %v3459 = vmul.f32 %v3443, %v3251
      %v3460 = vmul.f32 %v3444, %v3252
      %v3461 = vmul.f32 %v3445, %v3253
      %v3462 = vmul.f32 %v3446, %v3254
      %v3463 = vmul.f32 %v3447, %v3255
      %v3464 = vmul.f32 %v3448, %v3256
      %3465 = vset.pattern.permute.xlu0 3
      %3466 = vperm.xlu0 %3465, %v544
      %v3467 = vpop.permute.xlu0 %3466
      %3469 = vset.pattern.permute.xlu0 3
      %3470 = vperm.xlu0 %3469, %v547
      %v3471 = vpop.permute.xlu0 %3470
      %3473 = vset.pattern.permute.xlu0 3
      %3474 = vperm.xlu0 %3473, %v552
      %v3475 = vpop.permute.xlu0 %3474
      %3477 = vset.pattern.permute.xlu0 3
      %3478 = vperm.xlu0 %3477, %v555
      %v3479 = vpop.permute.xlu0 %3478
      %3481 = vset.pattern.permute.xlu0 3
      %3482 = vperm.xlu0 %3481, %v560
      %v3483 = vpop.permute.xlu0 %3482
      %3485 = vset.pattern.permute.xlu0 3
      %3486 = vperm.xlu0 %3485, %v563
      %v3487 = vpop.permute.xlu0 %3486
      %3489 = vset.pattern.permute.xlu0 3
      %3490 = vperm.xlu0 %3489, %v568
      %v3491 = vpop.permute.xlu0 %3490
      %3493 = vset.pattern.permute.xlu0 3
      %3494 = vperm.xlu0 %3493, %v571
      %v3495 = vpop.permute.xlu0 %3494
      %3497 = vset.pattern.permute.xlu0 3
      %3498 = vperm.xlu0 %3497, %v576
      %v3499 = vpop.permute.xlu0 %3498
      %3501 = vset.pattern.permute.xlu0 3
      %3502 = vperm.xlu0 %3501, %v579
      %v3503 = vpop.permute.xlu0 %3502
      %3505 = vset.pattern.permute.xlu0 3
      %3506 = vperm.xlu0 %3505, %v584
      %v3507 = vpop.permute.xlu0 %3506
      %3509 = vset.pattern.permute.xlu0 3
      %3510 = vperm.xlu0 %3509, %v587
      %v3511 = vpop.permute.xlu0 %3510
      %3513 = vset.pattern.permute.xlu0 3
      %3514 = vperm.xlu0 %3513, %v592
      %v3515 = vpop.permute.xlu0 %3514
      %3517 = vset.pattern.permute.xlu0 3
      %3518 = vperm.xlu0 %3517, %v595
      %v3519 = vpop.permute.xlu0 %3518
      %3521 = vset.pattern.permute.xlu0 3
      %3522 = vperm.xlu0 %3521, %v600
      %v3523 = vpop.permute.xlu0 %3522
      %3525 = vset.pattern.permute.xlu0 3
      %3526 = vperm.xlu0 %3525, %v603
      %v3527 = vpop.permute.xlu0 %3526
      %v3529 = vlaneseq
      %v3530 = vshrl.u32 %v3529, 7
      %v3531 = vsub.s32 3, %v3530
      %v3532 = vrot.slane %v644, %v3531
      %v3533 = vadd.f32 %v3467, %v3532
      %v3534 = vadd.f32 %v3471, %v3532
      %v3535 = vadd.f32 %v3475, %v3532
      %v3536 = vadd.f32 %v3479, %v3532
      %v3537 = vadd.f32 %v3483, %v3532
      %v3538 = vadd.f32 %v3487, %v3532
      %v3539 = vadd.f32 %v3491, %v3532
      %v3540 = vadd.f32 %v3495, %v3532
      %v3541 = vadd.f32 %v3499, %v3532
      %v3542 = vadd.f32 %v3503, %v3532
      %v3543 = vadd.f32 %v3507, %v3532
      %v3544 = vadd.f32 %v3511, %v3532
      %v3545 = vadd.f32 %v3515, %v3532
      %v3546 = vadd.f32 %v3519, %v3532
      %v3547 = vadd.f32 %v3523, %v3532
      %v3548 = vadd.f32 %v3527, %v3532
      %vm3549 = vcmp.gt.f32.partialorder %v3533, 0.0
      %vm3550 = vcmp.gt.f32.partialorder %v3534, 0.0
      %vm3551 = vcmp.gt.f32.partialorder %v3535, 0.0
      %vm3552 = vcmp.gt.f32.partialorder %v3536, 0.0
      %vm3553 = vcmp.gt.f32.partialorder %v3537, 0.0
      %vm3554 = vcmp.gt.f32.partialorder %v3538, 0.0
      %vm3555 = vcmp.gt.f32.partialorder %v3539, 0.0
      %vm3556 = vcmp.gt.f32.partialorder %v3540, 0.0
      %vm3557 = vcmp.gt.f32.partialorder %v3541, 0.0
      %vm3558 = vcmp.gt.f32.partialorder %v3542, 0.0
      %vm3559 = vcmp.gt.f32.partialorder %v3543, 0.0
      %vm3560 = vcmp.gt.f32.partialorder %v3544, 0.0
      %vm3561 = vcmp.gt.f32.partialorder %v3545, 0.0
      %vm3562 = vcmp.gt.f32.partialorder %v3546, 0.0
      %vm3563 = vcmp.gt.f32.partialorder %v3547, 0.0
      %vm3564 = vcmp.gt.f32.partialorder %v3548, 0.0
      %v3565 = vmul.f32 %v3533, 0.1
      %v3566 = vmul.f32 %v3534, 0.1
      %v3567 = vmul.f32 %v3535, 0.1
      %v3568 = vmul.f32 %v3536, 0.1
      %v3569 = vmul.f32 %v3537, 0.1
      %v3570 = vmul.f32 %v3538, 0.1
      %v3571 = vmul.f32 %v3539, 0.1
      %v3572 = vmul.f32 %v3540, 0.1
      %v3573 = vmul.f32 %v3541, 0.1
      %v3574 = vmul.f32 %v3542, 0.1
      %v3575 = vmul.f32 %v3543, 0.1
      %v3576 = vmul.f32 %v3544, 0.1
      %v3577 = vmul.f32 %v3545, 0.1
      %v3578 = vmul.f32 %v3546, 0.1
      %v3579 = vmul.f32 %v3547, 0.1
      %v3580 = vmul.f32 %v3548, 0.1
      %v3581 = vsel %vm3549, %v3533, %v3565
      %v3582 = vsel %vm3550, %v3534, %v3566
      %v3583 = vsel %vm3551, %v3535, %v3567
      %v3584 = vsel %vm3552, %v3536, %v3568
      %v3585 = vsel %vm3553, %v3537, %v3569
      %v3586 = vsel %vm3554, %v3538, %v3570
      %v3587 = vsel %vm3555, %v3539, %v3571
      %v3588 = vsel %vm3556, %v3540, %v3572
      %v3589 = vsel %vm3557, %v3541, %v3573
      %v3590 = vsel %vm3558, %v3542, %v3574
      %v3591 = vsel %vm3559, %v3543, %v3575
      %v3592 = vsel %vm3560, %v3544, %v3576
      %v3593 = vsel %vm3561, %v3545, %v3577
      %v3594 = vsel %vm3562, %v3546, %v3578
      %v3595 = vsel %vm3563, %v3547, %v3579
      %v3596 = vsel %vm3564, %v3548, %v3580
      %v3597 = vsel %vm797, %v3581, -9e+15
      %v3598 = vsel %vm798, %v3582, -9e+15
      %v3599 = vsel %vm799, %v3583, -9e+15
      %v3600 = vsel %vm800, %v3584, -9e+15
      %v3601 = vsel %vm801, %v3585, -9e+15
      %v3602 = vsel %vm802, %v3586, -9e+15
      %v3603 = vsel %vm803, %v3587, -9e+15
      %v3604 = vsel %vm804, %v3588, -9e+15
      %v3605 = vsel %vm805, %v3589, -9e+15
      %v3606 = vsel %vm806, %v3590, -9e+15
      %v3607 = vsel %vm807, %v3591, -9e+15
      %v3608 = vsel %vm808, %v3592, -9e+15
      %v3609 = vsel %vm809, %v3593, -9e+15
      %v3610 = vsel %vm810, %v3594, -9e+15
      %v3611 = vsel %vm811, %v3595, -9e+15
      %v3612 = vsel %vm812, %v3596, -9e+15
      %3613 = vmax.xlane.f32.xlu0 %v3597
      %v3614 = vpop.xlane.xlu0 %3613
      %3615 = vmax.xlane.f32.xlu0 %v3598
      %v3616 = vpop.xlane.xlu0 %3615
      %3617 = vmax.xlane.f32.xlu0 %v3599
      %v3618 = vpop.xlane.xlu0 %3617
      %3619 = vmax.xlane.f32.xlu0 %v3600
      %v3620 = vpop.xlane.xlu0 %3619
      %3621 = vmax.xlane.f32.xlu0 %v3601
      %v3622 = vpop.xlane.xlu0 %3621
      %3623 = vmax.xlane.f32.xlu0 %v3602
      %v3624 = vpop.xlane.xlu0 %3623
      %3625 = vmax.xlane.f32.xlu0 %v3603
      %v3626 = vpop.xlane.xlu0 %3625
      %3627 = vmax.xlane.f32.xlu0 %v3604
      %v3628 = vpop.xlane.xlu0 %3627
      %3629 = vmax.xlane.f32.xlu0 %v3605
      %v3630 = vpop.xlane.xlu0 %3629
      %3631 = vmax.xlane.f32.xlu0 %v3606
      %v3632 = vpop.xlane.xlu0 %3631
      %3633 = vmax.xlane.f32.xlu0 %v3607
      %v3634 = vpop.xlane.xlu0 %3633
      %3635 = vmax.xlane.f32.xlu0 %v3608
      %v3636 = vpop.xlane.xlu0 %3635
      %3637 = vmax.xlane.f32.xlu0 %v3609
      %v3638 = vpop.xlane.xlu0 %3637
      %3639 = vmax.xlane.f32.xlu0 %v3610
      %v3640 = vpop.xlane.xlu0 %3639
      %3641 = vmax.xlane.f32.xlu0 %v3611
      %v3642 = vpop.xlane.xlu0 %3641
      %3643 = vmax.xlane.f32.xlu0 %v3612
      %v3644 = vpop.xlane.xlu0 %3643
      %v3645 = vsub.f32 %v3597, %v3614
      %v3646 = vsub.f32 %v3598, %v3616
      %v3647 = vsub.f32 %v3599, %v3618
      %v3648 = vsub.f32 %v3600, %v3620
      %v3649 = vsub.f32 %v3601, %v3622
      %v3650 = vsub.f32 %v3602, %v3624
      %v3651 = vsub.f32 %v3603, %v3626
      %v3652 = vsub.f32 %v3604, %v3628
      %v3653 = vsub.f32 %v3605, %v3630
      %v3654 = vsub.f32 %v3606, %v3632
      %v3655 = vsub.f32 %v3607, %v3634
      %v3656 = vsub.f32 %v3608, %v3636
      %v3657 = vsub.f32 %v3609, %v3638
      %v3658 = vsub.f32 %v3610, %v3640
      %v3659 = vsub.f32 %v3611, %v3642
      %v3660 = vsub.f32 %v3612, %v3644
      %v3661 = vmul.f32 %v3645, 1.442695
      %v3662 = vpow.pop %v3661
      %v3663 = vmul.f32 %v3646, 1.442695
      %v3664 = vpow.pop %v3663
      %v3665 = vmul.f32 %v3647, 1.442695
      %v3666 = vpow.pop %v3665
      %v3667 = vmul.f32 %v3648, 1.442695
      %v3668 = vpow.pop %v3667
      %v3669 = vmul.f32 %v3649, 1.442695
      %v3670 = vpow.pop %v3669
      %v3671 = vmul.f32 %v3650, 1.442695
      %v3672 = vpow.pop %v3671
      %v3673 = vmul.f32 %v3651, 1.442695
      %v3674 = vpow.pop %v3673
      %v3675 = vmul.f32 %v3652, 1.442695
      %v3676 = vpow.pop %v3675
      %v3677 = vmul.f32 %v3653, 1.442695
      %v3678 = vpow.pop %v3677
      %v3679 = vmul.f32 %v3654, 1.442695
      %v3680 = vpow.pop %v3679
      %v3681 = vmul.f32 %v3655, 1.442695
      %v3682 = vpow.pop %v3681
      %v3683 = vmul.f32 %v3656, 1.442695
      %v3684 = vpow.pop %v3683
      %v3685 = vmul.f32 %v3657, 1.442695
      %v3686 = vpow.pop %v3685
      %v3687 = vmul.f32 %v3658, 1.442695
      %v3688 = vpow.pop %v3687
      %v3689 = vmul.f32 %v3659, 1.442695
      %v3690 = vpow.pop %v3689
      %v3691 = vmul.f32 %v3660, 1.442695
      %v3692 = vpow.pop %v3691
      %3693 = vadd.xlane.f32.xlu0 %v3662
      %v3694 = vpop.xlane.xlu0 %3693
      %3695 = vadd.xlane.f32.xlu0 %v3664
      %v3696 = vpop.xlane.xlu0 %3695
      %3697 = vadd.xlane.f32.xlu0 %v3666
      %v3698 = vpop.xlane.xlu0 %3697
      %3699 = vadd.xlane.f32.xlu0 %v3668
      %v3700 = vpop.xlane.xlu0 %3699
      %3701 = vadd.xlane.f32.xlu0 %v3670
      %v3702 = vpop.xlane.xlu0 %3701
      %3703 = vadd.xlane.f32.xlu0 %v3672
      %v3704 = vpop.xlane.xlu0 %3703
      %3705 = vadd.xlane.f32.xlu0 %v3674
      %v3706 = vpop.xlane.xlu0 %3705
      %3707 = vadd.xlane.f32.xlu0 %v3676
      %v3708 = vpop.xlane.xlu0 %3707
      %3709 = vadd.xlane.f32.xlu0 %v3678
      %v3710 = vpop.xlane.xlu0 %3709
      %3711 = vadd.xlane.f32.xlu0 %v3680
      %v3712 = vpop.xlane.xlu0 %3711
      %3713 = vadd.xlane.f32.xlu0 %v3682
      %v3714 = vpop.xlane.xlu0 %3713
      %3715 = vadd.xlane.f32.xlu0 %v3684
      %v3716 = vpop.xlane.xlu0 %3715
      %3717 = vadd.xlane.f32.xlu0 %v3686
      %v3718 = vpop.xlane.xlu0 %3717
      %3719 = vadd.xlane.f32.xlu0 %v3688
      %v3720 = vpop.xlane.xlu0 %3719
      %3721 = vadd.xlane.f32.xlu0 %v3690
      %v3722 = vpop.xlane.xlu0 %3721
      %3723 = vadd.xlane.f32.xlu0 %v3692
      %v3724 = vpop.xlane.xlu0 %3723
      %v3725 = vrcp.pop %v3694
      %v3726 = vrcp.pop %v3696
      %v3727 = vrcp.pop %v3698
      %v3728 = vrcp.pop %v3700
      %v3729 = vrcp.pop %v3702
      %v3730 = vrcp.pop %v3704
      %v3731 = vrcp.pop %v3706
      %v3732 = vrcp.pop %v3708
      %v3733 = vrcp.pop %v3710
      %v3734 = vrcp.pop %v3712
      %v3735 = vrcp.pop %v3714
      %v3736 = vrcp.pop %v3716
      %v3737 = vrcp.pop %v3718
      %v3738 = vrcp.pop %v3720
      %v3739 = vrcp.pop %v3722
      %v3740 = vrcp.pop %v3724
      %v3741 = vmul.f32 %v3662, %v3725
      %v3742 = vmul.f32 %v3664, %v3726
      %v3743 = vmul.f32 %v3666, %v3727
      %v3744 = vmul.f32 %v3668, %v3728
      %v3745 = vmul.f32 %v3670, %v3729
      %v3746 = vmul.f32 %v3672, %v3730
      %v3747 = vmul.f32 %v3674, %v3731
      %v3748 = vmul.f32 %v3676, %v3732
      %v3749 = vmul.f32 %v3678, %v3733
      %v3750 = vmul.f32 %v3680, %v3734
      %v3751 = vmul.f32 %v3682, %v3735
      %v3752 = vmul.f32 %v3684, %v3736
      %v3753 = vmul.f32 %v3686, %v3737
      %v3754 = vmul.f32 %v3688, %v3738
      %v3755 = vmul.f32 %v3690, %v3739
      %v3756 = vmul.f32 %v3692, %v3740
      %v3757 = vpack.c.bf16 %v3742, %v3741
      %v3758 = vpack.c.bf16 %v3744, %v3743
      %v3759 = vpack.c.bf16 %v3746, %v3745
      %v3760 = vpack.c.bf16 %v3748, %v3747
      %v3761 = vpack.c.bf16 %v3750, %v3749
      %v3762 = vpack.c.bf16 %v3752, %v3751
      %v3763 = vpack.c.bf16 %v3754, %v3753
      %v3764 = vpack.c.bf16 %v3756, %v3755
      %3765 = vrot.lane.b32.xlu0 %v476, 104
      %v3766 = vpop.permute.xlu0 %3765
      %3767 = vrot.lane.b32.xlu0 %v477, 104
      %v3768 = vpop.permute.xlu0 %3767
      %3769 = vrot.lane.b32.xlu0 %v478, 104
      %v3770 = vpop.permute.xlu0 %3769
      %3771 = vrot.lane.b32.xlu0 %v479, 104
      %v3772 = vpop.permute.xlu0 %3771
      %3773 = vrot.lane.b32.xlu0 %v480, 104
      %v3774 = vpop.permute.xlu0 %3773
      %3775 = vrot.lane.b32.xlu0 %v481, 104
      %v3776 = vpop.permute.xlu0 %3775
      %3777 = vrot.lane.b32.xlu0 %v482, 104
      %v3778 = vpop.permute.xlu0 %3777
      %3779 = vrot.lane.b32.xlu0 %v483, 104
      %v3780 = vpop.permute.xlu0 %3779
      %3789 = vmatprep.subr.bf16.mxu0 0
      %3790 = vmatpush1.bf16.msra.mxu0 %v3766
      %3791 = vmatprep.subr.bf16.mxu0 0
      %3792 = vmatpush1.bf16.msra.mxu0 %v3768
      %3793 = vmatprep.subr.bf16.mxu0 0
      %3794 = vmatpush1.bf16.msra.mxu0 %v3770
      %3795 = vmatprep.subr.bf16.mxu0 0
      %3796 = vmatpush1.bf16.msra.mxu0 %v3772
      %3797 = vmatprep.subr.bf16.mxu0 0
      %3798 = vmatpush1.bf16.msra.mxu0 %v3774
      %3799 = vmatprep.subr.bf16.mxu0 0
      %3800 = vmatpush1.bf16.msra.mxu0 %v3776
      %3801 = vmatprep.subr.bf16.mxu0 0
      %3802 = vmatpush1.bf16.msra.mxu0 %v3778
      %3803 = vmatprep.subr.bf16.mxu0 0
      %3804 = vmatpush1.bf16.msra.mxu0 %v3780
      %3805 = vmatprep.subr.bf16.mxu0 0
      %3806 = vmatpush1.bf16.msra.mxu0 0
      %3807 = vmatprep.subr.bf16.mxu0 0
      %3808 = vmatpush1.bf16.msra.mxu0 0
      %3809 = vmatprep.subr.bf16.mxu0 0
      %3810 = vmatpush1.bf16.msra.mxu0 0
      %3811 = vmatprep.subr.bf16.mxu0 0
      %3812 = vmatpush1.bf16.msra.mxu0 0
      %3813 = vmatprep.subr.bf16.mxu0 0
      %3814 = vmatpush1.bf16.msra.mxu0 0
      %3815 = vmatprep.subr.bf16.mxu0 0
      %3816 = vmatpush1.bf16.msra.mxu0 0
      %3817 = vmatprep.subr.bf16.mxu0 0
      %3818 = vmatpush1.bf16.msra.mxu0 0
      %3819 = vmatprep.subr.bf16.mxu0 0
      %3820 = vmatpush1.bf16.msra.mxu0 0
      %3821 = vmatprep.mubr.bf16.mxu0 0
      %3822 = vmatmul.mubr.bf16.gmra.mrb[0].mxu0 %v3757
      %v3823 = vpop.f32.mrb[0].mxu0
      %v3824 = vadd.f32 0.0, %v3823
      %v3825 = vpop.f32.mrb[0].mxu0
      %v3826 = vpop.f32.mrb[0].mxu0
      %v3827 = vadd.f32 0.0, %v3826
      %v3828 = vpop.f32.mrb[0].mxu0
      %3829 = vmatprep.mubr.bf16.mxu0 0
      %3830 = vmatmul.mubr.bf16.gmra.mrb[0].mxu0 %v3758
      %v3831 = vpop.f32.mrb[0].mxu0
      %v3832 = vadd.f32 0.0, %v3831
      %v3833 = vpop.f32.mrb[0].mxu0
      %v3834 = vpop.f32.mrb[0].mxu0
      %v3835 = vadd.f32 0.0, %v3834
      %v3836 = vpop.f32.mrb[0].mxu0
      %3837 = vmatprep.mubr.bf16.mxu0 0
      %3838 = vmatmul.mubr.bf16.gmra.mrb[0].mxu0 %v3759
      %v3839 = vpop.f32.mrb[0].mxu0
      %v3840 = vadd.f32 0.0, %v3839
      %v3841 = vpop.f32.mrb[0].mxu0
      %v3842 = vpop.f32.mrb[0].mxu0
      %v3843 = vadd.f32 0.0, %v3842
      %v3844 = vpop.f32.mrb[0].mxu0
      %3845 = vmatprep.mubr.bf16.mxu0 0
      %3846 = vmatmul.mubr.bf16.gmra.mrb[0].mxu0 %v3760
      %v3847 = vpop.f32.mrb[0].mxu0
      %v3848 = vadd.f32 0.0, %v3847
      %v3849 = vpop.f32.mrb[0].mxu0
      %v3850 = vpop.f32.mrb[0].mxu0
      %v3851 = vadd.f32 0.0, %v3850
      %v3852 = vpop.f32.mrb[0].mxu0
      %3853 = vmatprep.mubr.bf16.mxu0 0
      %3854 = vmatmul.mubr.bf16.gmra.mrb[0].mxu0 %v3761
      %v3855 = vpop.f32.mrb[0].mxu0
      %v3856 = vadd.f32 0.0, %v3855
      %v3857 = vpop.f32.mrb[0].mxu0
      %v3858 = vpop.f32.mrb[0].mxu0
      %v3859 = vadd.f32 0.0, %v3858
      %v3860 = vpop.f32.mrb[0].mxu0
      %3861 = vmatprep.mubr.bf16.mxu0 0
      %3862 = vmatmul.mubr.bf16.gmra.mrb[0].mxu0 %v3762
      %v3863 = vpop.f32.mrb[0].mxu0
      %v3864 = vadd.f32 0.0, %v3863
      %v3865 = vpop.f32.mrb[0].mxu0
      %v3866 = vpop.f32.mrb[0].mxu0
      %v3867 = vadd.f32 0.0, %v3866
      %v3868 = vpop.f32.mrb[0].mxu0
      %3869 = vmatprep.mubr.bf16.mxu0 0
      %3870 = vmatmul.mubr.bf16.gmra.mrb[0].mxu0 %v3763
      %v3871 = vpop.f32.mrb[0].mxu0
      %v3872 = vadd.f32 0.0, %v3871
      %v3873 = vpop.f32.mrb[0].mxu0
      %v3874 = vpop.f32.mrb[0].mxu0
      %v3875 = vadd.f32 0.0, %v3874
      %v3876 = vpop.f32.mrb[0].mxu0
      %3877 = vmatprep.mubr.bf16.mxu0 0
      %3878 = vmatmul.mubr.bf16.gmra.mrb[0].mxu0 %v3764
      %v3879 = vpop.f32.mrb[0].mxu0
      %v3880 = vadd.f32 0.0, %v3879
      %v3881 = vpop.f32.mrb[0].mxu0
      %v3882 = vpop.f32.mrb[0].mxu0
      %v3883 = vadd.f32 0.0, %v3882
      %v3884 = vpop.f32.mrb[0].mxu0
      %3885 = vdwg.mxu0
      %v3886 = vmul.f32 %v3824, %v3824
      %v3887 = vmul.f32 %v3827, %v3827
      %v3888 = vmul.f32 %v3832, %v3832
      %v3889 = vmul.f32 %v3835, %v3835
      %v3890 = vmul.f32 %v3840, %v3840
      %v3891 = vmul.f32 %v3843, %v3843
      %v3892 = vmul.f32 %v3848, %v3848
      %v3893 = vmul.f32 %v3851, %v3851
      %v3894 = vmul.f32 %v3856, %v3856
      %v3895 = vmul.f32 %v3859, %v3859
      %v3896 = vmul.f32 %v3864, %v3864
      %v3897 = vmul.f32 %v3867, %v3867
      %v3898 = vmul.f32 %v3872, %v3872
      %v3899 = vmul.f32 %v3875, %v3875
      %v3900 = vmul.f32 %v3880, %v3880
      %v3901 = vmul.f32 %v3883, %v3883
      %v3902 = vsel %vm1094, %v3886, 0.0
      %3903 = vadd.xlane.f32.xlu0 %v3902
      %v3904 = vpop.xlane.xlu0 %3903
      %v3905 = vsel %vm1094, %v3887, 0.0
      %3906 = vadd.xlane.f32.xlu0 %v3905
      %v3907 = vpop.xlane.xlu0 %3906
      %v3908 = vsel %vm1094, %v3888, 0.0
      %3909 = vadd.xlane.f32.xlu0 %v3908
      %v3910 = vpop.xlane.xlu0 %3909
      %v3911 = vsel %vm1094, %v3889, 0.0
      %3912 = vadd.xlane.f32.xlu0 %v3911
      %v3913 = vpop.xlane.xlu0 %3912
      %v3914 = vsel %vm1094, %v3890, 0.0
      %3915 = vadd.xlane.f32.xlu0 %v3914
      %v3916 = vpop.xlane.xlu0 %3915
      %v3917 = vsel %vm1094, %v3891, 0.0
      %3918 = vadd.xlane.f32.xlu0 %v3917
      %v3919 = vpop.xlane.xlu0 %3918
      %v3920 = vsel %vm1094, %v3892, 0.0
      %3921 = vadd.xlane.f32.xlu0 %v3920
      %v3922 = vpop.xlane.xlu0 %3921
      %v3923 = vsel %vm1094, %v3893, 0.0
      %3924 = vadd.xlane.f32.xlu0 %v3923
      %v3925 = vpop.xlane.xlu0 %3924
      %v3926 = vsel %vm1094, %v3894, 0.0
      %3927 = vadd.xlane.f32.xlu0 %v3926
      %v3928 = vpop.xlane.xlu0 %3927
      %v3929 = vsel %vm1094, %v3895, 0.0
      %3930 = vadd.xlane.f32.xlu0 %v3929
      %v3931 = vpop.xlane.xlu0 %3930
      %v3932 = vsel %vm1094, %v3896, 0.0
      %3933 = vadd.xlane.f32.xlu0 %v3932
      %v3934 = vpop.xlane.xlu0 %3933
      %v3935 = vsel %vm1094, %v3897, 0.0
      %3936 = vadd.xlane.f32.xlu0 %v3935
      %v3937 = vpop.xlane.xlu0 %3936
      %v3938 = vsel %vm1094, %v3898, 0.0
      %3939 = vadd.xlane.f32.xlu0 %v3938
      %v3940 = vpop.xlane.xlu0 %3939
      %v3941 = vsel %vm1094, %v3899, 0.0
      %3942 = vadd.xlane.f32.xlu0 %v3941
      %v3943 = vpop.xlane.xlu0 %3942
      %v3944 = vsel %vm1094, %v3900, 0.0
      %3945 = vadd.xlane.f32.xlu0 %v3944
      %v3946 = vpop.xlane.xlu0 %3945
      %v3947 = vsel %vm1094, %v3901, 0.0
      %3948 = vadd.xlane.f32.xlu0 %v3947
      %v3949 = vpop.xlane.xlu0 %3948
      %v3950 = vrsqrt.pop %v3904
      %v3951 = vmul.f32 %v3904, %v3950
      %vm3952 = vcmp.eq.f32.partialorder %v3904, inf
      %v3953 = vsel %vm3952, %v3904, %v3951
      %vm3954 = vcmp.eq.f32.partialorder %v3904, 0.0
      %v3955 = vand.u32 %v3904, 2147483648
      %v3956 = vsel %vm3954, %v3955, %v3953
      %v3957 = vrsqrt.pop %v3907
      %v3958 = vmul.f32 %v3907, %v3957
      %vm3959 = vcmp.eq.f32.partialorder %v3907, inf
      %v3960 = vsel %vm3959, %v3907, %v3958
      %vm3961 = vcmp.eq.f32.partialorder %v3907, 0.0
      %v3962 = vand.u32 %v3907, 2147483648
      %v3963 = vsel %vm3961, %v3962, %v3960
      %v3964 = vrsqrt.pop %v3910
      %v3965 = vmul.f32 %v3910, %v3964
      %vm3966 = vcmp.eq.f32.partialorder %v3910, inf
      %v3967 = vsel %vm3966, %v3910, %v3965
      %vm3968 = vcmp.eq.f32.partialorder %v3910, 0.0
      %v3969 = vand.u32 %v3910, 2147483648
      %v3970 = vsel %vm3968, %v3969, %v3967
      %v3971 = vrsqrt.pop %v3913
      %v3972 = vmul.f32 %v3913, %v3971
      %vm3973 = vcmp.eq.f32.partialorder %v3913, inf
      %v3974 = vsel %vm3973, %v3913, %v3972
      %vm3975 = vcmp.eq.f32.partialorder %v3913, 0.0
      %v3976 = vand.u32 %v3913, 2147483648
      %v3977 = vsel %vm3975, %v3976, %v3974
      %v3978 = vrsqrt.pop %v3916
      %v3979 = vmul.f32 %v3916, %v3978
      %vm3980 = vcmp.eq.f32.partialorder %v3916, inf
      %v3981 = vsel %vm3980, %v3916, %v3979
      %vm3982 = vcmp.eq.f32.partialorder %v3916, 0.0
      %v3983 = vand.u32 %v3916, 2147483648
      %v3984 = vsel %vm3982, %v3983, %v3981
      %v3985 = vrsqrt.pop %v3919
      %v3986 = vmul.f32 %v3919, %v3985
      %vm3987 = vcmp.eq.f32.partialorder %v3919, inf
      %v3988 = vsel %vm3987, %v3919, %v3986
      %vm3989 = vcmp.eq.f32.partialorder %v3919, 0.0
      %v3990 = vand.u32 %v3919, 2147483648
      %v3991 = vsel %vm3989, %v3990, %v3988
      %v3992 = vrsqrt.pop %v3922
      %v3993 = vmul.f32 %v3922, %v3992
      %vm3994 = vcmp.eq.f32.partialorder %v3922, inf
      %v3995 = vsel %vm3994, %v3922, %v3993
      %vm3996 = vcmp.eq.f32.partialorder %v3922, 0.0
      %v3997 = vand.u32 %v3922, 2147483648
      %v3998 = vsel %vm3996, %v3997, %v3995
      %v3999 = vrsqrt.pop %v3925
      %v4000 = vmul.f32 %v3925, %v3999
      %vm4001 = vcmp.eq.f32.partialorder %v3925, inf
      %v4002 = vsel %vm4001, %v3925, %v4000
      %vm4003 = vcmp.eq.f32.partialorder %v3925, 0.0
      %v4004 = vand.u32 %v3925, 2147483648
      %v4005 = vsel %vm4003, %v4004, %v4002
      %v4006 = vrsqrt.pop %v3928
      %v4007 = vmul.f32 %v3928, %v4006
      %vm4008 = vcmp.eq.f32.partialorder %v3928, inf
      %v4009 = vsel %vm4008, %v3928, %v4007
      %vm4010 = vcmp.eq.f32.partialorder %v3928, 0.0
      %v4011 = vand.u32 %v3928, 2147483648
      %v4012 = vsel %vm4010, %v4011, %v4009
      %v4013 = vrsqrt.pop %v3931
      %v4014 = vmul.f32 %v3931, %v4013
      %vm4015 = vcmp.eq.f32.partialorder %v3931, inf
      %v4016 = vsel %vm4015, %v3931, %v4014
      %vm4017 = vcmp.eq.f32.partialorder %v3931, 0.0
      %v4018 = vand.u32 %v3931, 2147483648
      %v4019 = vsel %vm4017, %v4018, %v4016
      %v4020 = vrsqrt.pop %v3934
      %v4021 = vmul.f32 %v3934, %v4020
      %vm4022 = vcmp.eq.f32.partialorder %v3934, inf
      %v4023 = vsel %vm4022, %v3934, %v4021
      %vm4024 = vcmp.eq.f32.partialorder %v3934, 0.0
      %v4025 = vand.u32 %v3934, 2147483648
      %v4026 = vsel %vm4024, %v4025, %v4023
      %v4027 = vrsqrt.pop %v3937
      %v4028 = vmul.f32 %v3937, %v4027
      %vm4029 = vcmp.eq.f32.partialorder %v3937, inf
      %v4030 = vsel %vm4029, %v3937, %v4028
      %vm4031 = vcmp.eq.f32.partialorder %v3937, 0.0
      %v4032 = vand.u32 %v3937, 2147483648
      %v4033 = vsel %vm4031, %v4032, %v4030
      %v4034 = vrsqrt.pop %v3940
      %v4035 = vmul.f32 %v3940, %v4034
      %vm4036 = vcmp.eq.f32.partialorder %v3940, inf
      %v4037 = vsel %vm4036, %v3940, %v4035
      %vm4038 = vcmp.eq.f32.partialorder %v3940, 0.0
      %v4039 = vand.u32 %v3940, 2147483648
      %v4040 = vsel %vm4038, %v4039, %v4037
      %v4041 = vrsqrt.pop %v3943
      %v4042 = vmul.f32 %v3943, %v4041
      %vm4043 = vcmp.eq.f32.partialorder %v3943, inf
      %v4044 = vsel %vm4043, %v3943, %v4042
      %vm4045 = vcmp.eq.f32.partialorder %v3943, 0.0
      %v4046 = vand.u32 %v3943, 2147483648
      %v4047 = vsel %vm4045, %v4046, %v4044
      %v4048 = vrsqrt.pop %v3946
      %v4049 = vmul.f32 %v3946, %v4048
      %vm4050 = vcmp.eq.f32.partialorder %v3946, inf
      %v4051 = vsel %vm4050, %v3946, %v4049
      %vm4052 = vcmp.eq.f32.partialorder %v3946, 0.0
      %v4053 = vand.u32 %v3946, 2147483648
      %v4054 = vsel %vm4052, %v4053, %v4051
      %v4055 = vrsqrt.pop %v3949
      %v4056 = vmul.f32 %v3949, %v4055
      %vm4057 = vcmp.eq.f32.partialorder %v3949, inf
      %v4058 = vsel %vm4057, %v3949, %v4056
      %vm4059 = vcmp.eq.f32.partialorder %v3949, 0.0
      %v4060 = vand.u32 %v3949, 2147483648
      %v4061 = vsel %vm4059, %v4060, %v4058
      %v4062 = vmax.f32 %v3956, 1e-15
      %v4063 = vmax.f32 %v3963, 1e-15
      %v4064 = vmax.f32 %v3970, 1e-15
      %v4065 = vmax.f32 %v3977, 1e-15
      %v4066 = vmax.f32 %v3984, 1e-15
      %v4067 = vmax.f32 %v3991, 1e-15
      %v4068 = vmax.f32 %v3998, 1e-15
      %v4069 = vmax.f32 %v4005, 1e-15
      %v4070 = vmax.f32 %v4012, 1e-15
      %v4071 = vmax.f32 %v4019, 1e-15
      %v4072 = vmax.f32 %v4026, 1e-15
      %v4073 = vmax.f32 %v4033, 1e-15
      %v4074 = vmax.f32 %v4040, 1e-15
      %v4075 = vmax.f32 %v4047, 1e-15
      %v4076 = vmax.f32 %v4054, 1e-15
      %v4077 = vmax.f32 %v4061, 1e-15
      %vm4078 = vcmp.gt.f32.partialorder %v4062, 0.996
      %vm4079 = vcmp.gt.f32.partialorder %v4063, 0.996
      %vm4080 = vcmp.gt.f32.partialorder %v4064, 0.996
      %vm4081 = vcmp.gt.f32.partialorder %v4065, 0.996
      %vm4082 = vcmp.gt.f32.partialorder %v4066, 0.996
      %vm4083 = vcmp.gt.f32.partialorder %v4067, 0.996
      %vm4084 = vcmp.gt.f32.partialorder %v4068, 0.996
      %vm4085 = vcmp.gt.f32.partialorder %v4069, 0.996
      %vm4086 = vcmp.gt.f32.partialorder %v4070, 0.996
      %vm4087 = vcmp.gt.f32.partialorder %v4071, 0.996
      %vm4088 = vcmp.gt.f32.partialorder %v4072, 0.996
      %vm4089 = vcmp.gt.f32.partialorder %v4073, 0.996
      %vm4090 = vcmp.gt.f32.partialorder %v4074, 0.996
      %vm4091 = vcmp.gt.f32.partialorder %v4075, 0.996
      %vm4092 = vcmp.gt.f32.partialorder %v4076, 0.996
      %vm4093 = vcmp.gt.f32.partialorder %v4077, 0.996
      %v4094 = vrcp.pop %v4062
      %v4095 = vmul.f32 %v3824, %v4094
      %v4096 = vrcp.pop %v4063
      %v4097 = vmul.f32 %v3827, %v4096
      %v4098 = vrcp.pop %v4064
      %v4099 = vmul.f32 %v3832, %v4098
      %v4100 = vrcp.pop %v4065
      %v4101 = vmul.f32 %v3835, %v4100
      %v4102 = vrcp.pop %v4066
      %v4103 = vmul.f32 %v3840, %v4102
      %v4104 = vrcp.pop %v4067
      %v4105 = vmul.f32 %v3843, %v4104
      %v4106 = vrcp.pop %v4068
      %v4107 = vmul.f32 %v3848, %v4106
      %v4108 = vrcp.pop %v4069
      %v4109 = vmul.f32 %v3851, %v4108
      %v4110 = vrcp.pop %v4070
      %v4111 = vmul.f32 %v3856, %v4110
      %v4112 = vrcp.pop %v4071
      %v4113 = vmul.f32 %v3859, %v4112
      %v4114 = vrcp.pop %v4072
      %v4115 = vmul.f32 %v3864, %v4114
      %v4116 = vrcp.pop %v4073
      %v4117 = vmul.f32 %v3867, %v4116
      %v4118 = vrcp.pop %v4074
      %v4119 = vmul.f32 %v3872, %v4118
      %v4120 = vrcp.pop %v4075
      %v4121 = vmul.f32 %v3875, %v4120
      %v4122 = vrcp.pop %v4076
      %v4123 = vmul.f32 %v3880, %v4122
      %v4124 = vrcp.pop %v4077
      %v4125 = vmul.f32 %v3883, %v4124
      %v4126 = vmul.f32 %v4095, 0.996
      %v4127 = vmul.f32 %v4097, 0.996
      %v4128 = vmul.f32 %v4099, 0.996
      %v4129 = vmul.f32 %v4101, 0.996
      %v4130 = vmul.f32 %v4103, 0.996
      %v4131 = vmul.f32 %v4105, 0.996
      %v4132 = vmul.f32 %v4107, 0.996
      %v4133 = vmul.f32 %v4109, 0.996
      %v4134 = vmul.f32 %v4111, 0.996
      %v4135 = vmul.f32 %v4113, 0.996
      %v4136 = vmul.f32 %v4115, 0.996
      %v4137 = vmul.f32 %v4117, 0.996
      %v4138 = vmul.f32 %v4119, 0.996
      %v4139 = vmul.f32 %v4121, 0.996
      %v4140 = vmul.f32 %v4123, 0.996
      %v4141 = vmul.f32 %v4125, 0.996
      %v4142 = vsel %vm4078, 1, 0
      %v4143 = vsel %vm4079, 1, 0
      %v4144 = vsel %vm4080, 1, 0
      %v4145 = vsel %vm4081, 1, 0
      %v4146 = vsel %vm4082, 1, 0
      %v4147 = vsel %vm4083, 1, 0
      %v4148 = vsel %vm4084, 1, 0
      %v4149 = vsel %vm4085, 1, 0
      %v4150 = vsel %vm4086, 1, 0
      %v4151 = vsel %vm4087, 1, 0
      %v4152 = vsel %vm4088, 1, 0
      %v4153 = vsel %vm4089, 1, 0
      %v4154 = vsel %vm4090, 1, 0
      %v4155 = vsel %vm4091, 1, 0
      %v4156 = vsel %vm4092, 1, 0
      %v4157 = vsel %vm4093, 1, 0
      %vm4158 = vcmp.eq.s32.totalorder %v4142, 1
      %vm4159 = vcmp.eq.s32.totalorder %v4143, 1
      %vm4160 = vcmp.eq.s32.totalorder %v4144, 1
      %vm4161 = vcmp.eq.s32.totalorder %v4145, 1
      %vm4162 = vcmp.eq.s32.totalorder %v4146, 1
      %vm4163 = vcmp.eq.s32.totalorder %v4147, 1
      %vm4164 = vcmp.eq.s32.totalorder %v4148, 1
      %vm4165 = vcmp.eq.s32.totalorder %v4149, 1
      %vm4166 = vcmp.eq.s32.totalorder %v4150, 1
      %vm4167 = vcmp.eq.s32.totalorder %v4151, 1
      %vm4168 = vcmp.eq.s32.totalorder %v4152, 1
      %vm4169 = vcmp.eq.s32.totalorder %v4153, 1
      %vm4170 = vcmp.eq.s32.totalorder %v4154, 1
      %vm4171 = vcmp.eq.s32.totalorder %v4155, 1
      %vm4172 = vcmp.eq.s32.totalorder %v4156, 1
      %vm4173 = vcmp.eq.s32.totalorder %v4157, 1
      %v4174 = vsel %vm4158, %v4126, %v3824
      %v4175 = vsel %vm4159, %v4127, %v3827
      %v4176 = vsel %vm4160, %v4128, %v3832
      %v4177 = vsel %vm4161, %v4129, %v3835
      %v4178 = vsel %vm4162, %v4130, %v3840
      %v4179 = vsel %vm4163, %v4131, %v3843
      %v4180 = vsel %vm4164, %v4132, %v3848
      %v4181 = vsel %vm4165, %v4133, %v3851
      %v4182 = vsel %vm4166, %v4134, %v3856
      %v4183 = vsel %vm4167, %v4135, %v3859
      %v4184 = vsel %vm4168, %v4136, %v3864
      %v4185 = vsel %vm4169, %v4137, %v3867
      %v4186 = vsel %vm4170, %v4138, %v3872
      %v4187 = vsel %vm4171, %v4139, %v3875
      %v4188 = vsel %vm4172, %v4140, %v3880
      %v4189 = vsel %vm4173, %v4141, %v3883
      %v4190 = vmin.f32 %v4062, 0.996
      %v4191 = vmin.f32 %v4063, 0.996
      %v4192 = vmin.f32 %v4064, 0.996
      %v4193 = vmin.f32 %v4065, 0.996
      %v4194 = vmin.f32 %v4066, 0.996
      %v4195 = vmin.f32 %v4067, 0.996
      %v4196 = vmin.f32 %v4068, 0.996
      %v4197 = vmin.f32 %v4069, 0.996
      %v4198 = vmin.f32 %v4070, 0.996
      %v4199 = vmin.f32 %v4071, 0.996
      %v4200 = vmin.f32 %v4072, 0.996
      %v4201 = vmin.f32 %v4073, 0.996
      %v4202 = vmin.f32 %v4074, 0.996
      %v4203 = vmin.f32 %v4075, 0.996
      %v4204 = vmin.f32 %v4076, 0.996
      %v4205 = vmin.f32 %v4077, 0.996
      %v4206 = vmax.f32 %v4190, -0.9999999
      %v4207 = vmax.f32 %v4191, -0.9999999
      %v4208 = vmax.f32 %v4192, -0.9999999
      %v4209 = vmax.f32 %v4193, -0.9999999
      %v4210 = vmax.f32 %v4194, -0.9999999
      %v4211 = vmax.f32 %v4195, -0.9999999
      %v4212 = vmax.f32 %v4196, -0.9999999
      %v4213 = vmax.f32 %v4197, -0.9999999
      %v4214 = vmax.f32 %v4198, -0.9999999
      %v4215 = vmax.f32 %v4199, -0.9999999
      %v4216 = vmax.f32 %v4200, -0.9999999
      %v4217 = vmax.f32 %v4201, -0.9999999
      %v4218 = vmax.f32 %v4202, -0.9999999
      %v4219 = vmax.f32 %v4203, -0.9999999
      %v4220 = vmax.f32 %v4204, -0.9999999
      %v4221 = vmax.f32 %v4205, -0.9999999
      %v4222 = vmin.f32 %v4206, 0.9999999
      %v4223 = vmin.f32 %v4207, 0.9999999
      %v4224 = vmin.f32 %v4208, 0.9999999
      %v4225 = vmin.f32 %v4209, 0.9999999
      %v4226 = vmin.f32 %v4210, 0.9999999
      %v4227 = vmin.f32 %v4211, 0.9999999
      %v4228 = vmin.f32 %v4212, 0.9999999
      %v4229 = vmin.f32 %v4213, 0.9999999
      %v4230 = vmin.f32 %v4214, 0.9999999
      %v4231 = vmin.f32 %v4215, 0.9999999
      %v4232 = vmin.f32 %v4216, 0.9999999
      %v4233 = vmin.f32 %v4217, 0.9999999
      %v4234 = vmin.f32 %v4218, 0.9999999
      %v4235 = vmin.f32 %v4219, 0.9999999
      %v4236 = vmin.f32 %v4220, 0.9999999
      %v4237 = vmin.f32 %v4221, 0.9999999
      %v4238 = vadd.f32 %v4222, 1.0
      %v4239 = vadd.f32 %v4223, 1.0
      %v4240 = vadd.f32 %v4224, 1.0
      %v4241 = vadd.f32 %v4225, 1.0
      %v4242 = vadd.f32 %v4226, 1.0
      %v4243 = vadd.f32 %v4227, 1.0
      %v4244 = vadd.f32 %v4228, 1.0
      %v4245 = vadd.f32 %v4229, 1.0
      %v4246 = vadd.f32 %v4230, 1.0
      %v4247 = vadd.f32 %v4231, 1.0
      %v4248 = vadd.f32 %v4232, 1.0
      %v4249 = vadd.f32 %v4233, 1.0
      %v4250 = vadd.f32 %v4234, 1.0
      %v4251 = vadd.f32 %v4235, 1.0
      %v4252 = vadd.f32 %v4236, 1.0
      %v4253 = vadd.f32 %v4237, 1.0
      %v4254 = vsub.f32 1.0, %v4222
      %v4255 = vsub.f32 1.0, %v4223
      %v4256 = vsub.f32 1.0, %v4224
      %v4257 = vsub.f32 1.0, %v4225
      %v4258 = vsub.f32 1.0, %v4226
      %v4259 = vsub.f32 1.0, %v4227
      %v4260 = vsub.f32 1.0, %v4228
      %v4261 = vsub.f32 1.0, %v4229
      %v4262 = vsub.f32 1.0, %v4230
      %v4263 = vsub.f32 1.0, %v4231
      %v4264 = vsub.f32 1.0, %v4232
      %v4265 = vsub.f32 1.0, %v4233
      %v4266 = vsub.f32 1.0, %v4234
      %v4267 = vsub.f32 1.0, %v4235
      %v4268 = vsub.f32 1.0, %v4236
      %v4269 = vsub.f32 1.0, %v4237
      %v4270 = vrcp.pop %v4254
      %v4271 = vmul.f32 %v4238, %v4270
      %v4272 = vrcp.pop %v4255
      %v4273 = vmul.f32 %v4239, %v4272
      %v4274 = vrcp.pop %v4256
      %v4275 = vmul.f32 %v4240, %v4274
      %v4276 = vrcp.pop %v4257
      %v4277 = vmul.f32 %v4241, %v4276
      %v4278 = vrcp.pop %v4258
      %v4279 = vmul.f32 %v4242, %v4278
      %v4280 = vrcp.pop %v4259
      %v4281 = vmul.f32 %v4243, %v4280
      %v4282 = vrcp.pop %v4260
      %v4283 = vmul.f32 %v4244, %v4282
      %v4284 = vrcp.pop %v4261
      %v4285 = vmul.f32 %v4245, %v4284
      %v4286 = vrcp.pop %v4262
      %v4287 = vmul.f32 %v4246, %v4286
      %v4288 = vrcp.pop %v4263
      %v4289 = vmul.f32 %v4247, %v4288
      %v4290 = vrcp.pop %v4264
      %v4291 = vmul.f32 %v4248, %v4290
      %v4292 = vrcp.pop %v4265
      %v4293 = vmul.f32 %v4249, %v4292
      %v4294 = vrcp.pop %v4266
      %v4295 = vmul.f32 %v4250, %v4294
      %v4296 = vrcp.pop %v4267
      %v4297 = vmul.f32 %v4251, %v4296
      %v4298 = vrcp.pop %v4268
      %v4299 = vmul.f32 %v4252, %v4298
      %v4300 = vrcp.pop %v4269
      %v4301 = vmul.f32 %v4253, %v4300
      %v4302 = vlog2.pop %v4271
      %v4303 = vmul.f32 %v4302, 0.6931472
      %v4304 = vlog2.pop %v4273
      %v4305 = vmul.f32 %v4304, 0.6931472
      %v4306 = vlog2.pop %v4275
      %v4307 = vmul.f32 %v4306, 0.6931472
      %v4308 = vlog2.pop %v4277
      %v4309 = vmul.f32 %v4308, 0.6931472
      %v4310 = vlog2.pop %v4279
      %v4311 = vmul.f32 %v4310, 0.6931472
      %v4312 = vlog2.pop %v4281
      %v4313 = vmul.f32 %v4312, 0.6931472
      %v4314 = vlog2.pop %v4283
      %v4315 = vmul.f32 %v4314, 0.6931472
      %v4316 = vlog2.pop %v4285
      %v4317 = vmul.f32 %v4316, 0.6931472
      %v4318 = vlog2.pop %v4287
      %v4319 = vmul.f32 %v4318, 0.6931472
      %v4320 = vlog2.pop %v4289
      %v4321 = vmul.f32 %v4320, 0.6931472
      %v4322 = vlog2.pop %v4291
      %v4323 = vmul.f32 %v4322, 0.6931472
      %v4324 = vlog2.pop %v4293
      %v4325 = vmul.f32 %v4324, 0.6931472
      %v4326 = vlog2.pop %v4295
      %v4327 = vmul.f32 %v4326, 0.6931472
      %v4328 = vlog2.pop %v4297
      %v4329 = vmul.f32 %v4328, 0.6931472
      %v4330 = vlog2.pop %v4299
      %v4331 = vmul.f32 %v4330, 0.6931472
      %v4332 = vlog2.pop %v4301
      %v4333 = vmul.f32 %v4332, 0.6931472
      %v4334 = vmul.f32 %v4303, 0.5
      %v4335 = vmul.f32 %v4305, 0.5
      %v4336 = vmul.f32 %v4307, 0.5
      %v4337 = vmul.f32 %v4309, 0.5
      %v4338 = vmul.f32 %v4311, 0.5
      %v4339 = vmul.f32 %v4313, 0.5
      %v4340 = vmul.f32 %v4315, 0.5
      %v4341 = vmul.f32 %v4317, 0.5
      %v4342 = vmul.f32 %v4319, 0.5
      %v4343 = vmul.f32 %v4321, 0.5
      %v4344 = vmul.f32 %v4323, 0.5
      %v4345 = vmul.f32 %v4325, 0.5
      %v4346 = vmul.f32 %v4327, 0.5
      %v4347 = vmul.f32 %v4329, 0.5
      %v4348 = vmul.f32 %v4331, 0.5
      %v4349 = vmul.f32 %v4333, 0.5
      %v4350 = vrcp.pop %v4190
      %v4351 = vrcp.pop %v4191
      %v4352 = vrcp.pop %v4192
      %v4353 = vrcp.pop %v4193
      %v4354 = vrcp.pop %v4194
      %v4355 = vrcp.pop %v4195
      %v4356 = vrcp.pop %v4196
      %v4357 = vrcp.pop %v4197
      %v4358 = vrcp.pop %v4198
      %v4359 = vrcp.pop %v4199
      %v4360 = vrcp.pop %v4200
      %v4361 = vrcp.pop %v4201
      %v4362 = vrcp.pop %v4202
      %v4363 = vrcp.pop %v4203
      %v4364 = vrcp.pop %v4204
      %v4365 = vrcp.pop %v4205
      %v4366 = vmul.f32 %v4334, %v4350
      %v4367 = vmul.f32 %v4335, %v4351
      %v4368 = vmul.f32 %v4336, %v4352
      %v4369 = vmul.f32 %v4337, %v4353
      %v4370 = vmul.f32 %v4338, %v4354
      %v4371 = vmul.f32 %v4339, %v4355
      %v4372 = vmul.f32 %v4340, %v4356
      %v4373 = vmul.f32 %v4341, %v4357
      %v4374 = vmul.f32 %v4342, %v4358
      %v4375 = vmul.f32 %v4343, %v4359
      %v4376 = vmul.f32 %v4344, %v4360
      %v4377 = vmul.f32 %v4345, %v4361
      %v4378 = vmul.f32 %v4346, %v4362
      %v4379 = vmul.f32 %v4347, %v4363
      %v4380 = vmul.f32 %v4348, %v4364
      %v4381 = vmul.f32 %v4349, %v4365
      %v4382 = vmul.f32 %v4366, %v4174
      %v4383 = vmul.f32 %v4367, %v4175
      %v4384 = vmul.f32 %v4368, %v4176
      %v4385 = vmul.f32 %v4369, %v4177
      %v4386 = vmul.f32 %v4370, %v4178
      %v4387 = vmul.f32 %v4371, %v4179
      %v4388 = vmul.f32 %v4372, %v4180
      %v4389 = vmul.f32 %v4373, %v4181
      %v4390 = vmul.f32 %v4374, %v4182
      %v4391 = vmul.f32 %v4375, %v4183
      %v4392 = vmul.f32 %v4376, %v4184
      %v4393 = vmul.f32 %v4377, %v4185
      %v4394 = vmul.f32 %v4378, %v4186
      %v4395 = vmul.f32 %v4379, %v4187
      %v4396 = vmul.f32 %v4380, %v4188
      %v4397 = vmul.f32 %v4381, %v4189
      %4414 = vrot.lane.b32.xlu0 %v2516, 8
      %v4415 = vpop.permute.xlu0 %4414
      %4416 = vrot.lane.b32.xlu0 %v2517, 8
      %v4417 = vpop.permute.xlu0 %4416
      %4418 = vrot.lane.b32.xlu0 %v2518, 8
      %v4419 = vpop.permute.xlu0 %4418
      %4420 = vrot.lane.b32.xlu0 %v2519, 8
      %v4421 = vpop.permute.xlu0 %4420
      %4422 = vrot.lane.b32.xlu0 %v2520, 8
      %v4423 = vpop.permute.xlu0 %4422
      %4424 = vrot.lane.b32.xlu0 %v2521, 8
      %v4425 = vpop.permute.xlu0 %4424
      %4426 = vrot.lane.b32.xlu0 %v2522, 8
      %v4427 = vpop.permute.xlu0 %4426
      %4428 = vrot.lane.b32.xlu0 %v2523, 8
      %v4429 = vpop.permute.xlu0 %4428
      %4430 = vrot.lane.b32.xlu0 %v2524, 8
      %v4431 = vpop.permute.xlu0 %4430
      %4432 = vrot.lane.b32.xlu0 %v2525, 8
      %v4433 = vpop.permute.xlu0 %4432
      %4434 = vrot.lane.b32.xlu0 %v2526, 8
      %v4435 = vpop.permute.xlu0 %4434
      %4436 = vrot.lane.b32.xlu0 %v2527, 8
      %v4437 = vpop.permute.xlu0 %4436
      %4438 = vrot.lane.b32.xlu0 %v2528, 8
      %v4439 = vpop.permute.xlu0 %4438
      %4440 = vrot.lane.b32.xlu0 %v2529, 8
      %v4441 = vpop.permute.xlu0 %4440
      %4442 = vrot.lane.b32.xlu0 %v2530, 8
      %v4443 = vpop.permute.xlu0 %4442
      %4444 = vrot.lane.b32.xlu0 %v2531, 8
      %v4445 = vpop.permute.xlu0 %4444
      %4478 = vrot.lane.b32.xlu0 %v3449, 16
      %v4479 = vpop.permute.xlu0 %4478
      %4480 = vrot.lane.b32.xlu0 %v3450, 16
      %v4481 = vpop.permute.xlu0 %4480
      %4482 = vrot.lane.b32.xlu0 %v3451, 16
      %v4483 = vpop.permute.xlu0 %4482
      %4484 = vrot.lane.b32.xlu0 %v3452, 16
      %v4485 = vpop.permute.xlu0 %4484
      %4486 = vrot.lane.b32.xlu0 %v3453, 16
      %v4487 = vpop.permute.xlu0 %4486
      %4488 = vrot.lane.b32.xlu0 %v3454, 16
      %v4489 = vpop.permute.xlu0 %4488
      %4490 = vrot.lane.b32.xlu0 %v3455, 16
      %v4491 = vpop.permute.xlu0 %4490
      %4492 = vrot.lane.b32.xlu0 %v3456, 16
      %v4493 = vpop.permute.xlu0 %4492
      %4494 = vrot.lane.b32.xlu0 %v3457, 16
      %v4495 = vpop.permute.xlu0 %4494
      %4496 = vrot.lane.b32.xlu0 %v3458, 16
      %v4497 = vpop.permute.xlu0 %4496
      %4498 = vrot.lane.b32.xlu0 %v3459, 16
      %v4499 = vpop.permute.xlu0 %4498
      %4500 = vrot.lane.b32.xlu0 %v3460, 16
      %v4501 = vpop.permute.xlu0 %4500
      %4502 = vrot.lane.b32.xlu0 %v3461, 16
      %v4503 = vpop.permute.xlu0 %4502
      %4504 = vrot.lane.b32.xlu0 %v3462, 16
      %v4505 = vpop.permute.xlu0 %4504
      %4506 = vrot.lane.b32.xlu0 %v3463, 16
      %v4507 = vpop.permute.xlu0 %4506
      %4508 = vrot.lane.b32.xlu0 %v3464, 16
      %v4509 = vpop.permute.xlu0 %4508
      %4542 = vrot.lane.b32.xlu0 %v4382, 24
      %v4543 = vpop.permute.xlu0 %4542
      %4544 = vrot.lane.b32.xlu0 %v4383, 24
      %v4545 = vpop.permute.xlu0 %4544
      %4546 = vrot.lane.b32.xlu0 %v4384, 24
      %v4547 = vpop.permute.xlu0 %4546
      %4548 = vrot.lane.b32.xlu0 %v4385, 24
      %v4549 = vpop.permute.xlu0 %4548
      %4550 = vrot.lane.b32.xlu0 %v4386, 24
      %v4551 = vpop.permute.xlu0 %4550
      %4552 = vrot.lane.b32.xlu0 %v4387, 24
      %v4553 = vpop.permute.xlu0 %4552
      %4554 = vrot.lane.b32.xlu0 %v4388, 24
      %v4555 = vpop.permute.xlu0 %4554
      %4556 = vrot.lane.b32.xlu0 %v4389, 24
      %v4557 = vpop.permute.xlu0 %4556
      %4558 = vrot.lane.b32.xlu0 %v4390, 24
      %v4559 = vpop.permute.xlu0 %4558
      %4560 = vrot.lane.b32.xlu0 %v4391, 24
      %v4561 = vpop.permute.xlu0 %4560
      %4562 = vrot.lane.b32.xlu0 %v4392, 24
      %v4563 = vpop.permute.xlu0 %4562
      %4564 = vrot.lane.b32.xlu0 %v4393, 24
      %v4565 = vpop.permute.xlu0 %4564
      %4566 = vrot.lane.b32.xlu0 %v4394, 24
      %v4567 = vpop.permute.xlu0 %4566
      %4568 = vrot.lane.b32.xlu0 %v4395, 24
      %v4569 = vpop.permute.xlu0 %4568
      %4570 = vrot.lane.b32.xlu0 %v4396, 24
      %v4571 = vpop.permute.xlu0 %4570
      %4572 = vrot.lane.b32.xlu0 %v4397, 24
      %v4573 = vpop.permute.xlu0 %4572
      %v4590 = vsel %vm1094, %v1575, %v4415
      %v4591 = vsel %vm1094, %v1576, %v4417
      %v4592 = vsel %vm1094, %v1577, %v4419
      %v4593 = vsel %vm1094, %v1578, %v4421
      %v4594 = vsel %vm1094, %v1579, %v4423
      %v4595 = vsel %vm1094, %v1580, %v4425
      %v4596 = vsel %vm1094, %v1581, %v4427
      %v4597 = vsel %vm1094, %v1582, %v4429
      %v4598 = vsel %vm1094, %v1583, %v4431
      %v4599 = vsel %vm1094, %v1584, %v4433
      %v4600 = vsel %vm1094, %v1585, %v4435
      %v4601 = vsel %vm1094, %v1586, %v4437
      %v4602 = vsel %vm1094, %v1587, %v4439
      %v4603 = vsel %vm1094, %v1588, %v4441
      %v4604 = vsel %vm1094, %v1589, %v4443
      %v4605 = vsel %vm1094, %v1590, %v4445
      %vm4606 = vcmask 130048
      %v4607 = vsel %vm4606, %v4590, %v4479
      %v4608 = vsel %vm4606, %v4591, %v4481
      %v4609 = vsel %vm4606, %v4592, %v4483
      %v4610 = vsel %vm4606, %v4593, %v4485
      %v4611 = vsel %vm4606, %v4594, %v4487
      %v4612 = vsel %vm4606, %v4595, %v4489
      %v4613 = vsel %vm4606, %v4596, %v4491
      %v4614 = vsel %vm4606, %v4597, %v4493
      %v4615 = vsel %vm4606, %v4598, %v4495
      %v4616 = vsel %vm4606, %v4599, %v4497
      %v4617 = vsel %vm4606, %v4600, %v4499
      %v4618 = vsel %vm4606, %v4601, %v4501
      %v4619 = vsel %vm4606, %v4602, %v4503
      %v4620 = vsel %vm4606, %v4603, %v4505
      %v4621 = vsel %vm4606, %v4604, %v4507
      %v4622 = vsel %vm4606, %v4605, %v4509
      %vm4623 = vcmask 195584
      %v4624 = vsel %vm4623, %v4607, %v4543
      %v4625 = vsel %vm4623, %v4608, %v4545
      %v4626 = vsel %vm4623, %v4609, %v4547
      %v4627 = vsel %vm4623, %v4610, %v4549
      %v4628 = vsel %vm4623, %v4611, %v4551
      %v4629 = vsel %vm4623, %v4612, %v4553
      %v4630 = vsel %vm4623, %v4613, %v4555
      %v4631 = vsel %vm4623, %v4614, %v4557
      %v4632 = vsel %vm4623, %v4615, %v4559
      %v4633 = vsel %vm4623, %v4616, %v4561
      %v4634 = vsel %vm4623, %v4617, %v4563
      %v4635 = vsel %vm4623, %v4618, %v4565
      %v4636 = vsel %vm4623, %v4619, %v4567
      %v4637 = vsel %vm4623, %v4620, %v4569
      %v4638 = vsel %vm4623, %v4621, %v4571
      %v4639 = vsel %vm4623, %v4622, %v4573
      %vm4640 = vcmp.gt.f32.partialorder %v4624, 0.0
      %vm4641 = vcmp.gt.f32.partialorder %v4625, 0.0
      %vm4642 = vcmp.gt.f32.partialorder %v4626, 0.0
      %vm4643 = vcmp.gt.f32.partialorder %v4627, 0.0
      %vm4644 = vcmp.gt.f32.partialorder %v4628, 0.0
      %vm4645 = vcmp.gt.f32.partialorder %v4629, 0.0
      %vm4646 = vcmp.gt.f32.partialorder %v4630, 0.0
      %vm4647 = vcmp.gt.f32.partialorder %v4631, 0.0
      %vm4648 = vcmp.gt.f32.partialorder %v4632, 0.0
      %vm4649 = vcmp.gt.f32.partialorder %v4633, 0.0
      %vm4650 = vcmp.gt.f32.partialorder %v4634, 0.0
      %vm4651 = vcmp.gt.f32.partialorder %v4635, 0.0
      %vm4652 = vcmp.gt.f32.partialorder %v4636, 0.0
      %vm4653 = vcmp.gt.f32.partialorder %v4637, 0.0
      %vm4654 = vcmp.gt.f32.partialorder %v4638, 0.0
      %vm4655 = vcmp.gt.f32.partialorder %v4639, 0.0
      %v4656 = vmul.f32 %v4624, 1.442695
      %v4657 = vpow.pop %v4656
      %v4658 = vmul.f32 %v4625, 1.442695
      %v4659 = vpow.pop %v4658
      %v4660 = vmul.f32 %v4626, 1.442695
      %v4661 = vpow.pop %v4660
      %v4662 = vmul.f32 %v4627, 1.442695
      %v4663 = vpow.pop %v4662
      %v4664 = vmul.f32 %v4628, 1.442695
      %v4665 = vpow.pop %v4664
      %v4666 = vmul.f32 %v4629, 1.442695
      %v4667 = vpow.pop %v4666
      %v4668 = vmul.f32 %v4630, 1.442695
      %v4669 = vpow.pop %v4668
      %v4670 = vmul.f32 %v4631, 1.442695
      %v4671 = vpow.pop %v4670
      %v4672 = vmul.f32 %v4632, 1.442695
      %v4673 = vpow.pop %v4672
      %v4674 = vmul.f32 %v4633, 1.442695
      %v4675 = vpow.pop %v4674
      %v4676 = vmul.f32 %v4634, 1.442695
      %v4677 = vpow.pop %v4676
      %v4678 = vmul.f32 %v4635, 1.442695
      %v4679 = vpow.pop %v4678
      %v4680 = vmul.f32 %v4636, 1.442695
      %v4681 = vpow.pop %v4680
      %v4682 = vmul.f32 %v4637, 1.442695
      %v4683 = vpow.pop %v4682
      %v4684 = vmul.f32 %v4638, 1.442695
      %v4685 = vpow.pop %v4684
      %v4686 = vmul.f32 %v4639, 1.442695
      %v4687 = vpow.pop %v4686
      %v4688 = vsub.f32 %v4657, 1.0
      %v4689 = vsub.f32 %v4659, 1.0
      %v4690 = vsub.f32 %v4661, 1.0
      %v4691 = vsub.f32 %v4663, 1.0
      %v4692 = vsub.f32 %v4665, 1.0
      %v4693 = vsub.f32 %v4667, 1.0
      %v4694 = vsub.f32 %v4669, 1.0
      %v4695 = vsub.f32 %v4671, 1.0
      %v4696 = vsub.f32 %v4673, 1.0
      %v4697 = vsub.f32 %v4675, 1.0
      %v4698 = vsub.f32 %v4677, 1.0
      %v4699 = vsub.f32 %v4679, 1.0
      %v4700 = vsub.f32 %v4681, 1.0
      %v4701 = vsub.f32 %v4683, 1.0
      %v4702 = vsub.f32 %v4685, 1.0
      %v4703 = vsub.f32 %v4687, 1.0
      %v4704 = vsel %vm4640, %v4624, %v4688
      %v4705 = vsel %vm4641, %v4625, %v4689
      %v4706 = vsel %vm4642, %v4626, %v4690
      %v4707 = vsel %vm4643, %v4627, %v4691
      %v4708 = vsel %vm4644, %v4628, %v4692
      %v4709 = vsel %vm4645, %v4629, %v4693
      %v4710 = vsel %vm4646, %v4630, %v4694
      %v4711 = vsel %vm4647, %v4631, %v4695
      %v4712 = vsel %vm4648, %v4632, %v4696
      %v4713 = vsel %vm4649, %v4633, %v4697
      %v4714 = vsel %vm4650, %v4634, %v4698
      %v4715 = vsel %vm4651, %v4635, %v4699
      %v4716 = vsel %vm4652, %v4636, %v4700
      %v4717 = vsel %vm4653, %v4637, %v4701
      %v4718 = vsel %vm4654, %v4638, %v4702
      %v4719 = vsel %vm4655, %v4639, %v4703
      %v4720 = vadd.f32 %v4624, 0.94247776
      %v4721 = vadd.f32 %v4625, 0.94247776
      %v4722 = vadd.f32 %v4626, 0.94247776
      %v4723 = vadd.f32 %v4627, 0.94247776
      %v4724 = vadd.f32 %v4628, 0.94247776
      %v4725 = vadd.f32 %v4629, 0.94247776
      %v4726 = vadd.f32 %v4630, 0.94247776
      %v4727 = vadd.f32 %v4631, 0.94247776
      %v4728 = vadd.f32 %v4632, 0.94247776
      %v4729 = vadd.f32 %v4633, 0.94247776
      %v4730 = vadd.f32 %v4634, 0.94247776
      %v4731 = vadd.f32 %v4635, 0.94247776
      %v4732 = vadd.f32 %v4636, 0.94247776
      %v4733 = vadd.f32 %v4637, 0.94247776
      %v4734 = vadd.f32 %v4638, 0.94247776
      %v4735 = vadd.f32 %v4639, 0.94247776
      %v4736 = vand.u32 2147483647, %v4720
      %vm4737 = vcmp.le.f32.partialorder %v4736, 0.7853982
      %vm4738 = vcmp.lt.s32.totalorder %v4720, 0
      %v4739 = vand.u32 %v4720, 2139095040
      %v4740 = vshrl.u32 %v4739, 23
      %v4741 = vsub.s32 %v4740, 127
      %v4742 = vand.u32 2147483647, %v4720
      %v4743 = vand.u32 %v4742, 8388607
      %v4744 = vor.u32 %v4743, 8388608
      %v4745 = vsub.s32 0, %v4744
      %v4746 = vadd.s32 %v4741, 1
      %vm4747 = vcmp.gt.s32.totalorder %v4746, 0
      %v4748 = vsel %vm4747, %v4746, 0
      %v4749 = vshrl.u32 %v4748, 5
      %v4750 = vand.u32 %v4748, 31
      %v4751 = vsub.s32 32, %v4750
      %v4752 = vshrl.u32 683565275, %v4751
      %v4753 = vshll.u32 683565275, %v4750
      %v4754 = vshrl.u32 2475754826, %v4751
      %v4755 = vor.u32 %v4753, %v4754
      %v4756 = vshll.u32 2475754826, %v4750
      %v4757 = vshrl.u32 2131351028, %v4751
      %v4758 = vor.u32 %v4756, %v4757
      %v4759 = vshll.u32 2131351028, %v4750
      %v4760 = vshrl.u32 2102212464, %v4751
      %v4761 = vor.u32 %v4759, %v4760
      %v4762 = vshll.u32 2102212464, %v4750
      %v4763 = vshrl.u32 920167782, %v4751
      %v4764 = vor.u32 %v4762, %v4763
      %v4765 = vshll.u32 920167782, %v4750
      %v4766 = vshrl.u32 1326507024, %v4751
      %v4767 = vor.u32 %v4765, %v4766
      %vm4768 = vcmp.lt.s32.totalorder %v4749, 1
      %vm4769 = vcmp.lt.s32.totalorder %v4749, 2
      %vm4770 = vcmp.lt.s32.totalorder %v4749, 3
      %vm4771 = vcmp.lt.s32.totalorder %v4749, 4
      %v4772 = vsel %vm4768, %v4752, %v4755
      %v4773 = vsel %vm4771, %v4761, 2102212464
      %v4774 = vsel %vm4770, %v4758, %v4773
      %v4775 = vsel %vm4769, %v4772, %v4774
      %v4776 = vsel %vm4768, %v4755, %v4758
      %v4777 = vsel %vm4771, %v4764, 920167782
      %v4778 = vsel %vm4770, %v4761, %v4777
      %v4779 = vsel %vm4769, %v4776, %v4778
      %v4780 = vsel %vm4768, %v4758, %v4761
      %v4781 = vsel %vm4771, %v4767, 1326507024
      %v4782 = vsel %vm4770, %v4764, %v4781
      %v4783 = vsel %vm4769, %v4780, %v4782
      %v4784 = vshll.u32 %v4744, 8
      %v4785 = vmul.u32.u64.compose %v4784, %v4783
      %v4786 = vextract.low.u32 %v4785
      %v4787 = vextract.high.u32 %v4785
      %v4788 = vmul.u32.u64.compose %v4784, %v4779
      %v4789 = vextract.low.u32 %v4788
      %v4790 = vextract.high.u32 %v4788
      %v4791 = vmul.u32 %v4784, %v4775
      %v4792 = vadd.s32 %v4787, %v4789
      %vm4793 = vc.u32 %v4787, %v4789
      %v4794 = vadd.s32 %v4790, 1
      %v4795 = vsel %vm4793, %v4794, %v4790
      %v4796 = vadd.s32 %v4791, %v4795
      %v4797 = vadd.s32 %v4796, 536870912
      %v4798 = vshrl.u32 %v4797, 30
      %v4799 = vshll.u32 %v4798, 30
      %v4800 = vsub.s32 %v4796, %v4799
      %vm4801 = vcmp.lt.s32.totalorder %v4800, 0
      %v4802 = vsub.s32 0, %v4800
      %v4803 = vsel %vm4801, %v4802, %v4800
      %v4804 = vclz %v4803
      %v4805 = vsub.s32 %v4804, 2
      %vm4806 = vcmp.gt.s32.totalorder 0, %v4805
      %v4807 = vsel %vm4806, 0, %v4805
      %v4808 = vsub.s32 32, %v4807
      %v4809 = vshll.u32 %v4800, %v4807
      %v4810 = vshrl.u32 %v4792, %v4808
      %v4811 = vor.u32 %v4809, %v4810
      %v4812 = vsub.s32 4294967266, %v4807
      %v4813 = vadd.s32 %v4812, 127
      %v4814 = vshll.u32 %v4813, 23
      %v4815 = vor.u32 4788187, %v4814
      %v4816 = vand.u32 2147483647, %v4815
      %v4818 = vcvt.s32.f32 %v4811
      %v4819 = vmul.f32 %v4818, %v4816
      %v4820 = vxor.u32 %v4819, 2147483648
      %v4821 = vsel %vm4738, %v4820, %v4819
      %v4822 = vsub.s32 4, %v4798
      %v4823 = vsel %vm4738, %v4822, %v4798
      %v4824 = vsel %vm4737, %v4720, %v4821
      %v4825 = vsel %vm4737, 0, %v4823
      %v4826 = vcosq.f32.pop %v4824
      %v4827 = vsinq.f32.pop %v4824
      %vm4828 = vweird.f32 %v4720
      %v4829 = vand.u32 %v4825, 3
      %vm4830 = vcmp.lt.s32.totalorder %v4829, 2
      %vm4831 = vcmp.eq.s32.totalorder %v4829, 0
      %v4832 = vxor.u32 %v4827, 2147483648
      %v4833 = vsel %vm4831, %v4826, %v4832
      %vm4834 = vcmp.eq.s32.totalorder %v4829, 2
      %v4835 = vxor.u32 %v4826, 2147483648
      %v4836 = vsel %vm4834, %v4835, %v4827
      %v4837 = vsel %vm4830, %v4833, %v4836
      %v4838 = vsel %vm4828, nan, %v4837
      %v4839 = vand.u32 2147483647, %v4721
      %vm4840 = vcmp.le.f32.partialorder %v4839, 0.7853982
      %vm4841 = vcmp.lt.s32.totalorder %v4721, 0
      %v4842 = vand.u32 %v4721, 2139095040
      %v4843 = vshrl.u32 %v4842, 23
      %v4844 = vsub.s32 %v4843, 127
      %v4845 = vand.u32 2147483647, %v4721
      %v4846 = vand.u32 %v4845, 8388607
      %v4847 = vor.u32 %v4846, 8388608
      %v4848 = vsub.s32 0, %v4847
      %v4849 = vadd.s32 %v4844, 1
      %vm4850 = vcmp.gt.s32.totalorder %v4849, 0
      %v4851 = vsel %vm4850, %v4849, 0
      %v4852 = vshrl.u32 %v4851, 5
      %v4853 = vand.u32 %v4851, 31
      %v4854 = vsub.s32 32, %v4853
      %v4855 = vshrl.u32 683565275, %v4854
      %v4856 = vshll.u32 683565275, %v4853
      %v4857 = vshrl.u32 2475754826, %v4854
      %v4858 = vor.u32 %v4856, %v4857
      %v4859 = vshll.u32 2475754826, %v4853
      %v4860 = vshrl.u32 2131351028, %v4854
      %v4861 = vor.u32 %v4859, %v4860
      %v4862 = vshll.u32 2131351028, %v4853
      %v4863 = vshrl.u32 2102212464, %v4854
      %v4864 = vor.u32 %v4862, %v4863
      %v4865 = vshll.u32 2102212464, %v4853
      %v4866 = vshrl.u32 920167782, %v4854
      %v4867 = vor.u32 %v4865, %v4866
      %v4868 = vshll.u32 920167782, %v4853
      %v4869 = vshrl.u32 1326507024, %v4854
      %v4870 = vor.u32 %v4868, %v4869
      %vm4871 = vcmp.lt.s32.totalorder %v4852, 1
      %vm4872 = vcmp.lt.s32.totalorder %v4852, 2
      %vm4873 = vcmp.lt.s32.totalorder %v4852, 3
      %vm4874 = vcmp.lt.s32.totalorder %v4852, 4
      %v4875 = vsel %vm4871, %v4855, %v4858
      %v4876 = vsel %vm4874, %v4864, 2102212464
      %v4877 = vsel %vm4873, %v4861, %v4876
      %v4878 = vsel %vm4872, %v4875, %v4877
      %v4879 = vsel %vm4871, %v4858, %v4861
      %v4880 = vsel %vm4874, %v4867, 920167782
      %v4881 = vsel %vm4873, %v4864, %v4880
      %v4882 = vsel %vm4872, %v4879, %v4881
      %v4883 = vsel %vm4871, %v4861, %v4864
      %v4884 = vsel %vm4874, %v4870, 1326507024
      %v4885 = vsel %vm4873, %v4867, %v4884
      %v4886 = vsel %vm4872, %v4883, %v4885
      %v4887 = vshll.u32 %v4847, 8
      %v4888 = vmul.u32.u64.compose %v4887, %v4886
      %v4889 = vextract.low.u32 %v4888
      %v4890 = vextract.high.u32 %v4888
      %v4891 = vmul.u32.u64.compose %v4887, %v4882
      %v4892 = vextract.low.u32 %v4891
      %v4893 = vextract.high.u32 %v4891
      %v4894 = vmul.u32 %v4887, %v4878
      %v4895 = vadd.s32 %v4890, %v4892
      %vm4896 = vc.u32 %v4890, %v4892
      %v4897 = vadd.s32 %v4893, 1
      %v4898 = vsel %vm4896, %v4897, %v4893
      %v4899 = vadd.s32 %v4894, %v4898
      %v4900 = vadd.s32 %v4899, 536870912
      %v4901 = vshrl.u32 %v4900, 30
      %v4902 = vshll.u32 %v4901, 30
      %v4903 = vsub.s32 %v4899, %v4902
      %vm4904 = vcmp.lt.s32.totalorder %v4903, 0
      %v4905 = vsub.s32 0, %v4903
      %v4906 = vsel %vm4904, %v4905, %v4903
      %v4907 = vclz %v4906
      %v4908 = vsub.s32 %v4907, 2
      %vm4909 = vcmp.gt.s32.totalorder 0, %v4908
      %v4910 = vsel %vm4909, 0, %v4908
      %v4911 = vsub.s32 32, %v4910
      %v4912 = vshll.u32 %v4903, %v4910
      %v4913 = vshrl.u32 %v4895, %v4911
      %v4914 = vor.u32 %v4912, %v4913
      %v4915 = vsub.s32 4294967266, %v4910
      %v4916 = vadd.s32 %v4915, 127
      %v4917 = vshll.u32 %v4916, 23
      %v4918 = vor.u32 4788187, %v4917
      %v4919 = vand.u32 2147483647, %v4918
      %v4921 = vcvt.s32.f32 %v4914
      %v4922 = vmul.f32 %v4921, %v4919
      %v4923 = vxor.u32 %v4922, 2147483648
      %v4924 = vsel %vm4841, %v4923, %v4922
      %v4925 = vsub.s32 4, %v4901
      %v4926 = vsel %vm4841, %v4925, %v4901
      %v4927 = vsel %vm4840, %v4721, %v4924
      %v4928 = vsel %vm4840, 0, %v4926
      %v4929 = vcosq.f32.pop %v4927
      %v4930 = vsinq.f32.pop %v4927
      %vm4931 = vweird.f32 %v4721
      %v4932 = vand.u32 %v4928, 3
      %vm4933 = vcmp.lt.s32.totalorder %v4932, 2
      %vm4934 = vcmp.eq.s32.totalorder %v4932, 0
      %v4935 = vxor.u32 %v4930, 2147483648
      %v4936 = vsel %vm4934, %v4929, %v4935
      %vm4937 = vcmp.eq.s32.totalorder %v4932, 2
      %v4938 = vxor.u32 %v4929, 2147483648
      %v4939 = vsel %vm4937, %v4938, %v4930
      %v4940 = vsel %vm4933, %v4936, %v4939
      %v4941 = vsel %vm4931, nan, %v4940
      %v4942 = vand.u32 2147483647, %v4722
      %vm4943 = vcmp.le.f32.partialorder %v4942, 0.7853982
      %vm4944 = vcmp.lt.s32.totalorder %v4722, 0
      %v4945 = vand.u32 %v4722, 2139095040
      %v4946 = vshrl.u32 %v4945, 23
      %v4947 = vsub.s32 %v4946, 127
      %v4948 = vand.u32 2147483647, %v4722
      %v4949 = vand.u32 %v4948, 8388607
      %v4950 = vor.u32 %v4949, 8388608
      %v4951 = vsub.s32 0, %v4950
      %v4952 = vadd.s32 %v4947, 1
      %vm4953 = vcmp.gt.s32.totalorder %v4952, 0
      %v4954 = vsel %vm4953, %v4952, 0
      %v4955 = vshrl.u32 %v4954, 5
      %v4956 = vand.u32 %v4954, 31
      %v4957 = vsub.s32 32, %v4956
      %v4958 = vshrl.u32 683565275, %v4957
      %v4959 = vshll.u32 683565275, %v4956
      %v4960 = vshrl.u32 2475754826, %v4957
      %v4961 = vor.u32 %v4959, %v4960
      %v4962 = vshll.u32 2475754826, %v4956
      %v4963 = vshrl.u32 2131351028, %v4957
      %v4964 = vor.u32 %v4962, %v4963
      %v4965 = vshll.u32 2131351028, %v4956
      %v4966 = vshrl.u32 2102212464, %v4957
      %v4967 = vor.u32 %v4965, %v4966
      %v4968 = vshll.u32 2102212464, %v4956
      %v4969 = vshrl.u32 920167782, %v4957
      %v4970 = vor.u32 %v4968, %v4969
      %v4971 = vshll.u32 920167782, %v4956
      %v4972 = vshrl.u32 1326507024, %v4957
      %v4973 = vor.u32 %v4971, %v4972
      %vm4974 = vcmp.lt.s32.totalorder %v4955, 1
      %vm4975 = vcmp.lt.s32.totalorder %v4955, 2
      %vm4976 = vcmp.lt.s32.totalorder %v4955, 3
      %vm4977 = vcmp.lt.s32.totalorder %v4955, 4
      %v4978 = vsel %vm4974, %v4958, %v4961
      %v4979 = vsel %vm4977, %v4967, 2102212464
      %v4980 = vsel %vm4976, %v4964, %v4979
      %v4981 = vsel %vm4975, %v4978, %v4980
      %v4982 = vsel %vm4974, %v4961, %v4964
      %v4983 = vsel %vm4977, %v4970, 920167782
      %v4984 = vsel %vm4976, %v4967, %v4983
      %v4985 = vsel %vm4975, %v4982, %v4984
      %v4986 = vsel %vm4974, %v4964, %v4967
      %v4987 = vsel %vm4977, %v4973, 1326507024
      %v4988 = vsel %vm4976, %v4970, %v4987
      %v4989 = vsel %vm4975, %v4986, %v4988
      %v4990 = vshll.u32 %v4950, 8
      %v4991 = vmul.u32.u64.compose %v4990, %v4989
      %v4992 = vextract.low.u32 %v4991
      %v4993 = vextract.high.u32 %v4991
      %v4994 = vmul.u32.u64.compose %v4990, %v4985
      %v4995 = vextract.low.u32 %v4994
      %v4996 = vextract.high.u32 %v4994
      %v4997 = vmul.u32 %v4990, %v4981
      %v4998 = vadd.s32 %v4993, %v4995
      %vm4999 = vc.u32 %v4993, %v4995
      %v5000 = vadd.s32 %v4996, 1
      %v5001 = vsel %vm4999, %v5000, %v4996
      %v5002 = vadd.s32 %v4997, %v5001
      %v5003 = vadd.s32 %v5002, 536870912
      %v5004 = vshrl.u32 %v5003, 30
      %v5005 = vshll.u32 %v5004, 30
      %v5006 = vsub.s32 %v5002, %v5005
      %vm5007 = vcmp.lt.s32.totalorder %v5006, 0
      %v5008 = vsub.s32 0, %v5006
      %v5009 = vsel %vm5007, %v5008, %v5006
      %v5010 = vclz %v5009
      %v5011 = vsub.s32 %v5010, 2
      %vm5012 = vcmp.gt.s32.totalorder 0, %v5011
      %v5013 = vsel %vm5012, 0, %v5011
      %v5014 = vsub.s32 32, %v5013
      %v5015 = vshll.u32 %v5006, %v5013
      %v5016 = vshrl.u32 %v4998, %v5014
      %v5017 = vor.u32 %v5015, %v5016
      %v5018 = vsub.s32 4294967266, %v5013
      %v5019 = vadd.s32 %v5018, 127
      %v5020 = vshll.u32 %v5019, 23
      %v5021 = vor.u32 4788187, %v5020
      %v5022 = vand.u32 2147483647, %v5021
      %v5024 = vcvt.s32.f32 %v5017
      %v5025 = vmul.f32 %v5024, %v5022
      %v5026 = vxor.u32 %v5025, 2147483648
      %v5027 = vsel %vm4944, %v5026, %v5025
      %v5028 = vsub.s32 4, %v5004
      %v5029 = vsel %vm4944, %v5028, %v5004
      %v5030 = vsel %vm4943, %v4722, %v5027
      %v5031 = vsel %vm4943, 0, %v5029
      %v5032 = vcosq.f32.pop %v5030
      %v5033 = vsinq.f32.pop %v5030
      %vm5034 = vweird.f32 %v4722
      %v5035 = vand.u32 %v5031, 3
      %vm5036 = vcmp.lt.s32.totalorder %v5035, 2
      %vm5037 = vcmp.eq.s32.totalorder %v5035, 0
      %v5038 = vxor.u32 %v5033, 2147483648
      %v5039 = vsel %vm5037, %v5032, %v5038
      %vm5040 = vcmp.eq.s32.totalorder %v5035, 2
      %v5041 = vxor.u32 %v5032, 2147483648
      %v5042 = vsel %vm5040, %v5041, %v5033
      %v5043 = vsel %vm5036, %v5039, %v5042
      %v5044 = vsel %vm5034, nan, %v5043
      %v5045 = vand.u32 2147483647, %v4723
      %vm5046 = vcmp.le.f32.partialorder %v5045, 0.7853982
      %vm5047 = vcmp.lt.s32.totalorder %v4723, 0
      %v5048 = vand.u32 %v4723, 2139095040
      %v5049 = vshrl.u32 %v5048, 23
      %v5050 = vsub.s32 %v5049, 127
      %v5051 = vand.u32 2147483647, %v4723
      %v5052 = vand.u32 %v5051, 8388607
      %v5053 = vor.u32 %v5052, 8388608
      %v5054 = vsub.s32 0, %v5053
      %v5055 = vadd.s32 %v5050, 1
      %vm5056 = vcmp.gt.s32.totalorder %v5055, 0
      %v5057 = vsel %vm5056, %v5055, 0
      %v5058 = vshrl.u32 %v5057, 5
      %v5059 = vand.u32 %v5057, 31
      %v5060 = vsub.s32 32, %v5059
      %v5061 = vshrl.u32 683565275, %v5060
      %v5062 = vshll.u32 683565275, %v5059
      %v5063 = vshrl.u32 2475754826, %v5060
      %v5064 = vor.u32 %v5062, %v5063
      %v5065 = vshll.u32 2475754826, %v5059
      %v5066 = vshrl.u32 2131351028, %v5060
      %v5067 = vor.u32 %v5065, %v5066
      %v5068 = vshll.u32 2131351028, %v5059
      %v5069 = vshrl.u32 2102212464, %v5060
      %v5070 = vor.u32 %v5068, %v5069
      %v5071 = vshll.u32 2102212464, %v5059
      %v5072 = vshrl.u32 920167782, %v5060
      %v5073 = vor.u32 %v5071, %v5072
      %v5074 = vshll.u32 920167782, %v5059
      %v5075 = vshrl.u32 1326507024, %v5060
      %v5076 = vor.u32 %v5074, %v5075
      %vm5077 = vcmp.lt.s32.totalorder %v5058, 1
      %vm5078 = vcmp.lt.s32.totalorder %v5058, 2
      %vm5079 = vcmp.lt.s32.totalorder %v5058, 3
      %vm5080 = vcmp.lt.s32.totalorder %v5058, 4
      %v5081 = vsel %vm5077, %v5061, %v5064
      %v5082 = vsel %vm5080, %v5070, 2102212464
      %v5083 = vsel %vm5079, %v5067, %v5082
      %v5084 = vsel %vm5078, %v5081, %v5083
      %v5085 = vsel %vm5077, %v5064, %v5067
      %v5086 = vsel %vm5080, %v5073, 920167782
      %v5087 = vsel %vm5079, %v5070, %v5086
      %v5088 = vsel %vm5078, %v5085, %v5087
      %v5089 = vsel %vm5077, %v5067, %v5070
      %v5090 = vsel %vm5080, %v5076, 1326507024
      %v5091 = vsel %vm5079, %v5073, %v5090
      %v5092 = vsel %vm5078, %v5089, %v5091
      %v5093 = vshll.u32 %v5053, 8
      %v5094 = vmul.u32.u64.compose %v5093, %v5092
      %v5095 = vextract.low.u32 %v5094
      %v5096 = vextract.high.u32 %v5094
      %v5097 = vmul.u32.u64.compose %v5093, %v5088
      %v5098 = vextract.low.u32 %v5097
      %v5099 = vextract.high.u32 %v5097
      %v5100 = vmul.u32 %v5093, %v5084
      %v5101 = vadd.s32 %v5096, %v5098
      %vm5102 = vc.u32 %v5096, %v5098
      %v5103 = vadd.s32 %v5099, 1
      %v5104 = vsel %vm5102, %v5103, %v5099
      %v5105 = vadd.s32 %v5100, %v5104
      %v5106 = vadd.s32 %v5105, 536870912
      %v5107 = vshrl.u32 %v5106, 30
      %v5108 = vshll.u32 %v5107, 30
      %v5109 = vsub.s32 %v5105, %v5108
      %vm5110 = vcmp.lt.s32.totalorder %v5109, 0
      %v5111 = vsub.s32 0, %v5109
      %v5112 = vsel %vm5110, %v5111, %v5109
      %v5113 = vclz %v5112
      %v5114 = vsub.s32 %v5113, 2
      %vm5115 = vcmp.gt.s32.totalorder 0, %v5114
      %v5116 = vsel %vm5115, 0, %v5114
      %v5117 = vsub.s32 32, %v5116
      %v5118 = vshll.u32 %v5109, %v5116
      %v5119 = vshrl.u32 %v5101, %v5117
      %v5120 = vor.u32 %v5118, %v5119
      %v5121 = vsub.s32 4294967266, %v5116
      %v5122 = vadd.s32 %v5121, 127
      %v5123 = vshll.u32 %v5122, 23
      %v5124 = vor.u32 4788187, %v5123
      %v5125 = vand.u32 2147483647, %v5124
      %v5127 = vcvt.s32.f32 %v5120
      %v5128 = vmul.f32 %v5127, %v5125
      %v5129 = vxor.u32 %v5128, 2147483648
      %v5130 = vsel %vm5047, %v5129, %v5128
      %v5131 = vsub.s32 4, %v5107
      %v5132 = vsel %vm5047, %v5131, %v5107
      %v5133 = vsel %vm5046, %v4723, %v5130
      %v5134 = vsel %vm5046, 0, %v5132
      %v5135 = vcosq.f32.pop %v5133
      %v5136 = vsinq.f32.pop %v5133
      %vm5137 = vweird.f32 %v4723
      %v5138 = vand.u32 %v5134, 3
      %vm5139 = vcmp.lt.s32.totalorder %v5138, 2
      %vm5140 = vcmp.eq.s32.totalorder %v5138, 0
      %v5141 = vxor.u32 %v5136, 2147483648
      %v5142 = vsel %vm5140, %v5135, %v5141
      %vm5143 = vcmp.eq.s32.totalorder %v5138, 2
      %v5144 = vxor.u32 %v5135, 2147483648
      %v5145 = vsel %vm5143, %v5144, %v5136
      %v5146 = vsel %vm5139, %v5142, %v5145
      %v5147 = vsel %vm5137, nan, %v5146
      %v5148 = vand.u32 2147483647, %v4724
      %vm5149 = vcmp.le.f32.partialorder %v5148, 0.7853982
      %vm5150 = vcmp.lt.s32.totalorder %v4724, 0
      %v5151 = vand.u32 %v4724, 2139095040
      %v5152 = vshrl.u32 %v5151, 23
      %v5153 = vsub.s32 %v5152, 127
      %v5154 = vand.u32 2147483647, %v4724
      %v5155 = vand.u32 %v5154, 8388607
      %v5156 = vor.u32 %v5155, 8388608
      %v5157 = vsub.s32 0, %v5156
      %v5158 = vadd.s32 %v5153, 1
      %vm5159 = vcmp.gt.s32.totalorder %v5158, 0
      %v5160 = vsel %vm5159, %v5158, 0
      %v5161 = vshrl.u32 %v5160, 5
      %v5162 = vand.u32 %v5160, 31
      %v5163 = vsub.s32 32, %v5162
      %v5164 = vshrl.u32 683565275, %v5163
      %v5165 = vshll.u32 683565275, %v5162
      %v5166 = vshrl.u32 2475754826, %v5163
      %v5167 = vor.u32 %v5165, %v5166
      %v5168 = vshll.u32 2475754826, %v5162
      %v5169 = vshrl.u32 2131351028, %v5163
      %v5170 = vor.u32 %v5168, %v5169
      %v5171 = vshll.u32 2131351028, %v5162
      %v5172 = vshrl.u32 2102212464, %v5163
      %v5173 = vor.u32 %v5171, %v5172
      %v5174 = vshll.u32 2102212464, %v5162
      %v5175 = vshrl.u32 920167782, %v5163
      %v5176 = vor.u32 %v5174, %v5175
      %v5177 = vshll.u32 920167782, %v5162
      %v5178 = vshrl.u32 1326507024, %v5163
      %v5179 = vor.u32 %v5177, %v5178
      %vm5180 = vcmp.lt.s32.totalorder %v5161, 1
      %vm5181 = vcmp.lt.s32.totalorder %v5161, 2
      %vm5182 = vcmp.lt.s32.totalorder %v5161, 3
      %vm5183 = vcmp.lt.s32.totalorder %v5161, 4
      %v5184 = vsel %vm5180, %v5164, %v5167
      %v5185 = vsel %vm5183, %v5173, 2102212464
      %v5186 = vsel %vm5182, %v5170, %v5185
      %v5187 = vsel %vm5181, %v5184, %v5186
      %v5188 = vsel %vm5180, %v5167, %v5170
      %v5189 = vsel %vm5183, %v5176, 920167782
      %v5190 = vsel %vm5182, %v5173, %v5189
      %v5191 = vsel %vm5181, %v5188, %v5190
      %v5192 = vsel %vm5180, %v5170, %v5173
      %v5193 = vsel %vm5183, %v5179, 1326507024
      %v5194 = vsel %vm5182, %v5176, %v5193
      %v5195 = vsel %vm5181, %v5192, %v5194
      %v5196 = vshll.u32 %v5156, 8
      %v5197 = vmul.u32.u64.compose %v5196, %v5195
      %v5198 = vextract.low.u32 %v5197
      %v5199 = vextract.high.u32 %v5197
      %v5200 = vmul.u32.u64.compose %v5196, %v5191
      %v5201 = vextract.low.u32 %v5200
      %v5202 = vextract.high.u32 %v5200
      %v5203 = vmul.u32 %v5196, %v5187
      %v5204 = vadd.s32 %v5199, %v5201
      %vm5205 = vc.u32 %v5199, %v5201
      %v5206 = vadd.s32 %v5202, 1
      %v5207 = vsel %vm5205, %v5206, %v5202
      %v5208 = vadd.s32 %v5203, %v5207
      %v5209 = vadd.s32 %v5208, 536870912
      %v5210 = vshrl.u32 %v5209, 30
      %v5211 = vshll.u32 %v5210, 30
      %v5212 = vsub.s32 %v5208, %v5211
      %vm5213 = vcmp.lt.s32.totalorder %v5212, 0
      %v5214 = vsub.s32 0, %v5212
      %v5215 = vsel %vm5213, %v5214, %v5212
      %v5216 = vclz %v5215
      %v5217 = vsub.s32 %v5216, 2
      %vm5218 = vcmp.gt.s32.totalorder 0, %v5217
      %v5219 = vsel %vm5218, 0, %v5217
      %v5220 = vsub.s32 32, %v5219
      %v5221 = vshll.u32 %v5212, %v5219
      %v5222 = vshrl.u32 %v5204, %v5220
      %v5223 = vor.u32 %v5221, %v5222
      %v5224 = vsub.s32 4294967266, %v5219
      %v5225 = vadd.s32 %v5224, 127
      %v5226 = vshll.u32 %v5225, 23
      %v5227 = vor.u32 4788187, %v5226
      %v5228 = vand.u32 2147483647, %v5227
      %v5230 = vcvt.s32.f32 %v5223
      %v5231 = vmul.f32 %v5230, %v5228
      %v5232 = vxor.u32 %v5231, 2147483648
      %v5233 = vsel %vm5150, %v5232, %v5231
      %v5234 = vsub.s32 4, %v5210
      %v5235 = vsel %vm5150, %v5234, %v5210
      %v5236 = vsel %vm5149, %v4724, %v5233
      %v5237 = vsel %vm5149, 0, %v5235
      %v5238 = vcosq.f32.pop %v5236
      %v5239 = vsinq.f32.pop %v5236
      %vm5240 = vweird.f32 %v4724
      %v5241 = vand.u32 %v5237, 3
      %vm5242 = vcmp.lt.s32.totalorder %v5241, 2
      %vm5243 = vcmp.eq.s32.totalorder %v5241, 0
      %v5244 = vxor.u32 %v5239, 2147483648
      %v5245 = vsel %vm5243, %v5238, %v5244
      %vm5246 = vcmp.eq.s32.totalorder %v5241, 2
      %v5247 = vxor.u32 %v5238, 2147483648
      %v5248 = vsel %vm5246, %v5247, %v5239
      %v5249 = vsel %vm5242, %v5245, %v5248
      %v5250 = vsel %vm5240, nan, %v5249
      %v5251 = vand.u32 2147483647, %v4725
      %vm5252 = vcmp.le.f32.partialorder %v5251, 0.7853982
      %vm5253 = vcmp.lt.s32.totalorder %v4725, 0
      %v5254 = vand.u32 %v4725, 2139095040
      %v5255 = vshrl.u32 %v5254, 23
      %v5256 = vsub.s32 %v5255, 127
      %v5257 = vand.u32 2147483647, %v4725
      %v5258 = vand.u32 %v5257, 8388607
      %v5259 = vor.u32 %v5258, 8388608
      %v5260 = vsub.s32 0, %v5259
      %v5261 = vadd.s32 %v5256, 1
      %vm5262 = vcmp.gt.s32.totalorder %v5261, 0
      %v5263 = vsel %vm5262, %v5261, 0
      %v5264 = vshrl.u32 %v5263, 5
      %v5265 = vand.u32 %v5263, 31
      %v5266 = vsub.s32 32, %v5265
      %v5267 = vshrl.u32 683565275, %v5266
      %v5268 = vshll.u32 683565275, %v5265
      %v5269 = vshrl.u32 2475754826, %v5266
      %v5270 = vor.u32 %v5268, %v5269
      %v5271 = vshll.u32 2475754826, %v5265
      %v5272 = vshrl.u32 2131351028, %v5266
      %v5273 = vor.u32 %v5271, %v5272
      %v5274 = vshll.u32 2131351028, %v5265
      %v5275 = vshrl.u32 2102212464, %v5266
      %v5276 = vor.u32 %v5274, %v5275
      %v5277 = vshll.u32 2102212464, %v5265
      %v5278 = vshrl.u32 920167782, %v5266
      %v5279 = vor.u32 %v5277, %v5278
      %v5280 = vshll.u32 920167782, %v5265
      %v5281 = vshrl.u32 1326507024, %v5266
      %v5282 = vor.u32 %v5280, %v5281
      %vm5283 = vcmp.lt.s32.totalorder %v5264, 1
      %vm5284 = vcmp.lt.s32.totalorder %v5264, 2
      %vm5285 = vcmp.lt.s32.totalorder %v5264, 3
      %vm5286 = vcmp.lt.s32.totalorder %v5264, 4
      %v5287 = vsel %vm5283, %v5267, %v5270
      %v5288 = vsel %vm5286, %v5276, 2102212464
      %v5289 = vsel %vm5285, %v5273, %v5288
      %v5290 = vsel %vm5284, %v5287, %v5289
      %v5291 = vsel %vm5283, %v5270, %v5273
      %v5292 = vsel %vm5286, %v5279, 920167782
      %v5293 = vsel %vm5285, %v5276, %v5292
      %v5294 = vsel %vm5284, %v5291, %v5293
      %v5295 = vsel %vm5283, %v5273, %v5276
      %v5296 = vsel %vm5286, %v5282, 1326507024
      %v5297 = vsel %vm5285, %v5279, %v5296
      %v5298 = vsel %vm5284, %v5295, %v5297
      %v5299 = vshll.u32 %v5259, 8
      %v5300 = vmul.u32.u64.compose %v5299, %v5298
      %v5301 = vextract.low.u32 %v5300
      %v5302 = vextract.high.u32 %v5300
      %v5303 = vmul.u32.u64.compose %v5299, %v5294
      %v5304 = vextract.low.u32 %v5303
      %v5305 = vextract.high.u32 %v5303
      %v5306 = vmul.u32 %v5299, %v5290
      %v5307 = vadd.s32 %v5302, %v5304
      %vm5308 = vc.u32 %v5302, %v5304
      %v5309 = vadd.s32 %v5305, 1
      %v5310 = vsel %vm5308, %v5309, %v5305
      %v5311 = vadd.s32 %v5306, %v5310
      %v5312 = vadd.s32 %v5311, 536870912
      %v5313 = vshrl.u32 %v5312, 30
      %v5314 = vshll.u32 %v5313, 30
      %v5315 = vsub.s32 %v5311, %v5314
      %vm5316 = vcmp.lt.s32.totalorder %v5315, 0
      %v5317 = vsub.s32 0, %v5315
      %v5318 = vsel %vm5316, %v5317, %v5315
      %v5319 = vclz %v5318
      %v5320 = vsub.s32 %v5319, 2
      %vm5321 = vcmp.gt.s32.totalorder 0, %v5320
      %v5322 = vsel %vm5321, 0, %v5320
      %v5323 = vsub.s32 32, %v5322
      %v5324 = vshll.u32 %v5315, %v5322
      %v5325 = vshrl.u32 %v5307, %v5323
      %v5326 = vor.u32 %v5324, %v5325
      %v5327 = vsub.s32 4294967266, %v5322
      %v5328 = vadd.s32 %v5327, 127
      %v5329 = vshll.u32 %v5328, 23
      %v5330 = vor.u32 4788187, %v5329
      %v5331 = vand.u32 2147483647, %v5330
      %v5333 = vcvt.s32.f32 %v5326
      %v5334 = vmul.f32 %v5333, %v5331
      %v5335 = vxor.u32 %v5334, 2147483648
      %v5336 = vsel %vm5253, %v5335, %v5334
      %v5337 = vsub.s32 4, %v5313
      %v5338 = vsel %vm5253, %v5337, %v5313
      %v5339 = vsel %vm5252, %v4725, %v5336
      %v5340 = vsel %vm5252, 0, %v5338
      %v5341 = vcosq.f32.pop %v5339
      %v5342 = vsinq.f32.pop %v5339
      %vm5343 = vweird.f32 %v4725
      %v5344 = vand.u32 %v5340, 3
      %vm5345 = vcmp.lt.s32.totalorder %v5344, 2
      %vm5346 = vcmp.eq.s32.totalorder %v5344, 0
      %v5347 = vxor.u32 %v5342, 2147483648
      %v5348 = vsel %vm5346, %v5341, %v5347
      %vm5349 = vcmp.eq.s32.totalorder %v5344, 2
      %v5350 = vxor.u32 %v5341, 2147483648
      %v5351 = vsel %vm5349, %v5350, %v5342
      %v5352 = vsel %vm5345, %v5348, %v5351
      %v5353 = vsel %vm5343, nan, %v5352
      %v5354 = vand.u32 2147483647, %v4726
      %vm5355 = vcmp.le.f32.partialorder %v5354, 0.7853982
      %vm5356 = vcmp.lt.s32.totalorder %v4726, 0
      %v5357 = vand.u32 %v4726, 2139095040
      %v5358 = vshrl.u32 %v5357, 23
      %v5359 = vsub.s32 %v5358, 127
      %v5360 = vand.u32 2147483647, %v4726
      %v5361 = vand.u32 %v5360, 8388607
      %v5362 = vor.u32 %v5361, 8388608
      %v5363 = vsub.s32 0, %v5362
      %v5364 = vadd.s32 %v5359, 1
      %vm5365 = vcmp.gt.s32.totalorder %v5364, 0
      %v5366 = vsel %vm5365, %v5364, 0
      %v5367 = vshrl.u32 %v5366, 5
      %v5368 = vand.u32 %v5366, 31
      %v5369 = vsub.s32 32, %v5368
      %v5370 = vshrl.u32 683565275, %v5369
      %v5371 = vshll.u32 683565275, %v5368
      %v5372 = vshrl.u32 2475754826, %v5369
      %v5373 = vor.u32 %v5371, %v5372
      %v5374 = vshll.u32 2475754826, %v5368
      %v5375 = vshrl.u32 2131351028, %v5369
      %v5376 = vor.u32 %v5374, %v5375
      %v5377 = vshll.u32 2131351028, %v5368
      %v5378 = vshrl.u32 2102212464, %v5369
      %v5379 = vor.u32 %v5377, %v5378
      %v5380 = vshll.u32 2102212464, %v5368
      %v5381 = vshrl.u32 920167782, %v5369
      %v5382 = vor.u32 %v5380, %v5381
      %v5383 = vshll.u32 920167782, %v5368
      %v5384 = vshrl.u32 1326507024, %v5369
      %v5385 = vor.u32 %v5383, %v5384
      %vm5386 = vcmp.lt.s32.totalorder %v5367, 1
      %vm5387 = vcmp.lt.s32.totalorder %v5367, 2
      %vm5388 = vcmp.lt.s32.totalorder %v5367, 3
      %vm5389 = vcmp.lt.s32.totalorder %v5367, 4
      %v5390 = vsel %vm5386, %v5370, %v5373
      %v5391 = vsel %vm5389, %v5379, 2102212464
      %v5392 = vsel %vm5388, %v5376, %v5391
      %v5393 = vsel %vm5387, %v5390, %v5392
      %v5394 = vsel %vm5386, %v5373, %v5376
      %v5395 = vsel %vm5389, %v5382, 920167782
      %v5396 = vsel %vm5388, %v5379, %v5395
      %v5397 = vsel %vm5387, %v5394, %v5396
      %v5398 = vsel %vm5386, %v5376, %v5379
      %v5399 = vsel %vm5389, %v5385, 1326507024
      %v5400 = vsel %vm5388, %v5382, %v5399
      %v5401 = vsel %vm5387, %v5398, %v5400
      %v5402 = vshll.u32 %v5362, 8
      %v5403 = vmul.u32.u64.compose %v5402, %v5401
      %v5404 = vextract.low.u32 %v5403
      %v5405 = vextract.high.u32 %v5403
      %v5406 = vmul.u32.u64.compose %v5402, %v5397
      %v5407 = vextract.low.u32 %v5406
      %v5408 = vextract.high.u32 %v5406
      %v5409 = vmul.u32 %v5402, %v5393
      %v5410 = vadd.s32 %v5405, %v5407
      %vm5411 = vc.u32 %v5405, %v5407
      %v5412 = vadd.s32 %v5408, 1
      %v5413 = vsel %vm5411, %v5412, %v5408
      %v5414 = vadd.s32 %v5409, %v5413
      %v5415 = vadd.s32 %v5414, 536870912
      %v5416 = vshrl.u32 %v5415, 30
      %v5417 = vshll.u32 %v5416, 30
      %v5418 = vsub.s32 %v5414, %v5417
      %vm5419 = vcmp.lt.s32.totalorder %v5418, 0
      %v5420 = vsub.s32 0, %v5418
      %v5421 = vsel %vm5419, %v5420, %v5418
      %v5422 = vclz %v5421
      %v5423 = vsub.s32 %v5422, 2
      %vm5424 = vcmp.gt.s32.totalorder 0, %v5423
      %v5425 = vsel %vm5424, 0, %v5423
      %v5426 = vsub.s32 32, %v5425
      %v5427 = vshll.u32 %v5418, %v5425
      %v5428 = vshrl.u32 %v5410, %v5426
      %v5429 = vor.u32 %v5427, %v5428
      %v5430 = vsub.s32 4294967266, %v5425
      %v5431 = vadd.s32 %v5430, 127
      %v5432 = vshll.u32 %v5431, 23
      %v5433 = vor.u32 4788187, %v5432
      %v5434 = vand.u32 2147483647, %v5433
      %v5436 = vcvt.s32.f32 %v5429
      %v5437 = vmul.f32 %v5436, %v5434
      %v5438 = vxor.u32 %v5437, 2147483648
      %v5439 = vsel %vm5356, %v5438, %v5437
      %v5440 = vsub.s32 4, %v5416
      %v5441 = vsel %vm5356, %v5440, %v5416
      %v5442 = vsel %vm5355, %v4726, %v5439
      %v5443 = vsel %vm5355, 0, %v5441
      %v5444 = vcosq.f32.pop %v5442
      %v5445 = vsinq.f32.pop %v5442
      %vm5446 = vweird.f32 %v4726
      %v5447 = vand.u32 %v5443, 3
      %vm5448 = vcmp.lt.s32.totalorder %v5447, 2
      %vm5449 = vcmp.eq.s32.totalorder %v5447, 0
      %v5450 = vxor.u32 %v5445, 2147483648
      %v5451 = vsel %vm5449, %v5444, %v5450
      %vm5452 = vcmp.eq.s32.totalorder %v5447, 2
      %v5453 = vxor.u32 %v5444, 2147483648
      %v5454 = vsel %vm5452, %v5453, %v5445
      %v5455 = vsel %vm5448, %v5451, %v5454
      %v5456 = vsel %vm5446, nan, %v5455
      %v5457 = vand.u32 2147483647, %v4727
      %vm5458 = vcmp.le.f32.partialorder %v5457, 0.7853982
      %vm5459 = vcmp.lt.s32.totalorder %v4727, 0
      %v5460 = vand.u32 %v4727, 2139095040
      %v5461 = vshrl.u32 %v5460, 23
      %v5462 = vsub.s32 %v5461, 127
      %v5463 = vand.u32 2147483647, %v4727
      %v5464 = vand.u32 %v5463, 8388607
      %v5465 = vor.u32 %v5464, 8388608
      %v5466 = vsub.s32 0, %v5465
      %v5467 = vadd.s32 %v5462, 1
      %vm5468 = vcmp.gt.s32.totalorder %v5467, 0
      %v5469 = vsel %vm5468, %v5467, 0
      %v5470 = vshrl.u32 %v5469, 5
      %v5471 = vand.u32 %v5469, 31
      %v5472 = vsub.s32 32, %v5471
      %v5473 = vshrl.u32 683565275, %v5472
      %v5474 = vshll.u32 683565275, %v5471
      %v5475 = vshrl.u32 2475754826, %v5472
      %v5476 = vor.u32 %v5474, %v5475
      %v5477 = vshll.u32 2475754826, %v5471
      %v5478 = vshrl.u32 2131351028, %v5472
      %v5479 = vor.u32 %v5477, %v5478
      %v5480 = vshll.u32 2131351028, %v5471
      %v5481 = vshrl.u32 2102212464, %v5472
      %v5482 = vor.u32 %v5480, %v5481
      %v5483 = vshll.u32 2102212464, %v5471
      %v5484 = vshrl.u32 920167782, %v5472
      %v5485 = vor.u32 %v5483, %v5484
      %v5486 = vshll.u32 920167782, %v5471
      %v5487 = vshrl.u32 1326507024, %v5472
      %v5488 = vor.u32 %v5486, %v5487
      %vm5489 = vcmp.lt.s32.totalorder %v5470, 1
      %vm5490 = vcmp.lt.s32.totalorder %v5470, 2
      %vm5491 = vcmp.lt.s32.totalorder %v5470, 3
      %vm5492 = vcmp.lt.s32.totalorder %v5470, 4
      %v5493 = vsel %vm5489, %v5473, %v5476
      %v5494 = vsel %vm5492, %v5482, 2102212464
      %v5495 = vsel %vm5491, %v5479, %v5494
      %v5496 = vsel %vm5490, %v5493, %v5495
      %v5497 = vsel %vm5489, %v5476, %v5479
      %v5498 = vsel %vm5492, %v5485, 920167782
      %v5499 = vsel %vm5491, %v5482, %v5498
      %v5500 = vsel %vm5490, %v5497, %v5499
      %v5501 = vsel %vm5489, %v5479, %v5482
      %v5502 = vsel %vm5492, %v5488, 1326507024
      %v5503 = vsel %vm5491, %v5485, %v5502
      %v5504 = vsel %vm5490, %v5501, %v5503
      %v5505 = vshll.u32 %v5465, 8
      %v5506 = vmul.u32.u64.compose %v5505, %v5504
      %v5507 = vextract.low.u32 %v5506
      %v5508 = vextract.high.u32 %v5506
      %v5509 = vmul.u32.u64.compose %v5505, %v5500
      %v5510 = vextract.low.u32 %v5509
      %v5511 = vextract.high.u32 %v5509
      %v5512 = vmul.u32 %v5505, %v5496
      %v5513 = vadd.s32 %v5508, %v5510
      %vm5514 = vc.u32 %v5508, %v5510
      %v5515 = vadd.s32 %v5511, 1
      %v5516 = vsel %vm5514, %v5515, %v5511
      %v5517 = vadd.s32 %v5512, %v5516
      %v5518 = vadd.s32 %v5517, 536870912
      %v5519 = vshrl.u32 %v5518, 30
      %v5520 = vshll.u32 %v5519, 30
      %v5521 = vsub.s32 %v5517, %v5520
      %vm5522 = vcmp.lt.s32.totalorder %v5521, 0
      %v5523 = vsub.s32 0, %v5521
      %v5524 = vsel %vm5522, %v5523, %v5521
      %v5525 = vclz %v5524
      %v5526 = vsub.s32 %v5525, 2
      %vm5527 = vcmp.gt.s32.totalorder 0, %v5526
      %v5528 = vsel %vm5527, 0, %v5526
      %v5529 = vsub.s32 32, %v5528
      %v5530 = vshll.u32 %v5521, %v5528
      %v5531 = vshrl.u32 %v5513, %v5529
      %v5532 = vor.u32 %v5530, %v5531
      %v5533 = vsub.s32 4294967266, %v5528
      %v5534 = vadd.s32 %v5533, 127
      %v5535 = vshll.u32 %v5534, 23
      %v5536 = vor.u32 4788187, %v5535
      %v5537 = vand.u32 2147483647, %v5536
      %v5539 = vcvt.s32.f32 %v5532
      %v5540 = vmul.f32 %v5539, %v5537
      %v5541 = vxor.u32 %v5540, 2147483648
      %v5542 = vsel %vm5459, %v5541, %v5540
      %v5543 = vsub.s32 4, %v5519
      %v5544 = vsel %vm5459, %v5543, %v5519
      %v5545 = vsel %vm5458, %v4727, %v5542
      %v5546 = vsel %vm5458, 0, %v5544
      %v5547 = vcosq.f32.pop %v5545
      %v5548 = vsinq.f32.pop %v5545
      %vm5549 = vweird.f32 %v4727
      %v5550 = vand.u32 %v5546, 3
      %vm5551 = vcmp.lt.s32.totalorder %v5550, 2
      %vm5552 = vcmp.eq.s32.totalorder %v5550, 0
      %v5553 = vxor.u32 %v5548, 2147483648
      %v5554 = vsel %vm5552, %v5547, %v5553
      %vm5555 = vcmp.eq.s32.totalorder %v5550, 2
      %v5556 = vxor.u32 %v5547, 2147483648
      %v5557 = vsel %vm5555, %v5556, %v5548
      %v5558 = vsel %vm5551, %v5554, %v5557
      %v5559 = vsel %vm5549, nan, %v5558
      %v5560 = vand.u32 2147483647, %v4728
      %vm5561 = vcmp.le.f32.partialorder %v5560, 0.7853982
      %vm5562 = vcmp.lt.s32.totalorder %v4728, 0
      %v5563 = vand.u32 %v4728, 2139095040
      %v5564 = vshrl.u32 %v5563, 23
      %v5565 = vsub.s32 %v5564, 127
      %v5566 = vand.u32 2147483647, %v4728
      %v5567 = vand.u32 %v5566, 8388607
      %v5568 = vor.u32 %v5567, 8388608
      %v5569 = vsub.s32 0, %v5568
      %v5570 = vadd.s32 %v5565, 1
      %vm5571 = vcmp.gt.s32.totalorder %v5570, 0
      %v5572 = vsel %vm5571, %v5570, 0
      %v5573 = vshrl.u32 %v5572, 5
      %v5574 = vand.u32 %v5572, 31
      %v5575 = vsub.s32 32, %v5574
      %v5576 = vshrl.u32 683565275, %v5575
      %v5577 = vshll.u32 683565275, %v5574
      %v5578 = vshrl.u32 2475754826, %v5575
      %v5579 = vor.u32 %v5577, %v5578
      %v5580 = vshll.u32 2475754826, %v5574
      %v5581 = vshrl.u32 2131351028, %v5575
      %v5582 = vor.u32 %v5580, %v5581
      %v5583 = vshll.u32 2131351028, %v5574
      %v5584 = vshrl.u32 2102212464, %v5575
      %v5585 = vor.u32 %v5583, %v5584
      %v5586 = vshll.u32 2102212464, %v5574
      %v5587 = vshrl.u32 920167782, %v5575
      %v5588 = vor.u32 %v5586, %v5587
      %v5589 = vshll.u32 920167782, %v5574
      %v5590 = vshrl.u32 1326507024, %v5575
      %v5591 = vor.u32 %v5589, %v5590
      %vm5592 = vcmp.lt.s32.totalorder %v5573, 1
      %vm5593 = vcmp.lt.s32.totalorder %v5573, 2
      %vm5594 = vcmp.lt.s32.totalorder %v5573, 3
      %vm5595 = vcmp.lt.s32.totalorder %v5573, 4
      %v5596 = vsel %vm5592, %v5576, %v5579
      %v5597 = vsel %vm5595, %v5585, 2102212464
      %v5598 = vsel %vm5594, %v5582, %v5597
      %v5599 = vsel %vm5593, %v5596, %v5598
      %v5600 = vsel %vm5592, %v5579, %v5582
      %v5601 = vsel %vm5595, %v5588, 920167782
      %v5602 = vsel %vm5594, %v5585, %v5601
      %v5603 = vsel %vm5593, %v5600, %v5602
      %v5604 = vsel %vm5592, %v5582, %v5585
      %v5605 = vsel %vm5595, %v5591, 1326507024
      %v5606 = vsel %vm5594, %v5588, %v5605
      %v5607 = vsel %vm5593, %v5604, %v5606
      %v5608 = vshll.u32 %v5568, 8
      %v5609 = vmul.u32.u64.compose %v5608, %v5607
      %v5610 = vextract.low.u32 %v5609
      %v5611 = vextract.high.u32 %v5609
      %v5612 = vmul.u32.u64.compose %v5608, %v5603
      %v5613 = vextract.low.u32 %v5612
      %v5614 = vextract.high.u32 %v5612
      %v5615 = vmul.u32 %v5608, %v5599
      %v5616 = vadd.s32 %v5611, %v5613
      %vm5617 = vc.u32 %v5611, %v5613
      %v5618 = vadd.s32 %v5614, 1
      %v5619 = vsel %vm5617, %v5618, %v5614
      %v5620 = vadd.s32 %v5615, %v5619
      %v5621 = vadd.s32 %v5620, 536870912
      %v5622 = vshrl.u32 %v5621, 30
      %v5623 = vshll.u32 %v5622, 30
      %v5624 = vsub.s32 %v5620, %v5623
      %vm5625 = vcmp.lt.s32.totalorder %v5624, 0
      %v5626 = vsub.s32 0, %v5624
      %v5627 = vsel %vm5625, %v5626, %v5624
      %v5628 = vclz %v5627
      %v5629 = vsub.s32 %v5628, 2
      %vm5630 = vcmp.gt.s32.totalorder 0, %v5629
      %v5631 = vsel %vm5630, 0, %v5629
      %v5632 = vsub.s32 32, %v5631
      %v5633 = vshll.u32 %v5624, %v5631
      %v5634 = vshrl.u32 %v5616, %v5632
      %v5635 = vor.u32 %v5633, %v5634
      %v5636 = vsub.s32 4294967266, %v5631
      %v5637 = vadd.s32 %v5636, 127
      %v5638 = vshll.u32 %v5637, 23
      %v5639 = vor.u32 4788187, %v5638
      %v5640 = vand.u32 2147483647, %v5639
      %v5642 = vcvt.s32.f32 %v5635
      %v5643 = vmul.f32 %v5642, %v5640
      %v5644 = vxor.u32 %v5643, 2147483648
      %v5645 = vsel %vm5562, %v5644, %v5643
      %v5646 = vsub.s32 4, %v5622
      %v5647 = vsel %vm5562, %v5646, %v5622
      %v5648 = vsel %vm5561, %v4728, %v5645
      %v5649 = vsel %vm5561, 0, %v5647
      %v5650 = vcosq.f32.pop %v5648
      %v5651 = vsinq.f32.pop %v5648
      %vm5652 = vweird.f32 %v4728
      %v5653 = vand.u32 %v5649, 3
      %vm5654 = vcmp.lt.s32.totalorder %v5653, 2
      %vm5655 = vcmp.eq.s32.totalorder %v5653, 0
      %v5656 = vxor.u32 %v5651, 2147483648
      %v5657 = vsel %vm5655, %v5650, %v5656
      %vm5658 = vcmp.eq.s32.totalorder %v5653, 2
      %v5659 = vxor.u32 %v5650, 2147483648
      %v5660 = vsel %vm5658, %v5659, %v5651
      %v5661 = vsel %vm5654, %v5657, %v5660
      %v5662 = vsel %vm5652, nan, %v5661
      %v5663 = vand.u32 2147483647, %v4729
      %vm5664 = vcmp.le.f32.partialorder %v5663, 0.7853982
      %vm5665 = vcmp.lt.s32.totalorder %v4729, 0
      %v5666 = vand.u32 %v4729, 2139095040
      %v5667 = vshrl.u32 %v5666, 23
      %v5668 = vsub.s32 %v5667, 127
      %v5669 = vand.u32 2147483647, %v4729
      %v5670 = vand.u32 %v5669, 8388607
      %v5671 = vor.u32 %v5670, 8388608
      %v5672 = vsub.s32 0, %v5671
      %v5673 = vadd.s32 %v5668, 1
      %vm5674 = vcmp.gt.s32.totalorder %v5673, 0
      %v5675 = vsel %vm5674, %v5673, 0
      %v5676 = vshrl.u32 %v5675, 5
      %v5677 = vand.u32 %v5675, 31
      %v5678 = vsub.s32 32, %v5677
      %v5679 = vshrl.u32 683565275, %v5678
      %v5680 = vshll.u32 683565275, %v5677
      %v5681 = vshrl.u32 2475754826, %v5678
      %v5682 = vor.u32 %v5680, %v5681
      %v5683 = vshll.u32 2475754826, %v5677
      %v5684 = vshrl.u32 2131351028, %v5678
      %v5685 = vor.u32 %v5683, %v5684
      %v5686 = vshll.u32 2131351028, %v5677
      %v5687 = vshrl.u32 2102212464, %v5678
      %v5688 = vor.u32 %v5686, %v5687
      %v5689 = vshll.u32 2102212464, %v5677
      %v5690 = vshrl.u32 920167782, %v5678
      %v5691 = vor.u32 %v5689, %v5690
      %v5692 = vshll.u32 920167782, %v5677
      %v5693 = vshrl.u32 1326507024, %v5678
      %v5694 = vor.u32 %v5692, %v5693
      %vm5695 = vcmp.lt.s32.totalorder %v5676, 1
      %vm5696 = vcmp.lt.s32.totalorder %v5676, 2
      %vm5697 = vcmp.lt.s32.totalorder %v5676, 3
      %vm5698 = vcmp.lt.s32.totalorder %v5676, 4
      %v5699 = vsel %vm5695, %v5679, %v5682
      %v5700 = vsel %vm5698, %v5688, 2102212464
      %v5701 = vsel %vm5697, %v5685, %v5700
      %v5702 = vsel %vm5696, %v5699, %v5701
      %v5703 = vsel %vm5695, %v5682, %v5685
      %v5704 = vsel %vm5698, %v5691, 920167782
      %v5705 = vsel %vm5697, %v5688, %v5704
      %v5706 = vsel %vm5696, %v5703, %v5705
      %v5707 = vsel %vm5695, %v5685, %v5688
      %v5708 = vsel %vm5698, %v5694, 1326507024
      %v5709 = vsel %vm5697, %v5691, %v5708
      %v5710 = vsel %vm5696, %v5707, %v5709
      %v5711 = vshll.u32 %v5671, 8
      %v5712 = vmul.u32.u64.compose %v5711, %v5710
      %v5713 = vextract.low.u32 %v5712
      %v5714 = vextract.high.u32 %v5712
      %v5715 = vmul.u32.u64.compose %v5711, %v5706
      %v5716 = vextract.low.u32 %v5715
      %v5717 = vextract.high.u32 %v5715
      %v5718 = vmul.u32 %v5711, %v5702
      %v5719 = vadd.s32 %v5714, %v5716
      %vm5720 = vc.u32 %v5714, %v5716
      %v5721 = vadd.s32 %v5717, 1
      %v5722 = vsel %vm5720, %v5721, %v5717
      %v5723 = vadd.s32 %v5718, %v5722
      %v5724 = vadd.s32 %v5723, 536870912
      %v5725 = vshrl.u32 %v5724, 30
      %v5726 = vshll.u32 %v5725, 30
      %v5727 = vsub.s32 %v5723, %v5726
      %vm5728 = vcmp.lt.s32.totalorder %v5727, 0
      %v5729 = vsub.s32 0, %v5727
      %v5730 = vsel %vm5728, %v5729, %v5727
      %v5731 = vclz %v5730
      %v5732 = vsub.s32 %v5731, 2
      %vm5733 = vcmp.gt.s32.totalorder 0, %v5732
      %v5734 = vsel %vm5733, 0, %v5732
      %v5735 = vsub.s32 32, %v5734
      %v5736 = vshll.u32 %v5727, %v5734
      %v5737 = vshrl.u32 %v5719, %v5735
      %v5738 = vor.u32 %v5736, %v5737
      %v5739 = vsub.s32 4294967266, %v5734
      %v5740 = vadd.s32 %v5739, 127
      %v5741 = vshll.u32 %v5740, 23
      %v5742 = vor.u32 4788187, %v5741
      %v5743 = vand.u32 2147483647, %v5742
      %v5745 = vcvt.s32.f32 %v5738
      %v5746 = vmul.f32 %v5745, %v5743
      %v5747 = vxor.u32 %v5746, 2147483648
      %v5748 = vsel %vm5665, %v5747, %v5746
      %v5749 = vsub.s32 4, %v5725
      %v5750 = vsel %vm5665, %v5749, %v5725
      %v5751 = vsel %vm5664, %v4729, %v5748
      %v5752 = vsel %vm5664, 0, %v5750
      %v5753 = vcosq.f32.pop %v5751
      %v5754 = vsinq.f32.pop %v5751
      %vm5755 = vweird.f32 %v4729
      %v5756 = vand.u32 %v5752, 3
      %vm5757 = vcmp.lt.s32.totalorder %v5756, 2
      %vm5758 = vcmp.eq.s32.totalorder %v5756, 0
      %v5759 = vxor.u32 %v5754, 2147483648
      %v5760 = vsel %vm5758, %v5753, %v5759
      %vm5761 = vcmp.eq.s32.totalorder %v5756, 2
      %v5762 = vxor.u32 %v5753, 2147483648
      %v5763 = vsel %vm5761, %v5762, %v5754
      %v5764 = vsel %vm5757, %v5760, %v5763
      %v5765 = vsel %vm5755, nan, %v5764
      %v5766 = vand.u32 2147483647, %v4730
      %vm5767 = vcmp.le.f32.partialorder %v5766, 0.7853982
      %vm5768 = vcmp.lt.s32.totalorder %v4730, 0
      %v5769 = vand.u32 %v4730, 2139095040
      %v5770 = vshrl.u32 %v5769, 23
      %v5771 = vsub.s32 %v5770, 127
      %v5772 = vand.u32 2147483647, %v4730
      %v5773 = vand.u32 %v5772, 8388607
      %v5774 = vor.u32 %v5773, 8388608
      %v5775 = vsub.s32 0, %v5774
      %v5776 = vadd.s32 %v5771, 1
      %vm5777 = vcmp.gt.s32.totalorder %v5776, 0
      %v5778 = vsel %vm5777, %v5776, 0
      %v5779 = vshrl.u32 %v5778, 5
      %v5780 = vand.u32 %v5778, 31
      %v5781 = vsub.s32 32, %v5780
      %v5782 = vshrl.u32 683565275, %v5781
      %v5783 = vshll.u32 683565275, %v5780
      %v5784 = vshrl.u32 2475754826, %v5781
      %v5785 = vor.u32 %v5783, %v5784
      %v5786 = vshll.u32 2475754826, %v5780
      %v5787 = vshrl.u32 2131351028, %v5781
      %v5788 = vor.u32 %v5786, %v5787
      %v5789 = vshll.u32 2131351028, %v5780
      %v5790 = vshrl.u32 2102212464, %v5781
      %v5791 = vor.u32 %v5789, %v5790
      %v5792 = vshll.u32 2102212464, %v5780
      %v5793 = vshrl.u32 920167782, %v5781
      %v5794 = vor.u32 %v5792, %v5793
      %v5795 = vshll.u32 920167782, %v5780
      %v5796 = vshrl.u32 1326507024, %v5781
      %v5797 = vor.u32 %v5795, %v5796
      %vm5798 = vcmp.lt.s32.totalorder %v5779, 1
      %vm5799 = vcmp.lt.s32.totalorder %v5779, 2
      %vm5800 = vcmp.lt.s32.totalorder %v5779, 3
      %vm5801 = vcmp.lt.s32.totalorder %v5779, 4
      %v5802 = vsel %vm5798, %v5782, %v5785
      %v5803 = vsel %vm5801, %v5791, 2102212464
      %v5804 = vsel %vm5800, %v5788, %v5803
      %v5805 = vsel %vm5799, %v5802, %v5804
      %v5806 = vsel %vm5798, %v5785, %v5788
      %v5807 = vsel %vm5801, %v5794, 920167782
      %v5808 = vsel %vm5800, %v5791, %v5807
      %v5809 = vsel %vm5799, %v5806, %v5808
      %v5810 = vsel %vm5798, %v5788, %v5791
      %v5811 = vsel %vm5801, %v5797, 1326507024
      %v5812 = vsel %vm5800, %v5794, %v5811
      %v5813 = vsel %vm5799, %v5810, %v5812
      %v5814 = vshll.u32 %v5774, 8
      %v5815 = vmul.u32.u64.compose %v5814, %v5813
      %v5816 = vextract.low.u32 %v5815
      %v5817 = vextract.high.u32 %v5815
      %v5818 = vmul.u32.u64.compose %v5814, %v5809
      %v5819 = vextract.low.u32 %v5818
      %v5820 = vextract.high.u32 %v5818
      %v5821 = vmul.u32 %v5814, %v5805
      %v5822 = vadd.s32 %v5817, %v5819
      %vm5823 = vc.u32 %v5817, %v5819
      %v5824 = vadd.s32 %v5820, 1
      %v5825 = vsel %vm5823, %v5824, %v5820
      %v5826 = vadd.s32 %v5821, %v5825
      %v5827 = vadd.s32 %v5826, 536870912
      %v5828 = vshrl.u32 %v5827, 30
      %v5829 = vshll.u32 %v5828, 30
      %v5830 = vsub.s32 %v5826, %v5829
      %vm5831 = vcmp.lt.s32.totalorder %v5830, 0
      %v5832 = vsub.s32 0, %v5830
      %v5833 = vsel %vm5831, %v5832, %v5830
      %v5834 = vclz %v5833
      %v5835 = vsub.s32 %v5834, 2
      %vm5836 = vcmp.gt.s32.totalorder 0, %v5835
      %v5837 = vsel %vm5836, 0, %v5835
      %v5838 = vsub.s32 32, %v5837
      %v5839 = vshll.u32 %v5830, %v5837
      %v5840 = vshrl.u32 %v5822, %v5838
      %v5841 = vor.u32 %v5839, %v5840
      %v5842 = vsub.s32 4294967266, %v5837
      %v5843 = vadd.s32 %v5842, 127
      %v5844 = vshll.u32 %v5843, 23
      %v5845 = vor.u32 4788187, %v5844
      %v5846 = vand.u32 2147483647, %v5845
      %v5848 = vcvt.s32.f32 %v5841
      %v5849 = vmul.f32 %v5848, %v5846
      %v5850 = vxor.u32 %v5849, 2147483648
      %v5851 = vsel %vm5768, %v5850, %v5849
      %v5852 = vsub.s32 4, %v5828
      %v5853 = vsel %vm5768, %v5852, %v5828
      %v5854 = vsel %vm5767, %v4730, %v5851
      %v5855 = vsel %vm5767, 0, %v5853
      %v5856 = vcosq.f32.pop %v5854
      %v5857 = vsinq.f32.pop %v5854
      %vm5858 = vweird.f32 %v4730
      %v5859 = vand.u32 %v5855, 3
      %vm5860 = vcmp.lt.s32.totalorder %v5859, 2
      %vm5861 = vcmp.eq.s32.totalorder %v5859, 0
      %v5862 = vxor.u32 %v5857, 2147483648
      %v5863 = vsel %vm5861, %v5856, %v5862
      %vm5864 = vcmp.eq.s32.totalorder %v5859, 2
      %v5865 = vxor.u32 %v5856, 2147483648
      %v5866 = vsel %vm5864, %v5865, %v5857
      %v5867 = vsel %vm5860, %v5863, %v5866
      %v5868 = vsel %vm5858, nan, %v5867
      %v5869 = vand.u32 2147483647, %v4731
      %vm5870 = vcmp.le.f32.partialorder %v5869, 0.7853982
      %vm5871 = vcmp.lt.s32.totalorder %v4731, 0
      %v5872 = vand.u32 %v4731, 2139095040
      %v5873 = vshrl.u32 %v5872, 23
      %v5874 = vsub.s32 %v5873, 127
      %v5875 = vand.u32 2147483647, %v4731
      %v5876 = vand.u32 %v5875, 8388607
      %v5877 = vor.u32 %v5876, 8388608
      %v5878 = vsub.s32 0, %v5877
      %v5879 = vadd.s32 %v5874, 1
      %vm5880 = vcmp.gt.s32.totalorder %v5879, 0
      %v5881 = vsel %vm5880, %v5879, 0
      %v5882 = vshrl.u32 %v5881, 5
      %v5883 = vand.u32 %v5881, 31
      %v5884 = vsub.s32 32, %v5883
      %v5885 = vshrl.u32 683565275, %v5884
      %v5886 = vshll.u32 683565275, %v5883
      %v5887 = vshrl.u32 2475754826, %v5884
      %v5888 = vor.u32 %v5886, %v5887
      %v5889 = vshll.u32 2475754826, %v5883
      %v5890 = vshrl.u32 2131351028, %v5884
      %v5891 = vor.u32 %v5889, %v5890
      %v5892 = vshll.u32 2131351028, %v5883
      %v5893 = vshrl.u32 2102212464, %v5884
      %v5894 = vor.u32 %v5892, %v5893
      %v5895 = vshll.u32 2102212464, %v5883
      %v5896 = vshrl.u32 920167782, %v5884
      %v5897 = vor.u32 %v5895, %v5896
      %v5898 = vshll.u32 920167782, %v5883
      %v5899 = vshrl.u32 1326507024, %v5884
      %v5900 = vor.u32 %v5898, %v5899
      %vm5901 = vcmp.lt.s32.totalorder %v5882, 1
      %vm5902 = vcmp.lt.s32.totalorder %v5882, 2
      %vm5903 = vcmp.lt.s32.totalorder %v5882, 3
      %vm5904 = vcmp.lt.s32.totalorder %v5882, 4
      %v5905 = vsel %vm5901, %v5885, %v5888
      %v5906 = vsel %vm5904, %v5894, 2102212464
      %v5907 = vsel %vm5903, %v5891, %v5906
      %v5908 = vsel %vm5902, %v5905, %v5907
      %v5909 = vsel %vm5901, %v5888, %v5891
      %v5910 = vsel %vm5904, %v5897, 920167782
      %v5911 = vsel %vm5903, %v5894, %v5910
      %v5912 = vsel %vm5902, %v5909, %v5911
      %v5913 = vsel %vm5901, %v5891, %v5894
      %v5914 = vsel %vm5904, %v5900, 1326507024
      %v5915 = vsel %vm5903, %v5897, %v5914
      %v5916 = vsel %vm5902, %v5913, %v5915
      %v5917 = vshll.u32 %v5877, 8
      %v5918 = vmul.u32.u64.compose %v5917, %v5916
      %v5919 = vextract.low.u32 %v5918
      %v5920 = vextract.high.u32 %v5918
      %v5921 = vmul.u32.u64.compose %v5917, %v5912
      %v5922 = vextract.low.u32 %v5921
      %v5923 = vextract.high.u32 %v5921
      %v5924 = vmul.u32 %v5917, %v5908
      %v5925 = vadd.s32 %v5920, %v5922
      %vm5926 = vc.u32 %v5920, %v5922
      %v5927 = vadd.s32 %v5923, 1
      %v5928 = vsel %vm5926, %v5927, %v5923
      %v5929 = vadd.s32 %v5924, %v5928
      %v5930 = vadd.s32 %v5929, 536870912
      %v5931 = vshrl.u32 %v5930, 30
      %v5932 = vshll.u32 %v5931, 30
      %v5933 = vsub.s32 %v5929, %v5932
      %vm5934 = vcmp.lt.s32.totalorder %v5933, 0
      %v5935 = vsub.s32 0, %v5933
      %v5936 = vsel %vm5934, %v5935, %v5933
      %v5937 = vclz %v5936
      %v5938 = vsub.s32 %v5937, 2
      %vm5939 = vcmp.gt.s32.totalorder 0, %v5938
      %v5940 = vsel %vm5939, 0, %v5938
      %v5941 = vsub.s32 32, %v5940
      %v5942 = vshll.u32 %v5933, %v5940
      %v5943 = vshrl.u32 %v5925, %v5941
      %v5944 = vor.u32 %v5942, %v5943
      %v5945 = vsub.s32 4294967266, %v5940
      %v5946 = vadd.s32 %v5945, 127
      %v5947 = vshll.u32 %v5946, 23
      %v5948 = vor.u32 4788187, %v5947
      %v5949 = vand.u32 2147483647, %v5948
      %v5951 = vcvt.s32.f32 %v5944
      %v5952 = vmul.f32 %v5951, %v5949
      %v5953 = vxor.u32 %v5952, 2147483648
      %v5954 = vsel %vm5871, %v5953, %v5952
      %v5955 = vsub.s32 4, %v5931
      %v5956 = vsel %vm5871, %v5955, %v5931
      %v5957 = vsel %vm5870, %v4731, %v5954
      %v5958 = vsel %vm5870, 0, %v5956
      %v5959 = vcosq.f32.pop %v5957
      %v5960 = vsinq.f32.pop %v5957
      %vm5961 = vweird.f32 %v4731
      %v5962 = vand.u32 %v5958, 3
      %vm5963 = vcmp.lt.s32.totalorder %v5962, 2
      %vm5964 = vcmp.eq.s32.totalorder %v5962, 0
      %v5965 = vxor.u32 %v5960, 2147483648
      %v5966 = vsel %vm5964, %v5959, %v5965
      %vm5967 = vcmp.eq.s32.totalorder %v5962, 2
      %v5968 = vxor.u32 %v5959, 2147483648
      %v5969 = vsel %vm5967, %v5968, %v5960
      %v5970 = vsel %vm5963, %v5966, %v5969
      %v5971 = vsel %vm5961, nan, %v5970
      %v5972 = vand.u32 2147483647, %v4732
      %vm5973 = vcmp.le.f32.partialorder %v5972, 0.7853982
      %vm5974 = vcmp.lt.s32.totalorder %v4732, 0
      %v5975 = vand.u32 %v4732, 2139095040
      %v5976 = vshrl.u32 %v5975, 23
      %v5977 = vsub.s32 %v5976, 127
      %v5978 = vand.u32 2147483647, %v4732
      %v5979 = vand.u32 %v5978, 8388607
      %v5980 = vor.u32 %v5979, 8388608
      %v5981 = vsub.s32 0, %v5980
      %v5982 = vadd.s32 %v5977, 1
      %vm5983 = vcmp.gt.s32.totalorder %v5982, 0
      %v5984 = vsel %vm5983, %v5982, 0
      %v5985 = vshrl.u32 %v5984, 5
      %v5986 = vand.u32 %v5984, 31
      %v5987 = vsub.s32 32, %v5986
      %v5988 = vshrl.u32 683565275, %v5987
      %v5989 = vshll.u32 683565275, %v5986
      %v5990 = vshrl.u32 2475754826, %v5987
      %v5991 = vor.u32 %v5989, %v5990
      %v5992 = vshll.u32 2475754826, %v5986
      %v5993 = vshrl.u32 2131351028, %v5987
      %v5994 = vor.u32 %v5992, %v5993
      %v5995 = vshll.u32 2131351028, %v5986
      %v5996 = vshrl.u32 2102212464, %v5987
      %v5997 = vor.u32 %v5995, %v5996
      %v5998 = vshll.u32 2102212464, %v5986
      %v5999 = vshrl.u32 920167782, %v5987
      %v6000 = vor.u32 %v5998, %v5999
      %v6001 = vshll.u32 920167782, %v5986
      %v6002 = vshrl.u32 1326507024, %v5987
      %v6003 = vor.u32 %v6001, %v6002
      %vm6004 = vcmp.lt.s32.totalorder %v5985, 1
      %vm6005 = vcmp.lt.s32.totalorder %v5985, 2
      %vm6006 = vcmp.lt.s32.totalorder %v5985, 3
      %vm6007 = vcmp.lt.s32.totalorder %v5985, 4
      %v6008 = vsel %vm6004, %v5988, %v5991
      %v6009 = vsel %vm6007, %v5997, 2102212464
      %v6010 = vsel %vm6006, %v5994, %v6009
      %v6011 = vsel %vm6005, %v6008, %v6010
      %v6012 = vsel %vm6004, %v5991, %v5994
      %v6013 = vsel %vm6007, %v6000, 920167782
      %v6014 = vsel %vm6006, %v5997, %v6013
      %v6015 = vsel %vm6005, %v6012, %v6014
      %v6016 = vsel %vm6004, %v5994, %v5997
      %v6017 = vsel %vm6007, %v6003, 1326507024
      %v6018 = vsel %vm6006, %v6000, %v6017
      %v6019 = vsel %vm6005, %v6016, %v6018
      %v6020 = vshll.u32 %v5980, 8
      %v6021 = vmul.u32.u64.compose %v6020, %v6019
      %v6022 = vextract.low.u32 %v6021
      %v6023 = vextract.high.u32 %v6021
      %v6024 = vmul.u32.u64.compose %v6020, %v6015
      %v6025 = vextract.low.u32 %v6024
      %v6026 = vextract.high.u32 %v6024
      %v6027 = vmul.u32 %v6020, %v6011
      %v6028 = vadd.s32 %v6023, %v6025
      %vm6029 = vc.u32 %v6023, %v6025
      %v6030 = vadd.s32 %v6026, 1
      %v6031 = vsel %vm6029, %v6030, %v6026
      %v6032 = vadd.s32 %v6027, %v6031
      %v6033 = vadd.s32 %v6032, 536870912
      %v6034 = vshrl.u32 %v6033, 30
      %v6035 = vshll.u32 %v6034, 30
      %v6036 = vsub.s32 %v6032, %v6035
      %vm6037 = vcmp.lt.s32.totalorder %v6036, 0
      %v6038 = vsub.s32 0, %v6036
      %v6039 = vsel %vm6037, %v6038, %v6036
      %v6040 = vclz %v6039
      %v6041 = vsub.s32 %v6040, 2
      %vm6042 = vcmp.gt.s32.totalorder 0, %v6041
      %v6043 = vsel %vm6042, 0, %v6041
      %v6044 = vsub.s32 32, %v6043
      %v6045 = vshll.u32 %v6036, %v6043
      %v6046 = vshrl.u32 %v6028, %v6044
      %v6047 = vor.u32 %v6045, %v6046
      %v6048 = vsub.s32 4294967266, %v6043
      %v6049 = vadd.s32 %v6048, 127
      %v6050 = vshll.u32 %v6049, 23
      %v6051 = vor.u32 4788187, %v6050
      %v6052 = vand.u32 2147483647, %v6051
      %v6054 = vcvt.s32.f32 %v6047
      %v6055 = vmul.f32 %v6054, %v6052
      %v6056 = vxor.u32 %v6055, 2147483648
      %v6057 = vsel %vm5974, %v6056, %v6055
      %v6058 = vsub.s32 4, %v6034
      %v6059 = vsel %vm5974, %v6058, %v6034
      %v6060 = vsel %vm5973, %v4732, %v6057
      %v6061 = vsel %vm5973, 0, %v6059
      %v6062 = vcosq.f32.pop %v6060
      %v6063 = vsinq.f32.pop %v6060
      %vm6064 = vweird.f32 %v4732
      %v6065 = vand.u32 %v6061, 3
      %vm6066 = vcmp.lt.s32.totalorder %v6065, 2
      %vm6067 = vcmp.eq.s32.totalorder %v6065, 0
      %v6068 = vxor.u32 %v6063, 2147483648
      %v6069 = vsel %vm6067, %v6062, %v6068
      %vm6070 = vcmp.eq.s32.totalorder %v6065, 2
      %v6071 = vxor.u32 %v6062, 2147483648
      %v6072 = vsel %vm6070, %v6071, %v6063
      %v6073 = vsel %vm6066, %v6069, %v6072
      %v6074 = vsel %vm6064, nan, %v6073
      %v6075 = vand.u32 2147483647, %v4733
      %vm6076 = vcmp.le.f32.partialorder %v6075, 0.7853982
      %vm6077 = vcmp.lt.s32.totalorder %v4733, 0
      %v6078 = vand.u32 %v4733, 2139095040
      %v6079 = vshrl.u32 %v6078, 23
      %v6080 = vsub.s32 %v6079, 127
      %v6081 = vand.u32 2147483647, %v4733
      %v6082 = vand.u32 %v6081, 8388607
      %v6083 = vor.u32 %v6082, 8388608
      %v6084 = vsub.s32 0, %v6083
      %v6085 = vadd.s32 %v6080, 1
      %vm6086 = vcmp.gt.s32.totalorder %v6085, 0
      %v6087 = vsel %vm6086, %v6085, 0
      %v6088 = vshrl.u32 %v6087, 5
      %v6089 = vand.u32 %v6087, 31
      %v6090 = vsub.s32 32, %v6089
      %v6091 = vshrl.u32 683565275, %v6090
      %v6092 = vshll.u32 683565275, %v6089
      %v6093 = vshrl.u32 2475754826, %v6090
      %v6094 = vor.u32 %v6092, %v6093
      %v6095 = vshll.u32 2475754826, %v6089
      %v6096 = vshrl.u32 2131351028, %v6090
      %v6097 = vor.u32 %v6095, %v6096
      %v6098 = vshll.u32 2131351028, %v6089
      %v6099 = vshrl.u32 2102212464, %v6090
      %v6100 = vor.u32 %v6098, %v6099
      %v6101 = vshll.u32 2102212464, %v6089
      %v6102 = vshrl.u32 920167782, %v6090
      %v6103 = vor.u32 %v6101, %v6102
      %v6104 = vshll.u32 920167782, %v6089
      %v6105 = vshrl.u32 1326507024, %v6090
      %v6106 = vor.u32 %v6104, %v6105
      %vm6107 = vcmp.lt.s32.totalorder %v6088, 1
      %vm6108 = vcmp.lt.s32.totalorder %v6088, 2
      %vm6109 = vcmp.lt.s32.totalorder %v6088, 3
      %vm6110 = vcmp.lt.s32.totalorder %v6088, 4
      %v6111 = vsel %vm6107, %v6091, %v6094
      %v6112 = vsel %vm6110, %v6100, 2102212464
      %v6113 = vsel %vm6109, %v6097, %v6112
      %v6114 = vsel %vm6108, %v6111, %v6113
      %v6115 = vsel %vm6107, %v6094, %v6097
      %v6116 = vsel %vm6110, %v6103, 920167782
      %v6117 = vsel %vm6109, %v6100, %v6116
      %v6118 = vsel %vm6108, %v6115, %v6117
      %v6119 = vsel %vm6107, %v6097, %v6100
      %v6120 = vsel %vm6110, %v6106, 1326507024
      %v6121 = vsel %vm6109, %v6103, %v6120
      %v6122 = vsel %vm6108, %v6119, %v6121
      %v6123 = vshll.u32 %v6083, 8
      %v6124 = vmul.u32.u64.compose %v6123, %v6122
      %v6125 = vextract.low.u32 %v6124
      %v6126 = vextract.high.u32 %v6124
      %v6127 = vmul.u32.u64.compose %v6123, %v6118
      %v6128 = vextract.low.u32 %v6127
      %v6129 = vextract.high.u32 %v6127
      %v6130 = vmul.u32 %v6123, %v6114
      %v6131 = vadd.s32 %v6126, %v6128
      %vm6132 = vc.u32 %v6126, %v6128
      %v6133 = vadd.s32 %v6129, 1
      %v6134 = vsel %vm6132, %v6133, %v6129
      %v6135 = vadd.s32 %v6130, %v6134
      %v6136 = vadd.s32 %v6135, 536870912
      %v6137 = vshrl.u32 %v6136, 30
      %v6138 = vshll.u32 %v6137, 30
      %v6139 = vsub.s32 %v6135, %v6138
      %vm6140 = vcmp.lt.s32.totalorder %v6139, 0
      %v6141 = vsub.s32 0, %v6139
      %v6142 = vsel %vm6140, %v6141, %v6139
      %v6143 = vclz %v6142
      %v6144 = vsub.s32 %v6143, 2
      %vm6145 = vcmp.gt.s32.totalorder 0, %v6144
      %v6146 = vsel %vm6145, 0, %v6144
      %v6147 = vsub.s32 32, %v6146
      %v6148 = vshll.u32 %v6139, %v6146
      %v6149 = vshrl.u32 %v6131, %v6147
      %v6150 = vor.u32 %v6148, %v6149
      %v6151 = vsub.s32 4294967266, %v6146
      %v6152 = vadd.s32 %v6151, 127
      %v6153 = vshll.u32 %v6152, 23
      %v6154 = vor.u32 4788187, %v6153
      %v6155 = vand.u32 2147483647, %v6154
      %v6157 = vcvt.s32.f32 %v6150
      %v6158 = vmul.f32 %v6157, %v6155
      %v6159 = vxor.u32 %v6158, 2147483648
      %v6160 = vsel %vm6077, %v6159, %v6158
      %v6161 = vsub.s32 4, %v6137
      %v6162 = vsel %vm6077, %v6161, %v6137
      %v6163 = vsel %vm6076, %v4733, %v6160
      %v6164 = vsel %vm6076, 0, %v6162
      %v6165 = vcosq.f32.pop %v6163
      %v6166 = vsinq.f32.pop %v6163
      %vm6167 = vweird.f32 %v4733
      %v6168 = vand.u32 %v6164, 3
      %vm6169 = vcmp.lt.s32.totalorder %v6168, 2
      %vm6170 = vcmp.eq.s32.totalorder %v6168, 0
      %v6171 = vxor.u32 %v6166, 2147483648
      %v6172 = vsel %vm6170, %v6165, %v6171
      %vm6173 = vcmp.eq.s32.totalorder %v6168, 2
      %v6174 = vxor.u32 %v6165, 2147483648
      %v6175 = vsel %vm6173, %v6174, %v6166
      %v6176 = vsel %vm6169, %v6172, %v6175
      %v6177 = vsel %vm6167, nan, %v6176
      %v6178 = vand.u32 2147483647, %v4734
      %vm6179 = vcmp.le.f32.partialorder %v6178, 0.7853982
      %vm6180 = vcmp.lt.s32.totalorder %v4734, 0
      %v6181 = vand.u32 %v4734, 2139095040
      %v6182 = vshrl.u32 %v6181, 23
      %v6183 = vsub.s32 %v6182, 127
      %v6184 = vand.u32 2147483647, %v4734
      %v6185 = vand.u32 %v6184, 8388607
      %v6186 = vor.u32 %v6185, 8388608
      %v6187 = vsub.s32 0, %v6186
      %v6188 = vadd.s32 %v6183, 1
      %vm6189 = vcmp.gt.s32.totalorder %v6188, 0
      %v6190 = vsel %vm6189, %v6188, 0
      %v6191 = vshrl.u32 %v6190, 5
      %v6192 = vand.u32 %v6190, 31
      %v6193 = vsub.s32 32, %v6192
      %v6194 = vshrl.u32 683565275, %v6193
      %v6195 = vshll.u32 683565275, %v6192
      %v6196 = vshrl.u32 2475754826, %v6193
      %v6197 = vor.u32 %v6195, %v6196
      %v6198 = vshll.u32 2475754826, %v6192
      %v6199 = vshrl.u32 2131351028, %v6193
      %v6200 = vor.u32 %v6198, %v6199
      %v6201 = vshll.u32 2131351028, %v6192
      %v6202 = vshrl.u32 2102212464, %v6193
      %v6203 = vor.u32 %v6201, %v6202
      %v6204 = vshll.u32 2102212464, %v6192
      %v6205 = vshrl.u32 920167782, %v6193
      %v6206 = vor.u32 %v6204, %v6205
      %v6207 = vshll.u32 920167782, %v6192
      %v6208 = vshrl.u32 1326507024, %v6193
      %v6209 = vor.u32 %v6207, %v6208
      %vm6210 = vcmp.lt.s32.totalorder %v6191, 1
      %vm6211 = vcmp.lt.s32.totalorder %v6191, 2
      %vm6212 = vcmp.lt.s32.totalorder %v6191, 3
      %vm6213 = vcmp.lt.s32.totalorder %v6191, 4
      %v6214 = vsel %vm6210, %v6194, %v6197
      %v6215 = vsel %vm6213, %v6203, 2102212464
      %v6216 = vsel %vm6212, %v6200, %v6215
      %v6217 = vsel %vm6211, %v6214, %v6216
      %v6218 = vsel %vm6210, %v6197, %v6200
      %v6219 = vsel %vm6213, %v6206, 920167782
      %v6220 = vsel %vm6212, %v6203, %v6219
      %v6221 = vsel %vm6211, %v6218, %v6220
      %v6222 = vsel %vm6210, %v6200, %v6203
      %v6223 = vsel %vm6213, %v6209, 1326507024
      %v6224 = vsel %vm6212, %v6206, %v6223
      %v6225 = vsel %vm6211, %v6222, %v6224
      %v6226 = vshll.u32 %v6186, 8
      %v6227 = vmul.u32.u64.compose %v6226, %v6225
      %v6228 = vextract.low.u32 %v6227
      %v6229 = vextract.high.u32 %v6227
      %v6230 = vmul.u32.u64.compose %v6226, %v6221
      %v6231 = vextract.low.u32 %v6230
      %v6232 = vextract.high.u32 %v6230
      %v6233 = vmul.u32 %v6226, %v6217
      %v6234 = vadd.s32 %v6229, %v6231
      %vm6235 = vc.u32 %v6229, %v6231
      %v6236 = vadd.s32 %v6232, 1
      %v6237 = vsel %vm6235, %v6236, %v6232
      %v6238 = vadd.s32 %v6233, %v6237
      %v6239 = vadd.s32 %v6238, 536870912
      %v6240 = vshrl.u32 %v6239, 30
      %v6241 = vshll.u32 %v6240, 30
      %v6242 = vsub.s32 %v6238, %v6241
      %vm6243 = vcmp.lt.s32.totalorder %v6242, 0
      %v6244 = vsub.s32 0, %v6242
      %v6245 = vsel %vm6243, %v6244, %v6242
      %v6246 = vclz %v6245
      %v6247 = vsub.s32 %v6246, 2
      %vm6248 = vcmp.gt.s32.totalorder 0, %v6247
      %v6249 = vsel %vm6248, 0, %v6247
      %v6250 = vsub.s32 32, %v6249
      %v6251 = vshll.u32 %v6242, %v6249
      %v6252 = vshrl.u32 %v6234, %v6250
      %v6253 = vor.u32 %v6251, %v6252
      %v6254 = vsub.s32 4294967266, %v6249
      %v6255 = vadd.s32 %v6254, 127
      %v6256 = vshll.u32 %v6255, 23
      %v6257 = vor.u32 4788187, %v6256
      %v6258 = vand.u32 2147483647, %v6257
      %v6260 = vcvt.s32.f32 %v6253
      %v6261 = vmul.f32 %v6260, %v6258
      %v6262 = vxor.u32 %v6261, 2147483648
      %v6263 = vsel %vm6180, %v6262, %v6261
      %v6264 = vsub.s32 4, %v6240
      %v6265 = vsel %vm6180, %v6264, %v6240
      %v6266 = vsel %vm6179, %v4734, %v6263
      %v6267 = vsel %vm6179, 0, %v6265
      %v6268 = vcosq.f32.pop %v6266
      %v6269 = vsinq.f32.pop %v6266
      %vm6270 = vweird.f32 %v4734
      %v6271 = vand.u32 %v6267, 3
      %vm6272 = vcmp.lt.s32.totalorder %v6271, 2
      %vm6273 = vcmp.eq.s32.totalorder %v6271, 0
      %v6274 = vxor.u32 %v6269, 2147483648
      %v6275 = vsel %vm6273, %v6268, %v6274
      %vm6276 = vcmp.eq.s32.totalorder %v6271, 2
      %v6277 = vxor.u32 %v6268, 2147483648
      %v6278 = vsel %vm6276, %v6277, %v6269
      %v6279 = vsel %vm6272, %v6275, %v6278
      %v6280 = vsel %vm6270, nan, %v6279
      %v6281 = vand.u32 2147483647, %v4735
      %vm6282 = vcmp.le.f32.partialorder %v6281, 0.7853982
      %vm6283 = vcmp.lt.s32.totalorder %v4735, 0
      %v6284 = vand.u32 %v4735, 2139095040
      %v6285 = vshrl.u32 %v6284, 23
      %v6286 = vsub.s32 %v6285, 127
      %v6287 = vand.u32 2147483647, %v4735
      %v6288 = vand.u32 %v6287, 8388607
      %v6289 = vor.u32 %v6288, 8388608
      %v6290 = vsub.s32 0, %v6289
      %v6291 = vadd.s32 %v6286, 1
      %vm6292 = vcmp.gt.s32.totalorder %v6291, 0
      %v6293 = vsel %vm6292, %v6291, 0
      %v6294 = vshrl.u32 %v6293, 5
      %v6295 = vand.u32 %v6293, 31
      %v6296 = vsub.s32 32, %v6295
      %v6297 = vshrl.u32 683565275, %v6296
      %v6298 = vshll.u32 683565275, %v6295
      %v6299 = vshrl.u32 2475754826, %v6296
      %v6300 = vor.u32 %v6298, %v6299
      %v6301 = vshll.u32 2475754826, %v6295
      %v6302 = vshrl.u32 2131351028, %v6296
      %v6303 = vor.u32 %v6301, %v6302
      %v6304 = vshll.u32 2131351028, %v6295
      %v6305 = vshrl.u32 2102212464, %v6296
      %v6306 = vor.u32 %v6304, %v6305
      %v6307 = vshll.u32 2102212464, %v6295
      %v6308 = vshrl.u32 920167782, %v6296
      %v6309 = vor.u32 %v6307, %v6308
      %v6310 = vshll.u32 920167782, %v6295
      %v6311 = vshrl.u32 1326507024, %v6296
      %v6312 = vor.u32 %v6310, %v6311
      %vm6313 = vcmp.lt.s32.totalorder %v6294, 1
      %vm6314 = vcmp.lt.s32.totalorder %v6294, 2
      %vm6315 = vcmp.lt.s32.totalorder %v6294, 3
      %vm6316 = vcmp.lt.s32.totalorder %v6294, 4
      %v6317 = vsel %vm6313, %v6297, %v6300
      %v6318 = vsel %vm6316, %v6306, 2102212464
      %v6319 = vsel %vm6315, %v6303, %v6318
      %v6320 = vsel %vm6314, %v6317, %v6319
      %v6321 = vsel %vm6313, %v6300, %v6303
      %v6322 = vsel %vm6316, %v6309, 920167782
      %v6323 = vsel %vm6315, %v6306, %v6322
      %v6324 = vsel %vm6314, %v6321, %v6323
      %v6325 = vsel %vm6313, %v6303, %v6306
      %v6326 = vsel %vm6316, %v6312, 1326507024
      %v6327 = vsel %vm6315, %v6309, %v6326
      %v6328 = vsel %vm6314, %v6325, %v6327
      %v6329 = vshll.u32 %v6289, 8
      %v6330 = vmul.u32.u64.compose %v6329, %v6328
      %v6331 = vextract.low.u32 %v6330
      %v6332 = vextract.high.u32 %v6330
      %v6333 = vmul.u32.u64.compose %v6329, %v6324
      %v6334 = vextract.low.u32 %v6333
      %v6335 = vextract.high.u32 %v6333
      %v6336 = vmul.u32 %v6329, %v6320
      %v6337 = vadd.s32 %v6332, %v6334
      %vm6338 = vc.u32 %v6332, %v6334
      %v6339 = vadd.s32 %v6335, 1
      %v6340 = vsel %vm6338, %v6339, %v6335
      %v6341 = vadd.s32 %v6336, %v6340
      %v6342 = vadd.s32 %v6341, 536870912
      %v6343 = vshrl.u32 %v6342, 30
      %v6344 = vshll.u32 %v6343, 30
      %v6345 = vsub.s32 %v6341, %v6344
      %vm6346 = vcmp.lt.s32.totalorder %v6345, 0
      %v6347 = vsub.s32 0, %v6345
      %v6348 = vsel %vm6346, %v6347, %v6345
      %v6349 = vclz %v6348
      %v6350 = vsub.s32 %v6349, 2
      %vm6351 = vcmp.gt.s32.totalorder 0, %v6350
      %v6352 = vsel %vm6351, 0, %v6350
      %v6353 = vsub.s32 32, %v6352
      %v6354 = vshll.u32 %v6345, %v6352
      %v6355 = vshrl.u32 %v6337, %v6353
      %v6356 = vor.u32 %v6354, %v6355
      %v6357 = vsub.s32 4294967266, %v6352
      %v6358 = vadd.s32 %v6357, 127
      %v6359 = vshll.u32 %v6358, 23
      %v6360 = vor.u32 4788187, %v6359
      %v6361 = vand.u32 2147483647, %v6360
      %v6363 = vcvt.s32.f32 %v6356
      %v6364 = vmul.f32 %v6363, %v6361
      %v6365 = vxor.u32 %v6364, 2147483648
      %v6366 = vsel %vm6283, %v6365, %v6364
      %v6367 = vsub.s32 4, %v6343
      %v6368 = vsel %vm6283, %v6367, %v6343
      %v6369 = vsel %vm6282, %v4735, %v6366
      %v6370 = vsel %vm6282, 0, %v6368
      %v6371 = vcosq.f32.pop %v6369
      %v6372 = vsinq.f32.pop %v6369
      %vm6373 = vweird.f32 %v4735
      %v6374 = vand.u32 %v6370, 3
      %vm6375 = vcmp.lt.s32.totalorder %v6374, 2
      %vm6376 = vcmp.eq.s32.totalorder %v6374, 0
      %v6377 = vxor.u32 %v6372, 2147483648
      %v6378 = vsel %vm6376, %v6371, %v6377
      %vm6379 = vcmp.eq.s32.totalorder %v6374, 2
      %v6380 = vxor.u32 %v6371, 2147483648
      %v6381 = vsel %vm6379, %v6380, %v6372
      %v6382 = vsel %vm6375, %v6378, %v6381
      %v6383 = vsel %vm6373, nan, %v6382
      %v6384 = vmul.f32 %v4838, 0.5
      %v6385 = vmul.f32 %v4941, 0.5
      %v6386 = vmul.f32 %v5044, 0.5
      %v6387 = vmul.f32 %v5147, 0.5
      %v6388 = vmul.f32 %v5250, 0.5
      %v6389 = vmul.f32 %v5353, 0.5
      %v6390 = vmul.f32 %v5456, 0.5
      %v6391 = vmul.f32 %v5559, 0.5
      %v6392 = vmul.f32 %v5662, 0.5
      %v6393 = vmul.f32 %v5765, 0.5
      %v6394 = vmul.f32 %v5868, 0.5
      %v6395 = vmul.f32 %v5971, 0.5
      %v6396 = vmul.f32 %v6074, 0.5
      %v6397 = vmul.f32 %v6177, 0.5
      %v6398 = vmul.f32 %v6280, 0.5
      %v6399 = vmul.f32 %v6383, 0.5
      %v6400 = vadd.f32 %v4704, %v6384
      %v6401 = vadd.f32 %v4705, %v6385
      %v6402 = vadd.f32 %v4706, %v6386
      %v6403 = vadd.f32 %v4707, %v6387
      %v6404 = vadd.f32 %v4708, %v6388
      %v6405 = vadd.f32 %v4709, %v6389
      %v6406 = vadd.f32 %v4710, %v6390
      %v6407 = vadd.f32 %v4711, %v6391
      %v6408 = vadd.f32 %v4712, %v6392
      %v6409 = vadd.f32 %v4713, %v6393
      %v6410 = vadd.f32 %v4714, %v6394
      %v6411 = vadd.f32 %v4715, %v6395
      %v6412 = vadd.f32 %v4716, %v6396
      %v6413 = vadd.f32 %v4717, %v6397
      %v6414 = vadd.f32 %v4718, %v6398
      %v6415 = vadd.f32 %v4719, %v6399
      %v6416 = vpack.c.bf16 %v6401, %v6400
      %v6417 = vpack.c.bf16 %v6403, %v6402
      %v6418 = vpack.c.bf16 %v6405, %v6404
      %v6419 = vpack.c.bf16 %v6407, %v6406
      %v6420 = vpack.c.bf16 %v6409, %v6408
      %v6421 = vpack.c.bf16 %v6411, %v6410
      %v6422 = vpack.c.bf16 %v6413, %v6412
      %v6423 = vpack.c.bf16 %v6415, %v6414
      %v6425 = vsel %vm484, %v6416, 0
      %v6428 = vsel %vm484, %v6417, 0
      %v6431 = vsel %vm484, %v6418, 0
      %v6434 = vsel %vm484, %v6419, 0
      %v6437 = vsel %vm484, %v6420, 0
      %v6440 = vsel %vm484, %v6421, 0
      %v6443 = vsel %vm484, %v6422, 0
      %v6446 = vsel %vm484, %v6423, 0
      %6448 = vmatprep.subr.bf16.mxu0 0
      %6449 = vmatpush1.bf16.msra.mxu0 %v336
      %6450 = vmatprep.subr.bf16.mxu0 0
      %6451 = vmatpush1.bf16.msra.mxu0 %v337
      %6452 = vmatprep.subr.bf16.mxu0 0
      %6453 = vmatpush1.bf16.msra.mxu0 0
      %6454 = vmatprep.subr.bf16.mxu0 0
      %6455 = vmatpush1.bf16.msra.mxu0 0
      %6456 = vmatprep.subr.bf16.mxu0 0
      %6457 = vmatpush1.bf16.msra.mxu0 0
      %6458 = vmatprep.subr.bf16.mxu0 0
      %6459 = vmatpush1.bf16.msra.mxu0 0
      %6460 = vmatprep.subr.bf16.mxu0 0
      %6461 = vmatpush1.bf16.msra.mxu0 0
      %6462 = vmatprep.subr.bf16.mxu0 0
      %6463 = vmatpush1.bf16.msra.mxu0 0
      %6464 = vmatprep.subr.bf16.mxu0 0
      %6465 = vmatpush1.bf16.msra.mxu0 0
      %6466 = vmatprep.subr.bf16.mxu0 0
      %6467 = vmatpush1.bf16.msra.mxu0 0
      %6468 = vmatprep.subr.bf16.mxu0 0
      %6469 = vmatpush1.bf16.msra.mxu0 0
      %6470 = vmatprep.subr.bf16.mxu0 0
      %6471 = vmatpush1.bf16.msra.mxu0 0
      %6472 = vmatprep.subr.bf16.mxu0 0
      %6473 = vmatpush1.bf16.msra.mxu0 0
      %6474 = vmatprep.subr.bf16.mxu0 0
      %6475 = vmatpush1.bf16.msra.mxu0 0
      %6476 = vmatprep.subr.bf16.mxu0 0
      %6477 = vmatpush1.bf16.msra.mxu0 0
      %6478 = vmatprep.subr.bf16.mxu0 0
      %6479 = vmatpush1.bf16.msra.mxu0 0
      %6480 = vmatprep.mubr.bf16.mxu0 0
      %6481 = vmatmul.mubr.bf16.gmra.mrb[0].mxu0 %v6425
      %v6482 = vpop.f32.mrb[0].mxu0
      %v6483 = vadd.f32 0.0, %v6482
      %v6484 = vpop.f32.mrb[0].mxu0
      %v6485 = vpop.f32.mrb[0].mxu0
      %v6486 = vadd.f32 0.0, %v6485
      %v6487 = vpop.f32.mrb[0].mxu0
      %6488 = vmatprep.mubr.bf16.mxu0 0
      %6489 = vmatmul.mubr.bf16.gmra.mrb[0].mxu0 %v6428
      %v6490 = vpop.f32.mrb[0].mxu0
      %v6491 = vadd.f32 0.0, %v6490
      %v6492 = vpop.f32.mrb[0].mxu0
      %v6493 = vpop.f32.mrb[0].mxu0
      %v6494 = vadd.f32 0.0, %v6493
      %v6495 = vpop.f32.mrb[0].mxu0
      %6496 = vmatprep.mubr.bf16.mxu0 0
      %6497 = vmatmul.mubr.bf16.gmra.mrb[0].mxu0 %v6431
      %v6498 = vpop.f32.mrb[0].mxu0
      %v6499 = vadd.f32 0.0, %v6498
      %v6500 = vpop.f32.mrb[0].mxu0
      %v6501 = vpop.f32.mrb[0].mxu0
      %v6502 = vadd.f32 0.0, %v6501
      %v6503 = vpop.f32.mrb[0].mxu0
      %6504 = vmatprep.mubr.bf16.mxu0 0
      %6505 = vmatmul.mubr.bf16.gmra.mrb[0].mxu0 %v6434
      %v6506 = vpop.f32.mrb[0].mxu0
      %v6507 = vadd.f32 0.0, %v6506
      %v6508 = vpop.f32.mrb[0].mxu0
      %v6509 = vpop.f32.mrb[0].mxu0
      %v6510 = vadd.f32 0.0, %v6509
      %v6511 = vpop.f32.mrb[0].mxu0
      %6512 = vmatprep.mubr.bf16.mxu0 0
      %6513 = vmatmul.mubr.bf16.gmra.mrb[0].mxu0 %v6437
      %v6514 = vpop.f32.mrb[0].mxu0
      %v6515 = vadd.f32 0.0, %v6514
      %v6516 = vpop.f32.mrb[0].mxu0
      %v6517 = vpop.f32.mrb[0].mxu0
      %v6518 = vadd.f32 0.0, %v6517
      %v6519 = vpop.f32.mrb[0].mxu0
      %6520 = vmatprep.mubr.bf16.mxu0 0
      %6521 = vmatmul.mubr.bf16.gmra.mrb[0].mxu0 %v6440
      %v6522 = vpop.f32.mrb[0].mxu0
      %v6523 = vadd.f32 0.0, %v6522
      %v6524 = vpop.f32.mrb[0].mxu0
      %v6525 = vpop.f32.mrb[0].mxu0
      %v6526 = vadd.f32 0.0, %v6525
      %v6527 = vpop.f32.mrb[0].mxu0
      %6528 = vmatprep.mubr.bf16.mxu0 0
      %6529 = vmatmul.mubr.bf16.gmra.mrb[0].mxu0 %v6443
      %v6530 = vpop.f32.mrb[0].mxu0
      %v6531 = vadd.f32 0.0, %v6530
      %v6532 = vpop.f32.mrb[0].mxu0
      %v6533 = vpop.f32.mrb[0].mxu0
      %v6534 = vadd.f32 0.0, %v6533
      %v6535 = vpop.f32.mrb[0].mxu0
      %6536 = vmatprep.mubr.bf16.mxu0 0
      %6537 = vmatmul.mubr.bf16.gmra.mrb[0].mxu0 %v6446
      %v6538 = vpop.f32.mrb[0].mxu0
      %v6539 = vadd.f32 0.0, %v6538
      %v6540 = vpop.f32.mrb[0].mxu0
      %v6541 = vpop.f32.mrb[0].mxu0
      %v6542 = vadd.f32 0.0, %v6541
      %v6543 = vpop.f32.mrb[0].mxu0
      %6544 = vdwg.mxu0
      %v6545 = vpack.c.bf16 %v6486, %v6483
      %v6546 = vpack.c.bf16 %v6494, %v6491
      %v6547 = vpack.c.bf16 %v6502, %v6499
      %v6548 = vpack.c.bf16 %v6510, %v6507
      %v6549 = vpack.c.bf16 %v6518, %v6515
      %v6550 = vpack.c.bf16 %v6526, %v6523
      %v6551 = vpack.c.bf16 %v6534, %v6531
      %v6552 = vpack.c.bf16 %v6542, %v6539
      %v6554 = vlaneseq
      %v6555 = vshrl.u32 %v6554, 7
      %v6556 = vsub.s32 0, %v6555
      %v6557 = vrot.slane %v338, %v6556
      %v6559 = vmul.f32 %v6483, %v6557
      %v6560 = vmul.f32 %v6486, %v6557
      %v6561 = vmul.f32 %v6491, %v6557
      %v6562 = vmul.f32 %v6494, %v6557
      %v6563 = vmul.f32 %v6499, %v6557
      %v6564 = vmul.f32 %v6502, %v6557
      %v6565 = vmul.f32 %v6507, %v6557
      %v6566 = vmul.f32 %v6510, %v6557
      %v6567 = vmul.f32 %v6515, %v6557
      %v6568 = vmul.f32 %v6518, %v6557
      %v6569 = vmul.f32 %v6523, %v6557
      %v6570 = vmul.f32 %v6526, %v6557
      %v6571 = vmul.f32 %v6531, %v6557
      %v6572 = vmul.f32 %v6534, %v6557
      %v6573 = vmul.f32 %v6539, %v6557
      %v6574 = vmul.f32 %v6542, %v6557
      %v6575 = vsel %vm1094, %v6559, 0.0
      %6576 = vadd.xlane.f32.xlu0 %v6575
      %v6577 = vpop.xlane.xlu0 %6576
      %v6578 = vsel %vm1094, %v6560, 0.0
      %6579 = vadd.xlane.f32.xlu0 %v6578
      %v6580 = vpop.xlane.xlu0 %6579
      %v6581 = vsel %vm1094, %v6561, 0.0
      %6582 = vadd.xlane.f32.xlu0 %v6581
      %v6583 = vpop.xlane.xlu0 %6582
      %v6584 = vsel %vm1094, %v6562, 0.0
      %6585 = vadd.xlane.f32.xlu0 %v6584
      %v6586 = vpop.xlane.xlu0 %6585
      %v6587 = vsel %vm1094, %v6563, 0.0
      %6588 = vadd.xlane.f32.xlu0 %v6587
      %v6589 = vpop.xlane.xlu0 %6588
      %v6590 = vsel %vm1094, %v6564, 0.0
      %6591 = vadd.xlane.f32.xlu0 %v6590
      %v6592 = vpop.xlane.xlu0 %6591
      %v6593 = vsel %vm1094, %v6565, 0.0
      %6594 = vadd.xlane.f32.xlu0 %v6593
      %v6595 = vpop.xlane.xlu0 %6594
      %v6596 = vsel %vm1094, %v6566, 0.0
      %6597 = vadd.xlane.f32.xlu0 %v6596
      %v6598 = vpop.xlane.xlu0 %6597
      %v6599 = vsel %vm1094, %v6567, 0.0
      %6600 = vadd.xlane.f32.xlu0 %v6599
      %v6601 = vpop.xlane.xlu0 %6600
      %v6602 = vsel %vm1094, %v6568, 0.0
      %6603 = vadd.xlane.f32.xlu0 %v6602
      %v6604 = vpop.xlane.xlu0 %6603
      %v6605 = vsel %vm1094, %v6569, 0.0
      %6606 = vadd.xlane.f32.xlu0 %v6605
      %v6607 = vpop.xlane.xlu0 %6606
      %v6608 = vsel %vm1094, %v6570, 0.0
      %6609 = vadd.xlane.f32.xlu0 %v6608
      %v6610 = vpop.xlane.xlu0 %6609
      %v6611 = vsel %vm1094, %v6571, 0.0
      %6612 = vadd.xlane.f32.xlu0 %v6611
      %v6613 = vpop.xlane.xlu0 %6612
      %v6614 = vsel %vm1094, %v6572, 0.0
      %6615 = vadd.xlane.f32.xlu0 %v6614
      %v6616 = vpop.xlane.xlu0 %6615
      %v6617 = vsel %vm1094, %v6573, 0.0
      %6618 = vadd.xlane.f32.xlu0 %v6617
      %v6619 = vpop.xlane.xlu0 %6618
      %v6620 = vsel %vm1094, %v6574, 0.0
      %6621 = vadd.xlane.f32.xlu0 %v6620
      %v6622 = vpop.xlane.xlu0 %6621
      %v6623 = vpack.c.bf16 %v338, %v338
      %6625 = vrot.lane.b32.xlu0 %v6623, 120
      %v6626 = vpop.permute.xlu0 %6625
      %v6628 = vsel %vm1094, %v6626, 0
      %v6631 = vsel %vm1094, %v6545, 0
      %v6634 = vsel %vm1094, %v6546, 0
      %v6637 = vsel %vm1094, %v6547, 0
      %v6640 = vsel %vm1094, %v6548, 0
      %v6643 = vsel %vm1094, %v6549, 0
      %v6646 = vsel %vm1094, %v6550, 0
      %v6649 = vsel %vm1094, %v6551, 0
      %v6652 = vsel %vm1094, %v6552, 0
      %6654 = vmatprep.subr.bf16.mxu0 0
      %6655 = vmatpush1.bf16.xpose.msra.mxu0 %v6631
      %6656 = vmatprep.subr.bf16.mxu0 0
      %6657 = vmatpush1.bf16.xpose.msra.mxu0 %v6634
      %6658 = vmatprep.subr.bf16.mxu0 0
      %6659 = vmatpush1.bf16.xpose.msra.mxu0 %v6637
      %6660 = vmatprep.subr.bf16.mxu0 0
      %6661 = vmatpush1.bf16.xpose.msra.mxu0 %v6640
      %6662 = vmatprep.subr.bf16.mxu0 0
      %6663 = vmatpush1.bf16.xpose.msra.mxu0 %v6643
      %6664 = vmatprep.subr.bf16.mxu0 0
      %6665 = vmatpush1.bf16.xpose.msra.mxu0 %v6646
      %6666 = vmatprep.subr.bf16.mxu0 0
      %6667 = vmatpush1.bf16.xpose.msra.mxu0 %v6649
      %6668 = vmatprep.subr.bf16.mxu0 0
      %6669 = vmatpush1.bf16.xpose.msra.mxu0 %v6652
      %6670 = vmatprep.subr.bf16.mxu0 0
      %6671 = vmatpush1.bf16.xpose.msra.mxu0 0
      %6672 = vmatprep.subr.bf16.mxu0 0
      %6673 = vmatpush1.bf16.xpose.msra.mxu0 0
      %6674 = vmatprep.subr.bf16.mxu0 0
      %6675 = vmatpush1.bf16.xpose.msra.mxu0 0
      %6676 = vmatprep.subr.bf16.mxu0 0
      %6677 = vmatpush1.bf16.xpose.msra.mxu0 0
      %6678 = vmatprep.subr.bf16.mxu0 0
      %6679 = vmatpush1.bf16.xpose.msra.mxu0 0
      %6680 = vmatprep.subr.bf16.mxu0 0
      %6681 = vmatpush1.bf16.xpose.msra.mxu0 0
      %6682 = vmatprep.subr.bf16.mxu0 0
      %6683 = vmatpush1.bf16.xpose.msra.mxu0 0
      %6684 = vmatprep.subr.bf16.mxu0 0
      %6685 = vmatpush1.bf16.xpose.msra.mxu0 0
      %6686 = vmatprep.mubr.bf16.mxu0 0
      %6687 = vmatmul.mubr.bf16.gmra.mrb[0].mxu0 %v6628
      %v6688 = vpop.f32.mrb[0].mxu0
      %v6689 = vadd.f32 0.0, %v6688
      %v6690 = vpop.f32.mrb[0].mxu0
      %v6691 = vpop.f32.mrb[0].mxu0
      %v6692 = vpop.f32.mrb[0].mxu0
      %6693 = vdwg.mxu0
      %v6694 = vlaneseq
      %v6695 = vshrl.u32 %v6694, 7
      %v6696 = vsub.s32 0, %v6695
      %v6697 = vrot.slane %v6689, %v6696
      %v6698 = vadd.f32 %v6577, %v6697
      %v6699 = vadd.f32 %v6580, %v6697
      %v6700 = vadd.f32 %v6583, %v6697
      %v6701 = vadd.f32 %v6586, %v6697
      %v6702 = vadd.f32 %v6589, %v6697
      %v6703 = vadd.f32 %v6592, %v6697
      %v6704 = vadd.f32 %v6595, %v6697
      %v6705 = vadd.f32 %v6598, %v6697
      %v6706 = vadd.f32 %v6601, %v6697
      %v6707 = vadd.f32 %v6604, %v6697
      %v6708 = vadd.f32 %v6607, %v6697
      %v6709 = vadd.f32 %v6610, %v6697
      %v6710 = vadd.f32 %v6613, %v6697
      %v6711 = vadd.f32 %v6616, %v6697
      %v6712 = vadd.f32 %v6619, %v6697
      %v6713 = vadd.f32 %v6622, %v6697
      %vm6714 = vcmp.gt.f32.partialorder %v6698, 0.0
      %vm6715 = vcmp.gt.f32.partialorder %v6699, 0.0
      %vm6716 = vcmp.gt.f32.partialorder %v6700, 0.0
      %vm6717 = vcmp.gt.f32.partialorder %v6701, 0.0
      %vm6718 = vcmp.gt.f32.partialorder %v6702, 0.0
      %vm6719 = vcmp.gt.f32.partialorder %v6703, 0.0
      %vm6720 = vcmp.gt.f32.partialorder %v6704, 0.0
      %vm6721 = vcmp.gt.f32.partialorder %v6705, 0.0
      %vm6722 = vcmp.gt.f32.partialorder %v6706, 0.0
      %vm6723 = vcmp.gt.f32.partialorder %v6707, 0.0
      %vm6724 = vcmp.gt.f32.partialorder %v6708, 0.0
      %vm6725 = vcmp.gt.f32.partialorder %v6709, 0.0
      %vm6726 = vcmp.gt.f32.partialorder %v6710, 0.0
      %vm6727 = vcmp.gt.f32.partialorder %v6711, 0.0
      %vm6728 = vcmp.gt.f32.partialorder %v6712, 0.0
      %vm6729 = vcmp.gt.f32.partialorder %v6713, 0.0
      %v6730 = vmul.f32 %v6698, 0.1
      %v6731 = vmul.f32 %v6699, 0.1
      %v6732 = vmul.f32 %v6700, 0.1
      %v6733 = vmul.f32 %v6701, 0.1
      %v6734 = vmul.f32 %v6702, 0.1
      %v6735 = vmul.f32 %v6703, 0.1
      %v6736 = vmul.f32 %v6704, 0.1
      %v6737 = vmul.f32 %v6705, 0.1
      %v6738 = vmul.f32 %v6706, 0.1
      %v6739 = vmul.f32 %v6707, 0.1
      %v6740 = vmul.f32 %v6708, 0.1
      %v6741 = vmul.f32 %v6709, 0.1
      %v6742 = vmul.f32 %v6710, 0.1
      %v6743 = vmul.f32 %v6711, 0.1
      %v6744 = vmul.f32 %v6712, 0.1
      %v6745 = vmul.f32 %v6713, 0.1
      %v6746 = vsel %vm6714, %v6698, %v6730
      %v6747 = vsel %vm6715, %v6699, %v6731
      %v6748 = vsel %vm6716, %v6700, %v6732
      %v6749 = vsel %vm6717, %v6701, %v6733
      %v6750 = vsel %vm6718, %v6702, %v6734
      %v6751 = vsel %vm6719, %v6703, %v6735
      %v6752 = vsel %vm6720, %v6704, %v6736
      %v6753 = vsel %vm6721, %v6705, %v6737
      %v6754 = vsel %vm6722, %v6706, %v6738
      %v6755 = vsel %vm6723, %v6707, %v6739
      %v6756 = vsel %vm6724, %v6708, %v6740
      %v6757 = vsel %vm6725, %v6709, %v6741
      %v6758 = vsel %vm6726, %v6710, %v6742
      %v6759 = vsel %vm6727, %v6711, %v6743
      %v6760 = vsel %vm6728, %v6712, %v6744
      %v6761 = vsel %vm6729, %v6713, %v6745
      %v6762 = vsel %vm797, %v6746, -9e+15
      %v6763 = vsel %vm798, %v6747, -9e+15
      %v6764 = vsel %vm799, %v6748, -9e+15
      %v6765 = vsel %vm800, %v6749, -9e+15
      %v6766 = vsel %vm801, %v6750, -9e+15
      %v6767 = vsel %vm802, %v6751, -9e+15
      %v6768 = vsel %vm803, %v6752, -9e+15
      %v6769 = vsel %vm804, %v6753, -9e+15
      %v6770 = vsel %vm805, %v6754, -9e+15
      %v6771 = vsel %vm806, %v6755, -9e+15
      %v6772 = vsel %vm807, %v6756, -9e+15
      %v6773 = vsel %vm808, %v6757, -9e+15
      %v6774 = vsel %vm809, %v6758, -9e+15
      %v6775 = vsel %vm810, %v6759, -9e+15
      %v6776 = vsel %vm811, %v6760, -9e+15
      %v6777 = vsel %vm812, %v6761, -9e+15
      %6778 = vmax.xlane.f32.xlu0 %v6762
      %v6779 = vpop.xlane.xlu0 %6778
      %6780 = vmax.xlane.f32.xlu0 %v6763
      %v6781 = vpop.xlane.xlu0 %6780
      %6782 = vmax.xlane.f32.xlu0 %v6764
      %v6783 = vpop.xlane.xlu0 %6782
      %6784 = vmax.xlane.f32.xlu0 %v6765
      %v6785 = vpop.xlane.xlu0 %6784
      %6786 = vmax.xlane.f32.xlu0 %v6766
      %v6787 = vpop.xlane.xlu0 %6786
      %6788 = vmax.xlane.f32.xlu0 %v6767
      %v6789 = vpop.xlane.xlu0 %6788
      %6790 = vmax.xlane.f32.xlu0 %v6768
      %v6791 = vpop.xlane.xlu0 %6790
      %6792 = vmax.xlane.f32.xlu0 %v6769
      %v6793 = vpop.xlane.xlu0 %6792
      %6794 = vmax.xlane.f32.xlu0 %v6770
      %v6795 = vpop.xlane.xlu0 %6794
      %6796 = vmax.xlane.f32.xlu0 %v6771
      %v6797 = vpop.xlane.xlu0 %6796
      %6798 = vmax.xlane.f32.xlu0 %v6772
      %v6799 = vpop.xlane.xlu0 %6798
      %6800 = vmax.xlane.f32.xlu0 %v6773
      %v6801 = vpop.xlane.xlu0 %6800
      %6802 = vmax.xlane.f32.xlu0 %v6774
      %v6803 = vpop.xlane.xlu0 %6802
      %6804 = vmax.xlane.f32.xlu0 %v6775
      %v6805 = vpop.xlane.xlu0 %6804
      %6806 = vmax.xlane.f32.xlu0 %v6776
      %v6807 = vpop.xlane.xlu0 %6806
      %6808 = vmax.xlane.f32.xlu0 %v6777
      %v6809 = vpop.xlane.xlu0 %6808
      %v6810 = vsub.f32 %v6762, %v6779
      %v6811 = vsub.f32 %v6763, %v6781
      %v6812 = vsub.f32 %v6764, %v6783
      %v6813 = vsub.f32 %v6765, %v6785
      %v6814 = vsub.f32 %v6766, %v6787
      %v6815 = vsub.f32 %v6767, %v6789
      %v6816 = vsub.f32 %v6768, %v6791
      %v6817 = vsub.f32 %v6769, %v6793
      %v6818 = vsub.f32 %v6770, %v6795
      %v6819 = vsub.f32 %v6771, %v6797
      %v6820 = vsub.f32 %v6772, %v6799
      %v6821 = vsub.f32 %v6773, %v6801
      %v6822 = vsub.f32 %v6774, %v6803
      %v6823 = vsub.f32 %v6775, %v6805
      %v6824 = vsub.f32 %v6776, %v6807
      %v6825 = vsub.f32 %v6777, %v6809
      %v6826 = vmul.f32 %v6810, 1.442695
      %v6827 = vpow.pop %v6826
      %v6828 = vmul.f32 %v6811, 1.442695
      %v6829 = vpow.pop %v6828
      %v6830 = vmul.f32 %v6812, 1.442695
      %v6831 = vpow.pop %v6830
      %v6832 = vmul.f32 %v6813, 1.442695
      %v6833 = vpow.pop %v6832
      %v6834 = vmul.f32 %v6814, 1.442695
      %v6835 = vpow.pop %v6834
      %v6836 = vmul.f32 %v6815, 1.442695
      %v6837 = vpow.pop %v6836
      %v6838 = vmul.f32 %v6816, 1.442695
      %v6839 = vpow.pop %v6838
      %v6840 = vmul.f32 %v6817, 1.442695
      %v6841 = vpow.pop %v6840
      %v6842 = vmul.f32 %v6818, 1.442695
      %v6843 = vpow.pop %v6842
      %v6844 = vmul.f32 %v6819, 1.442695
      %v6845 = vpow.pop %v6844
      %v6846 = vmul.f32 %v6820, 1.442695
      %v6847 = vpow.pop %v6846
      %v6848 = vmul.f32 %v6821, 1.442695
      %v6849 = vpow.pop %v6848
      %v6850 = vmul.f32 %v6822, 1.442695
      %v6851 = vpow.pop %v6850
      %v6852 = vmul.f32 %v6823, 1.442695
      %v6853 = vpow.pop %v6852
      %v6854 = vmul.f32 %v6824, 1.442695
      %v6855 = vpow.pop %v6854
      %v6856 = vmul.f32 %v6825, 1.442695
      %v6857 = vpow.pop %v6856
      %6858 = vadd.xlane.f32.xlu0 %v6827
      %v6859 = vpop.xlane.xlu0 %6858
      %6860 = vadd.xlane.f32.xlu0 %v6829
      %v6861 = vpop.xlane.xlu0 %6860
      %6862 = vadd.xlane.f32.xlu0 %v6831
      %v6863 = vpop.xlane.xlu0 %6862
      %6864 = vadd.xlane.f32.xlu0 %v6833
      %v6865 = vpop.xlane.xlu0 %6864
      %6866 = vadd.xlane.f32.xlu0 %v6835
      %v6867 = vpop.xlane.xlu0 %6866
      %6868 = vadd.xlane.f32.xlu0 %v6837
      %v6869 = vpop.xlane.xlu0 %6868
      %6870 = vadd.xlane.f32.xlu0 %v6839
      %v6871 = vpop.xlane.xlu0 %6870
      %6872 = vadd.xlane.f32.xlu0 %v6841
      %v6873 = vpop.xlane.xlu0 %6872
      %6874 = vadd.xlane.f32.xlu0 %v6843
      %v6875 = vpop.xlane.xlu0 %6874
      %6876 = vadd.xlane.f32.xlu0 %v6845
      %v6877 = vpop.xlane.xlu0 %6876
      %6878 = vadd.xlane.f32.xlu0 %v6847
      %v6879 = vpop.xlane.xlu0 %6878
      %6880 = vadd.xlane.f32.xlu0 %v6849
      %v6881 = vpop.xlane.xlu0 %6880
      %6882 = vadd.xlane.f32.xlu0 %v6851
      %v6883 = vpop.xlane.xlu0 %6882
      %6884 = vadd.xlane.f32.xlu0 %v6853
      %v6885 = vpop.xlane.xlu0 %6884
      %6886 = vadd.xlane.f32.xlu0 %v6855
      %v6887 = vpop.xlane.xlu0 %6886
      %6888 = vadd.xlane.f32.xlu0 %v6857
      %v6889 = vpop.xlane.xlu0 %6888
      %v6890 = vrcp.pop %v6859
      %v6891 = vrcp.pop %v6861
      %v6892 = vrcp.pop %v6863
      %v6893 = vrcp.pop %v6865
      %v6894 = vrcp.pop %v6867
      %v6895 = vrcp.pop %v6869
      %v6896 = vrcp.pop %v6871
      %v6897 = vrcp.pop %v6873
      %v6898 = vrcp.pop %v6875
      %v6899 = vrcp.pop %v6877
      %v6900 = vrcp.pop %v6879
      %v6901 = vrcp.pop %v6881
      %v6902 = vrcp.pop %v6883
      %v6903 = vrcp.pop %v6885
      %v6904 = vrcp.pop %v6887
      %v6905 = vrcp.pop %v6889
      %v6906 = vmul.f32 %v6827, %v6890
      %v6907 = vmul.f32 %v6829, %v6891
      %v6908 = vmul.f32 %v6831, %v6892
      %v6909 = vmul.f32 %v6833, %v6893
      %v6910 = vmul.f32 %v6835, %v6894
      %v6911 = vmul.f32 %v6837, %v6895
      %v6912 = vmul.f32 %v6839, %v6896
      %v6913 = vmul.f32 %v6841, %v6897
      %v6914 = vmul.f32 %v6843, %v6898
      %v6915 = vmul.f32 %v6845, %v6899
      %v6916 = vmul.f32 %v6847, %v6900
      %v6917 = vmul.f32 %v6849, %v6901
      %v6918 = vmul.f32 %v6851, %v6902
      %v6919 = vmul.f32 %v6853, %v6903
      %v6920 = vmul.f32 %v6855, %v6904
      %v6921 = vmul.f32 %v6857, %v6905
      %v6922 = vpack.c.bf16 %v6907, %v6906
      %v6923 = vpack.c.bf16 %v6909, %v6908
      %v6924 = vpack.c.bf16 %v6911, %v6910
      %v6925 = vpack.c.bf16 %v6913, %v6912
      %v6926 = vpack.c.bf16 %v6915, %v6914
      %v6927 = vpack.c.bf16 %v6917, %v6916
      %v6928 = vpack.c.bf16 %v6919, %v6918
      %v6929 = vpack.c.bf16 %v6921, %v6920
      %6930 = vmatprep.subr.bf16.mxu0 0
      %6931 = vmatpush1.bf16.msra.mxu0 %v6545
      %6932 = vmatprep.subr.bf16.mxu0 0
      %6933 = vmatpush1.bf16.msra.mxu0 %v6546
      %6934 = vmatprep.subr.bf16.mxu0 0
      %6935 = vmatpush1.bf16.msra.mxu0 %v6547
      %6936 = vmatprep.subr.bf16.mxu0 0
      %6937 = vmatpush1.bf16.msra.mxu0 %v6548
      %6938 = vmatprep.subr.bf16.mxu0 0
      %6939 = vmatpush1.bf16.msra.mxu0 %v6549
      %6940 = vmatprep.subr.bf16.mxu0 0
      %6941 = vmatpush1.bf16.msra.mxu0 %v6550
      %6942 = vmatprep.subr.bf16.mxu0 0
      %6943 = vmatpush1.bf16.msra.mxu0 %v6551
      %6944 = vmatprep.subr.bf16.mxu0 0
      %6945 = vmatpush1.bf16.msra.mxu0 %v6552
      %6946 = vmatprep.subr.bf16.mxu0 0
      %6947 = vmatpush1.bf16.msra.mxu0 0
      %6948 = vmatprep.subr.bf16.mxu0 0
      %6949 = vmatpush1.bf16.msra.mxu0 0
      %6950 = vmatprep.subr.bf16.mxu0 0
      %6951 = vmatpush1.bf16.msra.mxu0 0
      %6952 = vmatprep.subr.bf16.mxu0 0
      %6953 = vmatpush1.bf16.msra.mxu0 0
      %6954 = vmatprep.subr.bf16.mxu0 0
      %6955 = vmatpush1.bf16.msra.mxu0 0
      %6956 = vmatprep.subr.bf16.mxu0 0
      %6957 = vmatpush1.bf16.msra.mxu0 0
      %6958 = vmatprep.subr.bf16.mxu0 0
      %6959 = vmatpush1.bf16.msra.mxu0 0
      %6960 = vmatprep.subr.bf16.mxu0 0
      %6961 = vmatpush1.bf16.msra.mxu0 0
      %6962 = vmatprep.mubr.bf16.mxu0 0
      %6963 = vmatmul.mubr.bf16.gmra.mrb[0].mxu0 %v6922
      %v6964 = vpop.f32.mrb[0].mxu0
      %v6965 = vadd.f32 0.0, %v6964
      %v6966 = vpop.f32.mrb[0].mxu0
      %v6967 = vpop.f32.mrb[0].mxu0
      %v6968 = vadd.f32 0.0, %v6967
      %v6969 = vpop.f32.mrb[0].mxu0
      %6970 = vmatprep.mubr.bf16.mxu0 0
      %6971 = vmatmul.mubr.bf16.gmra.mrb[0].mxu0 %v6923
      %v6972 = vpop.f32.mrb[0].mxu0
      %v6973 = vadd.f32 0.0, %v6972
      %v6974 = vpop.f32.mrb[0].mxu0
      %v6975 = vpop.f32.mrb[0].mxu0
      %v6976 = vadd.f32 0.0, %v6975
      %v6977 = vpop.f32.mrb[0].mxu0
      %6978 = vmatprep.mubr.bf16.mxu0 0
      %6979 = vmatmul.mubr.bf16.gmra.mrb[0].mxu0 %v6924
      %v6980 = vpop.f32.mrb[0].mxu0
      %v6981 = vadd.f32 0.0, %v6980
      %v6982 = vpop.f32.mrb[0].mxu0
      %v6983 = vpop.f32.mrb[0].mxu0
      %v6984 = vadd.f32 0.0, %v6983
      %v6985 = vpop.f32.mrb[0].mxu0
      %6986 = vmatprep.mubr.bf16.mxu0 0
      %6987 = vmatmul.mubr.bf16.gmra.mrb[0].mxu0 %v6925
      %v6988 = vpop.f32.mrb[0].mxu0
      %v6989 = vadd.f32 0.0, %v6988
      %v6990 = vpop.f32.mrb[0].mxu0
      %v6991 = vpop.f32.mrb[0].mxu0
      %v6992 = vadd.f32 0.0, %v6991
      %v6993 = vpop.f32.mrb[0].mxu0
      %6994 = vmatprep.mubr.bf16.mxu0 0
      %6995 = vmatmul.mubr.bf16.gmra.mrb[0].mxu0 %v6926
      %v6996 = vpop.f32.mrb[0].mxu0
      %v6997 = vadd.f32 0.0, %v6996
      %v6998 = vpop.f32.mrb[0].mxu0
      %v6999 = vpop.f32.mrb[0].mxu0
      %v7000 = vadd.f32 0.0, %v6999
      %v7001 = vpop.f32.mrb[0].mxu0
      %7002 = vmatprep.mubr.bf16.mxu0 0
      %7003 = vmatmul.mubr.bf16.gmra.mrb[0].mxu0 %v6927
      %v7004 = vpop.f32.mrb[0].mxu0
      %v7005 = vadd.f32 0.0, %v7004
      %v7006 = vpop.f32.mrb[0].mxu0
      %v7007 = vpop.f32.mrb[0].mxu0
      %v7008 = vadd.f32 0.0, %v7007
      %v7009 = vpop.f32.mrb[0].mxu0
      %7010 = vmatprep.mubr.bf16.mxu0 0
      %7011 = vmatmul.mubr.bf16.gmra.mrb[0].mxu0 %v6928
      %v7012 = vpop.f32.mrb[0].mxu0
      %v7013 = vadd.f32 0.0, %v7012
      %v7014 = vpop.f32.mrb[0].mxu0
      %v7015 = vpop.f32.mrb[0].mxu0
      %v7016 = vadd.f32 0.0, %v7015
      %v7017 = vpop.f32.mrb[0].mxu0
      %7018 = vmatprep.mubr.bf16.mxu0 0
      %7019 = vmatmul.mubr.bf16.gmra.mrb[0].mxu0 %v6929
      %v7020 = vpop.f32.mrb[0].mxu0
      %v7021 = vadd.f32 0.0, %v7020
      %v7022 = vpop.f32.mrb[0].mxu0
      %v7023 = vpop.f32.mrb[0].mxu0
      %v7024 = vadd.f32 0.0, %v7023
      %v7025 = vpop.f32.mrb[0].mxu0
      %7026 = vdwg.mxu0
      %v7027 = vmul.f32 %v6965, %v6965
      %v7028 = vmul.f32 %v6968, %v6968
      %v7029 = vmul.f32 %v6973, %v6973
      %v7030 = vmul.f32 %v6976, %v6976
      %v7031 = vmul.f32 %v6981, %v6981
      %v7032 = vmul.f32 %v6984, %v6984
      %v7033 = vmul.f32 %v6989, %v6989
      %v7034 = vmul.f32 %v6992, %v6992
      %v7035 = vmul.f32 %v6997, %v6997
      %v7036 = vmul.f32 %v7000, %v7000
      %v7037 = vmul.f32 %v7005, %v7005
      %v7038 = vmul.f32 %v7008, %v7008
      %v7039 = vmul.f32 %v7013, %v7013
      %v7040 = vmul.f32 %v7016, %v7016
      %v7041 = vmul.f32 %v7021, %v7021
      %v7042 = vmul.f32 %v7024, %v7024
      %v7043 = vsel %vm1094, %v7027, 0.0
      %7044 = vadd.xlane.f32.xlu0 %v7043
      %v7045 = vpop.xlane.xlu0 %7044
      %v7046 = vsel %vm1094, %v7028, 0.0
      %7047 = vadd.xlane.f32.xlu0 %v7046
      %v7048 = vpop.xlane.xlu0 %7047
      %v7049 = vsel %vm1094, %v7029, 0.0
      %7050 = vadd.xlane.f32.xlu0 %v7049
      %v7051 = vpop.xlane.xlu0 %7050
      %v7052 = vsel %vm1094, %v7030, 0.0
      %7053 = vadd.xlane.f32.xlu0 %v7052
      %v7054 = vpop.xlane.xlu0 %7053
      %v7055 = vsel %vm1094, %v7031, 0.0
      %7056 = vadd.xlane.f32.xlu0 %v7055
      %v7057 = vpop.xlane.xlu0 %7056
      %v7058 = vsel %vm1094, %v7032, 0.0
      %7059 = vadd.xlane.f32.xlu0 %v7058
      %v7060 = vpop.xlane.xlu0 %7059
      %v7061 = vsel %vm1094, %v7033, 0.0
      %7062 = vadd.xlane.f32.xlu0 %v7061
      %v7063 = vpop.xlane.xlu0 %7062
      %v7064 = vsel %vm1094, %v7034, 0.0
      %7065 = vadd.xlane.f32.xlu0 %v7064
      %v7066 = vpop.xlane.xlu0 %7065
      %v7067 = vsel %vm1094, %v7035, 0.0
      %7068 = vadd.xlane.f32.xlu0 %v7067
      %v7069 = vpop.xlane.xlu0 %7068
      %v7070 = vsel %vm1094, %v7036, 0.0
      %7071 = vadd.xlane.f32.xlu0 %v7070
      %v7072 = vpop.xlane.xlu0 %7071
      %v7073 = vsel %vm1094, %v7037, 0.0
      %7074 = vadd.xlane.f32.xlu0 %v7073
      %v7075 = vpop.xlane.xlu0 %7074
      %v7076 = vsel %vm1094, %v7038, 0.0
      %7077 = vadd.xlane.f32.xlu0 %v7076
      %v7078 = vpop.xlane.xlu0 %7077
      %v7079 = vsel %vm1094, %v7039, 0.0
      %7080 = vadd.xlane.f32.xlu0 %v7079
      %v7081 = vpop.xlane.xlu0 %7080
      %v7082 = vsel %vm1094, %v7040, 0.0
      %7083 = vadd.xlane.f32.xlu0 %v7082
      %v7084 = vpop.xlane.xlu0 %7083
      %v7085 = vsel %vm1094, %v7041, 0.0
      %7086 = vadd.xlane.f32.xlu0 %v7085
      %v7087 = vpop.xlane.xlu0 %7086
      %v7088 = vsel %vm1094, %v7042, 0.0
      %7089 = vadd.xlane.f32.xlu0 %v7088
      %v7090 = vpop.xlane.xlu0 %7089
      %v7091 = vrsqrt.pop %v7045
      %v7092 = vmul.f32 %v7045, %v7091
      %vm7093 = vcmp.eq.f32.partialorder %v7045, inf
      %v7094 = vsel %vm7093, %v7045, %v7092
      %vm7095 = vcmp.eq.f32.partialorder %v7045, 0.0
      %v7096 = vand.u32 %v7045, 2147483648
      %v7097 = vsel %vm7095, %v7096, %v7094
      %v7098 = vrsqrt.pop %v7048
      %v7099 = vmul.f32 %v7048, %v7098
      %vm7100 = vcmp.eq.f32.partialorder %v7048, inf
      %v7101 = vsel %vm7100, %v7048, %v7099
      %vm7102 = vcmp.eq.f32.partialorder %v7048, 0.0
      %v7103 = vand.u32 %v7048, 2147483648
      %v7104 = vsel %vm7102, %v7103, %v7101
      %v7105 = vrsqrt.pop %v7051
      %v7106 = vmul.f32 %v7051, %v7105
      %vm7107 = vcmp.eq.f32.partialorder %v7051, inf
      %v7108 = vsel %vm7107, %v7051, %v7106
      %vm7109 = vcmp.eq.f32.partialorder %v7051, 0.0
      %v7110 = vand.u32 %v7051, 2147483648
      %v7111 = vsel %vm7109, %v7110, %v7108
      %v7112 = vrsqrt.pop %v7054
      %v7113 = vmul.f32 %v7054, %v7112
      %vm7114 = vcmp.eq.f32.partialorder %v7054, inf
      %v7115 = vsel %vm7114, %v7054, %v7113
      %vm7116 = vcmp.eq.f32.partialorder %v7054, 0.0
      %v7117 = vand.u32 %v7054, 2147483648
      %v7118 = vsel %vm7116, %v7117, %v7115
      %v7119 = vrsqrt.pop %v7057
      %v7120 = vmul.f32 %v7057, %v7119
      %vm7121 = vcmp.eq.f32.partialorder %v7057, inf
      %v7122 = vsel %vm7121, %v7057, %v7120
      %vm7123 = vcmp.eq.f32.partialorder %v7057, 0.0
      %v7124 = vand.u32 %v7057, 2147483648
      %v7125 = vsel %vm7123, %v7124, %v7122
      %v7126 = vrsqrt.pop %v7060
      %v7127 = vmul.f32 %v7060, %v7126
      %vm7128 = vcmp.eq.f32.partialorder %v7060, inf
      %v7129 = vsel %vm7128, %v7060, %v7127
      %vm7130 = vcmp.eq.f32.partialorder %v7060, 0.0
      %v7131 = vand.u32 %v7060, 2147483648
      %v7132 = vsel %vm7130, %v7131, %v7129
      %v7133 = vrsqrt.pop %v7063
      %v7134 = vmul.f32 %v7063, %v7133
      %vm7135 = vcmp.eq.f32.partialorder %v7063, inf
      %v7136 = vsel %vm7135, %v7063, %v7134
      %vm7137 = vcmp.eq.f32.partialorder %v7063, 0.0
      %v7138 = vand.u32 %v7063, 2147483648
      %v7139 = vsel %vm7137, %v7138, %v7136
      %v7140 = vrsqrt.pop %v7066
      %v7141 = vmul.f32 %v7066, %v7140
      %vm7142 = vcmp.eq.f32.partialorder %v7066, inf
      %v7143 = vsel %vm7142, %v7066, %v7141
      %vm7144 = vcmp.eq.f32.partialorder %v7066, 0.0
      %v7145 = vand.u32 %v7066, 2147483648
      %v7146 = vsel %vm7144, %v7145, %v7143
      %v7147 = vrsqrt.pop %v7069
      %v7148 = vmul.f32 %v7069, %v7147
      %vm7149 = vcmp.eq.f32.partialorder %v7069, inf
      %v7150 = vsel %vm7149, %v7069, %v7148
      %vm7151 = vcmp.eq.f32.partialorder %v7069, 0.0
      %v7152 = vand.u32 %v7069, 2147483648
      %v7153 = vsel %vm7151, %v7152, %v7150
      %v7154 = vrsqrt.pop %v7072
      %v7155 = vmul.f32 %v7072, %v7154
      %vm7156 = vcmp.eq.f32.partialorder %v7072, inf
      %v7157 = vsel %vm7156, %v7072, %v7155
      %vm7158 = vcmp.eq.f32.partialorder %v7072, 0.0
      %v7159 = vand.u32 %v7072, 2147483648
      %v7160 = vsel %vm7158, %v7159, %v7157
      %v7161 = vrsqrt.pop %v7075
      %v7162 = vmul.f32 %v7075, %v7161
      %vm7163 = vcmp.eq.f32.partialorder %v7075, inf
      %v7164 = vsel %vm7163, %v7075, %v7162
      %vm7165 = vcmp.eq.f32.partialorder %v7075, 0.0
      %v7166 = vand.u32 %v7075, 2147483648
      %v7167 = vsel %vm7165, %v7166, %v7164
      %v7168 = vrsqrt.pop %v7078
      %v7169 = vmul.f32 %v7078, %v7168
      %vm7170 = vcmp.eq.f32.partialorder %v7078, inf
      %v7171 = vsel %vm7170, %v7078, %v7169
      %vm7172 = vcmp.eq.f32.partialorder %v7078, 0.0
      %v7173 = vand.u32 %v7078, 2147483648
      %v7174 = vsel %vm7172, %v7173, %v7171
      %v7175 = vrsqrt.pop %v7081
      %v7176 = vmul.f32 %v7081, %v7175
      %vm7177 = vcmp.eq.f32.partialorder %v7081, inf
      %v7178 = vsel %vm7177, %v7081, %v7176
      %vm7179 = vcmp.eq.f32.partialorder %v7081, 0.0
      %v7180 = vand.u32 %v7081, 2147483648
      %v7181 = vsel %vm7179, %v7180, %v7178
      %v7182 = vrsqrt.pop %v7084
      %v7183 = vmul.f32 %v7084, %v7182
      %vm7184 = vcmp.eq.f32.partialorder %v7084, inf
      %v7185 = vsel %vm7184, %v7084, %v7183
      %vm7186 = vcmp.eq.f32.partialorder %v7084, 0.0
      %v7187 = vand.u32 %v7084, 2147483648
      %v7188 = vsel %vm7186, %v7187, %v7185
      %v7189 = vrsqrt.pop %v7087
      %v7190 = vmul.f32 %v7087, %v7189
      %vm7191 = vcmp.eq.f32.partialorder %v7087, inf
      %v7192 = vsel %vm7191, %v7087, %v7190
      %vm7193 = vcmp.eq.f32.partialorder %v7087, 0.0
      %v7194 = vand.u32 %v7087, 2147483648
      %v7195 = vsel %vm7193, %v7194, %v7192
      %v7196 = vrsqrt.pop %v7090
      %v7197 = vmul.f32 %v7090, %v7196
      %vm7198 = vcmp.eq.f32.partialorder %v7090, inf
      %v7199 = vsel %vm7198, %v7090, %v7197
      %vm7200 = vcmp.eq.f32.partialorder %v7090, 0.0
      %v7201 = vand.u32 %v7090, 2147483648
      %v7202 = vsel %vm7200, %v7201, %v7199
      %v7203 = vmax.f32 %v7097, 1e-15
      %v7204 = vmax.f32 %v7104, 1e-15
      %v7205 = vmax.f32 %v7111, 1e-15
      %v7206 = vmax.f32 %v7118, 1e-15
      %v7207 = vmax.f32 %v7125, 1e-15
      %v7208 = vmax.f32 %v7132, 1e-15
      %v7209 = vmax.f32 %v7139, 1e-15
      %v7210 = vmax.f32 %v7146, 1e-15
      %v7211 = vmax.f32 %v7153, 1e-15
      %v7212 = vmax.f32 %v7160, 1e-15
      %v7213 = vmax.f32 %v7167, 1e-15
      %v7214 = vmax.f32 %v7174, 1e-15
      %v7215 = vmax.f32 %v7181, 1e-15
      %v7216 = vmax.f32 %v7188, 1e-15
      %v7217 = vmax.f32 %v7195, 1e-15
      %v7218 = vmax.f32 %v7202, 1e-15
      %vm7219 = vcmp.gt.f32.partialorder %v7203, 0.996
      %vm7220 = vcmp.gt.f32.partialorder %v7204, 0.996
      %vm7221 = vcmp.gt.f32.partialorder %v7205, 0.996
      %vm7222 = vcmp.gt.f32.partialorder %v7206, 0.996
      %vm7223 = vcmp.gt.f32.partialorder %v7207, 0.996
      %vm7224 = vcmp.gt.f32.partialorder %v7208, 0.996
      %vm7225 = vcmp.gt.f32.partialorder %v7209, 0.996
      %vm7226 = vcmp.gt.f32.partialorder %v7210, 0.996
      %vm7227 = vcmp.gt.f32.partialorder %v7211, 0.996
      %vm7228 = vcmp.gt.f32.partialorder %v7212, 0.996
      %vm7229 = vcmp.gt.f32.partialorder %v7213, 0.996
      %vm7230 = vcmp.gt.f32.partialorder %v7214, 0.996
      %vm7231 = vcmp.gt.f32.partialorder %v7215, 0.996
      %vm7232 = vcmp.gt.f32.partialorder %v7216, 0.996
      %vm7233 = vcmp.gt.f32.partialorder %v7217, 0.996
      %vm7234 = vcmp.gt.f32.partialorder %v7218, 0.996
      %v7235 = vrcp.pop %v7203
      %v7236 = vmul.f32 %v6965, %v7235
      %v7237 = vrcp.pop %v7204
      %v7238 = vmul.f32 %v6968, %v7237
      %v7239 = vrcp.pop %v7205
      %v7240 = vmul.f32 %v6973, %v7239
      %v7241 = vrcp.pop %v7206
      %v7242 = vmul.f32 %v6976, %v7241
      %v7243 = vrcp.pop %v7207
      %v7244 = vmul.f32 %v6981, %v7243
      %v7245 = vrcp.pop %v7208
      %v7246 = vmul.f32 %v6984, %v7245
      %v7247 = vrcp.pop %v7209
      %v7248 = vmul.f32 %v6989, %v7247
      %v7249 = vrcp.pop %v7210
      %v7250 = vmul.f32 %v6992, %v7249
      %v7251 = vrcp.pop %v7211
      %v7252 = vmul.f32 %v6997, %v7251
      %v7253 = vrcp.pop %v7212
      %v7254 = vmul.f32 %v7000, %v7253
      %v7255 = vrcp.pop %v7213
      %v7256 = vmul.f32 %v7005, %v7255
      %v7257 = vrcp.pop %v7214
      %v7258 = vmul.f32 %v7008, %v7257
      %v7259 = vrcp.pop %v7215
      %v7260 = vmul.f32 %v7013, %v7259
      %v7261 = vrcp.pop %v7216
      %v7262 = vmul.f32 %v7016, %v7261
      %v7263 = vrcp.pop %v7217
      %v7264 = vmul.f32 %v7021, %v7263
      %v7265 = vrcp.pop %v7218
      %v7266 = vmul.f32 %v7024, %v7265
      %v7267 = vmul.f32 %v7236, 0.996
      %v7268 = vmul.f32 %v7238, 0.996
      %v7269 = vmul.f32 %v7240, 0.996
      %v7270 = vmul.f32 %v7242, 0.996
      %v7271 = vmul.f32 %v7244, 0.996
      %v7272 = vmul.f32 %v7246, 0.996
      %v7273 = vmul.f32 %v7248, 0.996
      %v7274 = vmul.f32 %v7250, 0.996
      %v7275 = vmul.f32 %v7252, 0.996
      %v7276 = vmul.f32 %v7254, 0.996
      %v7277 = vmul.f32 %v7256, 0.996
      %v7278 = vmul.f32 %v7258, 0.996
      %v7279 = vmul.f32 %v7260, 0.996
      %v7280 = vmul.f32 %v7262, 0.996
      %v7281 = vmul.f32 %v7264, 0.996
      %v7282 = vmul.f32 %v7266, 0.996
      %v7283 = vsel %vm7219, 1, 0
      %v7284 = vsel %vm7220, 1, 0
      %v7285 = vsel %vm7221, 1, 0
      %v7286 = vsel %vm7222, 1, 0
      %v7287 = vsel %vm7223, 1, 0
      %v7288 = vsel %vm7224, 1, 0
      %v7289 = vsel %vm7225, 1, 0
      %v7290 = vsel %vm7226, 1, 0
      %v7291 = vsel %vm7227, 1, 0
      %v7292 = vsel %vm7228, 1, 0
      %v7293 = vsel %vm7229, 1, 0
      %v7294 = vsel %vm7230, 1, 0
      %v7295 = vsel %vm7231, 1, 0
      %v7296 = vsel %vm7232, 1, 0
      %v7297 = vsel %vm7233, 1, 0
      %v7298 = vsel %vm7234, 1, 0
      %vm7299 = vcmp.eq.s32.totalorder %v7283, 1
      %vm7300 = vcmp.eq.s32.totalorder %v7284, 1
      %vm7301 = vcmp.eq.s32.totalorder %v7285, 1
      %vm7302 = vcmp.eq.s32.totalorder %v7286, 1
      %vm7303 = vcmp.eq.s32.totalorder %v7287, 1
      %vm7304 = vcmp.eq.s32.totalorder %v7288, 1
      %vm7305 = vcmp.eq.s32.totalorder %v7289, 1
      %vm7306 = vcmp.eq.s32.totalorder %v7290, 1
      %vm7307 = vcmp.eq.s32.totalorder %v7291, 1
      %vm7308 = vcmp.eq.s32.totalorder %v7292, 1
      %vm7309 = vcmp.eq.s32.totalorder %v7293, 1
      %vm7310 = vcmp.eq.s32.totalorder %v7294, 1
      %vm7311 = vcmp.eq.s32.totalorder %v7295, 1
      %vm7312 = vcmp.eq.s32.totalorder %v7296, 1
      %vm7313 = vcmp.eq.s32.totalorder %v7297, 1
      %vm7314 = vcmp.eq.s32.totalorder %v7298, 1
      %v7315 = vsel %vm7299, %v7267, %v6965
      %v7316 = vsel %vm7300, %v7268, %v6968
      %v7317 = vsel %vm7301, %v7269, %v6973
      %v7318 = vsel %vm7302, %v7270, %v6976
      %v7319 = vsel %vm7303, %v7271, %v6981
      %v7320 = vsel %vm7304, %v7272, %v6984
      %v7321 = vsel %vm7305, %v7273, %v6989
      %v7322 = vsel %vm7306, %v7274, %v6992
      %v7323 = vsel %vm7307, %v7275, %v6997
      %v7324 = vsel %vm7308, %v7276, %v7000
      %v7325 = vsel %vm7309, %v7277, %v7005
      %v7326 = vsel %vm7310, %v7278, %v7008
      %v7327 = vsel %vm7311, %v7279, %v7013
      %v7328 = vsel %vm7312, %v7280, %v7016
      %v7329 = vsel %vm7313, %v7281, %v7021
      %v7330 = vsel %vm7314, %v7282, %v7024
      %v7331 = vmin.f32 %v7203, 0.996
      %v7332 = vmin.f32 %v7204, 0.996
      %v7333 = vmin.f32 %v7205, 0.996
      %v7334 = vmin.f32 %v7206, 0.996
      %v7335 = vmin.f32 %v7207, 0.996
      %v7336 = vmin.f32 %v7208, 0.996
      %v7337 = vmin.f32 %v7209, 0.996
      %v7338 = vmin.f32 %v7210, 0.996
      %v7339 = vmin.f32 %v7211, 0.996
      %v7340 = vmin.f32 %v7212, 0.996
      %v7341 = vmin.f32 %v7213, 0.996
      %v7342 = vmin.f32 %v7214, 0.996
      %v7343 = vmin.f32 %v7215, 0.996
      %v7344 = vmin.f32 %v7216, 0.996
      %v7345 = vmin.f32 %v7217, 0.996
      %v7346 = vmin.f32 %v7218, 0.996
      %v7347 = vmax.f32 %v7331, -0.9999999
      %v7348 = vmax.f32 %v7332, -0.9999999
      %v7349 = vmax.f32 %v7333, -0.9999999
      %v7350 = vmax.f32 %v7334, -0.9999999
      %v7351 = vmax.f32 %v7335, -0.9999999
      %v7352 = vmax.f32 %v7336, -0.9999999
      %v7353 = vmax.f32 %v7337, -0.9999999
      %v7354 = vmax.f32 %v7338, -0.9999999
      %v7355 = vmax.f32 %v7339, -0.9999999
      %v7356 = vmax.f32 %v7340, -0.9999999
      %v7357 = vmax.f32 %v7341, -0.9999999
      %v7358 = vmax.f32 %v7342, -0.9999999
      %v7359 = vmax.f32 %v7343, -0.9999999
      %v7360 = vmax.f32 %v7344, -0.9999999
      %v7361 = vmax.f32 %v7345, -0.9999999
      %v7362 = vmax.f32 %v7346, -0.9999999
      %v7363 = vmin.f32 %v7347, 0.9999999
      %v7364 = vmin.f32 %v7348, 0.9999999
      %v7365 = vmin.f32 %v7349, 0.9999999
      %v7366 = vmin.f32 %v7350, 0.9999999
      %v7367 = vmin.f32 %v7351, 0.9999999
      %v7368 = vmin.f32 %v7352, 0.9999999
      %v7369 = vmin.f32 %v7353, 0.9999999
      %v7370 = vmin.f32 %v7354, 0.9999999
      %v7371 = vmin.f32 %v7355, 0.9999999
      %v7372 = vmin.f32 %v7356, 0.9999999
      %v7373 = vmin.f32 %v7357, 0.9999999
      %v7374 = vmin.f32 %v7358, 0.9999999
      %v7375 = vmin.f32 %v7359, 0.9999999
      %v7376 = vmin.f32 %v7360, 0.9999999
      %v7377 = vmin.f32 %v7361, 0.9999999
      %v7378 = vmin.f32 %v7362, 0.9999999
      %v7379 = vadd.f32 %v7363, 1.0
      %v7380 = vadd.f32 %v7364, 1.0
      %v7381 = vadd.f32 %v7365, 1.0
      %v7382 = vadd.f32 %v7366, 1.0
      %v7383 = vadd.f32 %v7367, 1.0
      %v7384 = vadd.f32 %v7368, 1.0
      %v7385 = vadd.f32 %v7369, 1.0
      %v7386 = vadd.f32 %v7370, 1.0
      %v7387 = vadd.f32 %v7371, 1.0
      %v7388 = vadd.f32 %v7372, 1.0
      %v7389 = vadd.f32 %v7373, 1.0
      %v7390 = vadd.f32 %v7374, 1.0
      %v7391 = vadd.f32 %v7375, 1.0
      %v7392 = vadd.f32 %v7376, 1.0
      %v7393 = vadd.f32 %v7377, 1.0
      %v7394 = vadd.f32 %v7378, 1.0
      %v7395 = vsub.f32 1.0, %v7363
      %v7396 = vsub.f32 1.0, %v7364
      %v7397 = vsub.f32 1.0, %v7365
      %v7398 = vsub.f32 1.0, %v7366
      %v7399 = vsub.f32 1.0, %v7367
      %v7400 = vsub.f32 1.0, %v7368
      %v7401 = vsub.f32 1.0, %v7369
      %v7402 = vsub.f32 1.0, %v7370
      %v7403 = vsub.f32 1.0, %v7371
      %v7404 = vsub.f32 1.0, %v7372
      %v7405 = vsub.f32 1.0, %v7373
      %v7406 = vsub.f32 1.0, %v7374
      %v7407 = vsub.f32 1.0, %v7375
      %v7408 = vsub.f32 1.0, %v7376
      %v7409 = vsub.f32 1.0, %v7377
      %v7410 = vsub.f32 1.0, %v7378
      %v7411 = vrcp.pop %v7395
      %v7412 = vmul.f32 %v7379, %v7411
      %v7413 = vrcp.pop %v7396
      %v7414 = vmul.f32 %v7380, %v7413
      %v7415 = vrcp.pop %v7397
      %v7416 = vmul.f32 %v7381, %v7415
      %v7417 = vrcp.pop %v7398
      %v7418 = vmul.f32 %v7382, %v7417
      %v7419 = vrcp.pop %v7399
      %v7420 = vmul.f32 %v7383, %v7419
      %v7421 = vrcp.pop %v7400
      %v7422 = vmul.f32 %v7384, %v7421
      %v7423 = vrcp.pop %v7401
      %v7424 = vmul.f32 %v7385, %v7423
      %v7425 = vrcp.pop %v7402
      %v7426 = vmul.f32 %v7386, %v7425
      %v7427 = vrcp.pop %v7403
      %v7428 = vmul.f32 %v7387, %v7427
      %v7429 = vrcp.pop %v7404
      %v7430 = vmul.f32 %v7388, %v7429
      %v7431 = vrcp.pop %v7405
      %v7432 = vmul.f32 %v7389, %v7431
      %v7433 = vrcp.pop %v7406
      %v7434 = vmul.f32 %v7390, %v7433
      %v7435 = vrcp.pop %v7407
      %v7436 = vmul.f32 %v7391, %v7435
      %v7437 = vrcp.pop %v7408
      %v7438 = vmul.f32 %v7392, %v7437
      %v7439 = vrcp.pop %v7409
      %v7440 = vmul.f32 %v7393, %v7439
      %v7441 = vrcp.pop %v7410
      %v7442 = vmul.f32 %v7394, %v7441
      %v7443 = vlog2.pop %v7412
      %v7444 = vmul.f32 %v7443, 0.6931472
      %v7445 = vlog2.pop %v7414
      %v7446 = vmul.f32 %v7445, 0.6931472
      %v7447 = vlog2.pop %v7416
      %v7448 = vmul.f32 %v7447, 0.6931472
      %v7449 = vlog2.pop %v7418
      %v7450 = vmul.f32 %v7449, 0.6931472
      %v7451 = vlog2.pop %v7420
      %v7452 = vmul.f32 %v7451, 0.6931472
      %v7453 = vlog2.pop %v7422
      %v7454 = vmul.f32 %v7453, 0.6931472
      %v7455 = vlog2.pop %v7424
      %v7456 = vmul.f32 %v7455, 0.6931472
      %v7457 = vlog2.pop %v7426
      %v7458 = vmul.f32 %v7457, 0.6931472
      %v7459 = vlog2.pop %v7428
      %v7460 = vmul.f32 %v7459, 0.6931472
      %v7461 = vlog2.pop %v7430
      %v7462 = vmul.f32 %v7461, 0.6931472
      %v7463 = vlog2.pop %v7432
      %v7464 = vmul.f32 %v7463, 0.6931472
      %v7465 = vlog2.pop %v7434
      %v7466 = vmul.f32 %v7465, 0.6931472
      %v7467 = vlog2.pop %v7436
      %v7468 = vmul.f32 %v7467, 0.6931472
      %v7469 = vlog2.pop %v7438
      %v7470 = vmul.f32 %v7469, 0.6931472
      %v7471 = vlog2.pop %v7440
      %v7472 = vmul.f32 %v7471, 0.6931472
      %v7473 = vlog2.pop %v7442
      %v7474 = vmul.f32 %v7473, 0.6931472
      %v7475 = vmul.f32 %v7444, 0.5
      %v7476 = vmul.f32 %v7446, 0.5
      %v7477 = vmul.f32 %v7448, 0.5
      %v7478 = vmul.f32 %v7450, 0.5
      %v7479 = vmul.f32 %v7452, 0.5
      %v7480 = vmul.f32 %v7454, 0.5
      %v7481 = vmul.f32 %v7456, 0.5
      %v7482 = vmul.f32 %v7458, 0.5
      %v7483 = vmul.f32 %v7460, 0.5
      %v7484 = vmul.f32 %v7462, 0.5
      %v7485 = vmul.f32 %v7464, 0.5
      %v7486 = vmul.f32 %v7466, 0.5
      %v7487 = vmul.f32 %v7468, 0.5
      %v7488 = vmul.f32 %v7470, 0.5
      %v7489 = vmul.f32 %v7472, 0.5
      %v7490 = vmul.f32 %v7474, 0.5
      %v7491 = vrcp.pop %v7331
      %v7492 = vrcp.pop %v7332
      %v7493 = vrcp.pop %v7333
      %v7494 = vrcp.pop %v7334
      %v7495 = vrcp.pop %v7335
      %v7496 = vrcp.pop %v7336
      %v7497 = vrcp.pop %v7337
      %v7498 = vrcp.pop %v7338
      %v7499 = vrcp.pop %v7339
      %v7500 = vrcp.pop %v7340
      %v7501 = vrcp.pop %v7341
      %v7502 = vrcp.pop %v7342
      %v7503 = vrcp.pop %v7343
      %v7504 = vrcp.pop %v7344
      %v7505 = vrcp.pop %v7345
      %v7506 = vrcp.pop %v7346
      %v7507 = vmul.f32 %v7475, %v7491
      %v7508 = vmul.f32 %v7476, %v7492
      %v7509 = vmul.f32 %v7477, %v7493
      %v7510 = vmul.f32 %v7478, %v7494
      %v7511 = vmul.f32 %v7479, %v7495
      %v7512 = vmul.f32 %v7480, %v7496
      %v7513 = vmul.f32 %v7481, %v7497
      %v7514 = vmul.f32 %v7482, %v7498
      %v7515 = vmul.f32 %v7483, %v7499
      %v7516 = vmul.f32 %v7484, %v7500
      %v7517 = vmul.f32 %v7485, %v7501
      %v7518 = vmul.f32 %v7486, %v7502
      %v7519 = vmul.f32 %v7487, %v7503
      %v7520 = vmul.f32 %v7488, %v7504
      %v7521 = vmul.f32 %v7489, %v7505
      %v7522 = vmul.f32 %v7490, %v7506
      %v7523 = vmul.f32 %v7507, %v7315
      %v7524 = vmul.f32 %v7508, %v7316
      %v7525 = vmul.f32 %v7509, %v7317
      %v7526 = vmul.f32 %v7510, %v7318
      %v7527 = vmul.f32 %v7511, %v7319
      %v7528 = vmul.f32 %v7512, %v7320
      %v7529 = vmul.f32 %v7513, %v7321
      %v7530 = vmul.f32 %v7514, %v7322
      %v7531 = vmul.f32 %v7515, %v7323
      %v7532 = vmul.f32 %v7516, %v7324
      %v7533 = vmul.f32 %v7517, %v7325
      %v7534 = vmul.f32 %v7518, %v7326
      %v7535 = vmul.f32 %v7519, %v7327
      %v7536 = vmul.f32 %v7520, %v7328
      %v7537 = vmul.f32 %v7521, %v7329
      %v7538 = vmul.f32 %v7522, %v7330
      %v7539 = vmul.f32 %v7523, %v7523
      %v7540 = vmul.f32 %v7524, %v7524
      %v7541 = vmul.f32 %v7525, %v7525
      %v7542 = vmul.f32 %v7526, %v7526
      %v7543 = vmul.f32 %v7527, %v7527
      %v7544 = vmul.f32 %v7528, %v7528
      %v7545 = vmul.f32 %v7529, %v7529
      %v7546 = vmul.f32 %v7530, %v7530
      %v7547 = vmul.f32 %v7531, %v7531
      %v7548 = vmul.f32 %v7532, %v7532
      %v7549 = vmul.f32 %v7533, %v7533
      %v7550 = vmul.f32 %v7534, %v7534
      %v7551 = vmul.f32 %v7535, %v7535
      %v7552 = vmul.f32 %v7536, %v7536
      %v7553 = vmul.f32 %v7537, %v7537
      %v7554 = vmul.f32 %v7538, %v7538
      %v7555 = vsel %vm1094, %v7539, 0.0
      %7556 = vadd.xlane.f32.xlu0 %v7555
      %v7557 = vpop.xlane.xlu0 %7556
      %v7558 = vsel %vm1094, %v7540, 0.0
      %7559 = vadd.xlane.f32.xlu0 %v7558
      %v7560 = vpop.xlane.xlu0 %7559
      %v7561 = vsel %vm1094, %v7541, 0.0
      %7562 = vadd.xlane.f32.xlu0 %v7561
      %v7563 = vpop.xlane.xlu0 %7562
      %v7564 = vsel %vm1094, %v7542, 0.0
      %7565 = vadd.xlane.f32.xlu0 %v7564
      %v7566 = vpop.xlane.xlu0 %7565
      %v7567 = vsel %vm1094, %v7543, 0.0
      %7568 = vadd.xlane.f32.xlu0 %v7567
      %v7569 = vpop.xlane.xlu0 %7568
      %v7570 = vsel %vm1094, %v7544, 0.0
      %7571 = vadd.xlane.f32.xlu0 %v7570
      %v7572 = vpop.xlane.xlu0 %7571
      %v7573 = vsel %vm1094, %v7545, 0.0
      %7574 = vadd.xlane.f32.xlu0 %v7573
      %v7575 = vpop.xlane.xlu0 %7574
      %v7576 = vsel %vm1094, %v7546, 0.0
      %7577 = vadd.xlane.f32.xlu0 %v7576
      %v7578 = vpop.xlane.xlu0 %7577
      %v7579 = vsel %vm1094, %v7547, 0.0
      %7580 = vadd.xlane.f32.xlu0 %v7579
      %v7581 = vpop.xlane.xlu0 %7580
      %v7582 = vsel %vm1094, %v7548, 0.0
      %7583 = vadd.xlane.f32.xlu0 %v7582
      %v7584 = vpop.xlane.xlu0 %7583
      %v7585 = vsel %vm1094, %v7549, 0.0
      %7586 = vadd.xlane.f32.xlu0 %v7585
      %v7587 = vpop.xlane.xlu0 %7586
      %v7588 = vsel %vm1094, %v7550, 0.0
      %7589 = vadd.xlane.f32.xlu0 %v7588
      %v7590 = vpop.xlane.xlu0 %7589
      %v7591 = vsel %vm1094, %v7551, 0.0
      %7592 = vadd.xlane.f32.xlu0 %v7591
      %v7593 = vpop.xlane.xlu0 %7592
      %v7594 = vsel %vm1094, %v7552, 0.0
      %7595 = vadd.xlane.f32.xlu0 %v7594
      %v7596 = vpop.xlane.xlu0 %7595
      %v7597 = vsel %vm1094, %v7553, 0.0
      %7598 = vadd.xlane.f32.xlu0 %v7597
      %v7599 = vpop.xlane.xlu0 %7598
      %v7600 = vsel %vm1094, %v7554, 0.0
      %7601 = vadd.xlane.f32.xlu0 %v7600
      %v7602 = vpop.xlane.xlu0 %7601
      %v7603 = vrsqrt.pop %v7557
      %v7604 = vmul.f32 %v7557, %v7603
      %vm7605 = vcmp.eq.f32.partialorder %v7557, inf
      %v7606 = vsel %vm7605, %v7557, %v7604
      %vm7607 = vcmp.eq.f32.partialorder %v7557, 0.0
      %v7608 = vand.u32 %v7557, 2147483648
      %v7609 = vsel %vm7607, %v7608, %v7606
      %v7610 = vrsqrt.pop %v7560
      %v7611 = vmul.f32 %v7560, %v7610
      %vm7612 = vcmp.eq.f32.partialorder %v7560, inf
      %v7613 = vsel %vm7612, %v7560, %v7611
      %vm7614 = vcmp.eq.f32.partialorder %v7560, 0.0
      %v7615 = vand.u32 %v7560, 2147483648
      %v7616 = vsel %vm7614, %v7615, %v7613
      %v7617 = vrsqrt.pop %v7563
      %v7618 = vmul.f32 %v7563, %v7617
      %vm7619 = vcmp.eq.f32.partialorder %v7563, inf
      %v7620 = vsel %vm7619, %v7563, %v7618
      %vm7621 = vcmp.eq.f32.partialorder %v7563, 0.0
      %v7622 = vand.u32 %v7563, 2147483648
      %v7623 = vsel %vm7621, %v7622, %v7620
      %v7624 = vrsqrt.pop %v7566
      %v7625 = vmul.f32 %v7566, %v7624
      %vm7626 = vcmp.eq.f32.partialorder %v7566, inf
      %v7627 = vsel %vm7626, %v7566, %v7625
      %vm7628 = vcmp.eq.f32.partialorder %v7566, 0.0
      %v7629 = vand.u32 %v7566, 2147483648
      %v7630 = vsel %vm7628, %v7629, %v7627
      %v7631 = vrsqrt.pop %v7569
      %v7632 = vmul.f32 %v7569, %v7631
      %vm7633 = vcmp.eq.f32.partialorder %v7569, inf
      %v7634 = vsel %vm7633, %v7569, %v7632
      %vm7635 = vcmp.eq.f32.partialorder %v7569, 0.0
      %v7636 = vand.u32 %v7569, 2147483648
      %v7637 = vsel %vm7635, %v7636, %v7634
      %v7638 = vrsqrt.pop %v7572
      %v7639 = vmul.f32 %v7572, %v7638
      %vm7640 = vcmp.eq.f32.partialorder %v7572, inf
      %v7641 = vsel %vm7640, %v7572, %v7639
      %vm7642 = vcmp.eq.f32.partialorder %v7572, 0.0
      %v7643 = vand.u32 %v7572, 2147483648
      %v7644 = vsel %vm7642, %v7643, %v7641
      %v7645 = vrsqrt.pop %v7575
      %v7646 = vmul.f32 %v7575, %v7645
      %vm7647 = vcmp.eq.f32.partialorder %v7575, inf
      %v7648 = vsel %vm7647, %v7575, %v7646
      %vm7649 = vcmp.eq.f32.partialorder %v7575, 0.0
      %v7650 = vand.u32 %v7575, 2147483648
      %v7651 = vsel %vm7649, %v7650, %v7648
      %v7652 = vrsqrt.pop %v7578
      %v7653 = vmul.f32 %v7578, %v7652
      %vm7654 = vcmp.eq.f32.partialorder %v7578, inf
      %v7655 = vsel %vm7654, %v7578, %v7653
      %vm7656 = vcmp.eq.f32.partialorder %v7578, 0.0
      %v7657 = vand.u32 %v7578, 2147483648
      %v7658 = vsel %vm7656, %v7657, %v7655
      %v7659 = vrsqrt.pop %v7581
      %v7660 = vmul.f32 %v7581, %v7659
      %vm7661 = vcmp.eq.f32.partialorder %v7581, inf
      %v7662 = vsel %vm7661, %v7581, %v7660
      %vm7663 = vcmp.eq.f32.partialorder %v7581, 0.0
      %v7664 = vand.u32 %v7581, 2147483648
      %v7665 = vsel %vm7663, %v7664, %v7662
      %v7666 = vrsqrt.pop %v7584
      %v7667 = vmul.f32 %v7584, %v7666
      %vm7668 = vcmp.eq.f32.partialorder %v7584, inf
      %v7669 = vsel %vm7668, %v7584, %v7667
      %vm7670 = vcmp.eq.f32.partialorder %v7584, 0.0
      %v7671 = vand.u32 %v7584, 2147483648
      %v7672 = vsel %vm7670, %v7671, %v7669
      %v7673 = vrsqrt.pop %v7587
      %v7674 = vmul.f32 %v7587, %v7673
      %vm7675 = vcmp.eq.f32.partialorder %v7587, inf
      %v7676 = vsel %vm7675, %v7587, %v7674
      %vm7677 = vcmp.eq.f32.partialorder %v7587, 0.0
      %v7678 = vand.u32 %v7587, 2147483648
      %v7679 = vsel %vm7677, %v7678, %v7676
      %v7680 = vrsqrt.pop %v7590
      %v7681 = vmul.f32 %v7590, %v7680
      %vm7682 = vcmp.eq.f32.partialorder %v7590, inf
      %v7683 = vsel %vm7682, %v7590, %v7681
      %vm7684 = vcmp.eq.f32.partialorder %v7590, 0.0
      %v7685 = vand.u32 %v7590, 2147483648
      %v7686 = vsel %vm7684, %v7685, %v7683
      %v7687 = vrsqrt.pop %v7593
      %v7688 = vmul.f32 %v7593, %v7687
      %vm7689 = vcmp.eq.f32.partialorder %v7593, inf
      %v7690 = vsel %vm7689, %v7593, %v7688
      %vm7691 = vcmp.eq.f32.partialorder %v7593, 0.0
      %v7692 = vand.u32 %v7593, 2147483648
      %v7693 = vsel %vm7691, %v7692, %v7690
      %v7694 = vrsqrt.pop %v7596
      %v7695 = vmul.f32 %v7596, %v7694
      %vm7696 = vcmp.eq.f32.partialorder %v7596, inf
      %v7697 = vsel %vm7696, %v7596, %v7695
      %vm7698 = vcmp.eq.f32.partialorder %v7596, 0.0
      %v7699 = vand.u32 %v7596, 2147483648
      %v7700 = vsel %vm7698, %v7699, %v7697
      %v7701 = vrsqrt.pop %v7599
      %v7702 = vmul.f32 %v7599, %v7701
      %vm7703 = vcmp.eq.f32.partialorder %v7599, inf
      %v7704 = vsel %vm7703, %v7599, %v7702
      %vm7705 = vcmp.eq.f32.partialorder %v7599, 0.0
      %v7706 = vand.u32 %v7599, 2147483648
      %v7707 = vsel %vm7705, %v7706, %v7704
      %v7708 = vrsqrt.pop %v7602
      %v7709 = vmul.f32 %v7602, %v7708
      %vm7710 = vcmp.eq.f32.partialorder %v7602, inf
      %v7711 = vsel %vm7710, %v7602, %v7709
      %vm7712 = vcmp.eq.f32.partialorder %v7602, 0.0
      %v7713 = vand.u32 %v7602, 2147483648
      %v7714 = vsel %vm7712, %v7713, %v7711
      %v7715 = vmax.f32 %v7609, 1e-15
      %v7716 = vmax.f32 %v7616, 1e-15
      %v7717 = vmax.f32 %v7623, 1e-15
      %v7718 = vmax.f32 %v7630, 1e-15
      %v7719 = vmax.f32 %v7637, 1e-15
      %v7720 = vmax.f32 %v7644, 1e-15
      %v7721 = vmax.f32 %v7651, 1e-15
      %v7722 = vmax.f32 %v7658, 1e-15
      %v7723 = vmax.f32 %v7665, 1e-15
      %v7724 = vmax.f32 %v7672, 1e-15
      %v7725 = vmax.f32 %v7679, 1e-15
      %v7726 = vmax.f32 %v7686, 1e-15
      %v7727 = vmax.f32 %v7693, 1e-15
      %v7728 = vmax.f32 %v7700, 1e-15
      %v7729 = vmax.f32 %v7707, 1e-15
      %v7730 = vmax.f32 %v7714, 1e-15
      %vm7731 = vcmp.gt.f32.partialorder %v7715, 0.996
      %vm7732 = vcmp.gt.f32.partialorder %v7716, 0.996
      %vm7733 = vcmp.gt.f32.partialorder %v7717, 0.996
      %vm7734 = vcmp.gt.f32.partialorder %v7718, 0.996
      %vm7735 = vcmp.gt.f32.partialorder %v7719, 0.996
      %vm7736 = vcmp.gt.f32.partialorder %v7720, 0.996
      %vm7737 = vcmp.gt.f32.partialorder %v7721, 0.996
      %vm7738 = vcmp.gt.f32.partialorder %v7722, 0.996
      %vm7739 = vcmp.gt.f32.partialorder %v7723, 0.996
      %vm7740 = vcmp.gt.f32.partialorder %v7724, 0.996
      %vm7741 = vcmp.gt.f32.partialorder %v7725, 0.996
      %vm7742 = vcmp.gt.f32.partialorder %v7726, 0.996
      %vm7743 = vcmp.gt.f32.partialorder %v7727, 0.996
      %vm7744 = vcmp.gt.f32.partialorder %v7728, 0.996
      %vm7745 = vcmp.gt.f32.partialorder %v7729, 0.996
      %vm7746 = vcmp.gt.f32.partialorder %v7730, 0.996
      %v7747 = vrcp.pop %v7715
      %v7748 = vmul.f32 %v7523, %v7747
      %v7749 = vrcp.pop %v7716
      %v7750 = vmul.f32 %v7524, %v7749
      %v7751 = vrcp.pop %v7717
      %v7752 = vmul.f32 %v7525, %v7751
      %v7753 = vrcp.pop %v7718
      %v7754 = vmul.f32 %v7526, %v7753
      %v7755 = vrcp.pop %v7719
      %v7756 = vmul.f32 %v7527, %v7755
      %v7757 = vrcp.pop %v7720
      %v7758 = vmul.f32 %v7528, %v7757
      %v7759 = vrcp.pop %v7721
      %v7760 = vmul.f32 %v7529, %v7759
      %v7761 = vrcp.pop %v7722
      %v7762 = vmul.f32 %v7530, %v7761
      %v7763 = vrcp.pop %v7723
      %v7764 = vmul.f32 %v7531, %v7763
      %v7765 = vrcp.pop %v7724
      %v7766 = vmul.f32 %v7532, %v7765
      %v7767 = vrcp.pop %v7725
      %v7768 = vmul.f32 %v7533, %v7767
      %v7769 = vrcp.pop %v7726
      %v7770 = vmul.f32 %v7534, %v7769
      %v7771 = vrcp.pop %v7727
      %v7772 = vmul.f32 %v7535, %v7771
      %v7773 = vrcp.pop %v7728
      %v7774 = vmul.f32 %v7536, %v7773
      %v7775 = vrcp.pop %v7729
      %v7776 = vmul.f32 %v7537, %v7775
      %v7777 = vrcp.pop %v7730
      %v7778 = vmul.f32 %v7538, %v7777
      %v7779 = vmul.f32 %v7748, 0.996
      %v7780 = vmul.f32 %v7750, 0.996
      %v7781 = vmul.f32 %v7752, 0.996
      %v7782 = vmul.f32 %v7754, 0.996
      %v7783 = vmul.f32 %v7756, 0.996
      %v7784 = vmul.f32 %v7758, 0.996
      %v7785 = vmul.f32 %v7760, 0.996
      %v7786 = vmul.f32 %v7762, 0.996
      %v7787 = vmul.f32 %v7764, 0.996
      %v7788 = vmul.f32 %v7766, 0.996
      %v7789 = vmul.f32 %v7768, 0.996
      %v7790 = vmul.f32 %v7770, 0.996
      %v7791 = vmul.f32 %v7772, 0.996
      %v7792 = vmul.f32 %v7774, 0.996
      %v7793 = vmul.f32 %v7776, 0.996
      %v7794 = vmul.f32 %v7778, 0.996
      %v7795 = vsel %vm7731, 1, 0
      %v7796 = vsel %vm7732, 1, 0
      %v7797 = vsel %vm7733, 1, 0
      %v7798 = vsel %vm7734, 1, 0
      %v7799 = vsel %vm7735, 1, 0
      %v7800 = vsel %vm7736, 1, 0
      %v7801 = vsel %vm7737, 1, 0
      %v7802 = vsel %vm7738, 1, 0
      %v7803 = vsel %vm7739, 1, 0
      %v7804 = vsel %vm7740, 1, 0
      %v7805 = vsel %vm7741, 1, 0
      %v7806 = vsel %vm7742, 1, 0
      %v7807 = vsel %vm7743, 1, 0
      %v7808 = vsel %vm7744, 1, 0
      %v7809 = vsel %vm7745, 1, 0
      %v7810 = vsel %vm7746, 1, 0
      %vm7811 = vcmp.eq.s32.totalorder %v7795, 1
      %vm7812 = vcmp.eq.s32.totalorder %v7796, 1
      %vm7813 = vcmp.eq.s32.totalorder %v7797, 1
      %vm7814 = vcmp.eq.s32.totalorder %v7798, 1
      %vm7815 = vcmp.eq.s32.totalorder %v7799, 1
      %vm7816 = vcmp.eq.s32.totalorder %v7800, 1
      %vm7817 = vcmp.eq.s32.totalorder %v7801, 1
      %vm7818 = vcmp.eq.s32.totalorder %v7802, 1
      %vm7819 = vcmp.eq.s32.totalorder %v7803, 1
      %vm7820 = vcmp.eq.s32.totalorder %v7804, 1
      %vm7821 = vcmp.eq.s32.totalorder %v7805, 1
      %vm7822 = vcmp.eq.s32.totalorder %v7806, 1
      %vm7823 = vcmp.eq.s32.totalorder %v7807, 1
      %vm7824 = vcmp.eq.s32.totalorder %v7808, 1
      %vm7825 = vcmp.eq.s32.totalorder %v7809, 1
      %vm7826 = vcmp.eq.s32.totalorder %v7810, 1
      %v7827 = vsel %vm7811, %v7779, %v7523
      %v7828 = vsel %vm7812, %v7780, %v7524
      %v7829 = vsel %vm7813, %v7781, %v7525
      %v7830 = vsel %vm7814, %v7782, %v7526
      %v7831 = vsel %vm7815, %v7783, %v7527
      %v7832 = vsel %vm7816, %v7784, %v7528
      %v7833 = vsel %vm7817, %v7785, %v7529
      %v7834 = vsel %vm7818, %v7786, %v7530
      %v7835 = vsel %vm7819, %v7787, %v7531
      %v7836 = vsel %vm7820, %v7788, %v7532
      %v7837 = vsel %vm7821, %v7789, %v7533
      %v7838 = vsel %vm7822, %v7790, %v7534
      %v7839 = vsel %vm7823, %v7791, %v7535
      %v7840 = vsel %vm7824, %v7792, %v7536
      %v7841 = vsel %vm7825, %v7793, %v7537
      %v7842 = vsel %vm7826, %v7794, %v7538
      %v7843 = vmin.f32 %v7715, 0.996
      %v7844 = vmin.f32 %v7716, 0.996
      %v7845 = vmin.f32 %v7717, 0.996
      %v7846 = vmin.f32 %v7718, 0.996
      %v7847 = vmin.f32 %v7719, 0.996
      %v7848 = vmin.f32 %v7720, 0.996
      %v7849 = vmin.f32 %v7721, 0.996
      %v7850 = vmin.f32 %v7722, 0.996
      %v7851 = vmin.f32 %v7723, 0.996
      %v7852 = vmin.f32 %v7724, 0.996
      %v7853 = vmin.f32 %v7725, 0.996
      %v7854 = vmin.f32 %v7726, 0.996
      %v7855 = vmin.f32 %v7727, 0.996
      %v7856 = vmin.f32 %v7728, 0.996
      %v7857 = vmin.f32 %v7729, 0.996
      %v7858 = vmin.f32 %v7730, 0.996
      %v7859 = vmax.f32 %v7843, -0.9999999
      %v7860 = vmax.f32 %v7844, -0.9999999
      %v7861 = vmax.f32 %v7845, -0.9999999
      %v7862 = vmax.f32 %v7846, -0.9999999
      %v7863 = vmax.f32 %v7847, -0.9999999
      %v7864 = vmax.f32 %v7848, -0.9999999
      %v7865 = vmax.f32 %v7849, -0.9999999
      %v7866 = vmax.f32 %v7850, -0.9999999
      %v7867 = vmax.f32 %v7851, -0.9999999
      %v7868 = vmax.f32 %v7852, -0.9999999
      %v7869 = vmax.f32 %v7853, -0.9999999
      %v7870 = vmax.f32 %v7854, -0.9999999
      %v7871 = vmax.f32 %v7855, -0.9999999
      %v7872 = vmax.f32 %v7856, -0.9999999
      %v7873 = vmax.f32 %v7857, -0.9999999
      %v7874 = vmax.f32 %v7858, -0.9999999
      %v7875 = vmin.f32 %v7859, 0.9999999
      %v7876 = vmin.f32 %v7860, 0.9999999
      %v7877 = vmin.f32 %v7861, 0.9999999
      %v7878 = vmin.f32 %v7862, 0.9999999
      %v7879 = vmin.f32 %v7863, 0.9999999
      %v7880 = vmin.f32 %v7864, 0.9999999
      %v7881 = vmin.f32 %v7865, 0.9999999
      %v7882 = vmin.f32 %v7866, 0.9999999
      %v7883 = vmin.f32 %v7867, 0.9999999
      %v7884 = vmin.f32 %v7868, 0.9999999
      %v7885 = vmin.f32 %v7869, 0.9999999
      %v7886 = vmin.f32 %v7870, 0.9999999
      %v7887 = vmin.f32 %v7871, 0.9999999
      %v7888 = vmin.f32 %v7872, 0.9999999
      %v7889 = vmin.f32 %v7873, 0.9999999
      %v7890 = vmin.f32 %v7874, 0.9999999
      %v7891 = vadd.f32 %v7875, 1.0
      %v7892 = vadd.f32 %v7876, 1.0
      %v7893 = vadd.f32 %v7877, 1.0
      %v7894 = vadd.f32 %v7878, 1.0
      %v7895 = vadd.f32 %v7879, 1.0
      %v7896 = vadd.f32 %v7880, 1.0
      %v7897 = vadd.f32 %v7881, 1.0
      %v7898 = vadd.f32 %v7882, 1.0
      %v7899 = vadd.f32 %v7883, 1.0
      %v7900 = vadd.f32 %v7884, 1.0
      %v7901 = vadd.f32 %v7885, 1.0
      %v7902 = vadd.f32 %v7886, 1.0
      %v7903 = vadd.f32 %v7887, 1.0
      %v7904 = vadd.f32 %v7888, 1.0
      %v7905 = vadd.f32 %v7889, 1.0
      %v7906 = vadd.f32 %v7890, 1.0
      %v7907 = vsub.f32 1.0, %v7875
      %v7908 = vsub.f32 1.0, %v7876
      %v7909 = vsub.f32 1.0, %v7877
      %v7910 = vsub.f32 1.0, %v7878
      %v7911 = vsub.f32 1.0, %v7879
      %v7912 = vsub.f32 1.0, %v7880
      %v7913 = vsub.f32 1.0, %v7881
      %v7914 = vsub.f32 1.0, %v7882
      %v7915 = vsub.f32 1.0, %v7883
      %v7916 = vsub.f32 1.0, %v7884
      %v7917 = vsub.f32 1.0, %v7885
      %v7918 = vsub.f32 1.0, %v7886
      %v7919 = vsub.f32 1.0, %v7887
      %v7920 = vsub.f32 1.0, %v7888
      %v7921 = vsub.f32 1.0, %v7889
      %v7922 = vsub.f32 1.0, %v7890
      %v7923 = vrcp.pop %v7907
      %v7924 = vmul.f32 %v7891, %v7923
      %v7925 = vrcp.pop %v7908
      %v7926 = vmul.f32 %v7892, %v7925
      %v7927 = vrcp.pop %v7909
      %v7928 = vmul.f32 %v7893, %v7927
      %v7929 = vrcp.pop %v7910
      %v7930 = vmul.f32 %v7894, %v7929
      %v7931 = vrcp.pop %v7911
      %v7932 = vmul.f32 %v7895, %v7931
      %v7933 = vrcp.pop %v7912
      %v7934 = vmul.f32 %v7896, %v7933
      %v7935 = vrcp.pop %v7913
      %v7936 = vmul.f32 %v7897, %v7935
      %v7937 = vrcp.pop %v7914
      %v7938 = vmul.f32 %v7898, %v7937
      %v7939 = vrcp.pop %v7915
      %v7940 = vmul.f32 %v7899, %v7939
      %v7941 = vrcp.pop %v7916
      %v7942 = vmul.f32 %v7900, %v7941
      %v7943 = vrcp.pop %v7917
      %v7944 = vmul.f32 %v7901, %v7943
      %v7945 = vrcp.pop %v7918
      %v7946 = vmul.f32 %v7902, %v7945
      %v7947 = vrcp.pop %v7919
      %v7948 = vmul.f32 %v7903, %v7947
      %v7949 = vrcp.pop %v7920
      %v7950 = vmul.f32 %v7904, %v7949
      %v7951 = vrcp.pop %v7921
      %v7952 = vmul.f32 %v7905, %v7951
      %v7953 = vrcp.pop %v7922
      %v7954 = vmul.f32 %v7906, %v7953
      %v7955 = vlog2.pop %v7924
      %v7956 = vmul.f32 %v7955, 0.6931472
      %v7957 = vlog2.pop %v7926
      %v7958 = vmul.f32 %v7957, 0.6931472
      %v7959 = vlog2.pop %v7928
      %v7960 = vmul.f32 %v7959, 0.6931472
      %v7961 = vlog2.pop %v7930
      %v7962 = vmul.f32 %v7961, 0.6931472
      %v7963 = vlog2.pop %v7932
      %v7964 = vmul.f32 %v7963, 0.6931472
      %v7965 = vlog2.pop %v7934
      %v7966 = vmul.f32 %v7965, 0.6931472
      %v7967 = vlog2.pop %v7936
      %v7968 = vmul.f32 %v7967, 0.6931472
      %v7969 = vlog2.pop %v7938
      %v7970 = vmul.f32 %v7969, 0.6931472
      %v7971 = vlog2.pop %v7940
      %v7972 = vmul.f32 %v7971, 0.6931472
      %v7973 = vlog2.pop %v7942
      %v7974 = vmul.f32 %v7973, 0.6931472
      %v7975 = vlog2.pop %v7944
      %v7976 = vmul.f32 %v7975, 0.6931472
      %v7977 = vlog2.pop %v7946
      %v7978 = vmul.f32 %v7977, 0.6931472
      %v7979 = vlog2.pop %v7948
      %v7980 = vmul.f32 %v7979, 0.6931472
      %v7981 = vlog2.pop %v7950
      %v7982 = vmul.f32 %v7981, 0.6931472
      %v7983 = vlog2.pop %v7952
      %v7984 = vmul.f32 %v7983, 0.6931472
      %v7985 = vlog2.pop %v7954
      %v7986 = vmul.f32 %v7985, 0.6931472
      %v7987 = vmul.f32 %v7956, 0.5
      %v7988 = vmul.f32 %v7958, 0.5
      %v7989 = vmul.f32 %v7960, 0.5
      %v7990 = vmul.f32 %v7962, 0.5
      %v7991 = vmul.f32 %v7964, 0.5
      %v7992 = vmul.f32 %v7966, 0.5
      %v7993 = vmul.f32 %v7968, 0.5
      %v7994 = vmul.f32 %v7970, 0.5
      %v7995 = vmul.f32 %v7972, 0.5
      %v7996 = vmul.f32 %v7974, 0.5
      %v7997 = vmul.f32 %v7976, 0.5
      %v7998 = vmul.f32 %v7978, 0.5
      %v7999 = vmul.f32 %v7980, 0.5
      %v8000 = vmul.f32 %v7982, 0.5
      %v8001 = vmul.f32 %v7984, 0.5
      %v8002 = vmul.f32 %v7986, 0.5
      %v8003 = vrcp.pop %v7843
      %v8004 = vrcp.pop %v7844
      %v8005 = vrcp.pop %v7845
      %v8006 = vrcp.pop %v7846
      %v8007 = vrcp.pop %v7847
      %v8008 = vrcp.pop %v7848
      %v8009 = vrcp.pop %v7849
      %v8010 = vrcp.pop %v7850
      %v8011 = vrcp.pop %v7851
      %v8012 = vrcp.pop %v7852
      %v8013 = vrcp.pop %v7853
      %v8014 = vrcp.pop %v7854
      %v8015 = vrcp.pop %v7855
      %v8016 = vrcp.pop %v7856
      %v8017 = vrcp.pop %v7857
      %v8018 = vrcp.pop %v7858
      %v8019 = vmul.f32 %v7987, %v8003
      %v8020 = vmul.f32 %v7988, %v8004
      %v8021 = vmul.f32 %v7989, %v8005
      %v8022 = vmul.f32 %v7990, %v8006
      %v8023 = vmul.f32 %v7991, %v8007
      %v8024 = vmul.f32 %v7992, %v8008
      %v8025 = vmul.f32 %v7993, %v8009
      %v8026 = vmul.f32 %v7994, %v8010
      %v8027 = vmul.f32 %v7995, %v8011
      %v8028 = vmul.f32 %v7996, %v8012
      %v8029 = vmul.f32 %v7997, %v8013
      %v8030 = vmul.f32 %v7998, %v8014
      %v8031 = vmul.f32 %v7999, %v8015
      %v8032 = vmul.f32 %v8000, %v8016
      %v8033 = vmul.f32 %v8001, %v8017
      %v8034 = vmul.f32 %v8002, %v8018
      %v8035 = vmul.f32 %v8019, %v7827
      %v8036 = vmul.f32 %v8020, %v7828
      %v8037 = vmul.f32 %v8021, %v7829
      %v8038 = vmul.f32 %v8022, %v7830
      %v8039 = vmul.f32 %v8023, %v7831
      %v8040 = vmul.f32 %v8024, %v7832
      %v8041 = vmul.f32 %v8025, %v7833
      %v8042 = vmul.f32 %v8026, %v7834
      %v8043 = vmul.f32 %v8027, %v7835
      %v8044 = vmul.f32 %v8028, %v7836
      %v8045 = vmul.f32 %v8029, %v7837
      %v8046 = vmul.f32 %v8030, %v7838
      %v8047 = vmul.f32 %v8031, %v7839
      %v8048 = vmul.f32 %v8032, %v7840
      %v8049 = vmul.f32 %v8033, %v7841
      %v8050 = vmul.f32 %v8034, %v7842
      %vm8051 = vcmp.gt.f32.partialorder %v8035, 0.0
      %vm8052 = vcmp.gt.f32.partialorder %v8036, 0.0
      %vm8053 = vcmp.gt.f32.partialorder %v8037, 0.0
      %vm8054 = vcmp.gt.f32.partialorder %v8038, 0.0
      %vm8055 = vcmp.gt.f32.partialorder %v8039, 0.0
      %vm8056 = vcmp.gt.f32.partialorder %v8040, 0.0
      %vm8057 = vcmp.gt.f32.partialorder %v8041, 0.0
      %vm8058 = vcmp.gt.f32.partialorder %v8042, 0.0
      %vm8059 = vcmp.gt.f32.partialorder %v8043, 0.0
      %vm8060 = vcmp.gt.f32.partialorder %v8044, 0.0
      %vm8061 = vcmp.gt.f32.partialorder %v8045, 0.0
      %vm8062 = vcmp.gt.f32.partialorder %v8046, 0.0
      %vm8063 = vcmp.gt.f32.partialorder %v8047, 0.0
      %vm8064 = vcmp.gt.f32.partialorder %v8048, 0.0
      %vm8065 = vcmp.gt.f32.partialorder %v8049, 0.0
      %vm8066 = vcmp.gt.f32.partialorder %v8050, 0.0
      %v8067 = vmul.f32 %v8035, 1.442695
      %v8068 = vpow.pop %v8067
      %v8069 = vmul.f32 %v8036, 1.442695
      %v8070 = vpow.pop %v8069
      %v8071 = vmul.f32 %v8037, 1.442695
      %v8072 = vpow.pop %v8071
      %v8073 = vmul.f32 %v8038, 1.442695
      %v8074 = vpow.pop %v8073
      %v8075 = vmul.f32 %v8039, 1.442695
      %v8076 = vpow.pop %v8075
      %v8077 = vmul.f32 %v8040, 1.442695
      %v8078 = vpow.pop %v8077
      %v8079 = vmul.f32 %v8041, 1.442695
      %v8080 = vpow.pop %v8079
      %v8081 = vmul.f32 %v8042, 1.442695
      %v8082 = vpow.pop %v8081
      %v8083 = vmul.f32 %v8043, 1.442695
      %v8084 = vpow.pop %v8083
      %v8085 = vmul.f32 %v8044, 1.442695
      %v8086 = vpow.pop %v8085
      %v8087 = vmul.f32 %v8045, 1.442695
      %v8088 = vpow.pop %v8087
      %v8089 = vmul.f32 %v8046, 1.442695
      %v8090 = vpow.pop %v8089
      %v8091 = vmul.f32 %v8047, 1.442695
      %v8092 = vpow.pop %v8091
      %v8093 = vmul.f32 %v8048, 1.442695
      %v8094 = vpow.pop %v8093
      %v8095 = vmul.f32 %v8049, 1.442695
      %v8096 = vpow.pop %v8095
      %v8097 = vmul.f32 %v8050, 1.442695
      %v8098 = vpow.pop %v8097
      %v8099 = vsub.f32 %v8068, 1.0
      %v8100 = vsub.f32 %v8070, 1.0
      %v8101 = vsub.f32 %v8072, 1.0
      %v8102 = vsub.f32 %v8074, 1.0
      %v8103 = vsub.f32 %v8076, 1.0
      %v8104 = vsub.f32 %v8078, 1.0
      %v8105 = vsub.f32 %v8080, 1.0
      %v8106 = vsub.f32 %v8082, 1.0
      %v8107 = vsub.f32 %v8084, 1.0
      %v8108 = vsub.f32 %v8086, 1.0
      %v8109 = vsub.f32 %v8088, 1.0
      %v8110 = vsub.f32 %v8090, 1.0
      %v8111 = vsub.f32 %v8092, 1.0
      %v8112 = vsub.f32 %v8094, 1.0
      %v8113 = vsub.f32 %v8096, 1.0
      %v8114 = vsub.f32 %v8098, 1.0
      %v8115 = vsel %vm8051, %v8035, %v8099
      %v8116 = vsel %vm8052, %v8036, %v8100
      %v8117 = vsel %vm8053, %v8037, %v8101
      %v8118 = vsel %vm8054, %v8038, %v8102
      %v8119 = vsel %vm8055, %v8039, %v8103
      %v8120 = vsel %vm8056, %v8040, %v8104
      %v8121 = vsel %vm8057, %v8041, %v8105
      %v8122 = vsel %vm8058, %v8042, %v8106
      %v8123 = vsel %vm8059, %v8043, %v8107
      %v8124 = vsel %vm8060, %v8044, %v8108
      %v8125 = vsel %vm8061, %v8045, %v8109
      %v8126 = vsel %vm8062, %v8046, %v8110
      %v8127 = vsel %vm8063, %v8047, %v8111
      %v8128 = vsel %vm8064, %v8048, %v8112
      %v8129 = vsel %vm8065, %v8049, %v8113
      %v8130 = vsel %vm8066, %v8050, %v8114
      %v8131 = vadd.f32 %v8035, 0.94247776
      %v8132 = vadd.f32 %v8036, 0.94247776
      %v8133 = vadd.f32 %v8037, 0.94247776
      %v8134 = vadd.f32 %v8038, 0.94247776
      %v8135 = vadd.f32 %v8039, 0.94247776
      %v8136 = vadd.f32 %v8040, 0.94247776
      %v8137 = vadd.f32 %v8041, 0.94247776
      %v8138 = vadd.f32 %v8042, 0.94247776
      %v8139 = vadd.f32 %v8043, 0.94247776
      %v8140 = vadd.f32 %v8044, 0.94247776
      %v8141 = vadd.f32 %v8045, 0.94247776
      %v8142 = vadd.f32 %v8046, 0.94247776
      %v8143 = vadd.f32 %v8047, 0.94247776
      %v8144 = vadd.f32 %v8048, 0.94247776
      %v8145 = vadd.f32 %v8049, 0.94247776
      %v8146 = vadd.f32 %v8050, 0.94247776
      %v8147 = vand.u32 2147483647, %v8131
      %vm8148 = vcmp.le.f32.partialorder %v8147, 0.7853982
      %vm8149 = vcmp.lt.s32.totalorder %v8131, 0
      %v8150 = vand.u32 %v8131, 2139095040
      %v8151 = vshrl.u32 %v8150, 23
      %v8152 = vsub.s32 %v8151, 127
      %v8153 = vand.u32 2147483647, %v8131
      %v8154 = vand.u32 %v8153, 8388607
      %v8155 = vor.u32 %v8154, 8388608
      %v8156 = vsub.s32 0, %v8155
      %v8157 = vadd.s32 %v8152, 1
      %vm8158 = vcmp.gt.s32.totalorder %v8157, 0
      %v8159 = vsel %vm8158, %v8157, 0
      %v8160 = vshrl.u32 %v8159, 5
      %v8161 = vand.u32 %v8159, 31
      %v8162 = vsub.s32 32, %v8161
      %v8163 = vshrl.u32 683565275, %v8162
      %v8164 = vshll.u32 683565275, %v8161
      %v8165 = vshrl.u32 2475754826, %v8162
      %v8166 = vor.u32 %v8164, %v8165
      %v8167 = vshll.u32 2475754826, %v8161
      %v8168 = vshrl.u32 2131351028, %v8162
      %v8169 = vor.u32 %v8167, %v8168
      %v8170 = vshll.u32 2131351028, %v8161
      %v8171 = vshrl.u32 2102212464, %v8162
      %v8172 = vor.u32 %v8170, %v8171
      %v8173 = vshll.u32 2102212464, %v8161
      %v8174 = vshrl.u32 920167782, %v8162
      %v8175 = vor.u32 %v8173, %v8174
      %v8176 = vshll.u32 920167782, %v8161
      %v8177 = vshrl.u32 1326507024, %v8162
      %v8178 = vor.u32 %v8176, %v8177
      %vm8179 = vcmp.lt.s32.totalorder %v8160, 1
      %vm8180 = vcmp.lt.s32.totalorder %v8160, 2
      %vm8181 = vcmp.lt.s32.totalorder %v8160, 3
      %vm8182 = vcmp.lt.s32.totalorder %v8160, 4
      %v8183 = vsel %vm8179, %v8163, %v8166
      %v8184 = vsel %vm8182, %v8172, 2102212464
      %v8185 = vsel %vm8181, %v8169, %v8184
      %v8186 = vsel %vm8180, %v8183, %v8185
      %v8187 = vsel %vm8179, %v8166, %v8169
      %v8188 = vsel %vm8182, %v8175, 920167782
      %v8189 = vsel %vm8181, %v8172, %v8188
      %v8190 = vsel %vm8180, %v8187, %v8189
      %v8191 = vsel %vm8179, %v8169, %v8172
      %v8192 = vsel %vm8182, %v8178, 1326507024
      %v8193 = vsel %vm8181, %v8175, %v8192
      %v8194 = vsel %vm8180, %v8191, %v8193
      %v8195 = vshll.u32 %v8155, 8
      %v8196 = vmul.u32.u64.compose %v8195, %v8194
      %v8197 = vextract.low.u32 %v8196
      %v8198 = vextract.high.u32 %v8196
      %v8199 = vmul.u32.u64.compose %v8195, %v8190
      %v8200 = vextract.low.u32 %v8199
      %v8201 = vextract.high.u32 %v8199
      %v8202 = vmul.u32 %v8195, %v8186
      %v8203 = vadd.s32 %v8198, %v8200
      %vm8204 = vc.u32 %v8198, %v8200
      %v8205 = vadd.s32 %v8201, 1
      %v8206 = vsel %vm8204, %v8205, %v8201
      %v8207 = vadd.s32 %v8202, %v8206
      %v8208 = vadd.s32 %v8207, 536870912
      %v8209 = vshrl.u32 %v8208, 30
      %v8210 = vshll.u32 %v8209, 30
      %v8211 = vsub.s32 %v8207, %v8210
      %vm8212 = vcmp.lt.s32.totalorder %v8211, 0
      %v8213 = vsub.s32 0, %v8211
      %v8214 = vsel %vm8212, %v8213, %v8211
      %v8215 = vclz %v8214
      %v8216 = vsub.s32 %v8215, 2
      %vm8217 = vcmp.gt.s32.totalorder 0, %v8216
      %v8218 = vsel %vm8217, 0, %v8216
      %v8219 = vsub.s32 32, %v8218
      %v8220 = vshll.u32 %v8211, %v8218
      %v8221 = vshrl.u32 %v8203, %v8219
      %v8222 = vor.u32 %v8220, %v8221
      %v8223 = vsub.s32 4294967266, %v8218
      %v8224 = vadd.s32 %v8223, 127
      %v8225 = vshll.u32 %v8224, 23
      %v8226 = vor.u32 4788187, %v8225
      %v8227 = vand.u32 2147483647, %v8226
      %v8229 = vcvt.s32.f32 %v8222
      %v8230 = vmul.f32 %v8229, %v8227
      %v8231 = vxor.u32 %v8230, 2147483648
      %v8232 = vsel %vm8149, %v8231, %v8230
      %v8233 = vsub.s32 4, %v8209
      %v8234 = vsel %vm8149, %v8233, %v8209
      %v8235 = vsel %vm8148, %v8131, %v8232
      %v8236 = vsel %vm8148, 0, %v8234
      %v8237 = vcosq.f32.pop %v8235
      %v8238 = vsinq.f32.pop %v8235
      %vm8239 = vweird.f32 %v8131
      %v8240 = vand.u32 %v8236, 3
      %vm8241 = vcmp.lt.s32.totalorder %v8240, 2
      %vm8242 = vcmp.eq.s32.totalorder %v8240, 0
      %v8243 = vxor.u32 %v8238, 2147483648
      %v8244 = vsel %vm8242, %v8237, %v8243
      %vm8245 = vcmp.eq.s32.totalorder %v8240, 2
      %v8246 = vxor.u32 %v8237, 2147483648
      %v8247 = vsel %vm8245, %v8246, %v8238
      %v8248 = vsel %vm8241, %v8244, %v8247
      %v8249 = vsel %vm8239, nan, %v8248
      %v8250 = vand.u32 2147483647, %v8132
      %vm8251 = vcmp.le.f32.partialorder %v8250, 0.7853982
      %vm8252 = vcmp.lt.s32.totalorder %v8132, 0
      %v8253 = vand.u32 %v8132, 2139095040
      %v8254 = vshrl.u32 %v8253, 23
      %v8255 = vsub.s32 %v8254, 127
      %v8256 = vand.u32 2147483647, %v8132
      %v8257 = vand.u32 %v8256, 8388607
      %v8258 = vor.u32 %v8257, 8388608
      %v8259 = vsub.s32 0, %v8258
      %v8260 = vadd.s32 %v8255, 1
      %vm8261 = vcmp.gt.s32.totalorder %v8260, 0
      %v8262 = vsel %vm8261, %v8260, 0
      %v8263 = vshrl.u32 %v8262, 5
      %v8264 = vand.u32 %v8262, 31
      %v8265 = vsub.s32 32, %v8264
      %v8266 = vshrl.u32 683565275, %v8265
      %v8267 = vshll.u32 683565275, %v8264
      %v8268 = vshrl.u32 2475754826, %v8265
      %v8269 = vor.u32 %v8267, %v8268
      %v8270 = vshll.u32 2475754826, %v8264
      %v8271 = vshrl.u32 2131351028, %v8265
      %v8272 = vor.u32 %v8270, %v8271
      %v8273 = vshll.u32 2131351028, %v8264
      %v8274 = vshrl.u32 2102212464, %v8265
      %v8275 = vor.u32 %v8273, %v8274
      %v8276 = vshll.u32 2102212464, %v8264
      %v8277 = vshrl.u32 920167782, %v8265
      %v8278 = vor.u32 %v8276, %v8277
      %v8279 = vshll.u32 920167782, %v8264
      %v8280 = vshrl.u32 1326507024, %v8265
      %v8281 = vor.u32 %v8279, %v8280
      %vm8282 = vcmp.lt.s32.totalorder %v8263, 1
      %vm8283 = vcmp.lt.s32.totalorder %v8263, 2
      %vm8284 = vcmp.lt.s32.totalorder %v8263, 3
      %vm8285 = vcmp.lt.s32.totalorder %v8263, 4
      %v8286 = vsel %vm8282, %v8266, %v8269
      %v8287 = vsel %vm8285, %v8275, 2102212464
      %v8288 = vsel %vm8284, %v8272, %v8287
      %v8289 = vsel %vm8283, %v8286, %v8288
      %v8290 = vsel %vm8282, %v8269, %v8272
      %v8291 = vsel %vm8285, %v8278, 920167782
      %v8292 = vsel %vm8284, %v8275, %v8291
      %v8293 = vsel %vm8283, %v8290, %v8292
      %v8294 = vsel %vm8282, %v8272, %v8275
      %v8295 = vsel %vm8285, %v8281, 1326507024
      %v8296 = vsel %vm8284, %v8278, %v8295
      %v8297 = vsel %vm8283, %v8294, %v8296
      %v8298 = vshll.u32 %v8258, 8
      %v8299 = vmul.u32.u64.compose %v8298, %v8297
      %v8300 = vextract.low.u32 %v8299
      %v8301 = vextract.high.u32 %v8299
      %v8302 = vmul.u32.u64.compose %v8298, %v8293
      %v8303 = vextract.low.u32 %v8302
      %v8304 = vextract.high.u32 %v8302
      %v8305 = vmul.u32 %v8298, %v8289
      %v8306 = vadd.s32 %v8301, %v8303
      %vm8307 = vc.u32 %v8301, %v8303
      %v8308 = vadd.s32 %v8304, 1
      %v8309 = vsel %vm8307, %v8308, %v8304
      %v8310 = vadd.s32 %v8305, %v8309
      %v8311 = vadd.s32 %v8310, 536870912
      %v8312 = vshrl.u32 %v8311, 30
      %v8313 = vshll.u32 %v8312, 30
      %v8314 = vsub.s32 %v8310, %v8313
      %vm8315 = vcmp.lt.s32.totalorder %v8314, 0
      %v8316 = vsub.s32 0, %v8314
      %v8317 = vsel %vm8315, %v8316, %v8314
      %v8318 = vclz %v8317
      %v8319 = vsub.s32 %v8318, 2
      %vm8320 = vcmp.gt.s32.totalorder 0, %v8319
      %v8321 = vsel %vm8320, 0, %v8319
      %v8322 = vsub.s32 32, %v8321
      %v8323 = vshll.u32 %v8314, %v8321
      %v8324 = vshrl.u32 %v8306, %v8322
      %v8325 = vor.u32 %v8323, %v8324
      %v8326 = vsub.s32 4294967266, %v8321
      %v8327 = vadd.s32 %v8326, 127
      %v8328 = vshll.u32 %v8327, 23
      %v8329 = vor.u32 4788187, %v8328
      %v8330 = vand.u32 2147483647, %v8329
      %v8332 = vcvt.s32.f32 %v8325
      %v8333 = vmul.f32 %v8332, %v8330
      %v8334 = vxor.u32 %v8333, 2147483648
      %v8335 = vsel %vm8252, %v8334, %v8333
      %v8336 = vsub.s32 4, %v8312
      %v8337 = vsel %vm8252, %v8336, %v8312
      %v8338 = vsel %vm8251, %v8132, %v8335
      %v8339 = vsel %vm8251, 0, %v8337
      %v8340 = vcosq.f32.pop %v8338
      %v8341 = vsinq.f32.pop %v8338
      %vm8342 = vweird.f32 %v8132
      %v8343 = vand.u32 %v8339, 3
      %vm8344 = vcmp.lt.s32.totalorder %v8343, 2
      %vm8345 = vcmp.eq.s32.totalorder %v8343, 0
      %v8346 = vxor.u32 %v8341, 2147483648
      %v8347 = vsel %vm8345, %v8340, %v8346
      %vm8348 = vcmp.eq.s32.totalorder %v8343, 2
      %v8349 = vxor.u32 %v8340, 2147483648
      %v8350 = vsel %vm8348, %v8349, %v8341
      %v8351 = vsel %vm8344, %v8347, %v8350
      %v8352 = vsel %vm8342, nan, %v8351
      %v8353 = vand.u32 2147483647, %v8133
      %vm8354 = vcmp.le.f32.partialorder %v8353, 0.7853982
      %vm8355 = vcmp.lt.s32.totalorder %v8133, 0
      %v8356 = vand.u32 %v8133, 2139095040
      %v8357 = vshrl.u32 %v8356, 23
      %v8358 = vsub.s32 %v8357, 127
      %v8359 = vand.u32 2147483647, %v8133
      %v8360 = vand.u32 %v8359, 8388607
      %v8361 = vor.u32 %v8360, 8388608
      %v8362 = vsub.s32 0, %v8361
      %v8363 = vadd.s32 %v8358, 1
      %vm8364 = vcmp.gt.s32.totalorder %v8363, 0
      %v8365 = vsel %vm8364, %v8363, 0
      %v8366 = vshrl.u32 %v8365, 5
      %v8367 = vand.u32 %v8365, 31
      %v8368 = vsub.s32 32, %v8367
      %v8369 = vshrl.u32 683565275, %v8368
      %v8370 = vshll.u32 683565275, %v8367
      %v8371 = vshrl.u32 2475754826, %v8368
      %v8372 = vor.u32 %v8370, %v8371
      %v8373 = vshll.u32 2475754826, %v8367
      %v8374 = vshrl.u32 2131351028, %v8368
      %v8375 = vor.u32 %v8373, %v8374
      %v8376 = vshll.u32 2131351028, %v8367
      %v8377 = vshrl.u32 2102212464, %v8368
      %v8378 = vor.u32 %v8376, %v8377
      %v8379 = vshll.u32 2102212464, %v8367
      %v8380 = vshrl.u32 920167782, %v8368
      %v8381 = vor.u32 %v8379, %v8380
      %v8382 = vshll.u32 920167782, %v8367
      %v8383 = vshrl.u32 1326507024, %v8368
      %v8384 = vor.u32 %v8382, %v8383
      %vm8385 = vcmp.lt.s32.totalorder %v8366, 1
      %vm8386 = vcmp.lt.s32.totalorder %v8366, 2
      %vm8387 = vcmp.lt.s32.totalorder %v8366, 3
      %vm8388 = vcmp.lt.s32.totalorder %v8366, 4
      %v8389 = vsel %vm8385, %v8369, %v8372
      %v8390 = vsel %vm8388, %v8378, 2102212464
      %v8391 = vsel %vm8387, %v8375, %v8390
      %v8392 = vsel %vm8386, %v8389, %v8391
      %v8393 = vsel %vm8385, %v8372, %v8375
      %v8394 = vsel %vm8388, %v8381, 920167782
      %v8395 = vsel %vm8387, %v8378, %v8394
      %v8396 = vsel %vm8386, %v8393, %v8395
      %v8397 = vsel %vm8385, %v8375, %v8378
      %v8398 = vsel %vm8388, %v8384, 1326507024
      %v8399 = vsel %vm8387, %v8381, %v8398
      %v8400 = vsel %vm8386, %v8397, %v8399
      %v8401 = vshll.u32 %v8361, 8
      %v8402 = vmul.u32.u64.compose %v8401, %v8400
      %v8403 = vextract.low.u32 %v8402
      %v8404 = vextract.high.u32 %v8402
      %v8405 = vmul.u32.u64.compose %v8401, %v8396
      %v8406 = vextract.low.u32 %v8405
      %v8407 = vextract.high.u32 %v8405
      %v8408 = vmul.u32 %v8401, %v8392
      %v8409 = vadd.s32 %v8404, %v8406
      %vm8410 = vc.u32 %v8404, %v8406
      %v8411 = vadd.s32 %v8407, 1
      %v8412 = vsel %vm8410, %v8411, %v8407
      %v8413 = vadd.s32 %v8408, %v8412
      %v8414 = vadd.s32 %v8413, 536870912
      %v8415 = vshrl.u32 %v8414, 30
      %v8416 = vshll.u32 %v8415, 30
      %v8417 = vsub.s32 %v8413, %v8416
      %vm8418 = vcmp.lt.s32.totalorder %v8417, 0
      %v8419 = vsub.s32 0, %v8417
      %v8420 = vsel %vm8418, %v8419, %v8417
      %v8421 = vclz %v8420
      %v8422 = vsub.s32 %v8421, 2
      %vm8423 = vcmp.gt.s32.totalorder 0, %v8422
      %v8424 = vsel %vm8423, 0, %v8422
      %v8425 = vsub.s32 32, %v8424
      %v8426 = vshll.u32 %v8417, %v8424
      %v8427 = vshrl.u32 %v8409, %v8425
      %v8428 = vor.u32 %v8426, %v8427
      %v8429 = vsub.s32 4294967266, %v8424
      %v8430 = vadd.s32 %v8429, 127
      %v8431 = vshll.u32 %v8430, 23
      %v8432 = vor.u32 4788187, %v8431
      %v8433 = vand.u32 2147483647, %v8432
      %v8435 = vcvt.s32.f32 %v8428
      %v8436 = vmul.f32 %v8435, %v8433
      %v8437 = vxor.u32 %v8436, 2147483648
      %v8438 = vsel %vm8355, %v8437, %v8436
      %v8439 = vsub.s32 4, %v8415
      %v8440 = vsel %vm8355, %v8439, %v8415
      %v8441 = vsel %vm8354, %v8133, %v8438
      %v8442 = vsel %vm8354, 0, %v8440
      %v8443 = vcosq.f32.pop %v8441
      %v8444 = vsinq.f32.pop %v8441
      %vm8445 = vweird.f32 %v8133
      %v8446 = vand.u32 %v8442, 3
      %vm8447 = vcmp.lt.s32.totalorder %v8446, 2
      %vm8448 = vcmp.eq.s32.totalorder %v8446, 0
      %v8449 = vxor.u32 %v8444, 2147483648
      %v8450 = vsel %vm8448, %v8443, %v8449
      %vm8451 = vcmp.eq.s32.totalorder %v8446, 2
      %v8452 = vxor.u32 %v8443, 2147483648
      %v8453 = vsel %vm8451, %v8452, %v8444
      %v8454 = vsel %vm8447, %v8450, %v8453
      %v8455 = vsel %vm8445, nan, %v8454
      %v8456 = vand.u32 2147483647, %v8134
      %vm8457 = vcmp.le.f32.partialorder %v8456, 0.7853982
      %vm8458 = vcmp.lt.s32.totalorder %v8134, 0
      %v8459 = vand.u32 %v8134, 2139095040
      %v8460 = vshrl.u32 %v8459, 23
      %v8461 = vsub.s32 %v8460, 127
      %v8462 = vand.u32 2147483647, %v8134
      %v8463 = vand.u32 %v8462, 8388607
      %v8464 = vor.u32 %v8463, 8388608
      %v8465 = vsub.s32 0, %v8464
      %v8466 = vadd.s32 %v8461, 1
      %vm8467 = vcmp.gt.s32.totalorder %v8466, 0
      %v8468 = vsel %vm8467, %v8466, 0
      %v8469 = vshrl.u32 %v8468, 5
      %v8470 = vand.u32 %v8468, 31
      %v8471 = vsub.s32 32, %v8470
      %v8472 = vshrl.u32 683565275, %v8471
      %v8473 = vshll.u32 683565275, %v8470
      %v8474 = vshrl.u32 2475754826, %v8471
      %v8475 = vor.u32 %v8473, %v8474
      %v8476 = vshll.u32 2475754826, %v8470
      %v8477 = vshrl.u32 2131351028, %v8471
      %v8478 = vor.u32 %v8476, %v8477
      %v8479 = vshll.u32 2131351028, %v8470
      %v8480 = vshrl.u32 2102212464, %v8471
      %v8481 = vor.u32 %v8479, %v8480
      %v8482 = vshll.u32 2102212464, %v8470
      %v8483 = vshrl.u32 920167782, %v8471
      %v8484 = vor.u32 %v8482, %v8483
      %v8485 = vshll.u32 920167782, %v8470
      %v8486 = vshrl.u32 1326507024, %v8471
      %v8487 = vor.u32 %v8485, %v8486
      %vm8488 = vcmp.lt.s32.totalorder %v8469, 1
      %vm8489 = vcmp.lt.s32.totalorder %v8469, 2
      %vm8490 = vcmp.lt.s32.totalorder %v8469, 3
      %vm8491 = vcmp.lt.s32.totalorder %v8469, 4
      %v8492 = vsel %vm8488, %v8472, %v8475
      %v8493 = vsel %vm8491, %v8481, 2102212464
      %v8494 = vsel %vm8490, %v8478, %v8493
      %v8495 = vsel %vm8489, %v8492, %v8494
      %v8496 = vsel %vm8488, %v8475, %v8478
      %v8497 = vsel %vm8491, %v8484, 920167782
      %v8498 = vsel %vm8490, %v8481, %v8497
      %v8499 = vsel %vm8489, %v8496, %v8498
      %v8500 = vsel %vm8488, %v8478, %v8481
      %v8501 = vsel %vm8491, %v8487, 1326507024
      %v8502 = vsel %vm8490, %v8484, %v8501
      %v8503 = vsel %vm8489, %v8500, %v8502
      %v8504 = vshll.u32 %v8464, 8
      %v8505 = vmul.u32.u64.compose %v8504, %v8503
      %v8506 = vextract.low.u32 %v8505
      %v8507 = vextract.high.u32 %v8505
      %v8508 = vmul.u32.u64.compose %v8504, %v8499
      %v8509 = vextract.low.u32 %v8508
      %v8510 = vextract.high.u32 %v8508
      %v8511 = vmul.u32 %v8504, %v8495
      %v8512 = vadd.s32 %v8507, %v8509
      %vm8513 = vc.u32 %v8507, %v8509
      %v8514 = vadd.s32 %v8510, 1
      %v8515 = vsel %vm8513, %v8514, %v8510
      %v8516 = vadd.s32 %v8511, %v8515
      %v8517 = vadd.s32 %v8516, 536870912
      %v8518 = vshrl.u32 %v8517, 30
      %v8519 = vshll.u32 %v8518, 30
      %v8520 = vsub.s32 %v8516, %v8519
      %vm8521 = vcmp.lt.s32.totalorder %v8520, 0
      %v8522 = vsub.s32 0, %v8520
      %v8523 = vsel %vm8521, %v8522, %v8520
      %v8524 = vclz %v8523
      %v8525 = vsub.s32 %v8524, 2
      %vm8526 = vcmp.gt.s32.totalorder 0, %v8525
      %v8527 = vsel %vm8526, 0, %v8525
      %v8528 = vsub.s32 32, %v8527
      %v8529 = vshll.u32 %v8520, %v8527
      %v8530 = vshrl.u32 %v8512, %v8528
      %v8531 = vor.u32 %v8529, %v8530
      %v8532 = vsub.s32 4294967266, %v8527
      %v8533 = vadd.s32 %v8532, 127
      %v8534 = vshll.u32 %v8533, 23
      %v8535 = vor.u32 4788187, %v8534
      %v8536 = vand.u32 2147483647, %v8535
      %v8538 = vcvt.s32.f32 %v8531
      %v8539 = vmul.f32 %v8538, %v8536
      %v8540 = vxor.u32 %v8539, 2147483648
      %v8541 = vsel %vm8458, %v8540, %v8539
      %v8542 = vsub.s32 4, %v8518
      %v8543 = vsel %vm8458, %v8542, %v8518
      %v8544 = vsel %vm8457, %v8134, %v8541
      %v8545 = vsel %vm8457, 0, %v8543
      %v8546 = vcosq.f32.pop %v8544
      %v8547 = vsinq.f32.pop %v8544
      %vm8548 = vweird.f32 %v8134
      %v8549 = vand.u32 %v8545, 3
      %vm8550 = vcmp.lt.s32.totalorder %v8549, 2
      %vm8551 = vcmp.eq.s32.totalorder %v8549, 0
      %v8552 = vxor.u32 %v8547, 2147483648
      %v8553 = vsel %vm8551, %v8546, %v8552
      %vm8554 = vcmp.eq.s32.totalorder %v8549, 2
      %v8555 = vxor.u32 %v8546, 2147483648
      %v8556 = vsel %vm8554, %v8555, %v8547
      %v8557 = vsel %vm8550, %v8553, %v8556
      %v8558 = vsel %vm8548, nan, %v8557
      %v8559 = vand.u32 2147483647, %v8135
      %vm8560 = vcmp.le.f32.partialorder %v8559, 0.7853982
      %vm8561 = vcmp.lt.s32.totalorder %v8135, 0
      %v8562 = vand.u32 %v8135, 2139095040
      %v8563 = vshrl.u32 %v8562, 23
      %v8564 = vsub.s32 %v8563, 127
      %v8565 = vand.u32 2147483647, %v8135
      %v8566 = vand.u32 %v8565, 8388607
      %v8567 = vor.u32 %v8566, 8388608
      %v8568 = vsub.s32 0, %v8567
      %v8569 = vadd.s32 %v8564, 1
      %vm8570 = vcmp.gt.s32.totalorder %v8569, 0
      %v8571 = vsel %vm8570, %v8569, 0
      %v8572 = vshrl.u32 %v8571, 5
      %v8573 = vand.u32 %v8571, 31
      %v8574 = vsub.s32 32, %v8573
      %v8575 = vshrl.u32 683565275, %v8574
      %v8576 = vshll.u32 683565275, %v8573
      %v8577 = vshrl.u32 2475754826, %v8574
      %v8578 = vor.u32 %v8576, %v8577
      %v8579 = vshll.u32 2475754826, %v8573
      %v8580 = vshrl.u32 2131351028, %v8574
      %v8581 = vor.u32 %v8579, %v8580
      %v8582 = vshll.u32 2131351028, %v8573
      %v8583 = vshrl.u32 2102212464, %v8574
      %v8584 = vor.u32 %v8582, %v8583
      %v8585 = vshll.u32 2102212464, %v8573
      %v8586 = vshrl.u32 920167782, %v8574
      %v8587 = vor.u32 %v8585, %v8586
      %v8588 = vshll.u32 920167782, %v8573
      %v8589 = vshrl.u32 1326507024, %v8574
      %v8590 = vor.u32 %v8588, %v8589
      %vm8591 = vcmp.lt.s32.totalorder %v8572, 1
      %vm8592 = vcmp.lt.s32.totalorder %v8572, 2
      %vm8593 = vcmp.lt.s32.totalorder %v8572, 3
      %vm8594 = vcmp.lt.s32.totalorder %v8572, 4
      %v8595 = vsel %vm8591, %v8575, %v8578
      %v8596 = vsel %vm8594, %v8584, 2102212464
      %v8597 = vsel %vm8593, %v8581, %v8596
      %v8598 = vsel %vm8592, %v8595, %v8597
      %v8599 = vsel %vm8591, %v8578, %v8581
      %v8600 = vsel %vm8594, %v8587, 920167782
      %v8601 = vsel %vm8593, %v8584, %v8600
      %v8602 = vsel %vm8592, %v8599, %v8601
      %v8603 = vsel %vm8591, %v8581, %v8584
      %v8604 = vsel %vm8594, %v8590, 1326507024
      %v8605 = vsel %vm8593, %v8587, %v8604
      %v8606 = vsel %vm8592, %v8603, %v8605
      %v8607 = vshll.u32 %v8567, 8
      %v8608 = vmul.u32.u64.compose %v8607, %v8606
      %v8609 = vextract.low.u32 %v8608
      %v8610 = vextract.high.u32 %v8608
      %v8611 = vmul.u32.u64.compose %v8607, %v8602
      %v8612 = vextract.low.u32 %v8611
      %v8613 = vextract.high.u32 %v8611
      %v8614 = vmul.u32 %v8607, %v8598
      %v8615 = vadd.s32 %v8610, %v8612
      %vm8616 = vc.u32 %v8610, %v8612
      %v8617 = vadd.s32 %v8613, 1
      %v8618 = vsel %vm8616, %v8617, %v8613
      %v8619 = vadd.s32 %v8614, %v8618
      %v8620 = vadd.s32 %v8619, 536870912
      %v8621 = vshrl.u32 %v8620, 30
      %v8622 = vshll.u32 %v8621, 30
      %v8623 = vsub.s32 %v8619, %v8622
      %vm8624 = vcmp.lt.s32.totalorder %v8623, 0
      %v8625 = vsub.s32 0, %v8623
      %v8626 = vsel %vm8624, %v8625, %v8623
      %v8627 = vclz %v8626
      %v8628 = vsub.s32 %v8627, 2
      %vm8629 = vcmp.gt.s32.totalorder 0, %v8628
      %v8630 = vsel %vm8629, 0, %v8628
      %v8631 = vsub.s32 32, %v8630
      %v8632 = vshll.u32 %v8623, %v8630
      %v8633 = vshrl.u32 %v8615, %v8631
      %v8634 = vor.u32 %v8632, %v8633
      %v8635 = vsub.s32 4294967266, %v8630
      %v8636 = vadd.s32 %v8635, 127
      %v8637 = vshll.u32 %v8636, 23
      %v8638 = vor.u32 4788187, %v8637
      %v8639 = vand.u32 2147483647, %v8638
      %v8641 = vcvt.s32.f32 %v8634
      %v8642 = vmul.f32 %v8641, %v8639
      %v8643 = vxor.u32 %v8642, 2147483648
      %v8644 = vsel %vm8561, %v8643, %v8642
      %v8645 = vsub.s32 4, %v8621
      %v8646 = vsel %vm8561, %v8645, %v8621
      %v8647 = vsel %vm8560, %v8135, %v8644
      %v8648 = vsel %vm8560, 0, %v8646
      %v8649 = vcosq.f32.pop %v8647
      %v8650 = vsinq.f32.pop %v8647
      %vm8651 = vweird.f32 %v8135
      %v8652 = vand.u32 %v8648, 3
      %vm8653 = vcmp.lt.s32.totalorder %v8652, 2
      %vm8654 = vcmp.eq.s32.totalorder %v8652, 0
      %v8655 = vxor.u32 %v8650, 2147483648
      %v8656 = vsel %vm8654, %v8649, %v8655
      %vm8657 = vcmp.eq.s32.totalorder %v8652, 2
      %v8658 = vxor.u32 %v8649, 2147483648
      %v8659 = vsel %vm8657, %v8658, %v8650
      %v8660 = vsel %vm8653, %v8656, %v8659
      %v8661 = vsel %vm8651, nan, %v8660
      %v8662 = vand.u32 2147483647, %v8136
      %vm8663 = vcmp.le.f32.partialorder %v8662, 0.7853982
      %vm8664 = vcmp.lt.s32.totalorder %v8136, 0
      %v8665 = vand.u32 %v8136, 2139095040
      %v8666 = vshrl.u32 %v8665, 23
      %v8667 = vsub.s32 %v8666, 127
      %v8668 = vand.u32 2147483647, %v8136
      %v8669 = vand.u32 %v8668, 8388607
      %v8670 = vor.u32 %v8669, 8388608
      %v8671 = vsub.s32 0, %v8670
      %v8672 = vadd.s32 %v8667, 1
      %vm8673 = vcmp.gt.s32.totalorder %v8672, 0
      %v8674 = vsel %vm8673, %v8672, 0
      %v8675 = vshrl.u32 %v8674, 5
      %v8676 = vand.u32 %v8674, 31
      %v8677 = vsub.s32 32, %v8676
      %v8678 = vshrl.u32 683565275, %v8677
      %v8679 = vshll.u32 683565275, %v8676
      %v8680 = vshrl.u32 2475754826, %v8677
      %v8681 = vor.u32 %v8679, %v8680
      %v8682 = vshll.u32 2475754826, %v8676
      %v8683 = vshrl.u32 2131351028, %v8677
      %v8684 = vor.u32 %v8682, %v8683
      %v8685 = vshll.u32 2131351028, %v8676
      %v8686 = vshrl.u32 2102212464, %v8677
      %v8687 = vor.u32 %v8685, %v8686
      %v8688 = vshll.u32 2102212464, %v8676
      %v8689 = vshrl.u32 920167782, %v8677
      %v8690 = vor.u32 %v8688, %v8689
      %v8691 = vshll.u32 920167782, %v8676
      %v8692 = vshrl.u32 1326507024, %v8677
      %v8693 = vor.u32 %v8691, %v8692
      %vm8694 = vcmp.lt.s32.totalorder %v8675, 1
      %vm8695 = vcmp.lt.s32.totalorder %v8675, 2
      %vm8696 = vcmp.lt.s32.totalorder %v8675, 3
      %vm8697 = vcmp.lt.s32.totalorder %v8675, 4
      %v8698 = vsel %vm8694, %v8678, %v8681
      %v8699 = vsel %vm8697, %v8687, 2102212464
      %v8700 = vsel %vm8696, %v8684, %v8699
      %v8701 = vsel %vm8695, %v8698, %v8700
      %v8702 = vsel %vm8694, %v8681, %v8684
      %v8703 = vsel %vm8697, %v8690, 920167782
      %v8704 = vsel %vm8696, %v8687, %v8703
      %v8705 = vsel %vm8695, %v8702, %v8704
      %v8706 = vsel %vm8694, %v8684, %v8687
      %v8707 = vsel %vm8697, %v8693, 1326507024
      %v8708 = vsel %vm8696, %v8690, %v8707
      %v8709 = vsel %vm8695, %v8706, %v8708
      %v8710 = vshll.u32 %v8670, 8
      %v8711 = vmul.u32.u64.compose %v8710, %v8709
      %v8712 = vextract.low.u32 %v8711
      %v8713 = vextract.high.u32 %v8711
      %v8714 = vmul.u32.u64.compose %v8710, %v8705
      %v8715 = vextract.low.u32 %v8714
      %v8716 = vextract.high.u32 %v8714
      %v8717 = vmul.u32 %v8710, %v8701
      %v8718 = vadd.s32 %v8713, %v8715
      %vm8719 = vc.u32 %v8713, %v8715
      %v8720 = vadd.s32 %v8716, 1
      %v8721 = vsel %vm8719, %v8720, %v8716
      %v8722 = vadd.s32 %v8717, %v8721
      %v8723 = vadd.s32 %v8722, 536870912
      %v8724 = vshrl.u32 %v8723, 30
      %v8725 = vshll.u32 %v8724, 30
      %v8726 = vsub.s32 %v8722, %v8725
      %vm8727 = vcmp.lt.s32.totalorder %v8726, 0
      %v8728 = vsub.s32 0, %v8726
      %v8729 = vsel %vm8727, %v8728, %v8726
      %v8730 = vclz %v8729
      %v8731 = vsub.s32 %v8730, 2
      %vm8732 = vcmp.gt.s32.totalorder 0, %v8731
      %v8733 = vsel %vm8732, 0, %v8731
      %v8734 = vsub.s32 32, %v8733
      %v8735 = vshll.u32 %v8726, %v8733
      %v8736 = vshrl.u32 %v8718, %v8734
      %v8737 = vor.u32 %v8735, %v8736
      %v8738 = vsub.s32 4294967266, %v8733
      %v8739 = vadd.s32 %v8738, 127
      %v8740 = vshll.u32 %v8739, 23
      %v8741 = vor.u32 4788187, %v8740
      %v8742 = vand.u32 2147483647, %v8741
      %v8744 = vcvt.s32.f32 %v8737
      %v8745 = vmul.f32 %v8744, %v8742
      %v8746 = vxor.u32 %v8745, 2147483648
      %v8747 = vsel %vm8664, %v8746, %v8745
      %v8748 = vsub.s32 4, %v8724
      %v8749 = vsel %vm8664, %v8748, %v8724
      %v8750 = vsel %vm8663, %v8136, %v8747
      %v8751 = vsel %vm8663, 0, %v8749
      %v8752 = vcosq.f32.pop %v8750
      %v8753 = vsinq.f32.pop %v8750
      %vm8754 = vweird.f32 %v8136
      %v8755 = vand.u32 %v8751, 3
      %vm8756 = vcmp.lt.s32.totalorder %v8755, 2
      %vm8757 = vcmp.eq.s32.totalorder %v8755, 0
      %v8758 = vxor.u32 %v8753, 2147483648
      %v8759 = vsel %vm8757, %v8752, %v8758
      %vm8760 = vcmp.eq.s32.totalorder %v8755, 2
      %v8761 = vxor.u32 %v8752, 2147483648
      %v8762 = vsel %vm8760, %v8761, %v8753
      %v8763 = vsel %vm8756, %v8759, %v8762
      %v8764 = vsel %vm8754, nan, %v8763
      %v8765 = vand.u32 2147483647, %v8137
      %vm8766 = vcmp.le.f32.partialorder %v8765, 0.7853982
      %vm8767 = vcmp.lt.s32.totalorder %v8137, 0
      %v8768 = vand.u32 %v8137, 2139095040
      %v8769 = vshrl.u32 %v8768, 23
      %v8770 = vsub.s32 %v8769, 127
      %v8771 = vand.u32 2147483647, %v8137
      %v8772 = vand.u32 %v8771, 8388607
      %v8773 = vor.u32 %v8772, 8388608
      %v8774 = vsub.s32 0, %v8773
      %v8775 = vadd.s32 %v8770, 1
      %vm8776 = vcmp.gt.s32.totalorder %v8775, 0
      %v8777 = vsel %vm8776, %v8775, 0
      %v8778 = vshrl.u32 %v8777, 5
      %v8779 = vand.u32 %v8777, 31
      %v8780 = vsub.s32 32, %v8779
      %v8781 = vshrl.u32 683565275, %v8780
      %v8782 = vshll.u32 683565275, %v8779
      %v8783 = vshrl.u32 2475754826, %v8780
      %v8784 = vor.u32 %v8782, %v8783
      %v8785 = vshll.u32 2475754826, %v8779
      %v8786 = vshrl.u32 2131351028, %v8780
      %v8787 = vor.u32 %v8785, %v8786
      %v8788 = vshll.u32 2131351028, %v8779
      %v8789 = vshrl.u32 2102212464, %v8780
      %v8790 = vor.u32 %v8788, %v8789
      %v8791 = vshll.u32 2102212464, %v8779
      %v8792 = vshrl.u32 920167782, %v8780
      %v8793 = vor.u32 %v8791, %v8792
      %v8794 = vshll.u32 920167782, %v8779
      %v8795 = vshrl.u32 1326507024, %v8780
      %v8796 = vor.u32 %v8794, %v8795
      %vm8797 = vcmp.lt.s32.totalorder %v8778, 1
      %vm8798 = vcmp.lt.s32.totalorder %v8778, 2
      %vm8799 = vcmp.lt.s32.totalorder %v8778, 3
      %vm8800 = vcmp.lt.s32.totalorder %v8778, 4
      %v8801 = vsel %vm8797, %v8781, %v8784
      %v8802 = vsel %vm8800, %v8790, 2102212464
      %v8803 = vsel %vm8799, %v8787, %v8802
      %v8804 = vsel %vm8798, %v8801, %v8803
      %v8805 = vsel %vm8797, %v8784, %v8787
      %v8806 = vsel %vm8800, %v8793, 920167782
      %v8807 = vsel %vm8799, %v8790, %v8806
      %v8808 = vsel %vm8798, %v8805, %v8807
      %v8809 = vsel %vm8797, %v8787, %v8790
      %v8810 = vsel %vm8800, %v8796, 1326507024
      %v8811 = vsel %vm8799, %v8793, %v8810
      %v8812 = vsel %vm8798, %v8809, %v8811
      %v8813 = vshll.u32 %v8773, 8
      %v8814 = vmul.u32.u64.compose %v8813, %v8812
      %v8815 = vextract.low.u32 %v8814
      %v8816 = vextract.high.u32 %v8814
      %v8817 = vmul.u32.u64.compose %v8813, %v8808
      %v8818 = vextract.low.u32 %v8817
      %v8819 = vextract.high.u32 %v8817
      %v8820 = vmul.u32 %v8813, %v8804
      %v8821 = vadd.s32 %v8816, %v8818
      %vm8822 = vc.u32 %v8816, %v8818
      %v8823 = vadd.s32 %v8819, 1
      %v8824 = vsel %vm8822, %v8823, %v8819
      %v8825 = vadd.s32 %v8820, %v8824
      %v8826 = vadd.s32 %v8825, 536870912
      %v8827 = vshrl.u32 %v8826, 30
      %v8828 = vshll.u32 %v8827, 30
      %v8829 = vsub.s32 %v8825, %v8828
      %vm8830 = vcmp.lt.s32.totalorder %v8829, 0
      %v8831 = vsub.s32 0, %v8829
      %v8832 = vsel %vm8830, %v8831, %v8829
      %v8833 = vclz %v8832
      %v8834 = vsub.s32 %v8833, 2
      %vm8835 = vcmp.gt.s32.totalorder 0, %v8834
      %v8836 = vsel %vm8835, 0, %v8834
      %v8837 = vsub.s32 32, %v8836
      %v8838 = vshll.u32 %v8829, %v8836
      %v8839 = vshrl.u32 %v8821, %v8837
      %v8840 = vor.u32 %v8838, %v8839
      %v8841 = vsub.s32 4294967266, %v8836
      %v8842 = vadd.s32 %v8841, 127
      %v8843 = vshll.u32 %v8842, 23
      %v8844 = vor.u32 4788187, %v8843
      %v8845 = vand.u32 2147483647, %v8844
      %v8847 = vcvt.s32.f32 %v8840
      %v8848 = vmul.f32 %v8847, %v8845
      %v8849 = vxor.u32 %v8848, 2147483648
      %v8850 = vsel %vm8767, %v8849, %v8848
      %v8851 = vsub.s32 4, %v8827
      %v8852 = vsel %vm8767, %v8851, %v8827
      %v8853 = vsel %vm8766, %v8137, %v8850
      %v8854 = vsel %vm8766, 0, %v8852
      %v8855 = vcosq.f32.pop %v8853
      %v8856 = vsinq.f32.pop %v8853
      %vm8857 = vweird.f32 %v8137
      %v8858 = vand.u32 %v8854, 3
      %vm8859 = vcmp.lt.s32.totalorder %v8858, 2
      %vm8860 = vcmp.eq.s32.totalorder %v8858, 0
      %v8861 = vxor.u32 %v8856, 2147483648
      %v8862 = vsel %vm8860, %v8855, %v8861
      %vm8863 = vcmp.eq.s32.totalorder %v8858, 2
      %v8864 = vxor.u32 %v8855, 2147483648
      %v8865 = vsel %vm8863, %v8864, %v8856
      %v8866 = vsel %vm8859, %v8862, %v8865
      %v8867 = vsel %vm8857, nan, %v8866
      %v8868 = vand.u32 2147483647, %v8138
      %vm8869 = vcmp.le.f32.partialorder %v8868, 0.7853982
      %vm8870 = vcmp.lt.s32.totalorder %v8138, 0
      %v8871 = vand.u32 %v8138, 2139095040
      %v8872 = vshrl.u32 %v8871, 23
      %v8873 = vsub.s32 %v8872, 127
      %v8874 = vand.u32 2147483647, %v8138
      %v8875 = vand.u32 %v8874, 8388607
      %v8876 = vor.u32 %v8875, 8388608
      %v8877 = vsub.s32 0, %v8876
      %v8878 = vadd.s32 %v8873, 1
      %vm8879 = vcmp.gt.s32.totalorder %v8878, 0
      %v8880 = vsel %vm8879, %v8878, 0
      %v8881 = vshrl.u32 %v8880, 5
      %v8882 = vand.u32 %v8880, 31
      %v8883 = vsub.s32 32, %v8882
      %v8884 = vshrl.u32 683565275, %v8883
      %v8885 = vshll.u32 683565275, %v8882
      %v8886 = vshrl.u32 2475754826, %v8883
      %v8887 = vor.u32 %v8885, %v8886
      %v8888 = vshll.u32 2475754826, %v8882
      %v8889 = vshrl.u32 2131351028, %v8883
      %v8890 = vor.u32 %v8888, %v8889
      %v8891 = vshll.u32 2131351028, %v8882
      %v8892 = vshrl.u32 2102212464, %v8883
      %v8893 = vor.u32 %v8891, %v8892
      %v8894 = vshll.u32 2102212464, %v8882
      %v8895 = vshrl.u32 920167782, %v8883
      %v8896 = vor.u32 %v8894, %v8895
      %v8897 = vshll.u32 920167782, %v8882
      %v8898 = vshrl.u32 1326507024, %v8883
      %v8899 = vor.u32 %v8897, %v8898
      %vm8900 = vcmp.lt.s32.totalorder %v8881, 1
      %vm8901 = vcmp.lt.s32.totalorder %v8881, 2
      %vm8902 = vcmp.lt.s32.totalorder %v8881, 3
      %vm8903 = vcmp.lt.s32.totalorder %v8881, 4
      %v8904 = vsel %vm8900, %v8884, %v8887
      %v8905 = vsel %vm8903, %v8893, 2102212464
      %v8906 = vsel %vm8902, %v8890, %v8905
      %v8907 = vsel %vm8901, %v8904, %v8906
      %v8908 = vsel %vm8900, %v8887, %v8890
      %v8909 = vsel %vm8903, %v8896, 920167782
      %v8910 = vsel %vm8902, %v8893, %v8909
      %v8911 = vsel %vm8901, %v8908, %v8910
      %v8912 = vsel %vm8900, %v8890, %v8893
      %v8913 = vsel %vm8903, %v8899, 1326507024
      %v8914 = vsel %vm8902, %v8896, %v8913
      %v8915 = vsel %vm8901, %v8912, %v8914
      %v8916 = vshll.u32 %v8876, 8
      %v8917 = vmul.u32.u64.compose %v8916, %v8915
      %v8918 = vextract.low.u32 %v8917
      %v8919 = vextract.high.u32 %v8917
      %v8920 = vmul.u32.u64.compose %v8916, %v8911
      %v8921 = vextract.low.u32 %v8920
      %v8922 = vextract.high.u32 %v8920
      %v8923 = vmul.u32 %v8916, %v8907
      %v8924 = vadd.s32 %v8919, %v8921
      %vm8925 = vc.u32 %v8919, %v8921
      %v8926 = vadd.s32 %v8922, 1
      %v8927 = vsel %vm8925, %v8926, %v8922
      %v8928 = vadd.s32 %v8923, %v8927
      %v8929 = vadd.s32 %v8928, 536870912
      %v8930 = vshrl.u32 %v8929, 30
      %v8931 = vshll.u32 %v8930, 30
      %v8932 = vsub.s32 %v8928, %v8931
      %vm8933 = vcmp.lt.s32.totalorder %v8932, 0
      %v8934 = vsub.s32 0, %v8932
      %v8935 = vsel %vm8933, %v8934, %v8932
      %v8936 = vclz %v8935
      %v8937 = vsub.s32 %v8936, 2
      %vm8938 = vcmp.gt.s32.totalorder 0, %v8937
      %v8939 = vsel %vm8938, 0, %v8937
      %v8940 = vsub.s32 32, %v8939
      %v8941 = vshll.u32 %v8932, %v8939
      %v8942 = vshrl.u32 %v8924, %v8940
      %v8943 = vor.u32 %v8941, %v8942
      %v8944 = vsub.s32 4294967266, %v8939
      %v8945 = vadd.s32 %v8944, 127
      %v8946 = vshll.u32 %v8945, 23
      %v8947 = vor.u32 4788187, %v8946
      %v8948 = vand.u32 2147483647, %v8947
      %v8950 = vcvt.s32.f32 %v8943
      %v8951 = vmul.f32 %v8950, %v8948
      %v8952 = vxor.u32 %v8951, 2147483648
      %v8953 = vsel %vm8870, %v8952, %v8951
      %v8954 = vsub.s32 4, %v8930
      %v8955 = vsel %vm8870, %v8954, %v8930
      %v8956 = vsel %vm8869, %v8138, %v8953
      %v8957 = vsel %vm8869, 0, %v8955
      %v8958 = vcosq.f32.pop %v8956
      %v8959 = vsinq.f32.pop %v8956
      %vm8960 = vweird.f32 %v8138
      %v8961 = vand.u32 %v8957, 3
      %vm8962 = vcmp.lt.s32.totalorder %v8961, 2
      %vm8963 = vcmp.eq.s32.totalorder %v8961, 0
      %v8964 = vxor.u32 %v8959, 2147483648
      %v8965 = vsel %vm8963, %v8958, %v8964
      %vm8966 = vcmp.eq.s32.totalorder %v8961, 2
      %v8967 = vxor.u32 %v8958, 2147483648
      %v8968 = vsel %vm8966, %v8967, %v8959
      %v8969 = vsel %vm8962, %v8965, %v8968
      %v8970 = vsel %vm8960, nan, %v8969
      %v8971 = vand.u32 2147483647, %v8139
      %vm8972 = vcmp.le.f32.partialorder %v8971, 0.7853982
      %vm8973 = vcmp.lt.s32.totalorder %v8139, 0
      %v8974 = vand.u32 %v8139, 2139095040
      %v8975 = vshrl.u32 %v8974, 23
      %v8976 = vsub.s32 %v8975, 127
      %v8977 = vand.u32 2147483647, %v8139
      %v8978 = vand.u32 %v8977, 8388607
      %v8979 = vor.u32 %v8978, 8388608
      %v8980 = vsub.s32 0, %v8979
      %v8981 = vadd.s32 %v8976, 1
      %vm8982 = vcmp.gt.s32.totalorder %v8981, 0
      %v8983 = vsel %vm8982, %v8981, 0
      %v8984 = vshrl.u32 %v8983, 5
      %v8985 = vand.u32 %v8983, 31
      %v8986 = vsub.s32 32, %v8985
      %v8987 = vshrl.u32 683565275, %v8986
      %v8988 = vshll.u32 683565275, %v8985
      %v8989 = vshrl.u32 2475754826, %v8986
      %v8990 = vor.u32 %v8988, %v8989
      %v8991 = vshll.u32 2475754826, %v8985
      %v8992 = vshrl.u32 2131351028, %v8986
      %v8993 = vor.u32 %v8991, %v8992
      %v8994 = vshll.u32 2131351028, %v8985
      %v8995 = vshrl.u32 2102212464, %v8986
      %v8996 = vor.u32 %v8994, %v8995
      %v8997 = vshll.u32 2102212464, %v8985
      %v8998 = vshrl.u32 920167782, %v8986
      %v8999 = vor.u32 %v8997, %v8998
      %v9000 = vshll.u32 920167782, %v8985
      %v9001 = vshrl.u32 1326507024, %v8986
      %v9002 = vor.u32 %v9000, %v9001
      %vm9003 = vcmp.lt.s32.totalorder %v8984, 1
      %vm9004 = vcmp.lt.s32.totalorder %v8984, 2
      %vm9005 = vcmp.lt.s32.totalorder %v8984, 3
      %vm9006 = vcmp.lt.s32.totalorder %v8984, 4
      %v9007 = vsel %vm9003, %v8987, %v8990
      %v9008 = vsel %vm9006, %v8996, 2102212464
      %v9009 = vsel %vm9005, %v8993, %v9008
      %v9010 = vsel %vm9004, %v9007, %v9009
      %v9011 = vsel %vm9003, %v8990, %v8993
      %v9012 = vsel %vm9006, %v8999, 920167782
      %v9013 = vsel %vm9005, %v8996, %v9012
      %v9014 = vsel %vm9004, %v9011, %v9013
      %v9015 = vsel %vm9003, %v8993, %v8996
      %v9016 = vsel %vm9006, %v9002, 1326507024
      %v9017 = vsel %vm9005, %v8999, %v9016
      %v9018 = vsel %vm9004, %v9015, %v9017
      %v9019 = vshll.u32 %v8979, 8
      %v9020 = vmul.u32.u64.compose %v9019, %v9018
      %v9021 = vextract.low.u32 %v9020
      %v9022 = vextract.high.u32 %v9020
      %v9023 = vmul.u32.u64.compose %v9019, %v9014
      %v9024 = vextract.low.u32 %v9023
      %v9025 = vextract.high.u32 %v9023
      %v9026 = vmul.u32 %v9019, %v9010
      %v9027 = vadd.s32 %v9022, %v9024
      %vm9028 = vc.u32 %v9022, %v9024
      %v9029 = vadd.s32 %v9025, 1
      %v9030 = vsel %vm9028, %v9029, %v9025
      %v9031 = vadd.s32 %v9026, %v9030
      %v9032 = vadd.s32 %v9031, 536870912
      %v9033 = vshrl.u32 %v9032, 30
      %v9034 = vshll.u32 %v9033, 30
      %v9035 = vsub.s32 %v9031, %v9034
      %vm9036 = vcmp.lt.s32.totalorder %v9035, 0
      %v9037 = vsub.s32 0, %v9035
      %v9038 = vsel %vm9036, %v9037, %v9035
      %v9039 = vclz %v9038
      %v9040 = vsub.s32 %v9039, 2
      %vm9041 = vcmp.gt.s32.totalorder 0, %v9040
      %v9042 = vsel %vm9041, 0, %v9040
      %v9043 = vsub.s32 32, %v9042
      %v9044 = vshll.u32 %v9035, %v9042
      %v9045 = vshrl.u32 %v9027, %v9043
      %v9046 = vor.u32 %v9044, %v9045
      %v9047 = vsub.s32 4294967266, %v9042
      %v9048 = vadd.s32 %v9047, 127
      %v9049 = vshll.u32 %v9048, 23
      %v9050 = vor.u32 4788187, %v9049
      %v9051 = vand.u32 2147483647, %v9050
      %v9053 = vcvt.s32.f32 %v9046
      %v9054 = vmul.f32 %v9053, %v9051
      %v9055 = vxor.u32 %v9054, 2147483648
      %v9056 = vsel %vm8973, %v9055, %v9054
      %v9057 = vsub.s32 4, %v9033
      %v9058 = vsel %vm8973, %v9057, %v9033
      %v9059 = vsel %vm8972, %v8139, %v9056
      %v9060 = vsel %vm8972, 0, %v9058
      %v9061 = vcosq.f32.pop %v9059
      %v9062 = vsinq.f32.pop %v9059
      %vm9063 = vweird.f32 %v8139
      %v9064 = vand.u32 %v9060, 3
      %vm9065 = vcmp.lt.s32.totalorder %v9064, 2
      %vm9066 = vcmp.eq.s32.totalorder %v9064, 0
      %v9067 = vxor.u32 %v9062, 2147483648
      %v9068 = vsel %vm9066, %v9061, %v9067
      %vm9069 = vcmp.eq.s32.totalorder %v9064, 2
      %v9070 = vxor.u32 %v9061, 2147483648
      %v9071 = vsel %vm9069, %v9070, %v9062
      %v9072 = vsel %vm9065, %v9068, %v9071
      %v9073 = vsel %vm9063, nan, %v9072
      %v9074 = vand.u32 2147483647, %v8140
      %vm9075 = vcmp.le.f32.partialorder %v9074, 0.7853982
      %vm9076 = vcmp.lt.s32.totalorder %v8140, 0
      %v9077 = vand.u32 %v8140, 2139095040
      %v9078 = vshrl.u32 %v9077, 23
      %v9079 = vsub.s32 %v9078, 127
      %v9080 = vand.u32 2147483647, %v8140
      %v9081 = vand.u32 %v9080, 8388607
      %v9082 = vor.u32 %v9081, 8388608
      %v9083 = vsub.s32 0, %v9082
      %v9084 = vadd.s32 %v9079, 1
      %vm9085 = vcmp.gt.s32.totalorder %v9084, 0
      %v9086 = vsel %vm9085, %v9084, 0
      %v9087 = vshrl.u32 %v9086, 5
      %v9088 = vand.u32 %v9086, 31
      %v9089 = vsub.s32 32, %v9088
      %v9090 = vshrl.u32 683565275, %v9089
      %v9091 = vshll.u32 683565275, %v9088
      %v9092 = vshrl.u32 2475754826, %v9089
      %v9093 = vor.u32 %v9091, %v9092
      %v9094 = vshll.u32 2475754826, %v9088
      %v9095 = vshrl.u32 2131351028, %v9089
      %v9096 = vor.u32 %v9094, %v9095
      %v9097 = vshll.u32 2131351028, %v9088
      %v9098 = vshrl.u32 2102212464, %v9089
      %v9099 = vor.u32 %v9097, %v9098
      %v9100 = vshll.u32 2102212464, %v9088
      %v9101 = vshrl.u32 920167782, %v9089
      %v9102 = vor.u32 %v9100, %v9101
      %v9103 = vshll.u32 920167782, %v9088
      %v9104 = vshrl.u32 1326507024, %v9089
      %v9105 = vor.u32 %v9103, %v9104
      %vm9106 = vcmp.lt.s32.totalorder %v9087, 1
      %vm9107 = vcmp.lt.s32.totalorder %v9087, 2
      %vm9108 = vcmp.lt.s32.totalorder %v9087, 3
      %vm9109 = vcmp.lt.s32.totalorder %v9087, 4
      %v9110 = vsel %vm9106, %v9090, %v9093
      %v9111 = vsel %vm9109, %v9099, 2102212464
      %v9112 = vsel %vm9108, %v9096, %v9111
      %v9113 = vsel %vm9107, %v9110, %v9112
      %v9114 = vsel %vm9106, %v9093, %v9096
      %v9115 = vsel %vm9109, %v9102, 920167782
      %v9116 = vsel %vm9108, %v9099, %v9115
      %v9117 = vsel %vm9107, %v9114, %v9116
      %v9118 = vsel %vm9106, %v9096, %v9099
      %v9119 = vsel %vm9109, %v9105, 1326507024
      %v9120 = vsel %vm9108, %v9102, %v9119
      %v9121 = vsel %vm9107, %v9118, %v9120
      %v9122 = vshll.u32 %v9082, 8
      %v9123 = vmul.u32.u64.compose %v9122, %v9121
      %v9124 = vextract.low.u32 %v9123
      %v9125 = vextract.high.u32 %v9123
      %v9126 = vmul.u32.u64.compose %v9122, %v9117
      %v9127 = vextract.low.u32 %v9126
      %v9128 = vextract.high.u32 %v9126
      %v9129 = vmul.u32 %v9122, %v9113
      %v9130 = vadd.s32 %v9125, %v9127
      %vm9131 = vc.u32 %v9125, %v9127
      %v9132 = vadd.s32 %v9128, 1
      %v9133 = vsel %vm9131, %v9132, %v9128
      %v9134 = vadd.s32 %v9129, %v9133
      %v9135 = vadd.s32 %v9134, 536870912
      %v9136 = vshrl.u32 %v9135, 30
      %v9137 = vshll.u32 %v9136, 30
      %v9138 = vsub.s32 %v9134, %v9137
      %vm9139 = vcmp.lt.s32.totalorder %v9138, 0
      %v9140 = vsub.s32 0, %v9138
      %v9141 = vsel %vm9139, %v9140, %v9138
      %v9142 = vclz %v9141
      %v9143 = vsub.s32 %v9142, 2
      %vm9144 = vcmp.gt.s32.totalorder 0, %v9143
      %v9145 = vsel %vm9144, 0, %v9143
      %v9146 = vsub.s32 32, %v9145
      %v9147 = vshll.u32 %v9138, %v9145
      %v9148 = vshrl.u32 %v9130, %v9146
      %v9149 = vor.u32 %v9147, %v9148
      %v9150 = vsub.s32 4294967266, %v9145
      %v9151 = vadd.s32 %v9150, 127
      %v9152 = vshll.u32 %v9151, 23
      %v9153 = vor.u32 4788187, %v9152
      %v9154 = vand.u32 2147483647, %v9153
      %v9156 = vcvt.s32.f32 %v9149
      %v9157 = vmul.f32 %v9156, %v9154
      %v9158 = vxor.u32 %v9157, 2147483648
      %v9159 = vsel %vm9076, %v9158, %v9157
      %v9160 = vsub.s32 4, %v9136
      %v9161 = vsel %vm9076, %v9160, %v9136
      %v9162 = vsel %vm9075, %v8140, %v9159
      %v9163 = vsel %vm9075, 0, %v9161
      %v9164 = vcosq.f32.pop %v9162
      %v9165 = vsinq.f32.pop %v9162
      %vm9166 = vweird.f32 %v8140
      %v9167 = vand.u32 %v9163, 3
      %vm9168 = vcmp.lt.s32.totalorder %v9167, 2
      %vm9169 = vcmp.eq.s32.totalorder %v9167, 0
      %v9170 = vxor.u32 %v9165, 2147483648
      %v9171 = vsel %vm9169, %v9164, %v9170
      %vm9172 = vcmp.eq.s32.totalorder %v9167, 2
      %v9173 = vxor.u32 %v9164, 2147483648
      %v9174 = vsel %vm9172, %v9173, %v9165
      %v9175 = vsel %vm9168, %v9171, %v9174
      %v9176 = vsel %vm9166, nan, %v9175
      %v9177 = vand.u32 2147483647, %v8141
      %vm9178 = vcmp.le.f32.partialorder %v9177, 0.7853982
      %vm9179 = vcmp.lt.s32.totalorder %v8141, 0
      %v9180 = vand.u32 %v8141, 2139095040
      %v9181 = vshrl.u32 %v9180, 23
      %v9182 = vsub.s32 %v9181, 127
      %v9183 = vand.u32 2147483647, %v8141
      %v9184 = vand.u32 %v9183, 8388607
      %v9185 = vor.u32 %v9184, 8388608
      %v9186 = vsub.s32 0, %v9185
      %v9187 = vadd.s32 %v9182, 1
      %vm9188 = vcmp.gt.s32.totalorder %v9187, 0
      %v9189 = vsel %vm9188, %v9187, 0
      %v9190 = vshrl.u32 %v9189, 5
      %v9191 = vand.u32 %v9189, 31
      %v9192 = vsub.s32 32, %v9191
      %v9193 = vshrl.u32 683565275, %v9192
      %v9194 = vshll.u32 683565275, %v9191
      %v9195 = vshrl.u32 2475754826, %v9192
      %v9196 = vor.u32 %v9194, %v9195
      %v9197 = vshll.u32 2475754826, %v9191
      %v9198 = vshrl.u32 2131351028, %v9192
      %v9199 = vor.u32 %v9197, %v9198
      %v9200 = vshll.u32 2131351028, %v9191
      %v9201 = vshrl.u32 2102212464, %v9192
      %v9202 = vor.u32 %v9200, %v9201
      %v9203 = vshll.u32 2102212464, %v9191
      %v9204 = vshrl.u32 920167782, %v9192
      %v9205 = vor.u32 %v9203, %v9204
      %v9206 = vshll.u32 920167782, %v9191
      %v9207 = vshrl.u32 1326507024, %v9192
      %v9208 = vor.u32 %v9206, %v9207
      %vm9209 = vcmp.lt.s32.totalorder %v9190, 1
      %vm9210 = vcmp.lt.s32.totalorder %v9190, 2
      %vm9211 = vcmp.lt.s32.totalorder %v9190, 3
      %vm9212 = vcmp.lt.s32.totalorder %v9190, 4
      %v9213 = vsel %vm9209, %v9193, %v9196
      %v9214 = vsel %vm9212, %v9202, 2102212464
      %v9215 = vsel %vm9211, %v9199, %v9214
      %v9216 = vsel %vm9210, %v9213, %v9215
      %v9217 = vsel %vm9209, %v9196, %v9199
      %v9218 = vsel %vm9212, %v9205, 920167782
      %v9219 = vsel %vm9211, %v9202, %v9218
      %v9220 = vsel %vm9210, %v9217, %v9219
      %v9221 = vsel %vm9209, %v9199, %v9202
      %v9222 = vsel %vm9212, %v9208, 1326507024
      %v9223 = vsel %vm9211, %v9205, %v9222
      %v9224 = vsel %vm9210, %v9221, %v9223
      %v9225 = vshll.u32 %v9185, 8
      %v9226 = vmul.u32.u64.compose %v9225, %v9224
      %v9227 = vextract.low.u32 %v9226
      %v9228 = vextract.high.u32 %v9226
      %v9229 = vmul.u32.u64.compose %v9225, %v9220
      %v9230 = vextract.low.u32 %v9229
      %v9231 = vextract.high.u32 %v9229
      %v9232 = vmul.u32 %v9225, %v9216
      %v9233 = vadd.s32 %v9228, %v9230
      %vm9234 = vc.u32 %v9228, %v9230
      %v9235 = vadd.s32 %v9231, 1
      %v9236 = vsel %vm9234, %v9235, %v9231
      %v9237 = vadd.s32 %v9232, %v9236
      %v9238 = vadd.s32 %v9237, 536870912
      %v9239 = vshrl.u32 %v9238, 30
      %v9240 = vshll.u32 %v9239, 30
      %v9241 = vsub.s32 %v9237, %v9240
      %vm9242 = vcmp.lt.s32.totalorder %v9241, 0
      %v9243 = vsub.s32 0, %v9241
      %v9244 = vsel %vm9242, %v9243, %v9241
      %v9245 = vclz %v9244
      %v9246 = vsub.s32 %v9245, 2
      %vm9247 = vcmp.gt.s32.totalorder 0, %v9246
      %v9248 = vsel %vm9247, 0, %v9246
      %v9249 = vsub.s32 32, %v9248
      %v9250 = vshll.u32 %v9241, %v9248
      %v9251 = vshrl.u32 %v9233, %v9249
      %v9252 = vor.u32 %v9250, %v9251
      %v9253 = vsub.s32 4294967266, %v9248
      %v9254 = vadd.s32 %v9253, 127
      %v9255 = vshll.u32 %v9254, 23
      %v9256 = vor.u32 4788187, %v9255
      %v9257 = vand.u32 2147483647, %v9256
      %v9259 = vcvt.s32.f32 %v9252
      %v9260 = vmul.f32 %v9259, %v9257
      %v9261 = vxor.u32 %v9260, 2147483648
      %v9262 = vsel %vm9179, %v9261, %v9260
      %v9263 = vsub.s32 4, %v9239
      %v9264 = vsel %vm9179, %v9263, %v9239
      %v9265 = vsel %vm9178, %v8141, %v9262
      %v9266 = vsel %vm9178, 0, %v9264
      %v9267 = vcosq.f32.pop %v9265
      %v9268 = vsinq.f32.pop %v9265
      %vm9269 = vweird.f32 %v8141
      %v9270 = vand.u32 %v9266, 3
      %vm9271 = vcmp.lt.s32.totalorder %v9270, 2
      %vm9272 = vcmp.eq.s32.totalorder %v9270, 0
      %v9273 = vxor.u32 %v9268, 2147483648
      %v9274 = vsel %vm9272, %v9267, %v9273
      %vm9275 = vcmp.eq.s32.totalorder %v9270, 2
      %v9276 = vxor.u32 %v9267, 2147483648
      %v9277 = vsel %vm9275, %v9276, %v9268
      %v9278 = vsel %vm9271, %v9274, %v9277
      %v9279 = vsel %vm9269, nan, %v9278
      %v9280 = vand.u32 2147483647, %v8142
      %vm9281 = vcmp.le.f32.partialorder %v9280, 0.7853982
      %vm9282 = vcmp.lt.s32.totalorder %v8142, 0
      %v9283 = vand.u32 %v8142, 2139095040
      %v9284 = vshrl.u32 %v9283, 23
      %v9285 = vsub.s32 %v9284, 127
      %v9286 = vand.u32 2147483647, %v8142
      %v9287 = vand.u32 %v9286, 8388607
      %v9288 = vor.u32 %v9287, 8388608
      %v9289 = vsub.s32 0, %v9288
      %v9290 = vadd.s32 %v9285, 1
      %vm9291 = vcmp.gt.s32.totalorder %v9290, 0
      %v9292 = vsel %vm9291, %v9290, 0
      %v9293 = vshrl.u32 %v9292, 5
      %v9294 = vand.u32 %v9292, 31
      %v9295 = vsub.s32 32, %v9294
      %v9296 = vshrl.u32 683565275, %v9295
      %v9297 = vshll.u32 683565275, %v9294
      %v9298 = vshrl.u32 2475754826, %v9295
      %v9299 = vor.u32 %v9297, %v9298
      %v9300 = vshll.u32 2475754826, %v9294
      %v9301 = vshrl.u32 2131351028, %v9295
      %v9302 = vor.u32 %v9300, %v9301
      %v9303 = vshll.u32 2131351028, %v9294
      %v9304 = vshrl.u32 2102212464, %v9295
      %v9305 = vor.u32 %v9303, %v9304
      %v9306 = vshll.u32 2102212464, %v9294
      %v9307 = vshrl.u32 920167782, %v9295
      %v9308 = vor.u32 %v9306, %v9307
      %v9309 = vshll.u32 920167782, %v9294
      %v9310 = vshrl.u32 1326507024, %v9295
      %v9311 = vor.u32 %v9309, %v9310
      %vm9312 = vcmp.lt.s32.totalorder %v9293, 1
      %vm9313 = vcmp.lt.s32.totalorder %v9293, 2
      %vm9314 = vcmp.lt.s32.totalorder %v9293, 3
      %vm9315 = vcmp.lt.s32.totalorder %v9293, 4
      %v9316 = vsel %vm9312, %v9296, %v9299
      %v9317 = vsel %vm9315, %v9305, 2102212464
      %v9318 = vsel %vm9314, %v9302, %v9317
      %v9319 = vsel %vm9313, %v9316, %v9318
      %v9320 = vsel %vm9312, %v9299, %v9302
      %v9321 = vsel %vm9315, %v9308, 920167782
      %v9322 = vsel %vm9314, %v9305, %v9321
      %v9323 = vsel %vm9313, %v9320, %v9322
      %v9324 = vsel %vm9312, %v9302, %v9305
      %v9325 = vsel %vm9315, %v9311, 1326507024
      %v9326 = vsel %vm9314, %v9308, %v9325
      %v9327 = vsel %vm9313, %v9324, %v9326
      %v9328 = vshll.u32 %v9288, 8
      %v9329 = vmul.u32.u64.compose %v9328, %v9327
      %v9330 = vextract.low.u32 %v9329
      %v9331 = vextract.high.u32 %v9329
      %v9332 = vmul.u32.u64.compose %v9328, %v9323
      %v9333 = vextract.low.u32 %v9332
      %v9334 = vextract.high.u32 %v9332
      %v9335 = vmul.u32 %v9328, %v9319
      %v9336 = vadd.s32 %v9331, %v9333
      %vm9337 = vc.u32 %v9331, %v9333
      %v9338 = vadd.s32 %v9334, 1
      %v9339 = vsel %vm9337, %v9338, %v9334
      %v9340 = vadd.s32 %v9335, %v9339
      %v9341 = vadd.s32 %v9340, 536870912
      %v9342 = vshrl.u32 %v9341, 30
      %v9343 = vshll.u32 %v9342, 30
      %v9344 = vsub.s32 %v9340, %v9343
      %vm9345 = vcmp.lt.s32.totalorder %v9344, 0
      %v9346 = vsub.s32 0, %v9344
      %v9347 = vsel %vm9345, %v9346, %v9344
      %v9348 = vclz %v9347
      %v9349 = vsub.s32 %v9348, 2
      %vm9350 = vcmp.gt.s32.totalorder 0, %v9349
      %v9351 = vsel %vm9350, 0, %v9349
      %v9352 = vsub.s32 32, %v9351
      %v9353 = vshll.u32 %v9344, %v9351
      %v9354 = vshrl.u32 %v9336, %v9352
      %v9355 = vor.u32 %v9353, %v9354
      %v9356 = vsub.s32 4294967266, %v9351
      %v9357 = vadd.s32 %v9356, 127
      %v9358 = vshll.u32 %v9357, 23
      %v9359 = vor.u32 4788187, %v9358
      %v9360 = vand.u32 2147483647, %v9359
      %v9362 = vcvt.s32.f32 %v9355
      %v9363 = vmul.f32 %v9362, %v9360
      %v9364 = vxor.u32 %v9363, 2147483648
      %v9365 = vsel %vm9282, %v9364, %v9363
      %v9366 = vsub.s32 4, %v9342
      %v9367 = vsel %vm9282, %v9366, %v9342
      %v9368 = vsel %vm9281, %v8142, %v9365
      %v9369 = vsel %vm9281, 0, %v9367
      %v9370 = vcosq.f32.pop %v9368
      %v9371 = vsinq.f32.pop %v9368
      %vm9372 = vweird.f32 %v8142
      %v9373 = vand.u32 %v9369, 3
      %vm9374 = vcmp.lt.s32.totalorder %v9373, 2
      %vm9375 = vcmp.eq.s32.totalorder %v9373, 0
      %v9376 = vxor.u32 %v9371, 2147483648
      %v9377 = vsel %vm9375, %v9370, %v9376
      %vm9378 = vcmp.eq.s32.totalorder %v9373, 2
      %v9379 = vxor.u32 %v9370, 2147483648
      %v9380 = vsel %vm9378, %v9379, %v9371
      %v9381 = vsel %vm9374, %v9377, %v9380
      %v9382 = vsel %vm9372, nan, %v9381
      %v9383 = vand.u32 2147483647, %v8143
      %vm9384 = vcmp.le.f32.partialorder %v9383, 0.7853982
      %vm9385 = vcmp.lt.s32.totalorder %v8143, 0
      %v9386 = vand.u32 %v8143, 2139095040
      %v9387 = vshrl.u32 %v9386, 23
      %v9388 = vsub.s32 %v9387, 127
      %v9389 = vand.u32 2147483647, %v8143
      %v9390 = vand.u32 %v9389, 8388607
      %v9391 = vor.u32 %v9390, 8388608
      %v9392 = vsub.s32 0, %v9391
      %v9393 = vadd.s32 %v9388, 1
      %vm9394 = vcmp.gt.s32.totalorder %v9393, 0
      %v9395 = vsel %vm9394, %v9393, 0
      %v9396 = vshrl.u32 %v9395, 5
      %v9397 = vand.u32 %v9395, 31
      %v9398 = vsub.s32 32, %v9397
      %v9399 = vshrl.u32 683565275, %v9398
      %v9400 = vshll.u32 683565275, %v9397
      %v9401 = vshrl.u32 2475754826, %v9398
      %v9402 = vor.u32 %v9400, %v9401
      %v9403 = vshll.u32 2475754826, %v9397
      %v9404 = vshrl.u32 2131351028, %v9398
      %v9405 = vor.u32 %v9403, %v9404
      %v9406 = vshll.u32 2131351028, %v9397
      %v9407 = vshrl.u32 2102212464, %v9398
      %v9408 = vor.u32 %v9406, %v9407
      %v9409 = vshll.u32 2102212464, %v9397
      %v9410 = vshrl.u32 920167782, %v9398
      %v9411 = vor.u32 %v9409, %v9410
      %v9412 = vshll.u32 920167782, %v9397
      %v9413 = vshrl.u32 1326507024, %v9398
      %v9414 = vor.u32 %v9412, %v9413
      %vm9415 = vcmp.lt.s32.totalorder %v9396, 1
      %vm9416 = vcmp.lt.s32.totalorder %v9396, 2
      %vm9417 = vcmp.lt.s32.totalorder %v9396, 3
      %vm9418 = vcmp.lt.s32.totalorder %v9396, 4
      %v9419 = vsel %vm9415, %v9399, %v9402
      %v9420 = vsel %vm9418, %v9408, 2102212464
      %v9421 = vsel %vm9417, %v9405, %v9420
      %v9422 = vsel %vm9416, %v9419, %v9421
      %v9423 = vsel %vm9415, %v9402, %v9405
      %v9424 = vsel %vm9418, %v9411, 920167782
      %v9425 = vsel %vm9417, %v9408, %v9424
      %v9426 = vsel %vm9416, %v9423, %v9425
      %v9427 = vsel %vm9415, %v9405, %v9408
      %v9428 = vsel %vm9418, %v9414, 1326507024
      %v9429 = vsel %vm9417, %v9411, %v9428
      %v9430 = vsel %vm9416, %v9427, %v9429
      %v9431 = vshll.u32 %v9391, 8
      %v9432 = vmul.u32.u64.compose %v9431, %v9430
      %v9433 = vextract.low.u32 %v9432
      %v9434 = vextract.high.u32 %v9432
      %v9435 = vmul.u32.u64.compose %v9431, %v9426
      %v9436 = vextract.low.u32 %v9435
      %v9437 = vextract.high.u32 %v9435
      %v9438 = vmul.u32 %v9431, %v9422
      %v9439 = vadd.s32 %v9434, %v9436
      %vm9440 = vc.u32 %v9434, %v9436
      %v9441 = vadd.s32 %v9437, 1
      %v9442 = vsel %vm9440, %v9441, %v9437
      %v9443 = vadd.s32 %v9438, %v9442
      %v9444 = vadd.s32 %v9443, 536870912
      %v9445 = vshrl.u32 %v9444, 30
      %v9446 = vshll.u32 %v9445, 30
      %v9447 = vsub.s32 %v9443, %v9446
      %vm9448 = vcmp.lt.s32.totalorder %v9447, 0
      %v9449 = vsub.s32 0, %v9447
      %v9450 = vsel %vm9448, %v9449, %v9447
      %v9451 = vclz %v9450
      %v9452 = vsub.s32 %v9451, 2
      %vm9453 = vcmp.gt.s32.totalorder 0, %v9452
      %v9454 = vsel %vm9453, 0, %v9452
      %v9455 = vsub.s32 32, %v9454
      %v9456 = vshll.u32 %v9447, %v9454
      %v9457 = vshrl.u32 %v9439, %v9455
      %v9458 = vor.u32 %v9456, %v9457
      %v9459 = vsub.s32 4294967266, %v9454
      %v9460 = vadd.s32 %v9459, 127
      %v9461 = vshll.u32 %v9460, 23
      %v9462 = vor.u32 4788187, %v9461
      %v9463 = vand.u32 2147483647, %v9462
      %v9465 = vcvt.s32.f32 %v9458
      %v9466 = vmul.f32 %v9465, %v9463
      %v9467 = vxor.u32 %v9466, 2147483648
      %v9468 = vsel %vm9385, %v9467, %v9466
      %v9469 = vsub.s32 4, %v9445
      %v9470 = vsel %vm9385, %v9469, %v9445
      %v9471 = vsel %vm9384, %v8143, %v9468
      %v9472 = vsel %vm9384, 0, %v9470
      %v9473 = vcosq.f32.pop %v9471
      %v9474 = vsinq.f32.pop %v9471
      %vm9475 = vweird.f32 %v8143
      %v9476 = vand.u32 %v9472, 3
      %vm9477 = vcmp.lt.s32.totalorder %v9476, 2
      %vm9478 = vcmp.eq.s32.totalorder %v9476, 0
      %v9479 = vxor.u32 %v9474, 2147483648
      %v9480 = vsel %vm9478, %v9473, %v9479
      %vm9481 = vcmp.eq.s32.totalorder %v9476, 2
      %v9482 = vxor.u32 %v9473, 2147483648
      %v9483 = vsel %vm9481, %v9482, %v9474
      %v9484 = vsel %vm9477, %v9480, %v9483
      %v9485 = vsel %vm9475, nan, %v9484
      %v9486 = vand.u32 2147483647, %v8144
      %vm9487 = vcmp.le.f32.partialorder %v9486, 0.7853982
      %vm9488 = vcmp.lt.s32.totalorder %v8144, 0
      %v9489 = vand.u32 %v8144, 2139095040
      %v9490 = vshrl.u32 %v9489, 23
      %v9491 = vsub.s32 %v9490, 127
      %v9492 = vand.u32 2147483647, %v8144
      %v9493 = vand.u32 %v9492, 8388607
      %v9494 = vor.u32 %v9493, 8388608
      %v9495 = vsub.s32 0, %v9494
      %v9496 = vadd.s32 %v9491, 1
      %vm9497 = vcmp.gt.s32.totalorder %v9496, 0
      %v9498 = vsel %vm9497, %v9496, 0
      %v9499 = vshrl.u32 %v9498, 5
      %v9500 = vand.u32 %v9498, 31
      %v9501 = vsub.s32 32, %v9500
      %v9502 = vshrl.u32 683565275, %v9501
      %v9503 = vshll.u32 683565275, %v9500
      %v9504 = vshrl.u32 2475754826, %v9501
      %v9505 = vor.u32 %v9503, %v9504
      %v9506 = vshll.u32 2475754826, %v9500
      %v9507 = vshrl.u32 2131351028, %v9501
      %v9508 = vor.u32 %v9506, %v9507
      %v9509 = vshll.u32 2131351028, %v9500
      %v9510 = vshrl.u32 2102212464, %v9501
      %v9511 = vor.u32 %v9509, %v9510
      %v9512 = vshll.u32 2102212464, %v9500
      %v9513 = vshrl.u32 920167782, %v9501
      %v9514 = vor.u32 %v9512, %v9513
      %v9515 = vshll.u32 920167782, %v9500
      %v9516 = vshrl.u32 1326507024, %v9501
      %v9517 = vor.u32 %v9515, %v9516
      %vm9518 = vcmp.lt.s32.totalorder %v9499, 1
      %vm9519 = vcmp.lt.s32.totalorder %v9499, 2
      %vm9520 = vcmp.lt.s32.totalorder %v9499, 3
      %vm9521 = vcmp.lt.s32.totalorder %v9499, 4
      %v9522 = vsel %vm9518, %v9502, %v9505
      %v9523 = vsel %vm9521, %v9511, 2102212464
      %v9524 = vsel %vm9520, %v9508, %v9523
      %v9525 = vsel %vm9519, %v9522, %v9524
      %v9526 = vsel %vm9518, %v9505, %v9508
      %v9527 = vsel %vm9521, %v9514, 920167782
      %v9528 = vsel %vm9520, %v9511, %v9527
      %v9529 = vsel %vm9519, %v9526, %v9528
      %v9530 = vsel %vm9518, %v9508, %v9511
      %v9531 = vsel %vm9521, %v9517, 1326507024
      %v9532 = vsel %vm9520, %v9514, %v9531
      %v9533 = vsel %vm9519, %v9530, %v9532
      %v9534 = vshll.u32 %v9494, 8
      %v9535 = vmul.u32.u64.compose %v9534, %v9533
      %v9536 = vextract.low.u32 %v9535
      %v9537 = vextract.high.u32 %v9535
      %v9538 = vmul.u32.u64.compose %v9534, %v9529
      %v9539 = vextract.low.u32 %v9538
      %v9540 = vextract.high.u32 %v9538
      %v9541 = vmul.u32 %v9534, %v9525
      %v9542 = vadd.s32 %v9537, %v9539
      %vm9543 = vc.u32 %v9537, %v9539
      %v9544 = vadd.s32 %v9540, 1
      %v9545 = vsel %vm9543, %v9544, %v9540
      %v9546 = vadd.s32 %v9541, %v9545
      %v9547 = vadd.s32 %v9546, 536870912
      %v9548 = vshrl.u32 %v9547, 30
      %v9549 = vshll.u32 %v9548, 30
      %v9550 = vsub.s32 %v9546, %v9549
      %vm9551 = vcmp.lt.s32.totalorder %v9550, 0
      %v9552 = vsub.s32 0, %v9550
      %v9553 = vsel %vm9551, %v9552, %v9550
      %v9554 = vclz %v9553
      %v9555 = vsub.s32 %v9554, 2
      %vm9556 = vcmp.gt.s32.totalorder 0, %v9555
      %v9557 = vsel %vm9556, 0, %v9555
      %v9558 = vsub.s32 32, %v9557
      %v9559 = vshll.u32 %v9550, %v9557
      %v9560 = vshrl.u32 %v9542, %v9558
      %v9561 = vor.u32 %v9559, %v9560
      %v9562 = vsub.s32 4294967266, %v9557
      %v9563 = vadd.s32 %v9562, 127
      %v9564 = vshll.u32 %v9563, 23
      %v9565 = vor.u32 4788187, %v9564
      %v9566 = vand.u32 2147483647, %v9565
      %v9568 = vcvt.s32.f32 %v9561
      %v9569 = vmul.f32 %v9568, %v9566
      %v9570 = vxor.u32 %v9569, 2147483648
      %v9571 = vsel %vm9488, %v9570, %v9569
      %v9572 = vsub.s32 4, %v9548
      %v9573 = vsel %vm9488, %v9572, %v9548
      %v9574 = vsel %vm9487, %v8144, %v9571
      %v9575 = vsel %vm9487, 0, %v9573
      %v9576 = vcosq.f32.pop %v9574
      %v9577 = vsinq.f32.pop %v9574
      %vm9578 = vweird.f32 %v8144
      %v9579 = vand.u32 %v9575, 3
      %vm9580 = vcmp.lt.s32.totalorder %v9579, 2
      %vm9581 = vcmp.eq.s32.totalorder %v9579, 0
      %v9582 = vxor.u32 %v9577, 2147483648
      %v9583 = vsel %vm9581, %v9576, %v9582
      %vm9584 = vcmp.eq.s32.totalorder %v9579, 2
      %v9585 = vxor.u32 %v9576, 2147483648
      %v9586 = vsel %vm9584, %v9585, %v9577
      %v9587 = vsel %vm9580, %v9583, %v9586
      %v9588 = vsel %vm9578, nan, %v9587
      %v9589 = vand.u32 2147483647, %v8145
      %vm9590 = vcmp.le.f32.partialorder %v9589, 0.7853982
      %vm9591 = vcmp.lt.s32.totalorder %v8145, 0
      %v9592 = vand.u32 %v8145, 2139095040
      %v9593 = vshrl.u32 %v9592, 23
      %v9594 = vsub.s32 %v9593, 127
      %v9595 = vand.u32 2147483647, %v8145
      %v9596 = vand.u32 %v9595, 8388607
      %v9597 = vor.u32 %v9596, 8388608
      %v9598 = vsub.s32 0, %v9597
      %v9599 = vadd.s32 %v9594, 1
      %vm9600 = vcmp.gt.s32.totalorder %v9599, 0
      %v9601 = vsel %vm9600, %v9599, 0
      %v9602 = vshrl.u32 %v9601, 5
      %v9603 = vand.u32 %v9601, 31
      %v9604 = vsub.s32 32, %v9603
      %v9605 = vshrl.u32 683565275, %v9604
      %v9606 = vshll.u32 683565275, %v9603
      %v9607 = vshrl.u32 2475754826, %v9604
      %v9608 = vor.u32 %v9606, %v9607
      %v9609 = vshll.u32 2475754826, %v9603
      %v9610 = vshrl.u32 2131351028, %v9604
      %v9611 = vor.u32 %v9609, %v9610
      %v9612 = vshll.u32 2131351028, %v9603
      %v9613 = vshrl.u32 2102212464, %v9604
      %v9614 = vor.u32 %v9612, %v9613
      %v9615 = vshll.u32 2102212464, %v9603
      %v9616 = vshrl.u32 920167782, %v9604
      %v9617 = vor.u32 %v9615, %v9616
      %v9618 = vshll.u32 920167782, %v9603
      %v9619 = vshrl.u32 1326507024, %v9604
      %v9620 = vor.u32 %v9618, %v9619
      %vm9621 = vcmp.lt.s32.totalorder %v9602, 1
      %vm9622 = vcmp.lt.s32.totalorder %v9602, 2
      %vm9623 = vcmp.lt.s32.totalorder %v9602, 3
      %vm9624 = vcmp.lt.s32.totalorder %v9602, 4
      %v9625 = vsel %vm9621, %v9605, %v9608
      %v9626 = vsel %vm9624, %v9614, 2102212464
      %v9627 = vsel %vm9623, %v9611, %v9626
      %v9628 = vsel %vm9622, %v9625, %v9627
      %v9629 = vsel %vm9621, %v9608, %v9611
      %v9630 = vsel %vm9624, %v9617, 920167782
      %v9631 = vsel %vm9623, %v9614, %v9630
      %v9632 = vsel %vm9622, %v9629, %v9631
      %v9633 = vsel %vm9621, %v9611, %v9614
      %v9634 = vsel %vm9624, %v9620, 1326507024
      %v9635 = vsel %vm9623, %v9617, %v9634
      %v9636 = vsel %vm9622, %v9633, %v9635
      %v9637 = vshll.u32 %v9597, 8
      %v9638 = vmul.u32.u64.compose %v9637, %v9636
      %v9639 = vextract.low.u32 %v9638
      %v9640 = vextract.high.u32 %v9638
      %v9641 = vmul.u32.u64.compose %v9637, %v9632
      %v9642 = vextract.low.u32 %v9641
      %v9643 = vextract.high.u32 %v9641
      %v9644 = vmul.u32 %v9637, %v9628
      %v9645 = vadd.s32 %v9640, %v9642
      %vm9646 = vc.u32 %v9640, %v9642
      %v9647 = vadd.s32 %v9643, 1
      %v9648 = vsel %vm9646, %v9647, %v9643
      %v9649 = vadd.s32 %v9644, %v9648
      %v9650 = vadd.s32 %v9649, 536870912
      %v9651 = vshrl.u32 %v9650, 30
      %v9652 = vshll.u32 %v9651, 30
      %v9653 = vsub.s32 %v9649, %v9652
      %vm9654 = vcmp.lt.s32.totalorder %v9653, 0
      %v9655 = vsub.s32 0, %v9653
      %v9656 = vsel %vm9654, %v9655, %v9653
      %v9657 = vclz %v9656
      %v9658 = vsub.s32 %v9657, 2
      %vm9659 = vcmp.gt.s32.totalorder 0, %v9658
      %v9660 = vsel %vm9659, 0, %v9658
      %v9661 = vsub.s32 32, %v9660
      %v9662 = vshll.u32 %v9653, %v9660
      %v9663 = vshrl.u32 %v9645, %v9661
      %v9664 = vor.u32 %v9662, %v9663
      %v9665 = vsub.s32 4294967266, %v9660
      %v9666 = vadd.s32 %v9665, 127
      %v9667 = vshll.u32 %v9666, 23
      %v9668 = vor.u32 4788187, %v9667
      %v9669 = vand.u32 2147483647, %v9668
      %v9671 = vcvt.s32.f32 %v9664
      %v9672 = vmul.f32 %v9671, %v9669
      %v9673 = vxor.u32 %v9672, 2147483648
      %v9674 = vsel %vm9591, %v9673, %v9672
      %v9675 = vsub.s32 4, %v9651
      %v9676 = vsel %vm9591, %v9675, %v9651
      %v9677 = vsel %vm9590, %v8145, %v9674
      %v9678 = vsel %vm9590, 0, %v9676
      %v9679 = vcosq.f32.pop %v9677
      %v9680 = vsinq.f32.pop %v9677
      %vm9681 = vweird.f32 %v8145
      %v9682 = vand.u32 %v9678, 3
      %vm9683 = vcmp.lt.s32.totalorder %v9682, 2
      %vm9684 = vcmp.eq.s32.totalorder %v9682, 0
      %v9685 = vxor.u32 %v9680, 2147483648
      %v9686 = vsel %vm9684, %v9679, %v9685
      %vm9687 = vcmp.eq.s32.totalorder %v9682, 2
      %v9688 = vxor.u32 %v9679, 2147483648
      %v9689 = vsel %vm9687, %v9688, %v9680
      %v9690 = vsel %vm9683, %v9686, %v9689
      %v9691 = vsel %vm9681, nan, %v9690
      %v9692 = vand.u32 2147483647, %v8146
      %vm9693 = vcmp.le.f32.partialorder %v9692, 0.7853982
      %vm9694 = vcmp.lt.s32.totalorder %v8146, 0
      %v9695 = vand.u32 %v8146, 2139095040
      %v9696 = vshrl.u32 %v9695, 23
      %v9697 = vsub.s32 %v9696, 127
      %v9698 = vand.u32 2147483647, %v8146
      %v9699 = vand.u32 %v9698, 8388607
      %v9700 = vor.u32 %v9699, 8388608
      %v9701 = vsub.s32 0, %v9700
      %v9702 = vadd.s32 %v9697, 1
      %vm9703 = vcmp.gt.s32.totalorder %v9702, 0
      %v9704 = vsel %vm9703, %v9702, 0
      %v9705 = vshrl.u32 %v9704, 5
      %v9706 = vand.u32 %v9704, 31
      %v9707 = vsub.s32 32, %v9706
      %v9708 = vshrl.u32 683565275, %v9707
      %v9709 = vshll.u32 683565275, %v9706
      %v9710 = vshrl.u32 2475754826, %v9707
      %v9711 = vor.u32 %v9709, %v9710
      %v9712 = vshll.u32 2475754826, %v9706
      %v9713 = vshrl.u32 2131351028, %v9707
      %v9714 = vor.u32 %v9712, %v9713
      %v9715 = vshll.u32 2131351028, %v9706
      %v9716 = vshrl.u32 2102212464, %v9707
      %v9717 = vor.u32 %v9715, %v9716
      %v9718 = vshll.u32 2102212464, %v9706
      %v9719 = vshrl.u32 920167782, %v9707
      %v9720 = vor.u32 %v9718, %v9719
      %v9721 = vshll.u32 920167782, %v9706
      %v9722 = vshrl.u32 1326507024, %v9707
      %v9723 = vor.u32 %v9721, %v9722
      %vm9724 = vcmp.lt.s32.totalorder %v9705, 1
      %vm9725 = vcmp.lt.s32.totalorder %v9705, 2
      %vm9726 = vcmp.lt.s32.totalorder %v9705, 3
      %vm9727 = vcmp.lt.s32.totalorder %v9705, 4
      %v9728 = vsel %vm9724, %v9708, %v9711
      %v9729 = vsel %vm9727, %v9717, 2102212464
      %v9730 = vsel %vm9726, %v9714, %v9729
      %v9731 = vsel %vm9725, %v9728, %v9730
      %v9732 = vsel %vm9724, %v9711, %v9714
      %v9733 = vsel %vm9727, %v9720, 920167782
      %v9734 = vsel %vm9726, %v9717, %v9733
      %v9735 = vsel %vm9725, %v9732, %v9734
      %v9736 = vsel %vm9724, %v9714, %v9717
      %v9737 = vsel %vm9727, %v9723, 1326507024
      %v9738 = vsel %vm9726, %v9720, %v9737
      %v9739 = vsel %vm9725, %v9736, %v9738
      %v9740 = vshll.u32 %v9700, 8
      %v9741 = vmul.u32.u64.compose %v9740, %v9739
      %v9742 = vextract.low.u32 %v9741
      %v9743 = vextract.high.u32 %v9741
      %v9744 = vmul.u32.u64.compose %v9740, %v9735
      %v9745 = vextract.low.u32 %v9744
      %v9746 = vextract.high.u32 %v9744
      %v9747 = vmul.u32 %v9740, %v9731
      %v9748 = vadd.s32 %v9743, %v9745
      %vm9749 = vc.u32 %v9743, %v9745
      %v9750 = vadd.s32 %v9746, 1
      %v9751 = vsel %vm9749, %v9750, %v9746
      %v9752 = vadd.s32 %v9747, %v9751
      %v9753 = vadd.s32 %v9752, 536870912
      %v9754 = vshrl.u32 %v9753, 30
      %v9755 = vshll.u32 %v9754, 30
      %v9756 = vsub.s32 %v9752, %v9755
      %vm9757 = vcmp.lt.s32.totalorder %v9756, 0
      %v9758 = vsub.s32 0, %v9756
      %v9759 = vsel %vm9757, %v9758, %v9756
      %v9760 = vclz %v9759
      %v9761 = vsub.s32 %v9760, 2
      %vm9762 = vcmp.gt.s32.totalorder 0, %v9761
      %v9763 = vsel %vm9762, 0, %v9761
      %v9764 = vsub.s32 32, %v9763
      %v9765 = vshll.u32 %v9756, %v9763
      %v9766 = vshrl.u32 %v9748, %v9764
      %v9767 = vor.u32 %v9765, %v9766
      %v9768 = vsub.s32 4294967266, %v9763
      %v9769 = vadd.s32 %v9768, 127
      %v9770 = vshll.u32 %v9769, 23
      %v9771 = vor.u32 4788187, %v9770
      %v9772 = vand.u32 2147483647, %v9771
      %v9774 = vcvt.s32.f32 %v9767
      %v9775 = vmul.f32 %v9774, %v9772
      %v9776 = vxor.u32 %v9775, 2147483648
      %v9777 = vsel %vm9694, %v9776, %v9775
      %v9778 = vsub.s32 4, %v9754
      %v9779 = vsel %vm9694, %v9778, %v9754
      %v9780 = vsel %vm9693, %v8146, %v9777
      %v9781 = vsel %vm9693, 0, %v9779
      %v9782 = vcosq.f32.pop %v9780
      %v9783 = vsinq.f32.pop %v9780
      %vm9784 = vweird.f32 %v8146
      %v9785 = vand.u32 %v9781, 3
      %vm9786 = vcmp.lt.s32.totalorder %v9785, 2
      %vm9787 = vcmp.eq.s32.totalorder %v9785, 0
      %v9788 = vxor.u32 %v9783, 2147483648
      %v9789 = vsel %vm9787, %v9782, %v9788
      %vm9790 = vcmp.eq.s32.totalorder %v9785, 2
      %v9791 = vxor.u32 %v9782, 2147483648
      %v9792 = vsel %vm9790, %v9791, %v9783
      %v9793 = vsel %vm9786, %v9789, %v9792
      %v9794 = vsel %vm9784, nan, %v9793
      %v9795 = vmul.f32 %v8249, 0.5
      %v9796 = vmul.f32 %v8352, 0.5
      %v9797 = vmul.f32 %v8455, 0.5
      %v9798 = vmul.f32 %v8558, 0.5
      %v9799 = vmul.f32 %v8661, 0.5
      %v9800 = vmul.f32 %v8764, 0.5
      %v9801 = vmul.f32 %v8867, 0.5
      %v9802 = vmul.f32 %v8970, 0.5
      %v9803 = vmul.f32 %v9073, 0.5
      %v9804 = vmul.f32 %v9176, 0.5
      %v9805 = vmul.f32 %v9279, 0.5
      %v9806 = vmul.f32 %v9382, 0.5
      %v9807 = vmul.f32 %v9485, 0.5
      %v9808 = vmul.f32 %v9588, 0.5
      %v9809 = vmul.f32 %v9691, 0.5
      %v9810 = vmul.f32 %v9794, 0.5
      %v9811 = vadd.f32 %v8115, %v9795
      %v9812 = vadd.f32 %v8116, %v9796
      %v9813 = vadd.f32 %v8117, %v9797
      %v9814 = vadd.f32 %v8118, %v9798
      %v9815 = vadd.f32 %v8119, %v9799
      %v9816 = vadd.f32 %v8120, %v9800
      %v9817 = vadd.f32 %v8121, %v9801
      %v9818 = vadd.f32 %v8122, %v9802
      %v9819 = vadd.f32 %v8123, %v9803
      %v9820 = vadd.f32 %v8124, %v9804
      %v9821 = vadd.f32 %v8125, %v9805
      %v9822 = vadd.f32 %v8126, %v9806
      %v9823 = vadd.f32 %v8127, %v9807
      %v9824 = vadd.f32 %v8128, %v9808
      %v9825 = vadd.f32 %v8129, %v9809
      %v9826 = vadd.f32 %v8130, %v9810
      %9827 = vst.msk [vmem:[%s298] sm:$0xff] %vm1094, %v9811
      %9828 = vst.msk [vmem:[%s298 + $0x8] sm:$0xff] %vm1094, %v9812
      %9829 = vst.msk [vmem:[%s298 + $0x10] sm:$0xff] %vm1094, %v9813
      %9830 = vst.msk [vmem:[%s298 + $0x18] sm:$0xff] %vm1094, %v9814
      %9831 = vst.msk [vmem:[%s298 + $0x20] sm:$0xff] %vm1094, %v9815
      %9832 = vst.msk [vmem:[%s298 + $0x28] sm:$0xff] %vm1094, %v9816
      %9833 = vst.msk [vmem:[%s298 + $0x30] sm:$0xff] %vm1094, %v9817
      %9834 = vst.msk [vmem:[%s298 + $0x38] sm:$0xff] %vm1094, %v9818
      %9835 = vst.msk [vmem:[%s298 + $0x40] sm:$0xff] %vm1094, %v9819
      %9836 = vst.msk [vmem:[%s298 + $0x48] sm:$0xff] %vm1094, %v9820
      %9837 = vst.msk [vmem:[%s298 + $0x50] sm:$0xff] %vm1094, %v9821
      %9838 = vst.msk [vmem:[%s298 + $0x58] sm:$0xff] %vm1094, %v9822
      %9839 = vst.msk [vmem:[%s298 + $0x60] sm:$0xff] %vm1094, %v9823
      %9840 = vst.msk [vmem:[%s298 + $0x68] sm:$0xff] %vm1094, %v9824
      %9841 = vst.msk [vmem:[%s298 + $0x70] sm:$0xff] %vm1094, %v9825
      %9842 = vst.msk [vmem:[%s298 + $0x78] sm:$0xff] %vm1094, %v9826
      %p9843 = scmp.lt.s32.totalorder %s18, 1
      %s9844 = scalar_select %p9843, %s18, 1
      %s9845 = smul.addr %s9844, 16
      %s9846 = smul.addr %s9845, 8
      %s9847 = scalar_lea.vmem %s7, %s9846
      // Predicated region
      $region49: #{module_fmri_forward.1} parent=47 // pred_check
        %p9848 = pneg %p193
      $region50: #{module_fmri_forward.1} parent=47 // pred_check_branch
        %9850 = sbr.rel (%p9848) target = $region52
      $region51: #{module_fmri_forward.1} parent=47 // pred_region
        _
      $region52: #{module_fmri_forward.1} parent=47 // pred_fallthru
        _
    $region48: #{module_fmri_forward.1} parent=5 // pred_fallthru
      _
    %p9851 = scmp.le.s32.totalorder 2, %s13
    // Predicated region
    $region53: #{module_fmri_forward.1} parent=5 // pred_check
      %p9852 = pneg %p9851
    $region54: #{module_fmri_forward.1} parent=5 // pred_check_branch
      %9854 = sbr.rel (%p9852) target = $region56
    $region55: #{module_fmri_forward.1} parent=5 // pred_region
      %s9855 = ssub.s32 %s13, 2
      // Predicated region
      $region57: #{module_fmri_forward.1} parent=55 // pred_check
        %p9856 = pneg %p199
      $region58: #{module_fmri_forward.1} parent=55 // pred_check_branch
        %9858 = sbr.rel (%p9856) target = $region60
      $region59: #{module_fmri_forward.1} parent=55 // pred_region
        %p9859 = scmp.lt.s32.totalorder %s19, 1
        %s9860 = scalar_select %p9859, %s19, 1
        %s9861 = smul.addr %s9860, 16
        %s9862 = smul.addr %s9861, 8
        %s9863 = scalar_lea.vmem %s7, %s9862
      $region60: #{module_fmri_forward.1} parent=55 // pred_fallthru
        _
    $region56: #{module_fmri_forward.1} parent=5 // pred_fallthru
      _
  $region6: #{module_fmri_forward.1} parent=0 // loop_footer
    %s17 = sadd.s32 1, %s13
  $region7: #{module_fmri_forward.1} parent=0 // loop_footer_branch
    %12 = sbr.rel target = $region3
  $region8: #{module_fmri_forward.1} parent=0 // loop_exit
    _

</llo_original>
